<compile_context>
chip_gen: v6e
topology: v6e:2x2x1
jax: 0.10.0
libtpu: 0.0.40
codegen_flags: <defaults>
</compile_context>

<pallas_src>
import numpy as np

import jax
import jax.numpy as jnp
from jax.experimental import pallas as pl
from jax.experimental.pallas import tpu as pltpu

BN_EPS = 1e-5
BATCH = 2          # constant selection matrices below are built for this batch
T_SEQ = 20
H_GRU = 128

# Everything lives in a single whole-array VMEM block (no grid).
VMEM_SPEC = pl.BlockSpec(memory_space=pltpu.MemorySpace.VMEM)


# ----------------------------------------------------------------------------
# The single fused kernel
# ----------------------------------------------------------------------------
def _watermarked_fused_kernel(
        # inputs ---------------------------------------------------------------
        x0_ref, seq_ref,
        rs1_ref, w1r_ref, b1_ref, pr1_ref, pc1_ref,
        rs2_ref, w2r_ref, b2_ref, pr2_ref, pc2_ref,
        rp_ref, wfc1_ref, bfc1_ref,
        wih_ref, whh_ref, bih_ref, bhh_ref, wg_ref, bg_ref,
        wa_ref, wb_ref, bm_ref, w2a_ref, b2a_ref, w2b_ref, b2b_ref,
        # outputs --------------------------------------------------------------
        y1_ref, y2_ref):
    f32 = jnp.float32
    dot = lambda a, b: jnp.dot(a, b, preferred_element_type=f32)

    # ---------------- LeNet branch: batch-packed 2-D GEMM chain ----------------
    # x0: (B*32, 32) zero-padded image, rows = (b, y), cols = x.
    x0 = x0_ref[...]

    # conv1 (1->6, 3x3, pad 2) + ReLU.  c1: (B*30, 6*30), cols = (co, x).
    c1 = dot(dot(rs1_ref[0], x0), w1r_ref[0])
    for dy in range(1, 3):
        c1 = c1 + dot(dot(rs1_ref[dy], x0), w1r_ref[dy])
    c1 = jnp.maximum(c1 + b1_ref[...], 0.0)

    # 2x2/2 max-pool #1 via row/col phase selectors.  p1: (B*15, 6*15)
    a0 = dot(pr1_ref[0], c1)
    a1 = dot(pr1_ref[1], c1)
    p1 = jnp.maximum(
        jnp.maximum(dot(a0, pc1_ref[0]), dot(a0, pc1_ref[1])),
        jnp.maximum(dot(a1, pc1_ref[0]), dot(a1, pc1_ref[1])))

    # conv2 (6->16, 5x5) + ReLU.  c2: (B*11, 16*11)
    c2 = dot(dot(rs2_ref[0], p1), w2r_ref[0])
    for dy in range(1, 5):
        c2 = c2 + dot(dot(rs2_ref[dy], p1), w2r_ref[dy])
    c2 = jnp.maximum(c2 + b2_ref[...], 0.0)

    # 2x2/2 max-pool #2 (floor mode).  p2: (B*5, 16*5)
    d0 = dot(pr2_ref[0], c2)
    d1 = dot(pr2_ref[1], c2)
    p2 = jnp.maximum(
        jnp.maximum(dot(d0, pc2_ref[0]), dot(d0, pc2_ref[1])),
        jnp.maximum(dot(d1, pc2_ref[0]), dot(d1, pc2_ref[1])))

    # flatten (torch NCHW .view order) + fc1 with BatchNorm folded in, + ReLU.
    f = dot(dot(rp_ref[0], p2), wfc1_ref[0])
    for i in range(1, 5):
        f = f + dot(dot(rp_ref[i], p2), wfc1_ref[i])
    x1 = jnp.maximum(f + bfc1_ref[...], 0.0)                 # (B, 128) featuremap

    # ---------------- GRU branch (frozen), unrolled over T=20 -----------------
    seq = seq_ref[...]                                       # (B, T)
    wih = wih_ref[...]                                       # (1, 3H)
    whh = whh_ref[...]                                       # (H, 3H)
    bih = bih_ref[...]
    bhh = bhh_ref[...]
    b_sz, t_len = seq.shape
    hsz = whh.shape[0]

    h = jnp.zeros((b_sz, hsz), f32)
    for t in range(t_len):                                   # fully unrolled
        xt = seq[:, t:t + 1]                                 # (B, 1)
        # input_size == 1 -> x_t @ W_ih is a broadcast multiply (VPU), and it
        # does not depend on h, so the unrolled scheduler overlaps it with the
        # serial recurrence matmul below.
        gi = xt * wih + bih                                  # (B, 3H)
        gh = dot(h, whh) + bhh                               # (B, 3H)
        r = jax.nn.sigmoid(gi[:, 0:hsz] + gh[:, 0:hsz])
        z = jax.nn.sigmoid(gi[:, hsz:2 * hsz] + gh[:, hsz:2 * hsz])
        n = jnp.tanh(gi[:, 2 * hsz:3 * hsz] + r * gh[:, 2 * hsz:3 * hsz])
        h = (1.0 - z) * n + z * h
    x2 = h                                                   # (B, 128) last hidden
    y2 = dot(x2, wg_ref[...]) + bg_ref[...]                  # (B, 10)

    # ---------------- merge head (BatchNorms folded into the linears) ---------
    y1 = jnp.maximum(dot(x1, wa_ref[...]) + dot(x2, wb_ref[...]) + bm_ref[...], 0.0)
    y1 = jnp.maximum(dot(y1, w2a_ref[...]) + b2a_ref[...], 0.0)
    y1 = dot(y1, w2b_ref[...]) + b2b_ref[...]                # (B, 10)

    y1_ref[...] = y1.astype(y1_ref.dtype)
    y2_ref[...] = y2.astype(y2_ref.dtype)


# ----------------------------------------------------------------------------
# Parameters (deterministic synthetic init; torch layouts/shapes)
# ----------------------------------------------------------------------------
def init_params(key):
    ks = iter(jax.random.split(key, 48))

    def dense(shape, scale=0.1):
        return scale * jax.random.normal(next(ks), shape, jnp.float32)

    def bn(n):
        return dict(
            gamma=1.0 + 0.1 * jax.random.normal(next(ks), (n,), jnp.float32),
            beta=0.1 * jax.random.normal(next(ks), (n,), jnp.float32),
            mean=0.1 * jax.random.normal(next(ks), (n,), jnp.float32),
            var=jax.random.uniform(next(ks), (n,), jnp.float32, 0.5, 1.5),
        )

    return dict(
        # LeNet (its own fc2 classification head is dead code in
        # WaterMarkedNet.forward -> not modeled / not computed)
        conv1_w=dense((6, 1, 3, 3)), conv1_b=dense((6,)),
        conv2_w=dense((16, 6, 5, 5)), conv2_b=dense((16,)),
        fc1_w=dense((128, 400)), fc1_b=dense((128,)), fc1_bn=bn(128),
        # GRUNet (inferred): GRU(1 -> 128, 1 layer) + Linear(128 -> 10), frozen.
        gru_wih=dense((3 * H_GRU, 1)), gru_whh=dense((3 * H_GRU, H_GRU)),
        gru_bih=dense((3 * H_GRU,)), gru_bhh=dense((3 * H_GRU,)),
        gru_fc_w=dense((10, H_GRU)), gru_fc_b=dense((10,)),
        # WaterMarkedNet head (self.c Linear(64,10) is unused in forward)
        a_w=dense((256, 128)), a_b=dense((256,)),
        b_w=dense((256, 128)), b_b=dense((256,)),
        head_bn1=bn(256),
        head_fc_w=dense((84, 256)), head_fc_b=dense((84,)),
        head_bn2=bn(84),
        head_out_w=dense((10, 84)), head_out_b=dense((10,)),
    )


# ----------------------------------------------------------------------------
# Host-side packing: fold BNs, build selection / Toeplitz-packed matrices.
# Called once, outside jit.
# ----------------------------------------------------------------------------
def make_packed(params, batch=BATCH):
    f32 = np.float32
    p = jax.tree_util.tree_map(lambda a: np.asarray(a, f32), params)
    Bq = batch

    # ---- conv1: c1 = sum_dy (RS1[dy] @ X0) @ W1R[dy] + b1row, then ReLU -----
    rs1 = np.zeros((3, Bq * 30, Bq * 32), f32)
    w1r = np.zeros((3, 32, 6 * 30), f32)
    for dy in range(3):
        for b in range(Bq):
            rs1[dy, b * 30 + np.arange(30), b * 32 + np.arange(30) + dy] = 1.0
        for co in range(6):
            for dx in range(3):
                w1r[dy, np.arange(30) + dx, co * 30 + np.arange(30)] = \
                    p["conv1_w"][co, 0, dy, dx]
    b1row = np.zeros((1, 180), f32)
    for co in range(6):
        b1row[0, co * 30:(co + 1) * 30] = p["conv1_b"][co]

    # ---- pool1 selectors: rows (b, 2i+p), cols (co, 2j+q) -> (b,i), (co,j) ---
    pr1 = np.zeros((2, Bq * 15, Bq * 30), f32)
    pc1 = np.zeros((2, 180, 90), f32)
    for ph in range(2):
        for b in range(Bq):
            pr1[ph, b * 15 + np.arange(15), b * 30 + 2 * np.arange(15) + ph] = 1.0
        for co in range(6):
            pc1[ph, co * 30 + 2 * np.arange(15) + ph, co * 15 + np.arange(15)] = 1.0

    # ---- conv2: c2 = sum_dy (RS2[dy] @ p1) @ W2R[dy] + b2row, then ReLU ------
    rs2 = np.zeros((5, Bq * 11, Bq * 15), f32)
    w2r = np.zeros((5, 90, 176), f32)
    for dy in range(5):
        for b in range(Bq):
            rs2[dy, b * 11 + np.arange(11), b * 15 + np.arange(11) + dy] = 1.0
        for co in range(16):
            for ci in range(6):
                for dx in range(5):
                    w2r[dy, ci * 15 + np.arange(11) + dx, co * 11 + np.arange(11)] = \
                        p["conv2_w"][co, ci, dy, dx]
    b2row = np.zeros((1, 176), f32)
    for co in range(16):
        b2row[0, co * 11:(co + 1) * 11] = p["conv2_b"][co]

    # ---- pool2 selectors (floor mode: 11 -> 5) -------------------------------
    pr2 = np.zeros((2, Bq * 5, Bq * 11), f32)
    pc2 = np.zeros((2, 176, 80), f32)
    for ph in range(2):
        for b in range(Bq):
            pr2[ph, b * 5 + np.arange(5), b * 11 + 2 * np.arange(5) + ph] = 1.0
        for co in range(16):
            pc2[ph, co * 11 + 2 * np.arange(5) + ph, co * 5 + np.arange(5)] = 1.0

    # ---- flatten (torch order f = co*25 + i*5 + j) + fc1, with BN folded -----
    rp = np.zeros((5, Bq, Bq * 5), f32)
    for i in range(5):
        for b in range(Bq):
            rp[i, b, b * 5 + i] = 1.0
    s_fc1 = p["fc1_bn"]["gamma"] / np.sqrt(p["fc1_bn"]["var"] + BN_EPS)
    wfc1 = np.zeros((5, 80, 128), f32)
    for i in range(5):
        for co in range(16):
            cols = co * 25 + i * 5 + np.arange(5)
            wfc1[i, co * 5:(co + 1) * 5, :] = (p["fc1_w"][:, cols] * s_fc1[:, None]).T
    bfc1 = (s_fc1 * (p["fc1_b"] - p["fc1_bn"]["mean"]) + p["fc1_bn"]["beta"])[None, :]

    # ---- GRU (frozen) ---------------------------------------------------------
    wih = p["gru_wih"].T                      # (1, 3H)
    whh = p["gru_whh"].T                      # (H, 3H)
    bih = p["gru_bih"][None, :]
    bhh = p["gru_bhh"][None, :]
    wg = p["gru_fc_w"].T                      # (128, 10)
    bg = p["gru_fc_b"][None, :]

    # ---- merge head: fold BN(256) into a/b, BN(84) into the 256->84 linear ----
    s1 = p["head_bn1"]["gamma"] / np.sqrt(p["head_bn1"]["var"] + BN_EPS)
    wa = p["a_w"].T * s1[None, :]             # (128, 256)
    wb = p["b_w"].T * s1[None, :]             # (128, 256)
    bm = (s1 * (p["a_b"] + p["b_b"] - p["head_bn1"]["mean"]) + p["head_bn1"]["beta"])[None, :]
    s2 = p["head_bn2"]["gamma"] / np.sqrt(p["head_bn2"]["var"] + BN_EPS)
    w2a = p["head_fc_w"].T * s2[None, :]      # (256, 84)
    b2a = (s2 * (p["head_fc_b"] - p["head_bn2"]["mean"]) + p["head_bn2"]["beta"])[None, :]
    w2b = p["head_out_w"].T                   # (84, 10)
    b2b = p["head_out_b"][None, :]

    arrs = [rs1, w1r, b1row, pr1, pc1,
            rs2, w2r, b2row, pr2, pc2,
            rp, wfc1, bfc1,
            wih, whh, bih, bhh, wg, bg,
            wa, wb, bm, w2a, b2a, w2b, b2b]
    return tuple(jnp.asarray(a) for a in arrs)


# ----------------------------------------------------------------------------
# Forward pass: one fused pallas_call
# ----------------------------------------------------------------------------
def watermarked_net_forward(packed, x):
    """x: (B, 1, 48, 28) NCHW float32 -> (y1 (B,10), y2 (B,10))."""
    batch = x.shape[0]
    # Only per-call XLA work: pad+pack the 28x28 image slab, slice the sequence.
    img = jnp.pad(x[:, 0, 0:28, :], ((0, 0), (2, 2), (2, 2)))     # (B, 32, 32)
    x0 = img.reshape(batch * 32, 32)
    seq = x[:, 0, 28:48, 0]                                       # (B, 20)

    n_in = 2 + len(packed)
    return pl.pallas_call(
        _watermarked_fused_kernel,
        out_shape=(jax.ShapeDtypeStruct((batch, 10), jnp.float32),
                   jax.ShapeDtypeStruct((batch, 10), jnp.float32)),
        in_specs=[VMEM_SPEC] * n_in,
        out_specs=(VMEM_SPEC, VMEM_SPEC),
    )(x0, seq, *packed)


# ----------------------------------------------------------------------------
# Pure-JAX reference (mirrors the PyTorch forward) for a numerical self-check
# ----------------------------------------------------------------------------
def _bn_eval(x, bn):
    return bn["gamma"] * (x - bn["mean"]) / jnp.sqrt(bn["var"] + BN_EPS) + bn["beta"]


def reference_forward(params, x):
    relu = jax.nn.relu
    dn = ("NCHW", "OIHW", "NCHW")
    img = x[:, :, 0:28, :]
    h = jax.lax.conv_general_dilated(img, params["conv1_w"], (1, 1),
                                     ((2, 2), (2, 2)), dimension_numbers=dn)
    h = relu(h + params["conv1_b"][None, :, None, None])
    h = jax.lax.reduce_window(h, -jnp.inf, jax.lax.max, (1, 1, 2, 2), (1, 1, 2, 2), "VALID")
    h = jax.lax.conv_general_dilated(h, params["conv2_w"], (1, 1), "VALID",
                                     dimension_numbers=dn)
    h = relu(h + params["conv2_b"][None, :, None, None])
    h = jax.lax.reduce_window(h, -jnp.inf, jax.lax.max, (1, 1, 2, 2), (1, 1, 2, 2), "VALID")
    flat = h.reshape(h.shape[0], -1)                              # (B, 400)
    x1 = relu(_bn_eval(flat @ params["fc1_w"].T + params["fc1_b"], params["fc1_bn"]))

    seq = x[:, 0, 28:48, 0]
    hh = H_GRU
    h_t = jnp.zeros((x.shape[0], hh), jnp.float32)
    for t in range(T_SEQ):
        xt = seq[:, t:t + 1]
        gi = xt @ params["gru_wih"].T + params["gru_bih"]
        gh = h_t @ params["gru_whh"].T + params["gru_bhh"]
        r = jax.nn.sigmoid(gi[:, :hh] + gh[:, :hh])
        z = jax.nn.sigmoid(gi[:, hh:2 * hh] + gh[:, hh:2 * hh])
        n = jnp.tanh(gi[:, 2 * hh:] + r * gh[:, 2 * hh:])
        h_t = (1.0 - z) * n + z * h_t
    x2 = h_t
    y2 = x2 @ params["gru_fc_w"].T + params["gru_fc_b"]

    y1 = x1 @ params["a_w"].T + params["a_b"] + x2 @ params["b_w"].T + params["b_b"]
    y1 = relu(_bn_eval(y1, params["head_bn1"]))
    y1 = y1 @ params["head_fc_w"].T + params["head_fc_b"]
    y1 = relu(_bn_eval(y1, params["head_bn2"]))
    y1 = y1 @ params["head_out_w"].T + params["head_out_b"]
    return y1, y2


# ----------------------------------------------------------------------------
if __name__ == "__main__":
    key = jax.random.PRNGKey(0)
    pkey, xkey = jax.random.split(key)
    params = init_params(pkey)
    x = jax.random.normal(xkey, (BATCH, 1, 48, 28), jnp.float32)

    packed = make_packed(params, BATCH)                   # host-side, once

    fwd = jax.jit(watermarked_net_forward)
    y1, y2 = fwd(packed, x)
    jax.block_until_ready((y1, y2))

    assert y1.shape == (BATCH, 10) and y1.dtype == jnp.float32
    assert y2.shape == (BATCH, 10) and y2.dtype == jnp.float32
    assert bool(jnp.all(jnp.isfinite(y1))) and bool(jnp.all(jnp.isfinite(y2)))

    # Numerical self-check against a pure-JAX reference of the PyTorch forward.
    r1, r2 = jax.jit(reference_forward)(params, x)
    d1 = float(jnp.max(jnp.abs(y1 - r1)))
    d2 = float(jnp.max(jnp.abs(y2 - r2)))
    assert bool(jnp.allclose(y1, r1, atol=5e-2, rtol=5e-2)), f"y1 mismatch, max|diff|={d1}"
    assert bool(jnp.allclose(y2, r2, atol=5e-2, rtol=5e-2)), f"y2 mismatch, max|diff|={d2}"

    print("KERNEL_OK")
</pallas_src>

<mosaic_0001>
module attributes {stable_mosaic.version = 11 : i64} {
  func.func @_watermarked_fused_kernel(%arg0: memref<64x32xf32, #tpu.memory_space<vmem>>, %arg1: memref<2x20xf32, #tpu.memory_space<vmem>>, %arg2: memref<3x60x64xf32, #tpu.memory_space<vmem>>, %arg3: memref<3x32x180xf32, #tpu.memory_space<vmem>>, %arg4: memref<1x180xf32, #tpu.memory_space<vmem>>, %arg5: memref<2x30x60xf32, #tpu.memory_space<vmem>>, %arg6: memref<2x180x90xf32, #tpu.memory_space<vmem>>, %arg7: memref<5x22x30xf32, #tpu.memory_space<vmem>>, %arg8: memref<5x90x176xf32, #tpu.memory_space<vmem>>, %arg9: memref<1x176xf32, #tpu.memory_space<vmem>>, %arg10: memref<2x10x22xf32, #tpu.memory_space<vmem>>, %arg11: memref<2x176x80xf32, #tpu.memory_space<vmem>>, %arg12: memref<5x2x10xf32, #tpu.memory_space<vmem>>, %arg13: memref<5x80x128xf32, #tpu.memory_space<vmem>>, %arg14: memref<1x128xf32, #tpu.memory_space<vmem>>, %arg15: memref<1x384xf32, #tpu.memory_space<vmem>>, %arg16: memref<128x384xf32, #tpu.memory_space<vmem>>, %arg17: memref<1x384xf32, #tpu.memory_space<vmem>>, %arg18: memref<1x384xf32, #tpu.memory_space<vmem>>, %arg19: memref<128x10xf32, #tpu.memory_space<vmem>>, %arg20: memref<1x10xf32, #tpu.memory_space<vmem>>, %arg21: memref<128x256xf32, #tpu.memory_space<vmem>>, %arg22: memref<128x256xf32, #tpu.memory_space<vmem>>, %arg23: memref<1x256xf32, #tpu.memory_space<vmem>>, %arg24: memref<256x84xf32, #tpu.memory_space<vmem>>, %arg25: memref<1x84xf32, #tpu.memory_space<vmem>>, %arg26: memref<84x10xf32, #tpu.memory_space<vmem>>, %arg27: memref<1x10xf32, #tpu.memory_space<vmem>>, %arg28: memref<2x10xf32, #tpu.memory_space<vmem>>, %arg29: memref<2x10xf32, #tpu.memory_space<vmem>>) attributes {dimension_semantics = [], scalar_prefetch = 0 : i64, scratch_operands = 0 : i64, tpu.core_type = #tpu.core_type<tc>} {
    %c0 = arith.constant 0 : index
    %c0_0 = arith.constant 0 : index
    %0 = vector.load %arg0[%c0, %c0_0] : memref<64x32xf32, #tpu.memory_space<vmem>>, vector<64x32xf32>
    %c0_1 = arith.constant 0 : index
    %c0_2 = arith.constant 0 : index
    %c0_3 = arith.constant 0 : index
    %1 = vector.load %arg2[%c0_1, %c0_2, %c0_3] : memref<3x60x64xf32, #tpu.memory_space<vmem>>, vector<1x60x64xf32>
    %2 = vector.shape_cast %1 : vector<1x60x64xf32> to vector<60x64xf32>
    %cst = arith.constant dense<0.000000e+00> : vector<60x32xf32>
    %3 = tpu.matmul %2, %0, %cst {dimension_numbers = #tpu.dot_dimension_numbers<[1], [0], [0], [1], [0, 0, 1, 1], [], []>} : vector<60x64xf32>, vector<64x32xf32>, vector<60x32xf32> -> vector<60x32xf32>
    %c0_4 = arith.constant 0 : index
    %c0_5 = arith.constant 0 : index
    %c0_6 = arith.constant 0 : index
    %4 = vector.load %arg3[%c0_4, %c0_5, %c0_6] : memref<3x32x180xf32, #tpu.memory_space<vmem>>, vector<1x32x180xf32>
    %5 = vector.shape_cast %4 : vector<1x32x180xf32> to vector<32x180xf32>
    %cst_7 = arith.constant dense<0.000000e+00> : vector<60x180xf32>
    %6 = tpu.matmul %3, %5, %cst_7 {dimension_numbers = #tpu.dot_dimension_numbers<[1], [0], [0], [1], [0, 0, 1, 1], [], []>} : vector<60x32xf32>, vector<32x180xf32>, vector<60x180xf32> -> vector<60x180xf32>
    %c1 = arith.constant 1 : index
    %c0_8 = arith.constant 0 : index
    %c0_9 = arith.constant 0 : index
    %7 = vector.load %arg2[%c1, %c0_8, %c0_9] : memref<3x60x64xf32, #tpu.memory_space<vmem>>, vector<1x60x64xf32>
    %8 = vector.shape_cast %7 : vector<1x60x64xf32> to vector<60x64xf32>
    %cst_10 = arith.constant dense<0.000000e+00> : vector<60x32xf32>
    %9 = tpu.matmul %8, %0, %cst_10 {dimension_numbers = #tpu.dot_dimension_numbers<[1], [0], [0], [1], [0, 0, 1, 1], [], []>} : vector<60x64xf32>, vector<64x32xf32>, vector<60x32xf32> -> vector<60x32xf32>
    %c1_11 = arith.constant 1 : index
    %c0_12 = arith.constant 0 : index
    %c0_13 = arith.constant 0 : index
    %10 = vector.load %arg3[%c1_11, %c0_12, %c0_13] : memref<3x32x180xf32, #tpu.memory_space<vmem>>, vector<1x32x180xf32>
    %11 = vector.shape_cast %10 : vector<1x32x180xf32> to vector<32x180xf32>
    %cst_14 = arith.constant dense<0.000000e+00> : vector<60x180xf32>
    %12 = tpu.matmul %9, %11, %cst_14 {dimension_numbers = #tpu.dot_dimension_numbers<[1], [0], [0], [1], [0, 0, 1, 1], [], []>} : vector<60x32xf32>, vector<32x180xf32>, vector<60x180xf32> -> vector<60x180xf32>
    %13 = arith.addf %6, %12 : vector<60x180xf32>
    %c2 = arith.constant 2 : index
    %c0_15 = arith.constant 0 : index
    %c0_16 = arith.constant 0 : index
    %14 = vector.load %arg2[%c2, %c0_15, %c0_16] : memref<3x60x64xf32, #tpu.memory_space<vmem>>, vector<1x60x64xf32>
    %15 = vector.shape_cast %14 : vector<1x60x64xf32> to vector<60x64xf32>
    %cst_17 = arith.constant dense<0.000000e+00> : vector<60x32xf32>
    %16 = tpu.matmul %15, %0, %cst_17 {dimension_numbers = #tpu.dot_dimension_numbers<[1], [0], [0], [1], [0, 0, 1, 1], [], []>} : vector<60x64xf32>, vector<64x32xf32>, vector<60x32xf32> -> vector<60x32xf32>
    %c2_18 = arith.constant 2 : index
    %c0_19 = arith.constant 0 : index
    %c0_20 = arith.constant 0 : index
    %17 = vector.load %arg3[%c2_18, %c0_19, %c0_20] : memref<3x32x180xf32, #tpu.memory_space<vmem>>, vector<1x32x180xf32>
    %18 = vector.shape_cast %17 : vector<1x32x180xf32> to vector<32x180xf32>
    %cst_21 = arith.constant dense<0.000000e+00> : vector<60x180xf32>
    %19 = tpu.matmul %16, %18, %cst_21 {dimension_numbers = #tpu.dot_dimension_numbers<[1], [0], [0], [1], [0, 0, 1, 1], [], []>} : vector<60x32xf32>, vector<32x180xf32>, vector<60x180xf32> -> vector<60x180xf32>
    %20 = arith.addf %13, %19 : vector<60x180xf32>
    %c0_22 = arith.constant 0 : index
    %c0_23 = arith.constant 0 : index
    %21 = vector.load %arg4[%c0_22, %c0_23] : memref<1x180xf32, #tpu.memory_space<vmem>>, vector<1x180xf32>
    %22 = vector.broadcast %21 : vector<1x180xf32> to vector<60x180xf32>
    %23 = arith.addf %20, %22 : vector<60x180xf32>
    %cst_24 = arith.constant 0.000000e+00 : f32
    %24 = vector.broadcast %cst_24 : f32 to vector<60x180xf32>
    %25 = arith.maximumf %23, %24 : vector<60x180xf32>
    %c0_25 = arith.constant 0 : index
    %c0_26 = arith.constant 0 : index
    %c0_27 = arith.constant 0 : index
    %26 = vector.load %arg5[%c0_25, %c0_26, %c0_27] : memref<2x30x60xf32, #tpu.memory_space<vmem>>, vector<1x30x60xf32>
    %27 = vector.shape_cast %26 : vector<1x30x60xf32> to vector<30x60xf32>
    %cst_28 = arith.constant dense<0.000000e+00> : vector<30x180xf32>
    %28 = tpu.matmul %27, %25, %cst_28 {dimension_numbers = #tpu.dot_dimension_numbers<[1], [0], [0], [1], [0, 0, 1, 1], [], []>} : vector<30x60xf32>, vector<60x180xf32>, vector<30x180xf32> -> vector<30x180xf32>
    %c1_29 = arith.constant 1 : index
    %c0_30 = arith.constant 0 : index
    %c0_31 = arith.constant 0 : index
    %29 = vector.load %arg5[%c1_29, %c0_30, %c0_31] : memref<2x30x60xf32, #tpu.memory_space<vmem>>, vector<1x30x60xf32>
    %30 = vector.shape_cast %29 : vector<1x30x60xf32> to vector<30x60xf32>
    %cst_32 = arith.constant dense<0.000000e+00> : vector<30x180xf32>
    %31 = tpu.matmul %30, %25, %cst_32 {dimension_numbers = #tpu.dot_dimension_numbers<[1], [0], [0], [1], [0, 0, 1, 1], [], []>} : vector<30x60xf32>, vector<60x180xf32>, vector<30x180xf32> -> vector<30x180xf32>
    %c0_33 = arith.constant 0 : index
    %c0_34 = arith.constant 0 : index
    %c0_35 = arith.constant 0 : index
    %32 = vector.load %arg6[%c0_33, %c0_34, %c0_35] : memref<2x180x90xf32, #tpu.memory_space<vmem>>, vector<1x180x90xf32>
    %33 = vector.shape_cast %32 : vector<1x180x90xf32> to vector<180x90xf32>
    %cst_36 = arith.constant dense<0.000000e+00> : vector<30x90xf32>
    %34 = tpu.matmul %28, %33, %cst_36 {dimension_numbers = #tpu.dot_dimension_numbers<[1], [0], [0], [1], [0, 0, 1, 1], [], []>} : vector<30x180xf32>, vector<180x90xf32>, vector<30x90xf32> -> vector<30x90xf32>
    %c1_37 = arith.constant 1 : index
    %c0_38 = arith.constant 0 : index
    %c0_39 = arith.constant 0 : index
    %35 = vector.load %arg6[%c1_37, %c0_38, %c0_39] : memref<2x180x90xf32, #tpu.memory_space<vmem>>, vector<1x180x90xf32>
    %36 = vector.shape_cast %35 : vector<1x180x90xf32> to vector<180x90xf32>
    %cst_40 = arith.constant dense<0.000000e+00> : vector<30x90xf32>
    %37 = tpu.matmul %28, %36, %cst_40 {dimension_numbers = #tpu.dot_dimension_numbers<[1], [0], [0], [1], [0, 0, 1, 1], [], []>} : vector<30x180xf32>, vector<180x90xf32>, vector<30x90xf32> -> vector<30x90xf32>
    %38 = arith.maximumf %34, %37 : vector<30x90xf32>
    %c0_41 = arith.constant 0 : index
    %c0_42 = arith.constant 0 : index
    %c0_43 = arith.constant 0 : index
    %39 = vector.load %arg6[%c0_41, %c0_42, %c0_43] : memref<2x180x90xf32, #tpu.memory_space<vmem>>, vector<1x180x90xf32>
    %40 = vector.shape_cast %39 : vector<1x180x90xf32> to vector<180x90xf32>
    %cst_44 = arith.constant dense<0.000000e+00> : vector<30x90xf32>
    %41 = tpu.matmul %31, %40, %cst_44 {dimension_numbers = #tpu.dot_dimension_numbers<[1], [0], [0], [1], [0, 0, 1, 1], [], []>} : vector<30x180xf32>, vector<180x90xf32>, vector<30x90xf32> -> vector<30x90xf32>
    %c1_45 = arith.constant 1 : index
    %c0_46 = arith.constant 0 : index
    %c0_47 = arith.constant 0 : index
    %42 = vector.load %arg6[%c1_45, %c0_46, %c0_47] : memref<2x180x90xf32, #tpu.memory_space<vmem>>, vector<1x180x90xf32>
    %43 = vector.shape_cast %42 : vector<1x180x90xf32> to vector<180x90xf32>
    %cst_48 = arith.constant dense<0.000000e+00> : vector<30x90xf32>
    %44 = tpu.matmul %31, %43, %cst_48 {dimension_numbers = #tpu.dot_dimension_numbers<[1], [0], [0], [1], [0, 0, 1, 1], [], []>} : vector<30x180xf32>, vector<180x90xf32>, vector<30x90xf32> -> vector<30x90xf32>
    %45 = arith.maximumf %41, %44 : vector<30x90xf32>
    %46 = arith.maximumf %38, %45 : vector<30x90xf32>
    %c0_49 = arith.constant 0 : index
    %c0_50 = arith.constant 0 : index
    %c0_51 = arith.constant 0 : index
    %47 = vector.load %arg7[%c0_49, %c0_50, %c0_51] : memref<5x22x30xf32, #tpu.memory_space<vmem>>, vector<1x22x30xf32>
    %48 = vector.shape_cast %47 : vector<1x22x30xf32> to vector<22x30xf32>
    %cst_52 = arith.constant dense<0.000000e+00> : vector<22x90xf32>
    %49 = tpu.matmul %48, %46, %cst_52 {dimension_numbers = #tpu.dot_dimension_numbers<[1], [0], [0], [1], [0, 0, 1, 1], [], []>} : vector<22x30xf32>, vector<30x90xf32>, vector<22x90xf32> -> vector<22x90xf32>
    %c0_53 = arith.constant 0 : index
    %c0_54 = arith.constant 0 : index
    %c0_55 = arith.constant 0 : index
    %50 = vector.load %arg8[%c0_53, %c0_54, %c0_55] : memref<5x90x176xf32, #tpu.memory_space<vmem>>, vector<1x90x176xf32>
    %51 = vector.shape_cast %50 : vector<1x90x176xf32> to vector<90x176xf32>
    %cst_56 = arith.constant dense<0.000000e+00> : vector<22x176xf32>
    %52 = tpu.matmul %49, %51, %cst_56 {dimension_numbers = #tpu.dot_dimension_numbers<[1], [0], [0], [1], [0, 0, 1, 1], [], []>} : vector<22x90xf32>, vector<90x176xf32>, vector<22x176xf32> -> vector<22x176xf32>
    %c1_57 = arith.constant 1 : index
    %c0_58 = arith.constant 0 : index
    %c0_59 = arith.constant 0 : index
    %53 = vector.load %arg7[%c1_57, %c0_58, %c0_59] : memref<5x22x30xf32, #tpu.memory_space<vmem>>, vector<1x22x30xf32>
    %54 = vector.shape_cast %53 : vector<1x22x30xf32> to vector<22x30xf32>
    %cst_60 = arith.constant dense<0.000000e+00> : vector<22x90xf32>
    %55 = tpu.matmul %54, %46, %cst_60 {dimension_numbers = #tpu.dot_dimension_numbers<[1], [0], [0], [1], [0, 0, 1, 1], [], []>} : vector<22x30xf32>, vector<30x90xf32>, vector<22x90xf32> -> vector<22x90xf32>
    %c1_61 = arith.constant 1 : index
    %c0_62 = arith.constant 0 : index
    %c0_63 = arith.constant 0 : index
    %56 = vector.load %arg8[%c1_61, %c0_62, %c0_63] : memref<5x90x176xf32, #tpu.memory_space<vmem>>, vector<1x90x176xf32>
    %57 = vector.shape_cast %56 : vector<1x90x176xf32> to vector<90x176xf32>
    %cst_64 = arith.constant dense<0.000000e+00> : vector<22x176xf32>
    %58 = tpu.matmul %55, %57, %cst_64 {dimension_numbers = #tpu.dot_dimension_numbers<[1], [0], [0], [1], [0, 0, 1, 1], [], []>} : vector<22x90xf32>, vector<90x176xf32>, vector<22x176xf32> -> vector<22x176xf32>
    %59 = arith.addf %52, %58 : vector<22x176xf32>
    %c2_65 = arith.constant 2 : index
    %c0_66 = arith.constant 0 : index
    %c0_67 = arith.constant 0 : index
    %60 = vector.load %arg7[%c2_65, %c0_66, %c0_67] : memref<5x22x30xf32, #tpu.memory_space<vmem>>, vector<1x22x30xf32>
    %61 = vector.shape_cast %60 : vector<1x22x30xf32> to vector<22x30xf32>
    %cst_68 = arith.constant dense<0.000000e+00> : vector<22x90xf32>
    %62 = tpu.matmul %61, %46, %cst_68 {dimension_numbers = #tpu.dot_dimension_numbers<[1], [0], [0], [1], [0, 0, 1, 1], [], []>} : vector<22x30xf32>, vector<30x90xf32>, vector<22x90xf32> -> vector<22x90xf32>
    %c2_69 = arith.constant 2 : index
    %c0_70 = arith.constant 0 : index
    %c0_71 = arith.constant 0 : index
    %63 = vector.load %arg8[%c2_69, %c0_70, %c0_71] : memref<5x90x176xf32, #tpu.memory_space<vmem>>, vector<1x90x176xf32>
    %64 = vector.shape_cast %63 : vector<1x90x176xf32> to vector<90x176xf32>
    %cst_72 = arith.constant dense<0.000000e+00> : vector<22x176xf32>
    %65 = tpu.matmul %62, %64, %cst_72 {dimension_numbers = #tpu.dot_dimension_numbers<[1], [0], [0], [1], [0, 0, 1, 1], [], []>} : vector<22x90xf32>, vector<90x176xf32>, vector<22x176xf32> -> vector<22x176xf32>
    %66 = arith.addf %59, %65 : vector<22x176xf32>
    %c3 = arith.constant 3 : index
    %c0_73 = arith.constant 0 : index
    %c0_74 = arith.constant 0 : index
    %67 = vector.load %arg7[%c3, %c0_73, %c0_74] : memref<5x22x30xf32, #tpu.memory_space<vmem>>, vector<1x22x30xf32>
    %68 = vector.shape_cast %67 : vector<1x22x30xf32> to vector<22x30xf32>
    %cst_75 = arith.constant dense<0.000000e+00> : vector<22x90xf32>
    %69 = tpu.matmul %68, %46, %cst_75 {dimension_numbers = #tpu.dot_dimension_numbers<[1], [0], [0], [1], [0, 0, 1, 1], [], []>} : vector<22x30xf32>, vector<30x90xf32>, vector<22x90xf32> -> vector<22x90xf32>
    %c3_76 = arith.constant 3 : index
    %c0_77 = arith.constant 0 : index
    %c0_78 = arith.constant 0 : index
    %70 = vector.load %arg8[%c3_76, %c0_77, %c0_78] : memref<5x90x176xf32, #tpu.memory_space<vmem>>, vector<1x90x176xf32>
    %71 = vector.shape_cast %70 : vector<1x90x176xf32> to vector<90x176xf32>
    %cst_79 = arith.constant dense<0.000000e+00> : vector<22x176xf32>
    %72 = tpu.matmul %69, %71, %cst_79 {dimension_numbers = #tpu.dot_dimension_numbers<[1], [0], [0], [1], [0, 0, 1, 1], [], []>} : vector<22x90xf32>, vector<90x176xf32>, vector<22x176xf32> -> vector<22x176xf32>
    %73 = arith.addf %66, %72 : vector<22x176xf32>
    %c4 = arith.constant 4 : index
    %c0_80 = arith.constant 0 : index
    %c0_81 = arith.constant 0 : index
    %74 = vector.load %arg7[%c4, %c0_80, %c0_81] : memref<5x22x30xf32, #tpu.memory_space<vmem>>, vector<1x22x30xf32>
    %75 = vector.shape_cast %74 : vector<1x22x30xf32> to vector<22x30xf32>
    %cst_82 = arith.constant dense<0.000000e+00> : vector<22x90xf32>
    %76 = tpu.matmul %75, %46, %cst_82 {dimension_numbers = #tpu.dot_dimension_numbers<[1], [0], [0], [1], [0, 0, 1, 1], [], []>} : vector<22x30xf32>, vector<30x90xf32>, vector<22x90xf32> -> vector<22x90xf32>
    %c4_83 = arith.constant 4 : index
    %c0_84 = arith.constant 0 : index
    %c0_85 = arith.constant 0 : index
    %77 = vector.load %arg8[%c4_83, %c0_84, %c0_85] : memref<5x90x176xf32, #tpu.memory_space<vmem>>, vector<1x90x176xf32>
    %78 = vector.shape_cast %77 : vector<1x90x176xf32> to vector<90x176xf32>
    %cst_86 = arith.constant dense<0.000000e+00> : vector<22x176xf32>
    %79 = tpu.matmul %76, %78, %cst_86 {dimension_numbers = #tpu.dot_dimension_numbers<[1], [0], [0], [1], [0, 0, 1, 1], [], []>} : vector<22x90xf32>, vector<90x176xf32>, vector<22x176xf32> -> vector<22x176xf32>
    %80 = arith.addf %73, %79 : vector<22x176xf32>
    %c0_87 = arith.constant 0 : index
    %c0_88 = arith.constant 0 : index
    %81 = vector.load %arg9[%c0_87, %c0_88] : memref<1x176xf32, #tpu.memory_space<vmem>>, vector<1x176xf32>
    %82 = vector.broadcast %81 : vector<1x176xf32> to vector<22x176xf32>
    %83 = arith.addf %80, %82 : vector<22x176xf32>
    %cst_89 = arith.constant 0.000000e+00 : f32
    %84 = vector.broadcast %cst_89 : f32 to vector<22x176xf32>
    %85 = arith.maximumf %83, %84 : vector<22x176xf32>
    %c0_90 = arith.constant 0 : index
    %c0_91 = arith.constant 0 : index
    %c0_92 = arith.constant 0 : index
    %86 = vector.load %arg10[%c0_90, %c0_91, %c0_92] : memref<2x10x22xf32, #tpu.memory_space<vmem>>, vector<1x10x22xf32>
    %87 = vector.shape_cast %86 : vector<1x10x22xf32> to vector<10x22xf32>
    %cst_93 = arith.constant dense<0.000000e+00> : vector<10x176xf32>
    %88 = tpu.matmul %87, %85, %cst_93 {dimension_numbers = #tpu.dot_dimension_numbers<[1], [0], [0], [1], [0, 0, 1, 1], [], []>} : vector<10x22xf32>, vector<22x176xf32>, vector<10x176xf32> -> vector<10x176xf32>
    %c1_94 = arith.constant 1 : index
    %c0_95 = arith.constant 0 : index
    %c0_96 = arith.constant 0 : index
    %89 = vector.load %arg10[%c1_94, %c0_95, %c0_96] : memref<2x10x22xf32, #tpu.memory_space<vmem>>, vector<1x10x22xf32>
    %90 = vector.shape_cast %89 : vector<1x10x22xf32> to vector<10x22xf32>
    %cst_97 = arith.constant dense<0.000000e+00> : vector<10x176xf32>
    %91 = tpu.matmul %90, %85, %cst_97 {dimension_numbers = #tpu.dot_dimension_numbers<[1], [0], [0], [1], [0, 0, 1, 1], [], []>} : vector<10x22xf32>, vector<22x176xf32>, vector<10x176xf32> -> vector<10x176xf32>
    %c0_98 = arith.constant 0 : index
    %c0_99 = arith.constant 0 : index
    %c0_100 = arith.constant 0 : index
    %92 = vector.load %arg11[%c0_98, %c0_99, %c0_100] : memref<2x176x80xf32, #tpu.memory_space<vmem>>, vector<1x176x80xf32>
    %93 = vector.shape_cast %92 : vector<1x176x80xf32> to vector<176x80xf32>
    %cst_101 = arith.constant dense<0.000000e+00> : vector<10x80xf32>
    %94 = tpu.matmul %88, %93, %cst_101 {dimension_numbers = #tpu.dot_dimension_numbers<[1], [0], [0], [1], [0, 0, 1, 1], [], []>} : vector<10x176xf32>, vector<176x80xf32>, vector<10x80xf32> -> vector<10x80xf32>
    %c1_102 = arith.constant 1 : index
    %c0_103 = arith.constant 0 : index
    %c0_104 = arith.constant 0 : index
    %95 = vector.load %arg11[%c1_102, %c0_103, %c0_104] : memref<2x176x80xf32, #tpu.memory_space<vmem>>, vector<1x176x80xf32>
    %96 = vector.shape_cast %95 : vector<1x176x80xf32> to vector<176x80xf32>
    %cst_105 = arith.constant dense<0.000000e+00> : vector<10x80xf32>
    %97 = tpu.matmul %88, %96, %cst_105 {dimension_numbers = #tpu.dot_dimension_numbers<[1], [0], [0], [1], [0, 0, 1, 1], [], []>} : vector<10x176xf32>, vector<176x80xf32>, vector<10x80xf32> -> vector<10x80xf32>
    %98 = arith.maximumf %94, %97 : vector<10x80xf32>
    %c0_106 = arith.constant 0 : index
    %c0_107 = arith.constant 0 : index
    %c0_108 = arith.constant 0 : index
    %99 = vector.load %arg11[%c0_106, %c0_107, %c0_108] : memref<2x176x80xf32, #tpu.memory_space<vmem>>, vector<1x176x80xf32>
    %100 = vector.shape_cast %99 : vector<1x176x80xf32> to vector<176x80xf32>
    %cst_109 = arith.constant dense<0.000000e+00> : vector<10x80xf32>
    %101 = tpu.matmul %91, %100, %cst_109 {dimension_numbers = #tpu.dot_dimension_numbers<[1], [0], [0], [1], [0, 0, 1, 1], [], []>} : vector<10x176xf32>, vector<176x80xf32>, vector<10x80xf32> -> vector<10x80xf32>
    %c1_110 = arith.constant 1 : index
    %c0_111 = arith.constant 0 : index
    %c0_112 = arith.constant 0 : index
    %102 = vector.load %arg11[%c1_110, %c0_111, %c0_112] : memref<2x176x80xf32, #tpu.memory_space<vmem>>, vector<1x176x80xf32>
    %103 = vector.shape_cast %102 : vector<1x176x80xf32> to vector<176x80xf32>
    %cst_113 = arith.constant dense<0.000000e+00> : vector<10x80xf32>
    %104 = tpu.matmul %91, %103, %cst_113 {dimension_numbers = #tpu.dot_dimension_numbers<[1], [0], [0], [1], [0, 0, 1, 1], [], []>} : vector<10x176xf32>, vector<176x80xf32>, vector<10x80xf32> -> vector<10x80xf32>
    %105 = arith.maximumf %101, %104 : vector<10x80xf32>
    %106 = arith.maximumf %98, %105 : vector<10x80xf32>
    %c0_114 = arith.constant 0 : index
    %c0_115 = arith.constant 0 : index
    %c0_116 = arith.constant 0 : index
    %107 = vector.load %arg12[%c0_114, %c0_115, %c0_116] : memref<5x2x10xf32, #tpu.memory_space<vmem>>, vector<1x2x10xf32>
    %108 = vector.shape_cast %107 : vector<1x2x10xf32> to vector<2x10xf32>
    %cst_117 = arith.constant dense<0.000000e+00> : vector<2x80xf32>
    %109 = tpu.matmul %108, %106, %cst_117 {dimension_numbers = #tpu.dot_dimension_numbers<[1], [0], [0], [1], [0, 0, 1, 1], [], []>} : vector<2x10xf32>, vector<10x80xf32>, vector<2x80xf32> -> vector<2x80xf32>
    %c0_118 = arith.constant 0 : index
    %c0_119 = arith.constant 0 : index
    %c0_120 = arith.constant 0 : index
    %110 = vector.load %arg13[%c0_118, %c0_119, %c0_120] : memref<5x80x128xf32, #tpu.memory_space<vmem>>, vector<1x80x128xf32>
    %111 = vector.shape_cast %110 : vector<1x80x128xf32> to vector<80x128xf32>
    %cst_121 = arith.constant dense<0.000000e+00> : vector<2x128xf32>
    %112 = tpu.matmul %109, %111, %cst_121 {dimension_numbers = #tpu.dot_dimension_numbers<[1], [0], [0], [1], [0, 0, 1, 1], [], []>} : vector<2x80xf32>, vector<80x128xf32>, vector<2x128xf32> -> vector<2x128xf32>
    %c1_122 = arith.constant 1 : index
    %c0_123 = arith.constant 0 : index
    %c0_124 = arith.constant 0 : index
    %113 = vector.load %arg12[%c1_122, %c0_123, %c0_124] : memref<5x2x10xf32, #tpu.memory_space<vmem>>, vector<1x2x10xf32>
    %114 = vector.shape_cast %113 : vector<1x2x10xf32> to vector<2x10xf32>
    %cst_125 = arith.constant dense<0.000000e+00> : vector<2x80xf32>
    %115 = tpu.matmul %114, %106, %cst_125 {dimension_numbers = #tpu.dot_dimension_numbers<[1], [0], [0], [1], [0, 0, 1, 1], [], []>} : vector<2x10xf32>, vector<10x80xf32>, vector<2x80xf32> -> vector<2x80xf32>
    %c1_126 = arith.constant 1 : index
    %c0_127 = arith.constant 0 : index
    %c0_128 = arith.constant 0 : index
    %116 = vector.load %arg13[%c1_126, %c0_127, %c0_128] : memref<5x80x128xf32, #tpu.memory_space<vmem>>, vector<1x80x128xf32>
    %117 = vector.shape_cast %116 : vector<1x80x128xf32> to vector<80x128xf32>
    %cst_129 = arith.constant dense<0.000000e+00> : vector<2x128xf32>
    %118 = tpu.matmul %115, %117, %cst_129 {dimension_numbers = #tpu.dot_dimension_numbers<[1], [0], [0], [1], [0, 0, 1, 1], [], []>} : vector<2x80xf32>, vector<80x128xf32>, vector<2x128xf32> -> vector<2x128xf32>
    %119 = arith.addf %112, %118 : vector<2x128xf32>
    %c2_130 = arith.constant 2 : index
    %c0_131 = arith.constant 0 : index
    %c0_132 = arith.constant 0 : index
    %120 = vector.load %arg12[%c2_130, %c0_131, %c0_132] : memref<5x2x10xf32, #tpu.memory_space<vmem>>, vector<1x2x10xf32>
    %121 = vector.shape_cast %120 : vector<1x2x10xf32> to vector<2x10xf32>
    %cst_133 = arith.constant dense<0.000000e+00> : vector<2x80xf32>
    %122 = tpu.matmul %121, %106, %cst_133 {dimension_numbers = #tpu.dot_dimension_numbers<[1], [0], [0], [1], [0, 0, 1, 1], [], []>} : vector<2x10xf32>, vector<10x80xf32>, vector<2x80xf32> -> vector<2x80xf32>
    %c2_134 = arith.constant 2 : index
    %c0_135 = arith.constant 0 : index
    %c0_136 = arith.constant 0 : index
    %123 = vector.load %arg13[%c2_134, %c0_135, %c0_136] : memref<5x80x128xf32, #tpu.memory_space<vmem>>, vector<1x80x128xf32>
    %124 = vector.shape_cast %123 : vector<1x80x128xf32> to vector<80x128xf32>
    %cst_137 = arith.constant dense<0.000000e+00> : vector<2x128xf32>
    %125 = tpu.matmul %122, %124, %cst_137 {dimension_numbers = #tpu.dot_dimension_numbers<[1], [0], [0], [1], [0, 0, 1, 1], [], []>} : vector<2x80xf32>, vector<80x128xf32>, vector<2x128xf32> -> vector<2x128xf32>
    %126 = arith.addf %119, %125 : vector<2x128xf32>
    %c3_138 = arith.constant 3 : index
    %c0_139 = arith.constant 0 : index
    %c0_140 = arith.constant 0 : index
    %127 = vector.load %arg12[%c3_138, %c0_139, %c0_140] : memref<5x2x10xf32, #tpu.memory_space<vmem>>, vector<1x2x10xf32>
    %128 = vector.shape_cast %127 : vector<1x2x10xf32> to vector<2x10xf32>
    %cst_141 = arith.constant dense<0.000000e+00> : vector<2x80xf32>
    %129 = tpu.matmul %128, %106, %cst_141 {dimension_numbers = #tpu.dot_dimension_numbers<[1], [0], [0], [1], [0, 0, 1, 1], [], []>} : vector<2x10xf32>, vector<10x80xf32>, vector<2x80xf32> -> vector<2x80xf32>
    %c3_142 = arith.constant 3 : index
    %c0_143 = arith.constant 0 : index
    %c0_144 = arith.constant 0 : index
    %130 = vector.load %arg13[%c3_142, %c0_143, %c0_144] : memref<5x80x128xf32, #tpu.memory_space<vmem>>, vector<1x80x128xf32>
    %131 = vector.shape_cast %130 : vector<1x80x128xf32> to vector<80x128xf32>
    %cst_145 = arith.constant dense<0.000000e+00> : vector<2x128xf32>
    %132 = tpu.matmul %129, %131, %cst_145 {dimension_numbers = #tpu.dot_dimension_numbers<[1], [0], [0], [1], [0, 0, 1, 1], [], []>} : vector<2x80xf32>, vector<80x128xf32>, vector<2x128xf32> -> vector<2x128xf32>
    %133 = arith.addf %126, %132 : vector<2x128xf32>
    %c4_146 = arith.constant 4 : index
    %c0_147 = arith.constant 0 : index
    %c0_148 = arith.constant 0 : index
    %134 = vector.load %arg12[%c4_146, %c0_147, %c0_148] : memref<5x2x10xf32, #tpu.memory_space<vmem>>, vector<1x2x10xf32>
    %135 = vector.shape_cast %134 : vector<1x2x10xf32> to vector<2x10xf32>
    %cst_149 = arith.constant dense<0.000000e+00> : vector<2x80xf32>
    %136 = tpu.matmul %135, %106, %cst_149 {dimension_numbers = #tpu.dot_dimension_numbers<[1], [0], [0], [1], [0, 0, 1, 1], [], []>} : vector<2x10xf32>, vector<10x80xf32>, vector<2x80xf32> -> vector<2x80xf32>
    %c4_150 = arith.constant 4 : index
    %c0_151 = arith.constant 0 : index
    %c0_152 = arith.constant 0 : index
    %137 = vector.load %arg13[%c4_150, %c0_151, %c0_152] : memref<5x80x128xf32, #tpu.memory_space<vmem>>, vector<1x80x128xf32>
    %138 = vector.shape_cast %137 : vector<1x80x128xf32> to vector<80x128xf32>
    %cst_153 = arith.constant dense<0.000000e+00> : vector<2x128xf32>
    %139 = tpu.matmul %136, %138, %cst_153 {dimension_numbers = #tpu.dot_dimension_numbers<[1], [0], [0], [1], [0, 0, 1, 1], [], []>} : vector<2x80xf32>, vector<80x128xf32>, vector<2x128xf32> -> vector<2x128xf32>
    %140 = arith.addf %133, %139 : vector<2x128xf32>
    %c0_154 = arith.constant 0 : index
    %c0_155 = arith.constant 0 : index
    %141 = vector.load %arg14[%c0_154, %c0_155] : memref<1x128xf32, #tpu.memory_space<vmem>>, vector<1x128xf32>
    %142 = vector.broadcast %141 : vector<1x128xf32> to vector<2x128xf32>
    %143 = arith.addf %140, %142 : vector<2x128xf32>
    %cst_156 = arith.constant 0.000000e+00 : f32
    %144 = vector.broadcast %cst_156 : f32 to vector<2x128xf32>
    %145 = arith.maximumf %143, %144 : vector<2x128xf32>
    %c0_157 = arith.constant 0 : index
    %c0_158 = arith.constant 0 : index
    %146 = vector.load %arg1[%c0_157, %c0_158] : memref<2x20xf32, #tpu.memory_space<vmem>>, vector<2x20xf32>
    %c0_159 = arith.constant 0 : index
    %c0_160 = arith.constant 0 : index
    %147 = vector.load %arg15[%c0_159, %c0_160] : memref<1x384xf32, #tpu.memory_space<vmem>>, vector<1x384xf32>
    %c0_161 = arith.constant 0 : index
    %c0_162 = arith.constant 0 : index
    %148 = vector.load %arg16[%c0_161, %c0_162] : memref<128x384xf32, #tpu.memory_space<vmem>>, vector<128x384xf32>
    %c0_163 = arith.constant 0 : index
    %c0_164 = arith.constant 0 : index
    %149 = vector.load %arg17[%c0_163, %c0_164] : memref<1x384xf32, #tpu.memory_space<vmem>>, vector<1x384xf32>
    %c0_165 = arith.constant 0 : index
    %c0_166 = arith.constant 0 : index
    %150 = vector.load %arg18[%c0_165, %c0_166] : memref<1x384xf32, #tpu.memory_space<vmem>>, vector<1x384xf32>
    %cst_167 = arith.constant 0.000000e+00 : f32
    %151 = vector.broadcast %cst_167 : f32 to vector<2x128xf32>
    %152 = vector.extract_strided_slice %146 {offsets = [0, 0], sizes = [2, 1], strides = [1, 1]} : vector<2x20xf32> to vector<2x1xf32>
    %153 = vector.broadcast %152 : vector<2x1xf32> to vector<2x384xf32>
    %154 = vector.broadcast %147 : vector<1x384xf32> to vector<2x384xf32>
    %155 = arith.mulf %153, %154 : vector<2x384xf32>
    %156 = vector.broadcast %149 : vector<1x384xf32> to vector<2x384xf32>
    %157 = arith.addf %155, %156 : vector<2x384xf32>
    %cst_168 = arith.constant dense<0.000000e+00> : vector<2x384xf32>
    %158 = tpu.matmul %151, %148, %cst_168 {dimension_numbers = #tpu.dot_dimension_numbers<[1], [0], [0], [1], [0, 0, 1, 1], [], []>} : vector<2x128xf32>, vector<128x384xf32>, vector<2x384xf32> -> vector<2x384xf32>
    %159 = vector.broadcast %150 : vector<1x384xf32> to vector<2x384xf32>
    %160 = arith.addf %158, %159 : vector<2x384xf32>
    %161 = vector.extract_strided_slice %157 {offsets = [0, 0], sizes = [2, 128], strides = [1, 1]} : vector<2x384xf32> to vector<2x128xf32>
    %162 = vector.extract_strided_slice %160 {offsets = [0, 0], sizes = [2, 128], strides = [1, 1]} : vector<2x384xf32> to vector<2x128xf32>
    %163 = arith.addf %161, %162 : vector<2x128xf32>
    %164 = arith.negf %163 : vector<2x128xf32>
    %165 = math.exp %164 : vector<2x128xf32>
    %cst_169 = arith.constant 1.000000e+00 : f32
    %166 = vector.broadcast %cst_169 : f32 to vector<2x128xf32>
    %167 = arith.addf %166, %165 : vector<2x128xf32>
    %168 = arith.divf %166, %167 : vector<2x128xf32>
    %169 = vector.extract_strided_slice %157 {offsets = [0, 128], sizes = [2, 128], strides = [1, 1]} : vector<2x384xf32> to vector<2x128xf32>
    %170 = vector.extract_strided_slice %160 {offsets = [0, 128], sizes = [2, 128], strides = [1, 1]} : vector<2x384xf32> to vector<2x128xf32>
    %171 = arith.addf %169, %170 : vector<2x128xf32>
    %172 = arith.negf %171 : vector<2x128xf32>
    %173 = math.exp %172 : vector<2x128xf32>
    %cst_170 = arith.constant 1.000000e+00 : f32
    %174 = vector.broadcast %cst_170 : f32 to vector<2x128xf32>
    %175 = arith.addf %174, %173 : vector<2x128xf32>
    %176 = arith.divf %174, %175 : vector<2x128xf32>
    %177 = vector.extract_strided_slice %157 {offsets = [0, 256], sizes = [2, 128], strides = [1, 1]} : vector<2x384xf32> to vector<2x128xf32>
    %178 = vector.extract_strided_slice %160 {offsets = [0, 256], sizes = [2, 128], strides = [1, 1]} : vector<2x384xf32> to vector<2x128xf32>
    %179 = arith.mulf %168, %178 : vector<2x128xf32>
    %180 = arith.addf %177, %179 : vector<2x128xf32>
    %181 = math.tanh %180 : vector<2x128xf32>
    %cst_171 = arith.constant 1.000000e+00 : f32
    %182 = vector.broadcast %cst_171 : f32 to vector<2x128xf32>
    %183 = arith.subf %182, %176 : vector<2x128xf32>
    %184 = arith.mulf %183, %181 : vector<2x128xf32>
    %185 = arith.mulf %176, %151 : vector<2x128xf32>
    %186 = arith.addf %184, %185 : vector<2x128xf32>
    %187 = vector.extract_strided_slice %146 {offsets = [0, 1], sizes = [2, 1], strides = [1, 1]} : vector<2x20xf32> to vector<2x1xf32>
    %188 = vector.broadcast %187 : vector<2x1xf32> to vector<2x384xf32>
    %189 = vector.broadcast %147 : vector<1x384xf32> to vector<2x384xf32>
    %190 = arith.mulf %188, %189 : vector<2x384xf32>
    %191 = vector.broadcast %149 : vector<1x384xf32> to vector<2x384xf32>
    %192 = arith.addf %190, %191 : vector<2x384xf32>
    %cst_172 = arith.constant dense<0.000000e+00> : vector<2x384xf32>
    %193 = tpu.matmul %186, %148, %cst_172 {dimension_numbers = #tpu.dot_dimension_numbers<[1], [0], [0], [1], [0, 0, 1, 1], [], []>} : vector<2x128xf32>, vector<128x384xf32>, vector<2x384xf32> -> vector<2x384xf32>
    %194 = vector.broadcast %150 : vector<1x384xf32> to vector<2x384xf32>
    %195 = arith.addf %193, %194 : vector<2x384xf32>
    %196 = vector.extract_strided_slice %192 {offsets = [0, 0], sizes = [2, 128], strides = [1, 1]} : vector<2x384xf32> to vector<2x128xf32>
    %197 = vector.extract_strided_slice %195 {offsets = [0, 0], sizes = [2, 128], strides = [1, 1]} : vector<2x384xf32> to vector<2x128xf32>
    %198 = arith.addf %196, %197 : vector<2x128xf32>
    %199 = arith.negf %198 : vector<2x128xf32>
    %200 = math.exp %199 : vector<2x128xf32>
    %cst_173 = arith.constant 1.000000e+00 : f32
    %201 = vector.broadcast %cst_173 : f32 to vector<2x128xf32>
    %202 = arith.addf %201, %200 : vector<2x128xf32>
    %203 = arith.divf %201, %202 : vector<2x128xf32>
    %204 = vector.extract_strided_slice %192 {offsets = [0, 128], sizes = [2, 128], strides = [1, 1]} : vector<2x384xf32> to vector<2x128xf32>
    %205 = vector.extract_strided_slice %195 {offsets = [0, 128], sizes = [2, 128], strides = [1, 1]} : vector<2x384xf32> to vector<2x128xf32>
    %206 = arith.addf %204, %205 : vector<2x128xf32>
    %207 = arith.negf %206 : vector<2x128xf32>
    %208 = math.exp %207 : vector<2x128xf32>
    %cst_174 = arith.constant 1.000000e+00 : f32
    %209 = vector.broadcast %cst_174 : f32 to vector<2x128xf32>
    %210 = arith.addf %209, %208 : vector<2x128xf32>
    %211 = arith.divf %209, %210 : vector<2x128xf32>
    %212 = vector.extract_strided_slice %192 {offsets = [0, 256], sizes = [2, 128], strides = [1, 1]} : vector<2x384xf32> to vector<2x128xf32>
    %213 = vector.extract_strided_slice %195 {offsets = [0, 256], sizes = [2, 128], strides = [1, 1]} : vector<2x384xf32> to vector<2x128xf32>
    %214 = arith.mulf %203, %213 : vector<2x128xf32>
    %215 = arith.addf %212, %214 : vector<2x128xf32>
    %216 = math.tanh %215 : vector<2x128xf32>
    %cst_175 = arith.constant 1.000000e+00 : f32
    %217 = vector.broadcast %cst_175 : f32 to vector<2x128xf32>
    %218 = arith.subf %217, %211 : vector<2x128xf32>
    %219 = arith.mulf %218, %216 : vector<2x128xf32>
    %220 = arith.mulf %211, %186 : vector<2x128xf32>
    %221 = arith.addf %219, %220 : vector<2x128xf32>
    %222 = vector.extract_strided_slice %146 {offsets = [0, 2], sizes = [2, 1], strides = [1, 1]} : vector<2x20xf32> to vector<2x1xf32>
    %223 = vector.broadcast %222 : vector<2x1xf32> to vector<2x384xf32>
    %224 = vector.broadcast %147 : vector<1x384xf32> to vector<2x384xf32>
    %225 = arith.mulf %223, %224 : vector<2x384xf32>
    %226 = vector.broadcast %149 : vector<1x384xf32> to vector<2x384xf32>
    %227 = arith.addf %225, %226 : vector<2x384xf32>
    %cst_176 = arith.constant dense<0.000000e+00> : vector<2x384xf32>
    %228 = tpu.matmul %221, %148, %cst_176 {dimension_numbers = #tpu.dot_dimension_numbers<[1], [0], [0], [1], [0, 0, 1, 1], [], []>} : vector<2x128xf32>, vector<128x384xf32>, vector<2x384xf32> -> vector<2x384xf32>
    %229 = vector.broadcast %150 : vector<1x384xf32> to vector<2x384xf32>
    %230 = arith.addf %228, %229 : vector<2x384xf32>
    %231 = vector.extract_strided_slice %227 {offsets = [0, 0], sizes = [2, 128], strides = [1, 1]} : vector<2x384xf32> to vector<2x128xf32>
    %232 = vector.extract_strided_slice %230 {offsets = [0, 0], sizes = [2, 128], strides = [1, 1]} : vector<2x384xf32> to vector<2x128xf32>
    %233 = arith.addf %231, %232 : vector<2x128xf32>
    %234 = arith.negf %233 : vector<2x128xf32>
    %235 = math.exp %234 : vector<2x128xf32>
    %cst_177 = arith.constant 1.000000e+00 : f32
    %236 = vector.broadcast %cst_177 : f32 to vector<2x128xf32>
    %237 = arith.addf %236, %235 : vector<2x128xf32>
    %238 = arith.divf %236, %237 : vector<2x128xf32>
    %239 = vector.extract_strided_slice %227 {offsets = [0, 128], sizes = [2, 128], strides = [1, 1]} : vector<2x384xf32> to vector<2x128xf32>
    %240 = vector.extract_strided_slice %230 {offsets = [0, 128], sizes = [2, 128], strides = [1, 1]} : vector<2x384xf32> to vector<2x128xf32>
    %241 = arith.addf %239, %240 : vector<2x128xf32>
    %242 = arith.negf %241 : vector<2x128xf32>
    %243 = math.exp %242 : vector<2x128xf32>
    %cst_178 = arith.constant 1.000000e+00 : f32
    %244 = vector.broadcast %cst_178 : f32 to vector<2x128xf32>
    %245 = arith.addf %244, %243 : vector<2x128xf32>
    %246 = arith.divf %244, %245 : vector<2x128xf32>
    %247 = vector.extract_strided_slice %227 {offsets = [0, 256], sizes = [2, 128], strides = [1, 1]} : vector<2x384xf32> to vector<2x128xf32>
    %248 = vector.extract_strided_slice %230 {offsets = [0, 256], sizes = [2, 128], strides = [1, 1]} : vector<2x384xf32> to vector<2x128xf32>
    %249 = arith.mulf %238, %248 : vector<2x128xf32>
    %250 = arith.addf %247, %249 : vector<2x128xf32>
    %251 = math.tanh %250 : vector<2x128xf32>
    %cst_179 = arith.constant 1.000000e+00 : f32
    %252 = vector.broadcast %cst_179 : f32 to vector<2x128xf32>
    %253 = arith.subf %252, %246 : vector<2x128xf32>
    %254 = arith.mulf %253, %251 : vector<2x128xf32>
    %255 = arith.mulf %246, %221 : vector<2x128xf32>
    %256 = arith.addf %254, %255 : vector<2x128xf32>
    %257 = vector.extract_strided_slice %146 {offsets = [0, 3], sizes = [2, 1], strides = [1, 1]} : vector<2x20xf32> to vector<2x1xf32>
    %258 = vector.broadcast %257 : vector<2x1xf32> to vector<2x384xf32>
    %259 = vector.broadcast %147 : vector<1x384xf32> to vector<2x384xf32>
    %260 = arith.mulf %258, %259 : vector<2x384xf32>
    %261 = vector.broadcast %149 : vector<1x384xf32> to vector<2x384xf32>
    %262 = arith.addf %260, %261 : vector<2x384xf32>
    %cst_180 = arith.constant dense<0.000000e+00> : vector<2x384xf32>
    %263 = tpu.matmul %256, %148, %cst_180 {dimension_numbers = #tpu.dot_dimension_numbers<[1], [0], [0], [1], [0, 0, 1, 1], [], []>} : vector<2x128xf32>, vector<128x384xf32>, vector<2x384xf32> -> vector<2x384xf32>
    %264 = vector.broadcast %150 : vector<1x384xf32> to vector<2x384xf32>
    %265 = arith.addf %263, %264 : vector<2x384xf32>
    %266 = vector.extract_strided_slice %262 {offsets = [0, 0], sizes = [2, 128], strides = [1, 1]} : vector<2x384xf32> to vector<2x128xf32>
    %267 = vector.extract_strided_slice %265 {offsets = [0, 0], sizes = [2, 128], strides = [1, 1]} : vector<2x384xf32> to vector<2x128xf32>
    %268 = arith.addf %266, %267 : vector<2x128xf32>
    %269 = arith.negf %268 : vector<2x128xf32>
    %270 = math.exp %269 : vector<2x128xf32>
    %cst_181 = arith.constant 1.000000e+00 : f32
    %271 = vector.broadcast %cst_181 : f32 to vector<2x128xf32>
    %272 = arith.addf %271, %270 : vector<2x128xf32>
    %273 = arith.divf %271, %272 : vector<2x128xf32>
    %274 = vector.extract_strided_slice %262 {offsets = [0, 128], sizes = [2, 128], strides = [1, 1]} : vector<2x384xf32> to vector<2x128xf32>
    %275 = vector.extract_strided_slice %265 {offsets = [0, 128], sizes = [2, 128], strides = [1, 1]} : vector<2x384xf32> to vector<2x128xf32>
    %276 = arith.addf %274, %275 : vector<2x128xf32>
    %277 = arith.negf %276 : vector<2x128xf32>
    %278 = math.exp %277 : vector<2x128xf32>
    %cst_182 = arith.constant 1.000000e+00 : f32
    %279 = vector.broadcast %cst_182 : f32 to vector<2x128xf32>
    %280 = arith.addf %279, %278 : vector<2x128xf32>
    %281 = arith.divf %279, %280 : vector<2x128xf32>
    %282 = vector.extract_strided_slice %262 {offsets = [0, 256], sizes = [2, 128], strides = [1, 1]} : vector<2x384xf32> to vector<2x128xf32>
    %283 = vector.extract_strided_slice %265 {offsets = [0, 256], sizes = [2, 128], strides = [1, 1]} : vector<2x384xf32> to vector<2x128xf32>
    %284 = arith.mulf %273, %283 : vector<2x128xf32>
    %285 = arith.addf %282, %284 : vector<2x128xf32>
    %286 = math.tanh %285 : vector<2x128xf32>
    %cst_183 = arith.constant 1.000000e+00 : f32
    %287 = vector.broadcast %cst_183 : f32 to vector<2x128xf32>
    %288 = arith.subf %287, %281 : vector<2x128xf32>
    %289 = arith.mulf %288, %286 : vector<2x128xf32>
    %290 = arith.mulf %281, %256 : vector<2x128xf32>
    %291 = arith.addf %289, %290 : vector<2x128xf32>
    %292 = vector.extract_strided_slice %146 {offsets = [0, 4], sizes = [2, 1], strides = [1, 1]} : vector<2x20xf32> to vector<2x1xf32>
    %293 = vector.broadcast %292 : vector<2x1xf32> to vector<2x384xf32>
    %294 = vector.broadcast %147 : vector<1x384xf32> to vector<2x384xf32>
    %295 = arith.mulf %293, %294 : vector<2x384xf32>
    %296 = vector.broadcast %149 : vector<1x384xf32> to vector<2x384xf32>
    %297 = arith.addf %295, %296 : vector<2x384xf32>
    %cst_184 = arith.constant dense<0.000000e+00> : vector<2x384xf32>
    %298 = tpu.matmul %291, %148, %cst_184 {dimension_numbers = #tpu.dot_dimension_numbers<[1], [0], [0], [1], [0, 0, 1, 1], [], []>} : vector<2x128xf32>, vector<128x384xf32>, vector<2x384xf32> -> vector<2x384xf32>
    %299 = vector.broadcast %150 : vector<1x384xf32> to vector<2x384xf32>
    %300 = arith.addf %298, %299 : vector<2x384xf32>
    %301 = vector.extract_strided_slice %297 {offsets = [0, 0], sizes = [2, 128], strides = [1, 1]} : vector<2x384xf32> to vector<2x128xf32>
    %302 = vector.extract_strided_slice %300 {offsets = [0, 0], sizes = [2, 128], strides = [1, 1]} : vector<2x384xf32> to vector<2x128xf32>
    %303 = arith.addf %301, %302 : vector<2x128xf32>
    %304 = arith.negf %303 : vector<2x128xf32>
    %305 = math.exp %304 : vector<2x128xf32>
    %cst_185 = arith.constant 1.000000e+00 : f32
    %306 = vector.broadcast %cst_185 : f32 to vector<2x128xf32>
    %307 = arith.addf %306, %305 : vector<2x128xf32>
    %308 = arith.divf %306, %307 : vector<2x128xf32>
    %309 = vector.extract_strided_slice %297 {offsets = [0, 128], sizes = [2, 128], strides = [1, 1]} : vector<2x384xf32> to vector<2x128xf32>
    %310 = vector.extract_strided_slice %300 {offsets = [0, 128], sizes = [2, 128], strides = [1, 1]} : vector<2x384xf32> to vector<2x128xf32>
    %311 = arith.addf %309, %310 : vector<2x128xf32>
    %312 = arith.negf %311 : vector<2x128xf32>
    %313 = math.exp %312 : vector<2x128xf32>
    %cst_186 = arith.constant 1.000000e+00 : f32
    %314 = vector.broadcast %cst_186 : f32 to vector<2x128xf32>
    %315 = arith.addf %314, %313 : vector<2x128xf32>
    %316 = arith.divf %314, %315 : vector<2x128xf32>
    %317 = vector.extract_strided_slice %297 {offsets = [0, 256], sizes = [2, 128], strides = [1, 1]} : vector<2x384xf32> to vector<2x128xf32>
    %318 = vector.extract_strided_slice %300 {offsets = [0, 256], sizes = [2, 128], strides = [1, 1]} : vector<2x384xf32> to vector<2x128xf32>
    %319 = arith.mulf %308, %318 : vector<2x128xf32>
    %320 = arith.addf %317, %319 : vector<2x128xf32>
    %321 = math.tanh %320 : vector<2x128xf32>
    %cst_187 = arith.constant 1.000000e+00 : f32
    %322 = vector.broadcast %cst_187 : f32 to vector<2x128xf32>
    %323 = arith.subf %322, %316 : vector<2x128xf32>
    %324 = arith.mulf %323, %321 : vector<2x128xf32>
    %325 = arith.mulf %316, %291 : vector<2x128xf32>
    %326 = arith.addf %324, %325 : vector<2x128xf32>
    %327 = vector.extract_strided_slice %146 {offsets = [0, 5], sizes = [2, 1], strides = [1, 1]} : vector<2x20xf32> to vector<2x1xf32>
    %328 = vector.broadcast %327 : vector<2x1xf32> to vector<2x384xf32>
    %329 = vector.broadcast %147 : vector<1x384xf32> to vector<2x384xf32>
    %330 = arith.mulf %328, %329 : vector<2x384xf32>
    %331 = vector.broadcast %149 : vector<1x384xf32> to vector<2x384xf32>
    %332 = arith.addf %330, %331 : vector<2x384xf32>
    %cst_188 = arith.constant dense<0.000000e+00> : vector<2x384xf32>
    %333 = tpu.matmul %326, %148, %cst_188 {dimension_numbers = #tpu.dot_dimension_numbers<[1], [0], [0], [1], [0, 0, 1, 1], [], []>} : vector<2x128xf32>, vector<128x384xf32>, vector<2x384xf32> -> vector<2x384xf32>
    %334 = vector.broadcast %150 : vector<1x384xf32> to vector<2x384xf32>
    %335 = arith.addf %333, %334 : vector<2x384xf32>
    %336 = vector.extract_strided_slice %332 {offsets = [0, 0], sizes = [2, 128], strides = [1, 1]} : vector<2x384xf32> to vector<2x128xf32>
    %337 = vector.extract_strided_slice %335 {offsets = [0, 0], sizes = [2, 128], strides = [1, 1]} : vector<2x384xf32> to vector<2x128xf32>
    %338 = arith.addf %336, %337 : vector<2x128xf32>
    %339 = arith.negf %338 : vector<2x128xf32>
    %340 = math.exp %339 : vector<2x128xf32>
    %cst_189 = arith.constant 1.000000e+00 : f32
    %341 = vector.broadcast %cst_189 : f32 to vector<2x128xf32>
    %342 = arith.addf %341, %340 : vector<2x128xf32>
    %343 = arith.divf %341, %342 : vector<2x128xf32>
    %344 = vector.extract_strided_slice %332 {offsets = [0, 128], sizes = [2, 128], strides = [1, 1]} : vector<2x384xf32> to vector<2x128xf32>
    %345 = vector.extract_strided_slice %335 {offsets = [0, 128], sizes = [2, 128], strides = [1, 1]} : vector<2x384xf32> to vector<2x128xf32>
    %346 = arith.addf %344, %345 : vector<2x128xf32>
    %347 = arith.negf %346 : vector<2x128xf32>
    %348 = math.exp %347 : vector<2x128xf32>
    %cst_190 = arith.constant 1.000000e+00 : f32
    %349 = vector.broadcast %cst_190 : f32 to vector<2x128xf32>
    %350 = arith.addf %349, %348 : vector<2x128xf32>
    %351 = arith.divf %349, %350 : vector<2x128xf32>
    %352 = vector.extract_strided_slice %332 {offsets = [0, 256], sizes = [2, 128], strides = [1, 1]} : vector<2x384xf32> to vector<2x128xf32>
    %353 = vector.extract_strided_slice %335 {offsets = [0, 256], sizes = [2, 128], strides = [1, 1]} : vector<2x384xf32> to vector<2x128xf32>
    %354 = arith.mulf %343, %353 : vector<2x128xf32>
    %355 = arith.addf %352, %354 : vector<2x128xf32>
    %356 = math.tanh %355 : vector<2x128xf32>
    %cst_191 = arith.constant 1.000000e+00 : f32
    %357 = vector.broadcast %cst_191 : f32 to vector<2x128xf32>
    %358 = arith.subf %357, %351 : vector<2x128xf32>
    %359 = arith.mulf %358, %356 : vector<2x128xf32>
    %360 = arith.mulf %351, %326 : vector<2x128xf32>
    %361 = arith.addf %359, %360 : vector<2x128xf32>
    %362 = vector.extract_strided_slice %146 {offsets = [0, 6], sizes = [2, 1], strides = [1, 1]} : vector<2x20xf32> to vector<2x1xf32>
    %363 = vector.broadcast %362 : vector<2x1xf32> to vector<2x384xf32>
    %364 = vector.broadcast %147 : vector<1x384xf32> to vector<2x384xf32>
    %365 = arith.mulf %363, %364 : vector<2x384xf32>
    %366 = vector.broadcast %149 : vector<1x384xf32> to vector<2x384xf32>
    %367 = arith.addf %365, %366 : vector<2x384xf32>
    %cst_192 = arith.constant dense<0.000000e+00> : vector<2x384xf32>
    %368 = tpu.matmul %361, %148, %cst_192 {dimension_numbers = #tpu.dot_dimension_numbers<[1], [0], [0], [1], [0, 0, 1, 1], [], []>} : vector<2x128xf32>, vector<128x384xf32>, vector<2x384xf32> -> vector<2x384xf32>
    %369 = vector.broadcast %150 : vector<1x384xf32> to vector<2x384xf32>
    %370 = arith.addf %368, %369 : vector<2x384xf32>
    %371 = vector.extract_strided_slice %367 {offsets = [0, 0], sizes = [2, 128], strides = [1, 1]} : vector<2x384xf32> to vector<2x128xf32>
    %372 = vector.extract_strided_slice %370 {offsets = [0, 0], sizes = [2, 128], strides = [1, 1]} : vector<2x384xf32> to vector<2x128xf32>
    %373 = arith.addf %371, %372 : vector<2x128xf32>
    %374 = arith.negf %373 : vector<2x128xf32>
    %375 = math.exp %374 : vector<2x128xf32>
    %cst_193 = arith.constant 1.000000e+00 : f32
    %376 = vector.broadcast %cst_193 : f32 to vector<2x128xf32>
    %377 = arith.addf %376, %375 : vector<2x128xf32>
    %378 = arith.divf %376, %377 : vector<2x128xf32>
    %379 = vector.extract_strided_slice %367 {offsets = [0, 128], sizes = [2, 128], strides = [1, 1]} : vector<2x384xf32> to vector<2x128xf32>
    %380 = vector.extract_strided_slice %370 {offsets = [0, 128], sizes = [2, 128], strides = [1, 1]} : vector<2x384xf32> to vector<2x128xf32>
    %381 = arith.addf %379, %380 : vector<2x128xf32>
    %382 = arith.negf %381 : vector<2x128xf32>
    %383 = math.exp %382 : vector<2x128xf32>
    %cst_194 = arith.constant 1.000000e+00 : f32
    %384 = vector.broadcast %cst_194 : f32 to vector<2x128xf32>
    %385 = arith.addf %384, %383 : vector<2x128xf32>
    %386 = arith.divf %384, %385 : vector<2x128xf32>
    %387 = vector.extract_strided_slice %367 {offsets = [0, 256], sizes = [2, 128], strides = [1, 1]} : vector<2x384xf32> to vector<2x128xf32>
    %388 = vector.extract_strided_slice %370 {offsets = [0, 256], sizes = [2, 128], strides = [1, 1]} : vector<2x384xf32> to vector<2x128xf32>
    %389 = arith.mulf %378, %388 : vector<2x128xf32>
    %390 = arith.addf %387, %389 : vector<2x128xf32>
    %391 = math.tanh %390 : vector<2x128xf32>
    %cst_195 = arith.constant 1.000000e+00 : f32
    %392 = vector.broadcast %cst_195 : f32 to vector<2x128xf32>
    %393 = arith.subf %392, %386 : vector<2x128xf32>
    %394 = arith.mulf %393, %391 : vector<2x128xf32>
    %395 = arith.mulf %386, %361 : vector<2x128xf32>
    %396 = arith.addf %394, %395 : vector<2x128xf32>
    %397 = vector.extract_strided_slice %146 {offsets = [0, 7], sizes = [2, 1], strides = [1, 1]} : vector<2x20xf32> to vector<2x1xf32>
    %398 = vector.broadcast %397 : vector<2x1xf32> to vector<2x384xf32>
    %399 = vector.broadcast %147 : vector<1x384xf32> to vector<2x384xf32>
    %400 = arith.mulf %398, %399 : vector<2x384xf32>
    %401 = vector.broadcast %149 : vector<1x384xf32> to vector<2x384xf32>
    %402 = arith.addf %400, %401 : vector<2x384xf32>
    %cst_196 = arith.constant dense<0.000000e+00> : vector<2x384xf32>
    %403 = tpu.matmul %396, %148, %cst_196 {dimension_numbers = #tpu.dot_dimension_numbers<[1], [0], [0], [1], [0, 0, 1, 1], [], []>} : vector<2x128xf32>, vector<128x384xf32>, vector<2x384xf32> -> vector<2x384xf32>
    %404 = vector.broadcast %150 : vector<1x384xf32> to vector<2x384xf32>
    %405 = arith.addf %403, %404 : vector<2x384xf32>
    %406 = vector.extract_strided_slice %402 {offsets = [0, 0], sizes = [2, 128], strides = [1, 1]} : vector<2x384xf32> to vector<2x128xf32>
    %407 = vector.extract_strided_slice %405 {offsets = [0, 0], sizes = [2, 128], strides = [1, 1]} : vector<2x384xf32> to vector<2x128xf32>
    %408 = arith.addf %406, %407 : vector<2x128xf32>
    %409 = arith.negf %408 : vector<2x128xf32>
    %410 = math.exp %409 : vector<2x128xf32>
    %cst_197 = arith.constant 1.000000e+00 : f32
    %411 = vector.broadcast %cst_197 : f32 to vector<2x128xf32>
    %412 = arith.addf %411, %410 : vector<2x128xf32>
    %413 = arith.divf %411, %412 : vector<2x128xf32>
    %414 = vector.extract_strided_slice %402 {offsets = [0, 128], sizes = [2, 128], strides = [1, 1]} : vector<2x384xf32> to vector<2x128xf32>
    %415 = vector.extract_strided_slice %405 {offsets = [0, 128], sizes = [2, 128], strides = [1, 1]} : vector<2x384xf32> to vector<2x128xf32>
    %416 = arith.addf %414, %415 : vector<2x128xf32>
    %417 = arith.negf %416 : vector<2x128xf32>
    %418 = math.exp %417 : vector<2x128xf32>
    %cst_198 = arith.constant 1.000000e+00 : f32
    %419 = vector.broadcast %cst_198 : f32 to vector<2x128xf32>
    %420 = arith.addf %419, %418 : vector<2x128xf32>
    %421 = arith.divf %419, %420 : vector<2x128xf32>
    %422 = vector.extract_strided_slice %402 {offsets = [0, 256], sizes = [2, 128], strides = [1, 1]} : vector<2x384xf32> to vector<2x128xf32>
    %423 = vector.extract_strided_slice %405 {offsets = [0, 256], sizes = [2, 128], strides = [1, 1]} : vector<2x384xf32> to vector<2x128xf32>
    %424 = arith.mulf %413, %423 : vector<2x128xf32>
    %425 = arith.addf %422, %424 : vector<2x128xf32>
    %426 = math.tanh %425 : vector<2x128xf32>
    %cst_199 = arith.constant 1.000000e+00 : f32
    %427 = vector.broadcast %cst_199 : f32 to vector<2x128xf32>
    %428 = arith.subf %427, %421 : vector<2x128xf32>
    %429 = arith.mulf %428, %426 : vector<2x128xf32>
    %430 = arith.mulf %421, %396 : vector<2x128xf32>
    %431 = arith.addf %429, %430 : vector<2x128xf32>
    %432 = vector.extract_strided_slice %146 {offsets = [0, 8], sizes = [2, 1], strides = [1, 1]} : vector<2x20xf32> to vector<2x1xf32>
    %433 = vector.broadcast %432 : vector<2x1xf32> to vector<2x384xf32>
    %434 = vector.broadcast %147 : vector<1x384xf32> to vector<2x384xf32>
    %435 = arith.mulf %433, %434 : vector<2x384xf32>
    %436 = vector.broadcast %149 : vector<1x384xf32> to vector<2x384xf32>
    %437 = arith.addf %435, %436 : vector<2x384xf32>
    %cst_200 = arith.constant dense<0.000000e+00> : vector<2x384xf32>
    %438 = tpu.matmul %431, %148, %cst_200 {dimension_numbers = #tpu.dot_dimension_numbers<[1], [0], [0], [1], [0, 0, 1, 1], [], []>} : vector<2x128xf32>, vector<128x384xf32>, vector<2x384xf32> -> vector<2x384xf32>
    %439 = vector.broadcast %150 : vector<1x384xf32> to vector<2x384xf32>
    %440 = arith.addf %438, %439 : vector<2x384xf32>
    %441 = vector.extract_strided_slice %437 {offsets = [0, 0], sizes = [2, 128], strides = [1, 1]} : vector<2x384xf32> to vector<2x128xf32>
    %442 = vector.extract_strided_slice %440 {offsets = [0, 0], sizes = [2, 128], strides = [1, 1]} : vector<2x384xf32> to vector<2x128xf32>
    %443 = arith.addf %441, %442 : vector<2x128xf32>
    %444 = arith.negf %443 : vector<2x128xf32>
    %445 = math.exp %444 : vector<2x128xf32>
    %cst_201 = arith.constant 1.000000e+00 : f32
    %446 = vector.broadcast %cst_201 : f32 to vector<2x128xf32>
    %447 = arith.addf %446, %445 : vector<2x128xf32>
    %448 = arith.divf %446, %447 : vector<2x128xf32>
    %449 = vector.extract_strided_slice %437 {offsets = [0, 128], sizes = [2, 128], strides = [1, 1]} : vector<2x384xf32> to vector<2x128xf32>
    %450 = vector.extract_strided_slice %440 {offsets = [0, 128], sizes = [2, 128], strides = [1, 1]} : vector<2x384xf32> to vector<2x128xf32>
    %451 = arith.addf %449, %450 : vector<2x128xf32>
    %452 = arith.negf %451 : vector<2x128xf32>
    %453 = math.exp %452 : vector<2x128xf32>
    %cst_202 = arith.constant 1.000000e+00 : f32
    %454 = vector.broadcast %cst_202 : f32 to vector<2x128xf32>
    %455 = arith.addf %454, %453 : vector<2x128xf32>
    %456 = arith.divf %454, %455 : vector<2x128xf32>
    %457 = vector.extract_strided_slice %437 {offsets = [0, 256], sizes = [2, 128], strides = [1, 1]} : vector<2x384xf32> to vector<2x128xf32>
    %458 = vector.extract_strided_slice %440 {offsets = [0, 256], sizes = [2, 128], strides = [1, 1]} : vector<2x384xf32> to vector<2x128xf32>
    %459 = arith.mulf %448, %458 : vector<2x128xf32>
    %460 = arith.addf %457, %459 : vector<2x128xf32>
    %461 = math.tanh %460 : vector<2x128xf32>
    %cst_203 = arith.constant 1.000000e+00 : f32
    %462 = vector.broadcast %cst_203 : f32 to vector<2x128xf32>
    %463 = arith.subf %462, %456 : vector<2x128xf32>
    %464 = arith.mulf %463, %461 : vector<2x128xf32>
    %465 = arith.mulf %456, %431 : vector<2x128xf32>
    %466 = arith.addf %464, %465 : vector<2x128xf32>
    %467 = vector.extract_strided_slice %146 {offsets = [0, 9], sizes = [2, 1], strides = [1, 1]} : vector<2x20xf32> to vector<2x1xf32>
    %468 = vector.broadcast %467 : vector<2x1xf32> to vector<2x384xf32>
    %469 = vector.broadcast %147 : vector<1x384xf32> to vector<2x384xf32>
    %470 = arith.mulf %468, %469 : vector<2x384xf32>
    %471 = vector.broadcast %149 : vector<1x384xf32> to vector<2x384xf32>
    %472 = arith.addf %470, %471 : vector<2x384xf32>
    %cst_204 = arith.constant dense<0.000000e+00> : vector<2x384xf32>
    %473 = tpu.matmul %466, %148, %cst_204 {dimension_numbers = #tpu.dot_dimension_numbers<[1], [0], [0], [1], [0, 0, 1, 1], [], []>} : vector<2x128xf32>, vector<128x384xf32>, vector<2x384xf32> -> vector<2x384xf32>
    %474 = vector.broadcast %150 : vector<1x384xf32> to vector<2x384xf32>
    %475 = arith.addf %473, %474 : vector<2x384xf32>
    %476 = vector.extract_strided_slice %472 {offsets = [0, 0], sizes = [2, 128], strides = [1, 1]} : vector<2x384xf32> to vector<2x128xf32>
    %477 = vector.extract_strided_slice %475 {offsets = [0, 0], sizes = [2, 128], strides = [1, 1]} : vector<2x384xf32> to vector<2x128xf32>
    %478 = arith.addf %476, %477 : vector<2x128xf32>
    %479 = arith.negf %478 : vector<2x128xf32>
    %480 = math.exp %479 : vector<2x128xf32>
    %cst_205 = arith.constant 1.000000e+00 : f32
    %481 = vector.broadcast %cst_205 : f32 to vector<2x128xf32>
    %482 = arith.addf %481, %480 : vector<2x128xf32>
    %483 = arith.divf %481, %482 : vector<2x128xf32>
    %484 = vector.extract_strided_slice %472 {offsets = [0, 128], sizes = [2, 128], strides = [1, 1]} : vector<2x384xf32> to vector<2x128xf32>
    %485 = vector.extract_strided_slice %475 {offsets = [0, 128], sizes = [2, 128], strides = [1, 1]} : vector<2x384xf32> to vector<2x128xf32>
    %486 = arith.addf %484, %485 : vector<2x128xf32>
    %487 = arith.negf %486 : vector<2x128xf32>
    %488 = math.exp %487 : vector<2x128xf32>
    %cst_206 = arith.constant 1.000000e+00 : f32
    %489 = vector.broadcast %cst_206 : f32 to vector<2x128xf32>
    %490 = arith.addf %489, %488 : vector<2x128xf32>
    %491 = arith.divf %489, %490 : vector<2x128xf32>
    %492 = vector.extract_strided_slice %472 {offsets = [0, 256], sizes = [2, 128], strides = [1, 1]} : vector<2x384xf32> to vector<2x128xf32>
    %493 = vector.extract_strided_slice %475 {offsets = [0, 256], sizes = [2, 128], strides = [1, 1]} : vector<2x384xf32> to vector<2x128xf32>
    %494 = arith.mulf %483, %493 : vector<2x128xf32>
    %495 = arith.addf %492, %494 : vector<2x128xf32>
    %496 = math.tanh %495 : vector<2x128xf32>
    %cst_207 = arith.constant 1.000000e+00 : f32
    %497 = vector.broadcast %cst_207 : f32 to vector<2x128xf32>
    %498 = arith.subf %497, %491 : vector<2x128xf32>
    %499 = arith.mulf %498, %496 : vector<2x128xf32>
    %500 = arith.mulf %491, %466 : vector<2x128xf32>
    %501 = arith.addf %499, %500 : vector<2x128xf32>
    %502 = vector.extract_strided_slice %146 {offsets = [0, 10], sizes = [2, 1], strides = [1, 1]} : vector<2x20xf32> to vector<2x1xf32>
    %503 = vector.broadcast %502 : vector<2x1xf32> to vector<2x384xf32>
    %504 = vector.broadcast %147 : vector<1x384xf32> to vector<2x384xf32>
    %505 = arith.mulf %503, %504 : vector<2x384xf32>
    %506 = vector.broadcast %149 : vector<1x384xf32> to vector<2x384xf32>
    %507 = arith.addf %505, %506 : vector<2x384xf32>
    %cst_208 = arith.constant dense<0.000000e+00> : vector<2x384xf32>
    %508 = tpu.matmul %501, %148, %cst_208 {dimension_numbers = #tpu.dot_dimension_numbers<[1], [0], [0], [1], [0, 0, 1, 1], [], []>} : vector<2x128xf32>, vector<128x384xf32>, vector<2x384xf32> -> vector<2x384xf32>
    %509 = vector.broadcast %150 : vector<1x384xf32> to vector<2x384xf32>
    %510 = arith.addf %508, %509 : vector<2x384xf32>
    %511 = vector.extract_strided_slice %507 {offsets = [0, 0], sizes = [2, 128], strides = [1, 1]} : vector<2x384xf32> to vector<2x128xf32>
    %512 = vector.extract_strided_slice %510 {offsets = [0, 0], sizes = [2, 128], strides = [1, 1]} : vector<2x384xf32> to vector<2x128xf32>
    %513 = arith.addf %511, %512 : vector<2x128xf32>
    %514 = arith.negf %513 : vector<2x128xf32>
    %515 = math.exp %514 : vector<2x128xf32>
    %cst_209 = arith.constant 1.000000e+00 : f32
    %516 = vector.broadcast %cst_209 : f32 to vector<2x128xf32>
    %517 = arith.addf %516, %515 : vector<2x128xf32>
    %518 = arith.divf %516, %517 : vector<2x128xf32>
    %519 = vector.extract_strided_slice %507 {offsets = [0, 128], sizes = [2, 128], strides = [1, 1]} : vector<2x384xf32> to vector<2x128xf32>
    %520 = vector.extract_strided_slice %510 {offsets = [0, 128], sizes = [2, 128], strides = [1, 1]} : vector<2x384xf32> to vector<2x128xf32>
    %521 = arith.addf %519, %520 : vector<2x128xf32>
    %522 = arith.negf %521 : vector<2x128xf32>
    %523 = math.exp %522 : vector<2x128xf32>
    %cst_210 = arith.constant 1.000000e+00 : f32
    %524 = vector.broadcast %cst_210 : f32 to vector<2x128xf32>
    %525 = arith.addf %524, %523 : vector<2x128xf32>
    %526 = arith.divf %524, %525 : vector<2x128xf32>
    %527 = vector.extract_strided_slice %507 {offsets = [0, 256], sizes = [2, 128], strides = [1, 1]} : vector<2x384xf32> to vector<2x128xf32>
    %528 = vector.extract_strided_slice %510 {offsets = [0, 256], sizes = [2, 128], strides = [1, 1]} : vector<2x384xf32> to vector<2x128xf32>
    %529 = arith.mulf %518, %528 : vector<2x128xf32>
    %530 = arith.addf %527, %529 : vector<2x128xf32>
    %531 = math.tanh %530 : vector<2x128xf32>
    %cst_211 = arith.constant 1.000000e+00 : f32
    %532 = vector.broadcast %cst_211 : f32 to vector<2x128xf32>
    %533 = arith.subf %532, %526 : vector<2x128xf32>
    %534 = arith.mulf %533, %531 : vector<2x128xf32>
    %535 = arith.mulf %526, %501 : vector<2x128xf32>
    %536 = arith.addf %534, %535 : vector<2x128xf32>
    %537 = vector.extract_strided_slice %146 {offsets = [0, 11], sizes = [2, 1], strides = [1, 1]} : vector<2x20xf32> to vector<2x1xf32>
    %538 = vector.broadcast %537 : vector<2x1xf32> to vector<2x384xf32>
    %539 = vector.broadcast %147 : vector<1x384xf32> to vector<2x384xf32>
    %540 = arith.mulf %538, %539 : vector<2x384xf32>
    %541 = vector.broadcast %149 : vector<1x384xf32> to vector<2x384xf32>
    %542 = arith.addf %540, %541 : vector<2x384xf32>
    %cst_212 = arith.constant dense<0.000000e+00> : vector<2x384xf32>
    %543 = tpu.matmul %536, %148, %cst_212 {dimension_numbers = #tpu.dot_dimension_numbers<[1], [0], [0], [1], [0, 0, 1, 1], [], []>} : vector<2x128xf32>, vector<128x384xf32>, vector<2x384xf32> -> vector<2x384xf32>
    %544 = vector.broadcast %150 : vector<1x384xf32> to vector<2x384xf32>
    %545 = arith.addf %543, %544 : vector<2x384xf32>
    %546 = vector.extract_strided_slice %542 {offsets = [0, 0], sizes = [2, 128], strides = [1, 1]} : vector<2x384xf32> to vector<2x128xf32>
    %547 = vector.extract_strided_slice %545 {offsets = [0, 0], sizes = [2, 128], strides = [1, 1]} : vector<2x384xf32> to vector<2x128xf32>
    %548 = arith.addf %546, %547 : vector<2x128xf32>
    %549 = arith.negf %548 : vector<2x128xf32>
    %550 = math.exp %549 : vector<2x128xf32>
    %cst_213 = arith.constant 1.000000e+00 : f32
    %551 = vector.broadcast %cst_213 : f32 to vector<2x128xf32>
    %552 = arith.addf %551, %550 : vector<2x128xf32>
    %553 = arith.divf %551, %552 : vector<2x128xf32>
    %554 = vector.extract_strided_slice %542 {offsets = [0, 128], sizes = [2, 128], strides = [1, 1]} : vector<2x384xf32> to vector<2x128xf32>
    %555 = vector.extract_strided_slice %545 {offsets = [0, 128], sizes = [2, 128], strides = [1, 1]} : vector<2x384xf32> to vector<2x128xf32>
    %556 = arith.addf %554, %555 : vector<2x128xf32>
    %557 = arith.negf %556 : vector<2x128xf32>
    %558 = math.exp %557 : vector<2x128xf32>
    %cst_214 = arith.constant 1.000000e+00 : f32
    %559 = vector.broadcast %cst_214 : f32 to vector<2x128xf32>
    %560 = arith.addf %559, %558 : vector<2x128xf32>
    %561 = arith.divf %559, %560 : vector<2x128xf32>
    %562 = vector.extract_strided_slice %542 {offsets = [0, 256], sizes = [2, 128], strides = [1, 1]} : vector<2x384xf32> to vector<2x128xf32>
    %563 = vector.extract_strided_slice %545 {offsets = [0, 256], sizes = [2, 128], strides = [1, 1]} : vector<2x384xf32> to vector<2x128xf32>
    %564 = arith.mulf %553, %563 : vector<2x128xf32>
    %565 = arith.addf %562, %564 : vector<2x128xf32>
    %566 = math.tanh %565 : vector<2x128xf32>
    %cst_215 = arith.constant 1.000000e+00 : f32
    %567 = vector.broadcast %cst_215 : f32 to vector<2x128xf32>
    %568 = arith.subf %567, %561 : vector<2x128xf32>
    %569 = arith.mulf %568, %566 : vector<2x128xf32>
    %570 = arith.mulf %561, %536 : vector<2x128xf32>
    %571 = arith.addf %569, %570 : vector<2x128xf32>
    %572 = vector.extract_strided_slice %146 {offsets = [0, 12], sizes = [2, 1], strides = [1, 1]} : vector<2x20xf32> to vector<2x1xf32>
    %573 = vector.broadcast %572 : vector<2x1xf32> to vector<2x384xf32>
    %574 = vector.broadcast %147 : vector<1x384xf32> to vector<2x384xf32>
    %575 = arith.mulf %573, %574 : vector<2x384xf32>
    %576 = vector.broadcast %149 : vector<1x384xf32> to vector<2x384xf32>
    %577 = arith.addf %575, %576 : vector<2x384xf32>
    %cst_216 = arith.constant dense<0.000000e+00> : vector<2x384xf32>
    %578 = tpu.matmul %571, %148, %cst_216 {dimension_numbers = #tpu.dot_dimension_numbers<[1], [0], [0], [1], [0, 0, 1, 1], [], []>} : vector<2x128xf32>, vector<128x384xf32>, vector<2x384xf32> -> vector<2x384xf32>
    %579 = vector.broadcast %150 : vector<1x384xf32> to vector<2x384xf32>
    %580 = arith.addf %578, %579 : vector<2x384xf32>
    %581 = vector.extract_strided_slice %577 {offsets = [0, 0], sizes = [2, 128], strides = [1, 1]} : vector<2x384xf32> to vector<2x128xf32>
    %582 = vector.extract_strided_slice %580 {offsets = [0, 0], sizes = [2, 128], strides = [1, 1]} : vector<2x384xf32> to vector<2x128xf32>
    %583 = arith.addf %581, %582 : vector<2x128xf32>
    %584 = arith.negf %583 : vector<2x128xf32>
    %585 = math.exp %584 : vector<2x128xf32>
    %cst_217 = arith.constant 1.000000e+00 : f32
    %586 = vector.broadcast %cst_217 : f32 to vector<2x128xf32>
    %587 = arith.addf %586, %585 : vector<2x128xf32>
    %588 = arith.divf %586, %587 : vector<2x128xf32>
    %589 = vector.extract_strided_slice %577 {offsets = [0, 128], sizes = [2, 128], strides = [1, 1]} : vector<2x384xf32> to vector<2x128xf32>
    %590 = vector.extract_strided_slice %580 {offsets = [0, 128], sizes = [2, 128], strides = [1, 1]} : vector<2x384xf32> to vector<2x128xf32>
    %591 = arith.addf %589, %590 : vector<2x128xf32>
    %592 = arith.negf %591 : vector<2x128xf32>
    %593 = math.exp %592 : vector<2x128xf32>
    %cst_218 = arith.constant 1.000000e+00 : f32
    %594 = vector.broadcast %cst_218 : f32 to vector<2x128xf32>
    %595 = arith.addf %594, %593 : vector<2x128xf32>
    %596 = arith.divf %594, %595 : vector<2x128xf32>
    %597 = vector.extract_strided_slice %577 {offsets = [0, 256], sizes = [2, 128], strides = [1, 1]} : vector<2x384xf32> to vector<2x128xf32>
    %598 = vector.extract_strided_slice %580 {offsets = [0, 256], sizes = [2, 128], strides = [1, 1]} : vector<2x384xf32> to vector<2x128xf32>
    %599 = arith.mulf %588, %598 : vector<2x128xf32>
    %600 = arith.addf %597, %599 : vector<2x128xf32>
    %601 = math.tanh %600 : vector<2x128xf32>
    %cst_219 = arith.constant 1.000000e+00 : f32
    %602 = vector.broadcast %cst_219 : f32 to vector<2x128xf32>
    %603 = arith.subf %602, %596 : vector<2x128xf32>
    %604 = arith.mulf %603, %601 : vector<2x128xf32>
    %605 = arith.mulf %596, %571 : vector<2x128xf32>
    %606 = arith.addf %604, %605 : vector<2x128xf32>
    %607 = vector.extract_strided_slice %146 {offsets = [0, 13], sizes = [2, 1], strides = [1, 1]} : vector<2x20xf32> to vector<2x1xf32>
    %608 = vector.broadcast %607 : vector<2x1xf32> to vector<2x384xf32>
    %609 = vector.broadcast %147 : vector<1x384xf32> to vector<2x384xf32>
    %610 = arith.mulf %608, %609 : vector<2x384xf32>
    %611 = vector.broadcast %149 : vector<1x384xf32> to vector<2x384xf32>
    %612 = arith.addf %610, %611 : vector<2x384xf32>
    %cst_220 = arith.constant dense<0.000000e+00> : vector<2x384xf32>
    %613 = tpu.matmul %606, %148, %cst_220 {dimension_numbers = #tpu.dot_dimension_numbers<[1], [0], [0], [1], [0, 0, 1, 1], [], []>} : vector<2x128xf32>, vector<128x384xf32>, vector<2x384xf32> -> vector<2x384xf32>
    %614 = vector.broadcast %150 : vector<1x384xf32> to vector<2x384xf32>
    %615 = arith.addf %613, %614 : vector<2x384xf32>
    %616 = vector.extract_strided_slice %612 {offsets = [0, 0], sizes = [2, 128], strides = [1, 1]} : vector<2x384xf32> to vector<2x128xf32>
    %617 = vector.extract_strided_slice %615 {offsets = [0, 0], sizes = [2, 128], strides = [1, 1]} : vector<2x384xf32> to vector<2x128xf32>
    %618 = arith.addf %616, %617 : vector<2x128xf32>
    %619 = arith.negf %618 : vector<2x128xf32>
    %620 = math.exp %619 : vector<2x128xf32>
    %cst_221 = arith.constant 1.000000e+00 : f32
    %621 = vector.broadcast %cst_221 : f32 to vector<2x128xf32>
    %622 = arith.addf %621, %620 : vector<2x128xf32>
    %623 = arith.divf %621, %622 : vector<2x128xf32>
    %624 = vector.extract_strided_slice %612 {offsets = [0, 128], sizes = [2, 128], strides = [1, 1]} : vector<2x384xf32> to vector<2x128xf32>
    %625 = vector.extract_strided_slice %615 {offsets = [0, 128], sizes = [2, 128], strides = [1, 1]} : vector<2x384xf32> to vector<2x128xf32>
    %626 = arith.addf %624, %625 : vector<2x128xf32>
    %627 = arith.negf %626 : vector<2x128xf32>
    %628 = math.exp %627 : vector<2x128xf32>
    %cst_222 = arith.constant 1.000000e+00 : f32
    %629 = vector.broadcast %cst_222 : f32 to vector<2x128xf32>
    %630 = arith.addf %629, %628 : vector<2x128xf32>
    %631 = arith.divf %629, %630 : vector<2x128xf32>
    %632 = vector.extract_strided_slice %612 {offsets = [0, 256], sizes = [2, 128], strides = [1, 1]} : vector<2x384xf32> to vector<2x128xf32>
    %633 = vector.extract_strided_slice %615 {offsets = [0, 256], sizes = [2, 128], strides = [1, 1]} : vector<2x384xf32> to vector<2x128xf32>
    %634 = arith.mulf %623, %633 : vector<2x128xf32>
    %635 = arith.addf %632, %634 : vector<2x128xf32>
    %636 = math.tanh %635 : vector<2x128xf32>
    %cst_223 = arith.constant 1.000000e+00 : f32
    %637 = vector.broadcast %cst_223 : f32 to vector<2x128xf32>
    %638 = arith.subf %637, %631 : vector<2x128xf32>
    %639 = arith.mulf %638, %636 : vector<2x128xf32>
    %640 = arith.mulf %631, %606 : vector<2x128xf32>
    %641 = arith.addf %639, %640 : vector<2x128xf32>
    %642 = vector.extract_strided_slice %146 {offsets = [0, 14], sizes = [2, 1], strides = [1, 1]} : vector<2x20xf32> to vector<2x1xf32>
    %643 = vector.broadcast %642 : vector<2x1xf32> to vector<2x384xf32>
    %644 = vector.broadcast %147 : vector<1x384xf32> to vector<2x384xf32>
    %645 = arith.mulf %643, %644 : vector<2x384xf32>
    %646 = vector.broadcast %149 : vector<1x384xf32> to vector<2x384xf32>
    %647 = arith.addf %645, %646 : vector<2x384xf32>
    %cst_224 = arith.constant dense<0.000000e+00> : vector<2x384xf32>
    %648 = tpu.matmul %641, %148, %cst_224 {dimension_numbers = #tpu.dot_dimension_numbers<[1], [0], [0], [1], [0, 0, 1, 1], [], []>} : vector<2x128xf32>, vector<128x384xf32>, vector<2x384xf32> -> vector<2x384xf32>
    %649 = vector.broadcast %150 : vector<1x384xf32> to vector<2x384xf32>
    %650 = arith.addf %648, %649 : vector<2x384xf32>
    %651 = vector.extract_strided_slice %647 {offsets = [0, 0], sizes = [2, 128], strides = [1, 1]} : vector<2x384xf32> to vector<2x128xf32>
    %652 = vector.extract_strided_slice %650 {offsets = [0, 0], sizes = [2, 128], strides = [1, 1]} : vector<2x384xf32> to vector<2x128xf32>
    %653 = arith.addf %651, %652 : vector<2x128xf32>
    %654 = arith.negf %653 : vector<2x128xf32>
    %655 = math.exp %654 : vector<2x128xf32>
    %cst_225 = arith.constant 1.000000e+00 : f32
    %656 = vector.broadcast %cst_225 : f32 to vector<2x128xf32>
    %657 = arith.addf %656, %655 : vector<2x128xf32>
    %658 = arith.divf %656, %657 : vector<2x128xf32>
    %659 = vector.extract_strided_slice %647 {offsets = [0, 128], sizes = [2, 128], strides = [1, 1]} : vector<2x384xf32> to vector<2x128xf32>
    %660 = vector.extract_strided_slice %650 {offsets = [0, 128], sizes = [2, 128], strides = [1, 1]} : vector<2x384xf32> to vector<2x128xf32>
    %661 = arith.addf %659, %660 : vector<2x128xf32>
    %662 = arith.negf %661 : vector<2x128xf32>
    %663 = math.exp %662 : vector<2x128xf32>
    %cst_226 = arith.constant 1.000000e+00 : f32
    %664 = vector.broadcast %cst_226 : f32 to vector<2x128xf32>
    %665 = arith.addf %664, %663 : vector<2x128xf32>
    %666 = arith.divf %664, %665 : vector<2x128xf32>
    %667 = vector.extract_strided_slice %647 {offsets = [0, 256], sizes = [2, 128], strides = [1, 1]} : vector<2x384xf32> to vector<2x128xf32>
    %668 = vector.extract_strided_slice %650 {offsets = [0, 256], sizes = [2, 128], strides = [1, 1]} : vector<2x384xf32> to vector<2x128xf32>
    %669 = arith.mulf %658, %668 : vector<2x128xf32>
    %670 = arith.addf %667, %669 : vector<2x128xf32>
    %671 = math.tanh %670 : vector<2x128xf32>
    %cst_227 = arith.constant 1.000000e+00 : f32
    %672 = vector.broadcast %cst_227 : f32 to vector<2x128xf32>
    %673 = arith.subf %672, %666 : vector<2x128xf32>
    %674 = arith.mulf %673, %671 : vector<2x128xf32>
    %675 = arith.mulf %666, %641 : vector<2x128xf32>
    %676 = arith.addf %674, %675 : vector<2x128xf32>
    %677 = vector.extract_strided_slice %146 {offsets = [0, 15], sizes = [2, 1], strides = [1, 1]} : vector<2x20xf32> to vector<2x1xf32>
    %678 = vector.broadcast %677 : vector<2x1xf32> to vector<2x384xf32>
    %679 = vector.broadcast %147 : vector<1x384xf32> to vector<2x384xf32>
    %680 = arith.mulf %678, %679 : vector<2x384xf32>
    %681 = vector.broadcast %149 : vector<1x384xf32> to vector<2x384xf32>
    %682 = arith.addf %680, %681 : vector<2x384xf32>
    %cst_228 = arith.constant dense<0.000000e+00> : vector<2x384xf32>
    %683 = tpu.matmul %676, %148, %cst_228 {dimension_numbers = #tpu.dot_dimension_numbers<[1], [0], [0], [1], [0, 0, 1, 1], [], []>} : vector<2x128xf32>, vector<128x384xf32>, vector<2x384xf32> -> vector<2x384xf32>
    %684 = vector.broadcast %150 : vector<1x384xf32> to vector<2x384xf32>
    %685 = arith.addf %683, %684 : vector<2x384xf32>
    %686 = vector.extract_strided_slice %682 {offsets = [0, 0], sizes = [2, 128], strides = [1, 1]} : vector<2x384xf32> to vector<2x128xf32>
    %687 = vector.extract_strided_slice %685 {offsets = [0, 0], sizes = [2, 128], strides = [1, 1]} : vector<2x384xf32> to vector<2x128xf32>
    %688 = arith.addf %686, %687 : vector<2x128xf32>
    %689 = arith.negf %688 : vector<2x128xf32>
    %690 = math.exp %689 : vector<2x128xf32>
    %cst_229 = arith.constant 1.000000e+00 : f32
    %691 = vector.broadcast %cst_229 : f32 to vector<2x128xf32>
    %692 = arith.addf %691, %690 : vector<2x128xf32>
    %693 = arith.divf %691, %692 : vector<2x128xf32>
    %694 = vector.extract_strided_slice %682 {offsets = [0, 128], sizes = [2, 128], strides = [1, 1]} : vector<2x384xf32> to vector<2x128xf32>
    %695 = vector.extract_strided_slice %685 {offsets = [0, 128], sizes = [2, 128], strides = [1, 1]} : vector<2x384xf32> to vector<2x128xf32>
    %696 = arith.addf %694, %695 : vector<2x128xf32>
    %697 = arith.negf %696 : vector<2x128xf32>
    %698 = math.exp %697 : vector<2x128xf32>
    %cst_230 = arith.constant 1.000000e+00 : f32
    %699 = vector.broadcast %cst_230 : f32 to vector<2x128xf32>
    %700 = arith.addf %699, %698 : vector<2x128xf32>
    %701 = arith.divf %699, %700 : vector<2x128xf32>
    %702 = vector.extract_strided_slice %682 {offsets = [0, 256], sizes = [2, 128], strides = [1, 1]} : vector<2x384xf32> to vector<2x128xf32>
    %703 = vector.extract_strided_slice %685 {offsets = [0, 256], sizes = [2, 128], strides = [1, 1]} : vector<2x384xf32> to vector<2x128xf32>
    %704 = arith.mulf %693, %703 : vector<2x128xf32>
    %705 = arith.addf %702, %704 : vector<2x128xf32>
    %706 = math.tanh %705 : vector<2x128xf32>
    %cst_231 = arith.constant 1.000000e+00 : f32
    %707 = vector.broadcast %cst_231 : f32 to vector<2x128xf32>
    %708 = arith.subf %707, %701 : vector<2x128xf32>
    %709 = arith.mulf %708, %706 : vector<2x128xf32>
    %710 = arith.mulf %701, %676 : vector<2x128xf32>
    %711 = arith.addf %709, %710 : vector<2x128xf32>
    %712 = vector.extract_strided_slice %146 {offsets = [0, 16], sizes = [2, 1], strides = [1, 1]} : vector<2x20xf32> to vector<2x1xf32>
    %713 = vector.broadcast %712 : vector<2x1xf32> to vector<2x384xf32>
    %714 = vector.broadcast %147 : vector<1x384xf32> to vector<2x384xf32>
    %715 = arith.mulf %713, %714 : vector<2x384xf32>
    %716 = vector.broadcast %149 : vector<1x384xf32> to vector<2x384xf32>
    %717 = arith.addf %715, %716 : vector<2x384xf32>
    %cst_232 = arith.constant dense<0.000000e+00> : vector<2x384xf32>
    %718 = tpu.matmul %711, %148, %cst_232 {dimension_numbers = #tpu.dot_dimension_numbers<[1], [0], [0], [1], [0, 0, 1, 1], [], []>} : vector<2x128xf32>, vector<128x384xf32>, vector<2x384xf32> -> vector<2x384xf32>
    %719 = vector.broadcast %150 : vector<1x384xf32> to vector<2x384xf32>
    %720 = arith.addf %718, %719 : vector<2x384xf32>
    %721 = vector.extract_strided_slice %717 {offsets = [0, 0], sizes = [2, 128], strides = [1, 1]} : vector<2x384xf32> to vector<2x128xf32>
    %722 = vector.extract_strided_slice %720 {offsets = [0, 0], sizes = [2, 128], strides = [1, 1]} : vector<2x384xf32> to vector<2x128xf32>
    %723 = arith.addf %721, %722 : vector<2x128xf32>
    %724 = arith.negf %723 : vector<2x128xf32>
    %725 = math.exp %724 : vector<2x128xf32>
    %cst_233 = arith.constant 1.000000e+00 : f32
    %726 = vector.broadcast %cst_233 : f32 to vector<2x128xf32>
    %727 = arith.addf %726, %725 : vector<2x128xf32>
    %728 = arith.divf %726, %727 : vector<2x128xf32>
    %729 = vector.extract_strided_slice %717 {offsets = [0, 128], sizes = [2, 128], strides = [1, 1]} : vector<2x384xf32> to vector<2x128xf32>
    %730 = vector.extract_strided_slice %720 {offsets = [0, 128], sizes = [2, 128], strides = [1, 1]} : vector<2x384xf32> to vector<2x128xf32>
    %731 = arith.addf %729, %730 : vector<2x128xf32>
    %732 = arith.negf %731 : vector<2x128xf32>
    %733 = math.exp %732 : vector<2x128xf32>
    %cst_234 = arith.constant 1.000000e+00 : f32
    %734 = vector.broadcast %cst_234 : f32 to vector<2x128xf32>
    %735 = arith.addf %734, %733 : vector<2x128xf32>
    %736 = arith.divf %734, %735 : vector<2x128xf32>
    %737 = vector.extract_strided_slice %717 {offsets = [0, 256], sizes = [2, 128], strides = [1, 1]} : vector<2x384xf32> to vector<2x128xf32>
    %738 = vector.extract_strided_slice %720 {offsets = [0, 256], sizes = [2, 128], strides = [1, 1]} : vector<2x384xf32> to vector<2x128xf32>
    %739 = arith.mulf %728, %738 : vector<2x128xf32>
    %740 = arith.addf %737, %739 : vector<2x128xf32>
    %741 = math.tanh %740 : vector<2x128xf32>
    %cst_235 = arith.constant 1.000000e+00 : f32
    %742 = vector.broadcast %cst_235 : f32 to vector<2x128xf32>
    %743 = arith.subf %742, %736 : vector<2x128xf32>
    %744 = arith.mulf %743, %741 : vector<2x128xf32>
    %745 = arith.mulf %736, %711 : vector<2x128xf32>
    %746 = arith.addf %744, %745 : vector<2x128xf32>
    %747 = vector.extract_strided_slice %146 {offsets = [0, 17], sizes = [2, 1], strides = [1, 1]} : vector<2x20xf32> to vector<2x1xf32>
    %748 = vector.broadcast %747 : vector<2x1xf32> to vector<2x384xf32>
    %749 = vector.broadcast %147 : vector<1x384xf32> to vector<2x384xf32>
    %750 = arith.mulf %748, %749 : vector<2x384xf32>
    %751 = vector.broadcast %149 : vector<1x384xf32> to vector<2x384xf32>
    %752 = arith.addf %750, %751 : vector<2x384xf32>
    %cst_236 = arith.constant dense<0.000000e+00> : vector<2x384xf32>
    %753 = tpu.matmul %746, %148, %cst_236 {dimension_numbers = #tpu.dot_dimension_numbers<[1], [0], [0], [1], [0, 0, 1, 1], [], []>} : vector<2x128xf32>, vector<128x384xf32>, vector<2x384xf32> -> vector<2x384xf32>
    %754 = vector.broadcast %150 : vector<1x384xf32> to vector<2x384xf32>
    %755 = arith.addf %753, %754 : vector<2x384xf32>
    %756 = vector.extract_strided_slice %752 {offsets = [0, 0], sizes = [2, 128], strides = [1, 1]} : vector<2x384xf32> to vector<2x128xf32>
    %757 = vector.extract_strided_slice %755 {offsets = [0, 0], sizes = [2, 128], strides = [1, 1]} : vector<2x384xf32> to vector<2x128xf32>
    %758 = arith.addf %756, %757 : vector<2x128xf32>
    %759 = arith.negf %758 : vector<2x128xf32>
    %760 = math.exp %759 : vector<2x128xf32>
    %cst_237 = arith.constant 1.000000e+00 : f32
    %761 = vector.broadcast %cst_237 : f32 to vector<2x128xf32>
    %762 = arith.addf %761, %760 : vector<2x128xf32>
    %763 = arith.divf %761, %762 : vector<2x128xf32>
    %764 = vector.extract_strided_slice %752 {offsets = [0, 128], sizes = [2, 128], strides = [1, 1]} : vector<2x384xf32> to vector<2x128xf32>
    %765 = vector.extract_strided_slice %755 {offsets = [0, 128], sizes = [2, 128], strides = [1, 1]} : vector<2x384xf32> to vector<2x128xf32>
    %766 = arith.addf %764, %765 : vector<2x128xf32>
    %767 = arith.negf %766 : vector<2x128xf32>
    %768 = math.exp %767 : vector<2x128xf32>
    %cst_238 = arith.constant 1.000000e+00 : f32
    %769 = vector.broadcast %cst_238 : f32 to vector<2x128xf32>
    %770 = arith.addf %769, %768 : vector<2x128xf32>
    %771 = arith.divf %769, %770 : vector<2x128xf32>
    %772 = vector.extract_strided_slice %752 {offsets = [0, 256], sizes = [2, 128], strides = [1, 1]} : vector<2x384xf32> to vector<2x128xf32>
    %773 = vector.extract_strided_slice %755 {offsets = [0, 256], sizes = [2, 128], strides = [1, 1]} : vector<2x384xf32> to vector<2x128xf32>
    %774 = arith.mulf %763, %773 : vector<2x128xf32>
    %775 = arith.addf %772, %774 : vector<2x128xf32>
    %776 = math.tanh %775 : vector<2x128xf32>
    %cst_239 = arith.constant 1.000000e+00 : f32
    %777 = vector.broadcast %cst_239 : f32 to vector<2x128xf32>
    %778 = arith.subf %777, %771 : vector<2x128xf32>
    %779 = arith.mulf %778, %776 : vector<2x128xf32>
    %780 = arith.mulf %771, %746 : vector<2x128xf32>
    %781 = arith.addf %779, %780 : vector<2x128xf32>
    %782 = vector.extract_strided_slice %146 {offsets = [0, 18], sizes = [2, 1], strides = [1, 1]} : vector<2x20xf32> to vector<2x1xf32>
    %783 = vector.broadcast %782 : vector<2x1xf32> to vector<2x384xf32>
    %784 = vector.broadcast %147 : vector<1x384xf32> to vector<2x384xf32>
    %785 = arith.mulf %783, %784 : vector<2x384xf32>
    %786 = vector.broadcast %149 : vector<1x384xf32> to vector<2x384xf32>
    %787 = arith.addf %785, %786 : vector<2x384xf32>
    %cst_240 = arith.constant dense<0.000000e+00> : vector<2x384xf32>
    %788 = tpu.matmul %781, %148, %cst_240 {dimension_numbers = #tpu.dot_dimension_numbers<[1], [0], [0], [1], [0, 0, 1, 1], [], []>} : vector<2x128xf32>, vector<128x384xf32>, vector<2x384xf32> -> vector<2x384xf32>
    %789 = vector.broadcast %150 : vector<1x384xf32> to vector<2x384xf32>
    %790 = arith.addf %788, %789 : vector<2x384xf32>
    %791 = vector.extract_strided_slice %787 {offsets = [0, 0], sizes = [2, 128], strides = [1, 1]} : vector<2x384xf32> to vector<2x128xf32>
    %792 = vector.extract_strided_slice %790 {offsets = [0, 0], sizes = [2, 128], strides = [1, 1]} : vector<2x384xf32> to vector<2x128xf32>
    %793 = arith.addf %791, %792 : vector<2x128xf32>
    %794 = arith.negf %793 : vector<2x128xf32>
    %795 = math.exp %794 : vector<2x128xf32>
    %cst_241 = arith.constant 1.000000e+00 : f32
    %796 = vector.broadcast %cst_241 : f32 to vector<2x128xf32>
    %797 = arith.addf %796, %795 : vector<2x128xf32>
    %798 = arith.divf %796, %797 : vector<2x128xf32>
    %799 = vector.extract_strided_slice %787 {offsets = [0, 128], sizes = [2, 128], strides = [1, 1]} : vector<2x384xf32> to vector<2x128xf32>
    %800 = vector.extract_strided_slice %790 {offsets = [0, 128], sizes = [2, 128], strides = [1, 1]} : vector<2x384xf32> to vector<2x128xf32>
    %801 = arith.addf %799, %800 : vector<2x128xf32>
    %802 = arith.negf %801 : vector<2x128xf32>
    %803 = math.exp %802 : vector<2x128xf32>
    %cst_242 = arith.constant 1.000000e+00 : f32
    %804 = vector.broadcast %cst_242 : f32 to vector<2x128xf32>
    %805 = arith.addf %804, %803 : vector<2x128xf32>
    %806 = arith.divf %804, %805 : vector<2x128xf32>
    %807 = vector.extract_strided_slice %787 {offsets = [0, 256], sizes = [2, 128], strides = [1, 1]} : vector<2x384xf32> to vector<2x128xf32>
    %808 = vector.extract_strided_slice %790 {offsets = [0, 256], sizes = [2, 128], strides = [1, 1]} : vector<2x384xf32> to vector<2x128xf32>
    %809 = arith.mulf %798, %808 : vector<2x128xf32>
    %810 = arith.addf %807, %809 : vector<2x128xf32>
    %811 = math.tanh %810 : vector<2x128xf32>
    %cst_243 = arith.constant 1.000000e+00 : f32
    %812 = vector.broadcast %cst_243 : f32 to vector<2x128xf32>
    %813 = arith.subf %812, %806 : vector<2x128xf32>
    %814 = arith.mulf %813, %811 : vector<2x128xf32>
    %815 = arith.mulf %806, %781 : vector<2x128xf32>
    %816 = arith.addf %814, %815 : vector<2x128xf32>
    %817 = vector.extract_strided_slice %146 {offsets = [0, 19], sizes = [2, 1], strides = [1, 1]} : vector<2x20xf32> to vector<2x1xf32>
    %818 = vector.broadcast %817 : vector<2x1xf32> to vector<2x384xf32>
    %819 = vector.broadcast %147 : vector<1x384xf32> to vector<2x384xf32>
    %820 = arith.mulf %818, %819 : vector<2x384xf32>
    %821 = vector.broadcast %149 : vector<1x384xf32> to vector<2x384xf32>
    %822 = arith.addf %820, %821 : vector<2x384xf32>
    %cst_244 = arith.constant dense<0.000000e+00> : vector<2x384xf32>
    %823 = tpu.matmul %816, %148, %cst_244 {dimension_numbers = #tpu.dot_dimension_numbers<[1], [0], [0], [1], [0, 0, 1, 1], [], []>} : vector<2x128xf32>, vector<128x384xf32>, vector<2x384xf32> -> vector<2x384xf32>
    %824 = vector.broadcast %150 : vector<1x384xf32> to vector<2x384xf32>
    %825 = arith.addf %823, %824 : vector<2x384xf32>
    %826 = vector.extract_strided_slice %822 {offsets = [0, 0], sizes = [2, 128], strides = [1, 1]} : vector<2x384xf32> to vector<2x128xf32>
    %827 = vector.extract_strided_slice %825 {offsets = [0, 0], sizes = [2, 128], strides = [1, 1]} : vector<2x384xf32> to vector<2x128xf32>
    %828 = arith.addf %826, %827 : vector<2x128xf32>
    %829 = arith.negf %828 : vector<2x128xf32>
    %830 = math.exp %829 : vector<2x128xf32>
    %cst_245 = arith.constant 1.000000e+00 : f32
    %831 = vector.broadcast %cst_245 : f32 to vector<2x128xf32>
    %832 = arith.addf %831, %830 : vector<2x128xf32>
    %833 = arith.divf %831, %832 : vector<2x128xf32>
    %834 = vector.extract_strided_slice %822 {offsets = [0, 128], sizes = [2, 128], strides = [1, 1]} : vector<2x384xf32> to vector<2x128xf32>
    %835 = vector.extract_strided_slice %825 {offsets = [0, 128], sizes = [2, 128], strides = [1, 1]} : vector<2x384xf32> to vector<2x128xf32>
    %836 = arith.addf %834, %835 : vector<2x128xf32>
    %837 = arith.negf %836 : vector<2x128xf32>
    %838 = math.exp %837 : vector<2x128xf32>
    %cst_246 = arith.constant 1.000000e+00 : f32
    %839 = vector.broadcast %cst_246 : f32 to vector<2x128xf32>
    %840 = arith.addf %839, %838 : vector<2x128xf32>
    %841 = arith.divf %839, %840 : vector<2x128xf32>
    %842 = vector.extract_strided_slice %822 {offsets = [0, 256], sizes = [2, 128], strides = [1, 1]} : vector<2x384xf32> to vector<2x128xf32>
    %843 = vector.extract_strided_slice %825 {offsets = [0, 256], sizes = [2, 128], strides = [1, 1]} : vector<2x384xf32> to vector<2x128xf32>
    %844 = arith.mulf %833, %843 : vector<2x128xf32>
    %845 = arith.addf %842, %844 : vector<2x128xf32>
    %846 = math.tanh %845 : vector<2x128xf32>
    %cst_247 = arith.constant 1.000000e+00 : f32
    %847 = vector.broadcast %cst_247 : f32 to vector<2x128xf32>
    %848 = arith.subf %847, %841 : vector<2x128xf32>
    %849 = arith.mulf %848, %846 : vector<2x128xf32>
    %850 = arith.mulf %841, %816 : vector<2x128xf32>
    %851 = arith.addf %849, %850 : vector<2x128xf32>
    %c0_248 = arith.constant 0 : index
    %c0_249 = arith.constant 0 : index
    %852 = vector.load %arg19[%c0_248, %c0_249] : memref<128x10xf32, #tpu.memory_space<vmem>>, vector<128x10xf32>
    %cst_250 = arith.constant dense<0.000000e+00> : vector<2x10xf32>
    %853 = tpu.matmul %851, %852, %cst_250 {dimension_numbers = #tpu.dot_dimension_numbers<[1], [0], [0], [1], [0, 0, 1, 1], [], []>} : vector<2x128xf32>, vector<128x10xf32>, vector<2x10xf32> -> vector<2x10xf32>
    %c0_251 = arith.constant 0 : index
    %c0_252 = arith.constant 0 : index
    %854 = vector.load %arg20[%c0_251, %c0_252] : memref<1x10xf32, #tpu.memory_space<vmem>>, vector<1x10xf32>
    %855 = vector.broadcast %854 : vector<1x10xf32> to vector<2x10xf32>
    %856 = arith.addf %853, %855 : vector<2x10xf32>
    %c0_253 = arith.constant 0 : index
    %c0_254 = arith.constant 0 : index
    %857 = vector.load %arg21[%c0_253, %c0_254] : memref<128x256xf32, #tpu.memory_space<vmem>>, vector<128x256xf32>
    %cst_255 = arith.constant dense<0.000000e+00> : vector<2x256xf32>
    %858 = tpu.matmul %145, %857, %cst_255 {dimension_numbers = #tpu.dot_dimension_numbers<[1], [0], [0], [1], [0, 0, 1, 1], [], []>} : vector<2x128xf32>, vector<128x256xf32>, vector<2x256xf32> -> vector<2x256xf32>
    %c0_256 = arith.constant 0 : index
    %c0_257 = arith.constant 0 : index
    %859 = vector.load %arg22[%c0_256, %c0_257] : memref<128x256xf32, #tpu.memory_space<vmem>>, vector<128x256xf32>
    %cst_258 = arith.constant dense<0.000000e+00> : vector<2x256xf32>
    %860 = tpu.matmul %851, %859, %cst_258 {dimension_numbers = #tpu.dot_dimension_numbers<[1], [0], [0], [1], [0, 0, 1, 1], [], []>} : vector<2x128xf32>, vector<128x256xf32>, vector<2x256xf32> -> vector<2x256xf32>
    %861 = arith.addf %858, %860 : vector<2x256xf32>
    %c0_259 = arith.constant 0 : index
    %c0_260 = arith.constant 0 : index
    %862 = vector.load %arg23[%c0_259, %c0_260] : memref<1x256xf32, #tpu.memory_space<vmem>>, vector<1x256xf32>
    %863 = vector.broadcast %862 : vector<1x256xf32> to vector<2x256xf32>
    %864 = arith.addf %861, %863 : vector<2x256xf32>
    %cst_261 = arith.constant 0.000000e+00 : f32
    %865 = vector.broadcast %cst_261 : f32 to vector<2x256xf32>
    %866 = arith.maximumf %864, %865 : vector<2x256xf32>
    %c0_262 = arith.constant 0 : index
    %c0_263 = arith.constant 0 : index
    %867 = vector.load %arg24[%c0_262, %c0_263] : memref<256x84xf32, #tpu.memory_space<vmem>>, vector<256x84xf32>
    %cst_264 = arith.constant dense<0.000000e+00> : vector<2x84xf32>
    %868 = tpu.matmul %866, %867, %cst_264 {dimension_numbers = #tpu.dot_dimension_numbers<[1], [0], [0], [1], [0, 0, 1, 1], [], []>} : vector<2x256xf32>, vector<256x84xf32>, vector<2x84xf32> -> vector<2x84xf32>
    %c0_265 = arith.constant 0 : index
    %c0_266 = arith.constant 0 : index
    %869 = vector.load %arg25[%c0_265, %c0_266] : memref<1x84xf32, #tpu.memory_space<vmem>>, vector<1x84xf32>
    %870 = vector.broadcast %869 : vector<1x84xf32> to vector<2x84xf32>
    %871 = arith.addf %868, %870 : vector<2x84xf32>
    %cst_267 = arith.constant 0.000000e+00 : f32
    %872 = vector.broadcast %cst_267 : f32 to vector<2x84xf32>
    %873 = arith.maximumf %871, %872 : vector<2x84xf32>
    %c0_268 = arith.constant 0 : index
    %c0_269 = arith.constant 0 : index
    %874 = vector.load %arg26[%c0_268, %c0_269] : memref<84x10xf32, #tpu.memory_space<vmem>>, vector<84x10xf32>
    %cst_270 = arith.constant dense<0.000000e+00> : vector<2x10xf32>
    %875 = tpu.matmul %873, %874, %cst_270 {dimension_numbers = #tpu.dot_dimension_numbers<[1], [0], [0], [1], [0, 0, 1, 1], [], []>} : vector<2x84xf32>, vector<84x10xf32>, vector<2x10xf32> -> vector<2x10xf32>
    %c0_271 = arith.constant 0 : index
    %c0_272 = arith.constant 0 : index
    %876 = vector.load %arg27[%c0_271, %c0_272] : memref<1x10xf32, #tpu.memory_space<vmem>>, vector<1x10xf32>
    %877 = vector.broadcast %876 : vector<1x10xf32> to vector<2x10xf32>
    %878 = arith.addf %875, %877 : vector<2x10xf32>
    %c0_273 = arith.constant 0 : index
    %c0_274 = arith.constant 0 : index
    %879 = vector.load %arg28[%c0_273, %c0_274] : memref<2x10xf32, #tpu.memory_space<vmem>>, vector<2x10xf32>
    tpu.vector_store %arg28[%c0_273, %c0_274], %878 {strides = array<i32>} : memref<2x10xf32, #tpu.memory_space<vmem>>, vector<2x10xf32>,
    %c0_275 = arith.constant 0 : index
    %c0_276 = arith.constant 0 : index
    %880 = vector.load %arg29[%c0_275, %c0_276] : memref<2x10xf32, #tpu.memory_space<vmem>>, vector<2x10xf32>
    tpu.vector_store %arg29[%c0_275, %c0_276], %856 {strides = array<i32>} : memref<2x10xf32, #tpu.memory_space<vmem>>, vector<2x10xf32>,
    return
  }
}

</mosaic_0001>

<llo_original>
// kernel: watermarked_net_forward.1
$region0: #{watermarked_net_forward.1}
  #allocation0 [shape = 'u32[]', space=smem, size = 0x4, offset = 0x4, fixed_abs, tag = 'smem constant byte address 0x4 - core index']
  #allocation1 [shape = 'u32[144,128]{1,0:T(1,128)}', space=vmem, size = 0x12000, scoped, tag = 'internal scratch']
  %s0 = inlined_call_operand.smem [shape: u32[30], index: -1, kind: input, shape index: {}]
  %s1 = sld [smem:[%s0]]
  %s2 = scalar_lea.smem %s0, 1
  %s3 = sld [smem:[%s2]]
  %s4 = scalar_lea.smem %s0, 2
  %s5 = sld [smem:[%s4]]
  %s6 = scalar_lea.smem %s0, 3
  %s7 = sld [smem:[%s6]]
  %s8 = scalar_lea.smem %s0, 4
  %s9 = sld [smem:[%s8]]
  %s10 = scalar_lea.smem %s0, 5
  %s11 = sld [smem:[%s10]]
  %s12 = scalar_lea.smem %s0, 6
  %s13 = sld [smem:[%s12]]
  %s14 = scalar_lea.smem %s0, 7
  %s15 = sld [smem:[%s14]]
  %s16 = scalar_lea.smem %s0, 8
  %s17 = sld [smem:[%s16]]
  %s18 = scalar_lea.smem %s0, 9
  %s19 = sld [smem:[%s18]]
  %s20 = scalar_lea.smem %s0, 10
  %s21 = sld [smem:[%s20]]
  %s22 = scalar_lea.smem %s0, 11
  %s23 = sld [smem:[%s22]]
  %s24 = scalar_lea.smem %s0, 12
  %s25 = sld [smem:[%s24]]
  %s26 = scalar_lea.smem %s0, 13
  %s27 = sld [smem:[%s26]]
  %s28 = scalar_lea.smem %s0, 14
  %s29 = sld [smem:[%s28]]
  %s30 = scalar_lea.smem %s0, 15
  %s31 = sld [smem:[%s30]]
  %s32 = scalar_lea.smem %s0, 16
  %s33 = sld [smem:[%s32]]
  %s34 = scalar_lea.smem %s0, 17
  %s35 = sld [smem:[%s34]]
  %s36 = scalar_lea.smem %s0, 18
  %s37 = sld [smem:[%s36]]
  %s38 = scalar_lea.smem %s0, 19
  %s39 = sld [smem:[%s38]]
  %s40 = scalar_lea.smem %s0, 20
  %s41 = sld [smem:[%s40]]
  %s42 = scalar_lea.smem %s0, 21
  %s43 = sld [smem:[%s42]]
  %s44 = scalar_lea.smem %s0, 22
  %s45 = sld [smem:[%s44]]
  %s46 = scalar_lea.smem %s0, 23
  %s47 = sld [smem:[%s46]]
  %s48 = scalar_lea.smem %s0, 24
  %s49 = sld [smem:[%s48]]
  %s50 = scalar_lea.smem %s0, 25
  %s51 = sld [smem:[%s50]]
  %s52 = scalar_lea.smem %s0, 26
  %s53 = sld [smem:[%s52]]
  %s54 = scalar_lea.smem %s0, 27
  %s55 = sld [smem:[%s54]]
  %s56 = scalar_lea.smem %s0, 28
  %s57 = sld [smem:[%s56]]
  %s58 = scalar_lea.smem %s0, 29
  %s59 = sld [smem:[%s58]]
  %60 = xla_tuple %s57, %s59
  %s61 = sld [smem:[#allocation0]]
  $region130: #{watermarked_net_forward.1} parent=0
    _
  %s63 = ssub.s32 1, %s61
  %s64 = scalar_select 0, %s63, %s61
  $region1: #{watermarked_net_forward.1} parent=0
    #allocation2 [shape = 'u8[1024]{0}', space=vmem, size = 0x400, scoped, tag = 'output window, operand 0, single buffered']
    #allocation3 [shape = 's32[1]{0}', space=sflag, size = 0x4, scoped, tag = 'scoped memory for watermarked_net_forward.1']
    #allocation4 [shape = 'u8[1024]{0}', space=vmem, size = 0x400, scoped, tag = 'output window, operand 1, single buffered']
    #allocation5 [shape = 's32[1]{0}', space=sflag, size = 0x4, scoped, tag = 'scoped memory for watermarked_net_forward.1']
    %65 = vsyncpa [#allocation3], 0
    %66 = vsyncpa [#allocation5], 0
    // Predicated region
    $region2: #{watermarked_net_forward.1} parent=1 // pred_check
      _
    $region3: #{watermarked_net_forward.1} parent=1 // pred_check_branch
      %68 = sbr.rel (0) target = $region5
    $region4: #{watermarked_net_forward.1} parent=1 // pred_region
      _
    $region5: #{watermarked_net_forward.1} parent=1 // pred_fallthru
      _
    // Predicated region
    $region6: #{watermarked_net_forward.1} parent=1 // pred_check
      _
    $region7: #{watermarked_net_forward.1} parent=1 // pred_check_branch
      %70 = sbr.rel (0) target = $region9
    $region8: #{watermarked_net_forward.1} parent=1 // pred_region
      _
    $region9: #{watermarked_net_forward.1} parent=1 // pred_fallthru
      _
    // Predicated region
    $region10: #{watermarked_net_forward.1} parent=1 // pred_check
      _
    $region11: #{watermarked_net_forward.1} parent=1 // pred_check_branch
      %72 = sbr.rel (0) target = $region13
    $region12: #{watermarked_net_forward.1} parent=1 // pred_region
      _
    $region13: #{watermarked_net_forward.1} parent=1 // pred_fallthru
      _
    // Predicated region
    $region14: #{watermarked_net_forward.1} parent=1 // pred_check
      _
    $region15: #{watermarked_net_forward.1} parent=1 // pred_check_branch
      %74 = sbr.rel (0) target = $region17
    $region16: #{watermarked_net_forward.1} parent=1 // pred_region
      _
    $region17: #{watermarked_net_forward.1} parent=1 // pred_fallthru
      _
    // Predicated region
    $region18: #{watermarked_net_forward.1} parent=1 // pred_check
      _
    $region19: #{watermarked_net_forward.1} parent=1 // pred_check_branch
      %76 = sbr.rel (0) target = $region21
    $region20: #{watermarked_net_forward.1} parent=1 // pred_region
      _
    $region21: #{watermarked_net_forward.1} parent=1 // pred_fallthru
      _
    // Predicated region
    $region22: #{watermarked_net_forward.1} parent=1 // pred_check
      _
    $region23: #{watermarked_net_forward.1} parent=1 // pred_check_branch
      %78 = sbr.rel (0) target = $region25
    $region24: #{watermarked_net_forward.1} parent=1 // pred_region
      _
    $region25: #{watermarked_net_forward.1} parent=1 // pred_fallthru
      _
    // Predicated region
    $region26: #{watermarked_net_forward.1} parent=1 // pred_check
      _
    $region27: #{watermarked_net_forward.1} parent=1 // pred_check_branch
      %80 = sbr.rel (0) target = $region29
    $region28: #{watermarked_net_forward.1} parent=1 // pred_region
      _
    $region29: #{watermarked_net_forward.1} parent=1 // pred_fallthru
      _
    // Predicated region
    $region30: #{watermarked_net_forward.1} parent=1 // pred_check
      _
    $region31: #{watermarked_net_forward.1} parent=1 // pred_check_branch
      %82 = sbr.rel (0) target = $region33
    $region32: #{watermarked_net_forward.1} parent=1 // pred_region
      _
    $region33: #{watermarked_net_forward.1} parent=1 // pred_fallthru
      _
    // Predicated region
    $region34: #{watermarked_net_forward.1} parent=1 // pred_check
      _
    $region35: #{watermarked_net_forward.1} parent=1 // pred_check_branch
      %84 = sbr.rel (0) target = $region37
    $region36: #{watermarked_net_forward.1} parent=1 // pred_region
      _
    $region37: #{watermarked_net_forward.1} parent=1 // pred_fallthru
      _
    // Predicated region
    $region38: #{watermarked_net_forward.1} parent=1 // pred_check
      _
    $region39: #{watermarked_net_forward.1} parent=1 // pred_check_branch
      %86 = sbr.rel (0) target = $region41
    $region40: #{watermarked_net_forward.1} parent=1 // pred_region
      _
    $region41: #{watermarked_net_forward.1} parent=1 // pred_fallthru
      _
    // Predicated region
    $region42: #{watermarked_net_forward.1} parent=1 // pred_check
      _
    $region43: #{watermarked_net_forward.1} parent=1 // pred_check_branch
      %88 = sbr.rel (0) target = $region45
    $region44: #{watermarked_net_forward.1} parent=1 // pred_region
      _
    $region45: #{watermarked_net_forward.1} parent=1 // pred_fallthru
      _
    // Predicated region
    $region46: #{watermarked_net_forward.1} parent=1 // pred_check
      _
    $region47: #{watermarked_net_forward.1} parent=1 // pred_check_branch
      %90 = sbr.rel (0) target = $region49
    $region48: #{watermarked_net_forward.1} parent=1 // pred_region
      _
    $region49: #{watermarked_net_forward.1} parent=1 // pred_fallthru
      _
    // Predicated region
    $region50: #{watermarked_net_forward.1} parent=1 // pred_check
      _
    $region51: #{watermarked_net_forward.1} parent=1 // pred_check_branch
      %92 = sbr.rel (0) target = $region53
    $region52: #{watermarked_net_forward.1} parent=1 // pred_region
      _
    $region53: #{watermarked_net_forward.1} parent=1 // pred_fallthru
      _
    // Predicated region
    $region54: #{watermarked_net_forward.1} parent=1 // pred_check
      _
    $region55: #{watermarked_net_forward.1} parent=1 // pred_check_branch
      %94 = sbr.rel (0) target = $region57
    $region56: #{watermarked_net_forward.1} parent=1 // pred_region
      _
    $region57: #{watermarked_net_forward.1} parent=1 // pred_fallthru
      _
    // Predicated region
    $region58: #{watermarked_net_forward.1} parent=1 // pred_check
      _
    $region59: #{watermarked_net_forward.1} parent=1 // pred_check_branch
      %96 = sbr.rel (0) target = $region61
    $region60: #{watermarked_net_forward.1} parent=1 // pred_region
      _
    $region61: #{watermarked_net_forward.1} parent=1 // pred_fallthru
      _
    // Predicated region
    $region62: #{watermarked_net_forward.1} parent=1 // pred_check
      _
    $region63: #{watermarked_net_forward.1} parent=1 // pred_check_branch
      %98 = sbr.rel (0) target = $region65
    $region64: #{watermarked_net_forward.1} parent=1 // pred_region
      _
    $region65: #{watermarked_net_forward.1} parent=1 // pred_fallthru
      _
    // Predicated region
    $region66: #{watermarked_net_forward.1} parent=1 // pred_check
      _
    $region67: #{watermarked_net_forward.1} parent=1 // pred_check_branch
      %100 = sbr.rel (0) target = $region69
    $region68: #{watermarked_net_forward.1} parent=1 // pred_region
      _
    $region69: #{watermarked_net_forward.1} parent=1 // pred_fallthru
      _
    // Predicated region
    $region70: #{watermarked_net_forward.1} parent=1 // pred_check
      _
    $region71: #{watermarked_net_forward.1} parent=1 // pred_check_branch
      %102 = sbr.rel (0) target = $region73
    $region72: #{watermarked_net_forward.1} parent=1 // pred_region
      _
    $region73: #{watermarked_net_forward.1} parent=1 // pred_fallthru
      _
    // Predicated region
    $region74: #{watermarked_net_forward.1} parent=1 // pred_check
      _
    $region75: #{watermarked_net_forward.1} parent=1 // pred_check_branch
      %104 = sbr.rel (0) target = $region77
    $region76: #{watermarked_net_forward.1} parent=1 // pred_region
      _
    $region77: #{watermarked_net_forward.1} parent=1 // pred_fallthru
      _
    // Predicated region
    $region78: #{watermarked_net_forward.1} parent=1 // pred_check
      _
    $region79: #{watermarked_net_forward.1} parent=1 // pred_check_branch
      %106 = sbr.rel (0) target = $region81
    $region80: #{watermarked_net_forward.1} parent=1 // pred_region
      _
    $region81: #{watermarked_net_forward.1} parent=1 // pred_fallthru
      _
    // Predicated region
    $region82: #{watermarked_net_forward.1} parent=1 // pred_check
      _
    $region83: #{watermarked_net_forward.1} parent=1 // pred_check_branch
      %108 = sbr.rel (0) target = $region85
    $region84: #{watermarked_net_forward.1} parent=1 // pred_region
      _
    $region85: #{watermarked_net_forward.1} parent=1 // pred_fallthru
      _
    // Predicated region
    $region86: #{watermarked_net_forward.1} parent=1 // pred_check
      _
    $region87: #{watermarked_net_forward.1} parent=1 // pred_check_branch
      %110 = sbr.rel (0) target = $region89
    $region88: #{watermarked_net_forward.1} parent=1 // pred_region
      _
    $region89: #{watermarked_net_forward.1} parent=1 // pred_fallthru
      _
    // Predicated region
    $region90: #{watermarked_net_forward.1} parent=1 // pred_check
      _
    $region91: #{watermarked_net_forward.1} parent=1 // pred_check_branch
      %112 = sbr.rel (0) target = $region93
    $region92: #{watermarked_net_forward.1} parent=1 // pred_region
      _
    $region93: #{watermarked_net_forward.1} parent=1 // pred_fallthru
      _
    // Predicated region
    $region94: #{watermarked_net_forward.1} parent=1 // pred_check
      _
    $region95: #{watermarked_net_forward.1} parent=1 // pred_check_branch
      %114 = sbr.rel (0) target = $region97
    $region96: #{watermarked_net_forward.1} parent=1 // pred_region
      _
    $region97: #{watermarked_net_forward.1} parent=1 // pred_fallthru
      _
    // Predicated region
    $region98: #{watermarked_net_forward.1} parent=1 // pred_check
      _
    $region99: #{watermarked_net_forward.1} parent=1 // pred_check_branch
      %116 = sbr.rel (0) target = $region101
    $region100: #{watermarked_net_forward.1} parent=1 // pred_region
      _
    $region101: #{watermarked_net_forward.1} parent=1 // pred_fallthru
      _
    // Predicated region
    $region102: #{watermarked_net_forward.1} parent=1 // pred_check
      _
    $region103: #{watermarked_net_forward.1} parent=1 // pred_check_branch
      %118 = sbr.rel (0) target = $region105
    $region104: #{watermarked_net_forward.1} parent=1 // pred_region
      _
    $region105: #{watermarked_net_forward.1} parent=1 // pred_fallthru
      _
    // Predicated region
    $region106: #{watermarked_net_forward.1} parent=1 // pred_check
      _
    $region107: #{watermarked_net_forward.1} parent=1 // pred_check_branch
      %120 = sbr.rel (0) target = $region109
    $region108: #{watermarked_net_forward.1} parent=1 // pred_region
      _
    $region109: #{watermarked_net_forward.1} parent=1 // pred_fallthru
      _
    // Predicated region
    $region110: #{watermarked_net_forward.1} parent=1 // pred_check
      _
    $region111: #{watermarked_net_forward.1} parent=1 // pred_check_branch
      %122 = sbr.rel (0) target = $region113
    $region112: #{watermarked_net_forward.1} parent=1 // pred_region
      _
    $region113: #{watermarked_net_forward.1} parent=1 // pred_fallthru
      _
    %v123 = vld [vmem:[%s1] sm:$0xff]
    %v124 = vld [vmem:[%s1 + $0x8] sm:$0xff]
    %v125 = vld [vmem:[%s1 + $0x10] sm:$0xff]
    %v126 = vld [vmem:[%s1 + $0x18] sm:$0xff]
    %v127 = vld [vmem:[%s1 + $0x20] sm:$0xff]
    %v128 = vld [vmem:[%s1 + $0x28] sm:$0xff]
    %v129 = vld [vmem:[%s1 + $0x30] sm:$0xff]
    %v130 = vld [vmem:[%s1 + $0x38] sm:$0xff]
    %v131 = vld [vmem:[%s5] sm:$0xff]
    %v132 = vld [vmem:[%s5 + $0x8] sm:$0xff]
    %v133 = vld [vmem:[%s5 + $0x10] sm:$0xff]
    %v134 = vld [vmem:[%s5 + $0x18] sm:$0xff]
    %v135 = vld [vmem:[%s5 + $0x20] sm:$0xff]
    %v136 = vld [vmem:[%s5 + $0x28] sm:$0xff]
    %v137 = vld [vmem:[%s5 + $0x30] sm:$0xff]
    %v138 = vld [vmem:[%s5 + $0x38] sm:$0xf]
    %vm139 = vcmask 523264
    %v141 = vsel %vm139, %v131, 0
    %v144 = vsel %vm139, %v132, 0
    %v147 = vsel %vm139, %v133, 0
    %v150 = vsel %vm139, %v134, 0
    %v153 = vsel %vm139, %v135, 0
    %v156 = vsel %vm139, %v136, 0
    %v159 = vsel %vm139, %v137, 0
    %v162 = vsel %vm139, %v138, 0
    %164 = vmatprep.subr.mxu0 0.0
    %165 = vmatpush1.msra.mxu0 0.0
    %166 = vmatprep.subr.mxu0 0.0
    %167 = vmatpush1.msra.mxu0 0.0
    %168 = vmatprep.subr.mxu0 0.0
    %169 = vmatpush1.msra.mxu0 0.0
    %170 = vmatprep.subr.mxu0 0.0
    %171 = vmatpush1.msra.mxu0 0.0
    %172 = vmatprep.subr.mxu0 0.0
    %173 = vmatpush1.msra.mxu0 0.0
    %174 = vmatprep.subr.mxu0 0.0
    %175 = vmatpush1.msra.mxu0 0.0
    %176 = vmatprep.subr.mxu0 0.0
    %177 = vmatpush1.msra.mxu0 0.0
    %178 = vmatprep.subr.mxu0 0.0
    %179 = vmatpush1.msra.mxu0 0.0
    %180 = vmatprep.subr.mxu0 0.0
    %181 = vmatpush1.msra.mxu0 %v130
    %182 = vmatprep.subr.mxu0 0.0
    %183 = vmatpush1.msra.mxu0 %v129
    %184 = vmatprep.subr.mxu0 0.0
    %185 = vmatpush1.msra.mxu0 %v128
    %186 = vmatprep.subr.mxu0 0.0
    %187 = vmatpush1.msra.mxu0 %v127
    %188 = vmatprep.subr.mxu0 0.0
    %189 = vmatpush1.msra.mxu0 %v126
    %190 = vmatprep.subr.mxu0 0.0
    %191 = vmatpush1.msra.mxu0 %v125
    %192 = vmatprep.subr.mxu0 0.0
    %193 = vmatpush1.msra.mxu0 %v124
    %194 = vmatprep.subr.mxu0 0.0
    %195 = vmatpush1.msra.mxu0 %v123
    %196 = vmatprep.subr.mxu0 0.0
    %197 = vmatpush2.msra.mxu0 0.0
    %198 = vmatprep.subr.mxu0 0.0
    %199 = vmatpush2.msra.mxu0 0.0
    %200 = vmatprep.subr.mxu0 0.0
    %201 = vmatpush2.msra.mxu0 0.0
    %202 = vmatprep.subr.mxu0 0.0
    %203 = vmatpush2.msra.mxu0 0.0
    %204 = vmatprep.subr.mxu0 0.0
    %205 = vmatpush2.msra.mxu0 0.0
    %206 = vmatprep.subr.mxu0 0.0
    %207 = vmatpush2.msra.mxu0 0.0
    %208 = vmatprep.subr.mxu0 0.0
    %209 = vmatpush2.msra.mxu0 0.0
    %210 = vmatprep.subr.mxu0 0.0
    %211 = vmatpush2.msra.mxu0 0.0
    %212 = vmatprep.subr.mxu0 0.0
    %213 = vmatpush2.msra.mxu0 0.0
    %214 = vmatprep.subr.mxu0 0.0
    %215 = vmatpush2.msra.mxu0 0.0
    %216 = vmatprep.subr.mxu0 0.0
    %217 = vmatpush2.msra.mxu0 0.0
    %218 = vmatprep.subr.mxu0 0.0
    %219 = vmatpush2.msra.mxu0 0.0
    %220 = vmatprep.subr.mxu0 0.0
    %221 = vmatpush2.msra.mxu0 0.0
    %222 = vmatprep.subr.mxu0 0.0
    %223 = vmatpush2.msra.mxu0 0.0
    %224 = vmatprep.subr.mxu0 0.0
    %225 = vmatpush2.msra.mxu0 0.0
    %226 = vmatprep.subr.mxu0 0.0
    %227 = vmatpush2.msra.mxu0 0.0
    %228 = vmatprep.mubr.f32.mxu0 0.0
    %229 = vmatmul.mubr.f32.gmra.mxu0 %v141
    %v230 = vpop.f32.mrf.mxu0
    %v231 = vadd.f32 0.0, %v230
    %v232 = vpop.f32.mrf.mxu0
    %233 = vmatprep.mubr.f32.mxu0 0.0
    %234 = vmatmul.mubr.f32.gmra.mxu0 %v144
    %v235 = vpop.f32.mrf.mxu0
    %v236 = vadd.f32 0.0, %v235
    %v237 = vpop.f32.mrf.mxu0
    %238 = vmatprep.mubr.f32.mxu0 0.0
    %239 = vmatmul.mubr.f32.gmra.mxu0 %v147
    %v240 = vpop.f32.mrf.mxu0
    %v241 = vadd.f32 0.0, %v240
    %v242 = vpop.f32.mrf.mxu0
    %243 = vmatprep.mubr.f32.mxu0 0.0
    %244 = vmatmul.mubr.f32.gmra.mxu0 %v150
    %v245 = vpop.f32.mrf.mxu0
    %v246 = vadd.f32 0.0, %v245
    %v247 = vpop.f32.mrf.mxu0
    %248 = vmatprep.mubr.f32.mxu0 0.0
    %249 = vmatmul.mubr.f32.gmra.mxu0 %v153
    %v250 = vpop.f32.mrf.mxu0
    %v251 = vadd.f32 0.0, %v250
    %v252 = vpop.f32.mrf.mxu0
    %253 = vmatprep.mubr.f32.mxu0 0.0
    %254 = vmatmul.mubr.f32.gmra.mxu0 %v156
    %v255 = vpop.f32.mrf.mxu0
    %v256 = vadd.f32 0.0, %v255
    %v257 = vpop.f32.mrf.mxu0
    %258 = vmatprep.mubr.f32.mxu0 0.0
    %259 = vmatmul.mubr.f32.gmra.mxu0 %v159
    %v260 = vpop.f32.mrf.mxu0
    %v261 = vadd.f32 0.0, %v260
    %v262 = vpop.f32.mrf.mxu0
    %263 = vmatprep.mubr.f32.mxu0 0.0
    %264 = vmatmul.mubr.f32.gmra.mxu0 %v162
    %v265 = vpop.f32.mrf.mxu0
    %v266 = vadd.f32 0.0, %v265
    %v267 = vpop.f32.mrf.mxu0
    %268 = vdwg.mxu0
    %v269 = vld [vmem:[%s7] sm:$0xff]
    %v270 = vld [vmem:[%s7 + $0x8] sm:$0xff]
    %v271 = vld [vmem:[%s7 + $0x10] sm:$0xff]
    %v272 = vld [vmem:[%s7 + $0x18] sm:$0xff]
    %v273 = vld [vmem:[%s7 + $0x20] sm:$0xff]
    %v274 = vld [vmem:[%s7 + $0x28] sm:$0xff]
    %v275 = vld [vmem:[%s7 + $0x30] sm:$0xff]
    %v276 = vld [vmem:[%s7 + $0x38] sm:$0xff]
    %s277 = scalar_lea.vmem %s5, 64
    %v278 = vld [vmem:[%s277] sm:$0xff]
    %v279 = vld [vmem:[%s277 + $0x8] sm:$0xff]
    %v280 = vld [vmem:[%s277 + $0x10] sm:$0xff]
    %v281 = vld [vmem:[%s277 + $0x18] sm:$0xff]
    %v282 = vld [vmem:[%s277 + $0x20] sm:$0xff]
    %v283 = vld [vmem:[%s277 + $0x28] sm:$0xff]
    %v284 = vld [vmem:[%s277 + $0x30] sm:$0xff]
    %v285 = vld [vmem:[%s277 + $0x38] sm:$0xf]
    %v287 = vsel %vm139, %v278, 0
    %v290 = vsel %vm139, %v279, 0
    %v293 = vsel %vm139, %v280, 0
    %v296 = vsel %vm139, %v281, 0
    %v299 = vsel %vm139, %v282, 0
    %v302 = vsel %vm139, %v283, 0
    %v305 = vsel %vm139, %v284, 0
    %v308 = vsel %vm139, %v285, 0
    %310 = vmatprep.subr.mxu0 0.0
    %311 = vmatpush1.msra.mxu0 0.0
    %312 = vmatprep.subr.mxu0 0.0
    %313 = vmatpush1.msra.mxu0 0.0
    %314 = vmatprep.subr.mxu0 0.0
    %315 = vmatpush1.msra.mxu0 0.0
    %316 = vmatprep.subr.mxu0 0.0
    %317 = vmatpush1.msra.mxu0 0.0
    %318 = vmatprep.subr.mxu0 0.0
    %319 = vmatpush1.msra.mxu0 0.0
    %320 = vmatprep.subr.mxu0 0.0
    %321 = vmatpush1.msra.mxu0 0.0
    %322 = vmatprep.subr.mxu0 0.0
    %323 = vmatpush1.msra.mxu0 0.0
    %324 = vmatprep.subr.mxu0 0.0
    %325 = vmatpush1.msra.mxu0 0.0
    %326 = vmatprep.subr.mxu0 0.0
    %327 = vmatpush1.msra.mxu0 %v130
    %328 = vmatprep.subr.mxu0 0.0
    %329 = vmatpush1.msra.mxu0 %v129
    %330 = vmatprep.subr.mxu0 0.0
    %331 = vmatpush1.msra.mxu0 %v128
    %332 = vmatprep.subr.mxu0 0.0
    %333 = vmatpush1.msra.mxu0 %v127
    %334 = vmatprep.subr.mxu0 0.0
    %335 = vmatpush1.msra.mxu0 %v126
    %336 = vmatprep.subr.mxu0 0.0
    %337 = vmatpush1.msra.mxu0 %v125
    %338 = vmatprep.subr.mxu0 0.0
    %339 = vmatpush1.msra.mxu0 %v124
    %340 = vmatprep.subr.mxu0 0.0
    %341 = vmatpush1.msra.mxu0 %v123
    %342 = vmatprep.subr.mxu0 0.0
    %343 = vmatpush2.msra.mxu0 0.0
    %344 = vmatprep.subr.mxu0 0.0
    %345 = vmatpush2.msra.mxu0 0.0
    %346 = vmatprep.subr.mxu0 0.0
    %347 = vmatpush2.msra.mxu0 0.0
    %348 = vmatprep.subr.mxu0 0.0
    %349 = vmatpush2.msra.mxu0 0.0
    %350 = vmatprep.subr.mxu0 0.0
    %351 = vmatpush2.msra.mxu0 0.0
    %352 = vmatprep.subr.mxu0 0.0
    %353 = vmatpush2.msra.mxu0 0.0
    %354 = vmatprep.subr.mxu0 0.0
    %355 = vmatpush2.msra.mxu0 0.0
    %356 = vmatprep.subr.mxu0 0.0
    %357 = vmatpush2.msra.mxu0 0.0
    %358 = vmatprep.subr.mxu0 0.0
    %359 = vmatpush2.msra.mxu0 0.0
    %360 = vmatprep.subr.mxu0 0.0
    %361 = vmatpush2.msra.mxu0 0.0
    %362 = vmatprep.subr.mxu0 0.0
    %363 = vmatpush2.msra.mxu0 0.0
    %364 = vmatprep.subr.mxu0 0.0
    %365 = vmatpush2.msra.mxu0 0.0
    %366 = vmatprep.subr.mxu0 0.0
    %367 = vmatpush2.msra.mxu0 0.0
    %368 = vmatprep.subr.mxu0 0.0
    %369 = vmatpush2.msra.mxu0 0.0
    %370 = vmatprep.subr.mxu0 0.0
    %371 = vmatpush2.msra.mxu0 0.0
    %372 = vmatprep.subr.mxu0 0.0
    %373 = vmatpush2.msra.mxu0 0.0
    %374 = vmatprep.mubr.f32.mxu0 0.0
    %375 = vmatmul.mubr.f32.gmra.mxu0 %v287
    %v376 = vpop.f32.mrf.mxu0
    %v377 = vadd.f32 0.0, %v376
    %v378 = vpop.f32.mrf.mxu0
    %379 = vmatprep.mubr.f32.mxu0 0.0
    %380 = vmatmul.mubr.f32.gmra.mxu0 %v290
    %v381 = vpop.f32.mrf.mxu0
    %v382 = vadd.f32 0.0, %v381
    %v383 = vpop.f32.mrf.mxu0
    %384 = vmatprep.mubr.f32.mxu0 0.0
    %385 = vmatmul.mubr.f32.gmra.mxu0 %v293
    %v386 = vpop.f32.mrf.mxu0
    %v387 = vadd.f32 0.0, %v386
    %v388 = vpop.f32.mrf.mxu0
    %389 = vmatprep.mubr.f32.mxu0 0.0
    %390 = vmatmul.mubr.f32.gmra.mxu0 %v296
    %v391 = vpop.f32.mrf.mxu0
    %v392 = vadd.f32 0.0, %v391
    %v393 = vpop.f32.mrf.mxu0
    %394 = vmatprep.mubr.f32.mxu0 0.0
    %395 = vmatmul.mubr.f32.gmra.mxu0 %v299
    %v396 = vpop.f32.mrf.mxu0
    %v397 = vadd.f32 0.0, %v396
    %v398 = vpop.f32.mrf.mxu0
    %399 = vmatprep.mubr.f32.mxu0 0.0
    %400 = vmatmul.mubr.f32.gmra.mxu0 %v302
    %v401 = vpop.f32.mrf.mxu0
    %v402 = vadd.f32 0.0, %v401
    %v403 = vpop.f32.mrf.mxu0
    %404 = vmatprep.mubr.f32.mxu0 0.0
    %405 = vmatmul.mubr.f32.gmra.mxu0 %v305
    %v406 = vpop.f32.mrf.mxu0
    %v407 = vadd.f32 0.0, %v406
    %v408 = vpop.f32.mrf.mxu0
    %409 = vmatprep.mubr.f32.mxu0 0.0
    %410 = vmatmul.mubr.f32.gmra.mxu0 %v308
    %v411 = vpop.f32.mrf.mxu0
    %v412 = vadd.f32 0.0, %v411
    %v413 = vpop.f32.mrf.mxu0
    %414 = vdwg.mxu0
    %s415 = scalar_lea.vmem %s7, 64
    %v416 = vld [vmem:[%s415] sm:$0xff]
    %v417 = vld [vmem:[%s415 + $0x8] sm:$0xff]
    %v418 = vld [vmem:[%s415 + $0x10] sm:$0xff]
    %v419 = vld [vmem:[%s415 + $0x18] sm:$0xff]
    %v420 = vld [vmem:[%s415 + $0x20] sm:$0xff]
    %v421 = vld [vmem:[%s415 + $0x28] sm:$0xff]
    %v422 = vld [vmem:[%s415 + $0x30] sm:$0xff]
    %v423 = vld [vmem:[%s415 + $0x38] sm:$0xff]
    %vm424 = vcmask 261120
    %v426 = vsel %vm424, %v377, 0
    %v429 = vsel %vm424, %v382, 0
    %v432 = vsel %vm424, %v387, 0
    %v435 = vsel %vm424, %v392, 0
    %v438 = vsel %vm424, %v397, 0
    %v441 = vsel %vm424, %v402, 0
    %v444 = vsel %vm424, %v407, 0
    %v447 = vsel %vm424, %v412, 0
    %449 = vmatprep.subr.mxu0 0.0
    %450 = vmatpush1.msra.mxu0 0.0
    %451 = vmatprep.subr.mxu0 0.0
    %452 = vmatpush1.msra.mxu0 0.0
    %453 = vmatprep.subr.mxu0 0.0
    %454 = vmatpush1.msra.mxu0 0.0
    %455 = vmatprep.subr.mxu0 0.0
    %456 = vmatpush1.msra.mxu0 0.0
    %457 = vmatprep.subr.mxu0 0.0
    %458 = vmatpush1.msra.mxu0 0.0
    %459 = vmatprep.subr.mxu0 0.0
    %460 = vmatpush1.msra.mxu0 0.0
    %461 = vmatprep.subr.mxu0 0.0
    %462 = vmatpush1.msra.mxu0 0.0
    %463 = vmatprep.subr.mxu0 0.0
    %464 = vmatpush1.msra.mxu0 0.0
    %465 = vmatprep.subr.mxu0 0.0
    %466 = vmatpush1.msra.mxu0 0.0
    %467 = vmatprep.subr.mxu0 0.0
    %468 = vmatpush1.msra.mxu0 0.0
    %469 = vmatprep.subr.mxu0 0.0
    %470 = vmatpush1.msra.mxu0 0.0
    %471 = vmatprep.subr.mxu0 0.0
    %472 = vmatpush1.msra.mxu0 0.0
    %473 = vmatprep.subr.mxu0 %v423
    %474 = vmatpush1.msra.mxu0 %v422
    %475 = vmatprep.subr.mxu0 %v421
    %476 = vmatpush1.msra.mxu0 %v420
    %477 = vmatprep.subr.mxu0 %v419
    %478 = vmatpush1.msra.mxu0 %v418
    %479 = vmatprep.subr.mxu0 %v417
    %480 = vmatpush1.msra.mxu0 %v416
    %481 = vmatprep.subr.mxu0 0.0
    %482 = vmatpush2.msra.mxu0 0.0
    %483 = vmatprep.subr.mxu0 0.0
    %484 = vmatpush2.msra.mxu0 0.0
    %485 = vmatprep.subr.mxu0 0.0
    %486 = vmatpush2.msra.mxu0 0.0
    %487 = vmatprep.subr.mxu0 0.0
    %488 = vmatpush2.msra.mxu0 0.0
    %489 = vmatprep.subr.mxu0 0.0
    %490 = vmatpush2.msra.mxu0 0.0
    %491 = vmatprep.subr.mxu0 0.0
    %492 = vmatpush2.msra.mxu0 0.0
    %493 = vmatprep.subr.mxu0 0.0
    %494 = vmatpush2.msra.mxu0 0.0
    %495 = vmatprep.subr.mxu0 0.0
    %496 = vmatpush2.msra.mxu0 0.0
    %497 = vmatprep.subr.mxu0 0.0
    %498 = vmatpush2.msra.mxu0 0.0
    %499 = vmatprep.subr.mxu0 0.0
    %500 = vmatpush2.msra.mxu0 0.0
    %501 = vmatprep.subr.mxu0 0.0
    %502 = vmatpush2.msra.mxu0 0.0
    %503 = vmatprep.subr.mxu0 0.0
    %504 = vmatpush2.msra.mxu0 0.0
    %505 = vmatprep.subr.mxu0 0.0
    %506 = vmatpush2.msra.mxu0 0.0
    %507 = vmatprep.subr.mxu0 0.0
    %508 = vmatpush2.msra.mxu0 0.0
    %509 = vmatprep.subr.mxu0 0.0
    %510 = vmatpush2.msra.mxu0 0.0
    %511 = vmatprep.subr.mxu0 0.0
    %512 = vmatpush2.msra.mxu0 0.0
    %513 = vmatprep.mubr.f32.mxu0 0.0
    %514 = vmatmul.mubr.f32.gmra.mxu0 %v426
    %v515 = vpop.f32.mrf.mxu0
    %v516 = vadd.f32 0.0, %v515
    %v517 = vpop.f32.mrf.mxu0
    %v518 = vadd.f32 0.0, %v517
    %519 = vmatprep.mubr.f32.mxu0 0.0
    %520 = vmatmul.mubr.f32.gmra.mxu0 %v429
    %v521 = vpop.f32.mrf.mxu0
    %v522 = vadd.f32 0.0, %v521
    %v523 = vpop.f32.mrf.mxu0
    %v524 = vadd.f32 0.0, %v523
    %525 = vmatprep.mubr.f32.mxu0 0.0
    %526 = vmatmul.mubr.f32.gmra.mxu0 %v432
    %v527 = vpop.f32.mrf.mxu0
    %v528 = vadd.f32 0.0, %v527
    %v529 = vpop.f32.mrf.mxu0
    %v530 = vadd.f32 0.0, %v529
    %531 = vmatprep.mubr.f32.mxu0 0.0
    %532 = vmatmul.mubr.f32.gmra.mxu0 %v435
    %v533 = vpop.f32.mrf.mxu0
    %v534 = vadd.f32 0.0, %v533
    %v535 = vpop.f32.mrf.mxu0
    %v536 = vadd.f32 0.0, %v535
    %537 = vmatprep.mubr.f32.mxu0 0.0
    %538 = vmatmul.mubr.f32.gmra.mxu0 %v438
    %v539 = vpop.f32.mrf.mxu0
    %v540 = vadd.f32 0.0, %v539
    %v541 = vpop.f32.mrf.mxu0
    %v542 = vadd.f32 0.0, %v541
    %543 = vmatprep.mubr.f32.mxu0 0.0
    %544 = vmatmul.mubr.f32.gmra.mxu0 %v441
    %v545 = vpop.f32.mrf.mxu0
    %v546 = vadd.f32 0.0, %v545
    %v547 = vpop.f32.mrf.mxu0
    %v548 = vadd.f32 0.0, %v547
    %549 = vmatprep.mubr.f32.mxu0 0.0
    %550 = vmatmul.mubr.f32.gmra.mxu0 %v444
    %v551 = vpop.f32.mrf.mxu0
    %v552 = vadd.f32 0.0, %v551
    %v553 = vpop.f32.mrf.mxu0
    %v554 = vadd.f32 0.0, %v553
    %555 = vmatprep.mubr.f32.mxu0 0.0
    %556 = vmatmul.mubr.f32.gmra.mxu0 %v447
    %v557 = vpop.f32.mrf.mxu0
    %v558 = vadd.f32 0.0, %v557
    %v559 = vpop.f32.mrf.mxu0
    %v560 = vadd.f32 0.0, %v559
    %561 = vdwg.mxu0
    %v563 = vsel %vm424, %v231, 0
    %v566 = vsel %vm424, %v236, 0
    %v569 = vsel %vm424, %v241, 0
    %v572 = vsel %vm424, %v246, 0
    %v575 = vsel %vm424, %v251, 0
    %v578 = vsel %vm424, %v256, 0
    %v581 = vsel %vm424, %v261, 0
    %v584 = vsel %vm424, %v266, 0
    %586 = vmatprep.subr.mxu0 0.0
    %587 = vmatpush1.msra.mxu0 0.0
    %588 = vmatprep.subr.mxu0 0.0
    %589 = vmatpush1.msra.mxu0 0.0
    %590 = vmatprep.subr.mxu0 0.0
    %591 = vmatpush1.msra.mxu0 0.0
    %592 = vmatprep.subr.mxu0 0.0
    %593 = vmatpush1.msra.mxu0 0.0
    %594 = vmatprep.subr.mxu0 0.0
    %595 = vmatpush1.msra.mxu0 0.0
    %596 = vmatprep.subr.mxu0 0.0
    %597 = vmatpush1.msra.mxu0 0.0
    %598 = vmatprep.subr.mxu0 0.0
    %599 = vmatpush1.msra.mxu0 0.0
    %600 = vmatprep.subr.mxu0 0.0
    %601 = vmatpush1.msra.mxu0 0.0
    %602 = vmatprep.subr.mxu0 0.0
    %603 = vmatpush1.msra.mxu0 0.0
    %604 = vmatprep.subr.mxu0 0.0
    %605 = vmatpush1.msra.mxu0 0.0
    %606 = vmatprep.subr.mxu0 0.0
    %607 = vmatpush1.msra.mxu0 0.0
    %608 = vmatprep.subr.mxu0 0.0
    %609 = vmatpush1.msra.mxu0 0.0
    %610 = vmatprep.subr.mxu0 %v276
    %611 = vmatpush1.msra.mxu0 %v275
    %612 = vmatprep.subr.mxu0 %v274
    %613 = vmatpush1.msra.mxu0 %v273
    %614 = vmatprep.subr.mxu0 %v272
    %615 = vmatpush1.msra.mxu0 %v271
    %616 = vmatprep.subr.mxu0 %v270
    %617 = vmatpush1.msra.mxu0 %v269
    %618 = vmatprep.subr.mxu0 0.0
    %619 = vmatpush2.msra.mxu0 0.0
    %620 = vmatprep.subr.mxu0 0.0
    %621 = vmatpush2.msra.mxu0 0.0
    %622 = vmatprep.subr.mxu0 0.0
    %623 = vmatpush2.msra.mxu0 0.0
    %624 = vmatprep.subr.mxu0 0.0
    %625 = vmatpush2.msra.mxu0 0.0
    %626 = vmatprep.subr.mxu0 0.0
    %627 = vmatpush2.msra.mxu0 0.0
    %628 = vmatprep.subr.mxu0 0.0
    %629 = vmatpush2.msra.mxu0 0.0
    %630 = vmatprep.subr.mxu0 0.0
    %631 = vmatpush2.msra.mxu0 0.0
    %632 = vmatprep.subr.mxu0 0.0
    %633 = vmatpush2.msra.mxu0 0.0
    %634 = vmatprep.subr.mxu0 0.0
    %635 = vmatpush2.msra.mxu0 0.0
    %636 = vmatprep.subr.mxu0 0.0
    %637 = vmatpush2.msra.mxu0 0.0
    %638 = vmatprep.subr.mxu0 0.0
    %639 = vmatpush2.msra.mxu0 0.0
    %640 = vmatprep.subr.mxu0 0.0
    %641 = vmatpush2.msra.mxu0 0.0
    %642 = vmatprep.subr.mxu0 0.0
    %643 = vmatpush2.msra.mxu0 0.0
    %644 = vmatprep.subr.mxu0 0.0
    %645 = vmatpush2.msra.mxu0 0.0
    %646 = vmatprep.subr.mxu0 0.0
    %647 = vmatpush2.msra.mxu0 0.0
    %648 = vmatprep.subr.mxu0 0.0
    %649 = vmatpush2.msra.mxu0 0.0
    %650 = vmatprep.mubr.f32.mxu0 0.0
    %651 = vmatmul.mubr.f32.gmra.mxu0 %v563
    %v652 = vpop.f32.mrf.mxu0
    %v653 = vadd.f32 %v516, %v652
    %v654 = vpop.f32.mrf.mxu0
    %v655 = vadd.f32 %v518, %v654
    %656 = vmatprep.mubr.f32.mxu0 0.0
    %657 = vmatmul.mubr.f32.gmra.mxu0 %v566
    %v658 = vpop.f32.mrf.mxu0
    %v659 = vadd.f32 %v522, %v658
    %v660 = vpop.f32.mrf.mxu0
    %v661 = vadd.f32 %v524, %v660
    %662 = vmatprep.mubr.f32.mxu0 0.0
    %663 = vmatmul.mubr.f32.gmra.mxu0 %v569
    %v664 = vpop.f32.mrf.mxu0
    %v665 = vadd.f32 %v528, %v664
    %v666 = vpop.f32.mrf.mxu0
    %v667 = vadd.f32 %v530, %v666
    %668 = vmatprep.mubr.f32.mxu0 0.0
    %669 = vmatmul.mubr.f32.gmra.mxu0 %v572
    %v670 = vpop.f32.mrf.mxu0
    %v671 = vadd.f32 %v534, %v670
    %v672 = vpop.f32.mrf.mxu0
    %v673 = vadd.f32 %v536, %v672
    %674 = vmatprep.mubr.f32.mxu0 0.0
    %675 = vmatmul.mubr.f32.gmra.mxu0 %v575
    %v676 = vpop.f32.mrf.mxu0
    %v677 = vadd.f32 %v540, %v676
    %v678 = vpop.f32.mrf.mxu0
    %v679 = vadd.f32 %v542, %v678
    %680 = vmatprep.mubr.f32.mxu0 0.0
    %681 = vmatmul.mubr.f32.gmra.mxu0 %v578
    %v682 = vpop.f32.mrf.mxu0
    %v683 = vadd.f32 %v546, %v682
    %v684 = vpop.f32.mrf.mxu0
    %v685 = vadd.f32 %v548, %v684
    %686 = vmatprep.mubr.f32.mxu0 0.0
    %687 = vmatmul.mubr.f32.gmra.mxu0 %v581
    %v688 = vpop.f32.mrf.mxu0
    %v689 = vadd.f32 %v552, %v688
    %v690 = vpop.f32.mrf.mxu0
    %v691 = vadd.f32 %v554, %v690
    %692 = vmatprep.mubr.f32.mxu0 0.0
    %693 = vmatmul.mubr.f32.gmra.mxu0 %v584
    %v694 = vpop.f32.mrf.mxu0
    %v695 = vadd.f32 %v558, %v694
    %v696 = vpop.f32.mrf.mxu0
    %v697 = vadd.f32 %v560, %v696
    %698 = vdwg.mxu0
    %s699 = scalar_lea.vmem %s5, 128
    %v700 = vld [vmem:[%s699] sm:$0xff]
    %v701 = vld [vmem:[%s699 + $0x8] sm:$0xff]
    %v702 = vld [vmem:[%s699 + $0x10] sm:$0xff]
    %v703 = vld [vmem:[%s699 + $0x18] sm:$0xff]
    %v704 = vld [vmem:[%s699 + $0x20] sm:$0xff]
    %v705 = vld [vmem:[%s699 + $0x28] sm:$0xff]
    %v706 = vld [vmem:[%s699 + $0x30] sm:$0xff]
    %v707 = vld [vmem:[%s699 + $0x38] sm:$0xf]
    %v709 = vsel %vm139, %v700, 0
    %v712 = vsel %vm139, %v701, 0
    %v715 = vsel %vm139, %v702, 0
    %v718 = vsel %vm139, %v703, 0
    %v721 = vsel %vm139, %v704, 0
    %v724 = vsel %vm139, %v705, 0
    %v727 = vsel %vm139, %v706, 0
    %v730 = vsel %vm139, %v707, 0
    %732 = vmatprep.subr.mxu0 0.0
    %733 = vmatpush1.msra.mxu0 0.0
    %734 = vmatprep.subr.mxu0 0.0
    %735 = vmatpush1.msra.mxu0 0.0
    %736 = vmatprep.subr.mxu0 0.0
    %737 = vmatpush1.msra.mxu0 0.0
    %738 = vmatprep.subr.mxu0 0.0
    %739 = vmatpush1.msra.mxu0 0.0
    %740 = vmatprep.subr.mxu0 0.0
    %741 = vmatpush1.msra.mxu0 0.0
    %742 = vmatprep.subr.mxu0 0.0
    %743 = vmatpush1.msra.mxu0 0.0
    %744 = vmatprep.subr.mxu0 0.0
    %745 = vmatpush1.msra.mxu0 0.0
    %746 = vmatprep.subr.mxu0 0.0
    %747 = vmatpush1.msra.mxu0 0.0
    %748 = vmatprep.subr.mxu0 0.0
    %749 = vmatpush1.msra.mxu0 %v130
    %750 = vmatprep.subr.mxu0 0.0
    %751 = vmatpush1.msra.mxu0 %v129
    %752 = vmatprep.subr.mxu0 0.0
    %753 = vmatpush1.msra.mxu0 %v128
    %754 = vmatprep.subr.mxu0 0.0
    %755 = vmatpush1.msra.mxu0 %v127
    %756 = vmatprep.subr.mxu0 0.0
    %757 = vmatpush1.msra.mxu0 %v126
    %758 = vmatprep.subr.mxu0 0.0
    %759 = vmatpush1.msra.mxu0 %v125
    %760 = vmatprep.subr.mxu0 0.0
    %761 = vmatpush1.msra.mxu0 %v124
    %762 = vmatprep.subr.mxu0 0.0
    %763 = vmatpush1.msra.mxu0 %v123
    %764 = vmatprep.subr.mxu0 0.0
    %765 = vmatpush2.msra.mxu0 0.0
    %766 = vmatprep.subr.mxu0 0.0
    %767 = vmatpush2.msra.mxu0 0.0
    %768 = vmatprep.subr.mxu0 0.0
    %769 = vmatpush2.msra.mxu0 0.0
    %770 = vmatprep.subr.mxu0 0.0
    %771 = vmatpush2.msra.mxu0 0.0
    %772 = vmatprep.subr.mxu0 0.0
    %773 = vmatpush2.msra.mxu0 0.0
    %774 = vmatprep.subr.mxu0 0.0
    %775 = vmatpush2.msra.mxu0 0.0
    %776 = vmatprep.subr.mxu0 0.0
    %777 = vmatpush2.msra.mxu0 0.0
    %778 = vmatprep.subr.mxu0 0.0
    %779 = vmatpush2.msra.mxu0 0.0
    %780 = vmatprep.subr.mxu0 0.0
    %781 = vmatpush2.msra.mxu0 0.0
    %782 = vmatprep.subr.mxu0 0.0
    %783 = vmatpush2.msra.mxu0 0.0
    %784 = vmatprep.subr.mxu0 0.0
    %785 = vmatpush2.msra.mxu0 0.0
    %786 = vmatprep.subr.mxu0 0.0
    %787 = vmatpush2.msra.mxu0 0.0
    %788 = vmatprep.subr.mxu0 0.0
    %789 = vmatpush2.msra.mxu0 0.0
    %790 = vmatprep.subr.mxu0 0.0
    %791 = vmatpush2.msra.mxu0 0.0
    %792 = vmatprep.subr.mxu0 0.0
    %793 = vmatpush2.msra.mxu0 0.0
    %794 = vmatprep.subr.mxu0 0.0
    %795 = vmatpush2.msra.mxu0 0.0
    %796 = vmatprep.mubr.f32.mxu0 0.0
    %797 = vmatmul.mubr.f32.gmra.mxu0 %v709
    %v798 = vpop.f32.mrf.mxu0
    %v799 = vadd.f32 0.0, %v798
    %v800 = vpop.f32.mrf.mxu0
    %801 = vmatprep.mubr.f32.mxu0 0.0
    %802 = vmatmul.mubr.f32.gmra.mxu0 %v712
    %v803 = vpop.f32.mrf.mxu0
    %v804 = vadd.f32 0.0, %v803
    %v805 = vpop.f32.mrf.mxu0
    %806 = vmatprep.mubr.f32.mxu0 0.0
    %807 = vmatmul.mubr.f32.gmra.mxu0 %v715
    %v808 = vpop.f32.mrf.mxu0
    %v809 = vadd.f32 0.0, %v808
    %v810 = vpop.f32.mrf.mxu0
    %811 = vmatprep.mubr.f32.mxu0 0.0
    %812 = vmatmul.mubr.f32.gmra.mxu0 %v718
    %v813 = vpop.f32.mrf.mxu0
    %v814 = vadd.f32 0.0, %v813
    %v815 = vpop.f32.mrf.mxu0
    %816 = vmatprep.mubr.f32.mxu0 0.0
    %817 = vmatmul.mubr.f32.gmra.mxu0 %v721
    %v818 = vpop.f32.mrf.mxu0
    %v819 = vadd.f32 0.0, %v818
    %v820 = vpop.f32.mrf.mxu0
    %821 = vmatprep.mubr.f32.mxu0 0.0
    %822 = vmatmul.mubr.f32.gmra.mxu0 %v724
    %v823 = vpop.f32.mrf.mxu0
    %v824 = vadd.f32 0.0, %v823
    %v825 = vpop.f32.mrf.mxu0
    %826 = vmatprep.mubr.f32.mxu0 0.0
    %827 = vmatmul.mubr.f32.gmra.mxu0 %v727
    %v828 = vpop.f32.mrf.mxu0
    %v829 = vadd.f32 0.0, %v828
    %v830 = vpop.f32.mrf.mxu0
    %831 = vmatprep.mubr.f32.mxu0 0.0
    %832 = vmatmul.mubr.f32.gmra.mxu0 %v730
    %v833 = vpop.f32.mrf.mxu0
    %v834 = vadd.f32 0.0, %v833
    %v835 = vpop.f32.mrf.mxu0
    %836 = vdwg.mxu0
    %s837 = scalar_lea.vmem %s7, 128
    %v838 = vld [vmem:[%s837] sm:$0xff]
    %v839 = vld [vmem:[%s837 + $0x8] sm:$0xff]
    %v840 = vld [vmem:[%s837 + $0x10] sm:$0xff]
    %v841 = vld [vmem:[%s837 + $0x18] sm:$0xff]
    %v842 = vld [vmem:[%s837 + $0x20] sm:$0xff]
    %v843 = vld [vmem:[%s837 + $0x28] sm:$0xff]
    %v844 = vld [vmem:[%s837 + $0x30] sm:$0xff]
    %v845 = vld [vmem:[%s837 + $0x38] sm:$0xff]
    %v847 = vsel %vm424, %v799, 0
    %v850 = vsel %vm424, %v804, 0
    %v853 = vsel %vm424, %v809, 0
    %v856 = vsel %vm424, %v814, 0
    %v859 = vsel %vm424, %v819, 0
    %v862 = vsel %vm424, %v824, 0
    %v865 = vsel %vm424, %v829, 0
    %v868 = vsel %vm424, %v834, 0
    %870 = vmatprep.subr.mxu0 0.0
    %871 = vmatpush1.msra.mxu0 0.0
    %872 = vmatprep.subr.mxu0 0.0
    %873 = vmatpush1.msra.mxu0 0.0
    %874 = vmatprep.subr.mxu0 0.0
    %875 = vmatpush1.msra.mxu0 0.0
    %876 = vmatprep.subr.mxu0 0.0
    %877 = vmatpush1.msra.mxu0 0.0
    %878 = vmatprep.subr.mxu0 0.0
    %879 = vmatpush1.msra.mxu0 0.0
    %880 = vmatprep.subr.mxu0 0.0
    %881 = vmatpush1.msra.mxu0 0.0
    %882 = vmatprep.subr.mxu0 0.0
    %883 = vmatpush1.msra.mxu0 0.0
    %884 = vmatprep.subr.mxu0 0.0
    %885 = vmatpush1.msra.mxu0 0.0
    %886 = vmatprep.subr.mxu0 0.0
    %887 = vmatpush1.msra.mxu0 0.0
    %888 = vmatprep.subr.mxu0 0.0
    %889 = vmatpush1.msra.mxu0 0.0
    %890 = vmatprep.subr.mxu0 0.0
    %891 = vmatpush1.msra.mxu0 0.0
    %892 = vmatprep.subr.mxu0 0.0
    %893 = vmatpush1.msra.mxu0 0.0
    %894 = vmatprep.subr.mxu0 %v845
    %895 = vmatpush1.msra.mxu0 %v844
    %896 = vmatprep.subr.mxu0 %v843
    %897 = vmatpush1.msra.mxu0 %v842
    %898 = vmatprep.subr.mxu0 %v841
    %899 = vmatpush1.msra.mxu0 %v840
    %900 = vmatprep.subr.mxu0 %v839
    %901 = vmatpush1.msra.mxu0 %v838
    %902 = vmatprep.subr.mxu0 0.0
    %903 = vmatpush2.msra.mxu0 0.0
    %904 = vmatprep.subr.mxu0 0.0
    %905 = vmatpush2.msra.mxu0 0.0
    %906 = vmatprep.subr.mxu0 0.0
    %907 = vmatpush2.msra.mxu0 0.0
    %908 = vmatprep.subr.mxu0 0.0
    %909 = vmatpush2.msra.mxu0 0.0
    %910 = vmatprep.subr.mxu0 0.0
    %911 = vmatpush2.msra.mxu0 0.0
    %912 = vmatprep.subr.mxu0 0.0
    %913 = vmatpush2.msra.mxu0 0.0
    %914 = vmatprep.subr.mxu0 0.0
    %915 = vmatpush2.msra.mxu0 0.0
    %916 = vmatprep.subr.mxu0 0.0
    %917 = vmatpush2.msra.mxu0 0.0
    %918 = vmatprep.subr.mxu0 0.0
    %919 = vmatpush2.msra.mxu0 0.0
    %920 = vmatprep.subr.mxu0 0.0
    %921 = vmatpush2.msra.mxu0 0.0
    %922 = vmatprep.subr.mxu0 0.0
    %923 = vmatpush2.msra.mxu0 0.0
    %924 = vmatprep.subr.mxu0 0.0
    %925 = vmatpush2.msra.mxu0 0.0
    %926 = vmatprep.subr.mxu0 0.0
    %927 = vmatpush2.msra.mxu0 0.0
    %928 = vmatprep.subr.mxu0 0.0
    %929 = vmatpush2.msra.mxu0 0.0
    %930 = vmatprep.subr.mxu0 0.0
    %931 = vmatpush2.msra.mxu0 0.0
    %932 = vmatprep.subr.mxu0 0.0
    %933 = vmatpush2.msra.mxu0 0.0
    %934 = vmatprep.mubr.f32.mxu0 0.0
    %935 = vmatmul.mubr.f32.gmra.mxu0 %v847
    %v936 = vpop.f32.mrf.mxu0
    %v937 = vadd.f32 0.0, %v936
    %v938 = vpop.f32.mrf.mxu0
    %v939 = vadd.f32 0.0, %v938
    %940 = vmatprep.mubr.f32.mxu0 0.0
    %941 = vmatmul.mubr.f32.gmra.mxu0 %v850
    %v942 = vpop.f32.mrf.mxu0
    %v943 = vadd.f32 0.0, %v942
    %v944 = vpop.f32.mrf.mxu0
    %v945 = vadd.f32 0.0, %v944
    %946 = vmatprep.mubr.f32.mxu0 0.0
    %947 = vmatmul.mubr.f32.gmra.mxu0 %v853
    %v948 = vpop.f32.mrf.mxu0
    %v949 = vadd.f32 0.0, %v948
    %v950 = vpop.f32.mrf.mxu0
    %v951 = vadd.f32 0.0, %v950
    %952 = vmatprep.mubr.f32.mxu0 0.0
    %953 = vmatmul.mubr.f32.gmra.mxu0 %v856
    %v954 = vpop.f32.mrf.mxu0
    %v955 = vadd.f32 0.0, %v954
    %v956 = vpop.f32.mrf.mxu0
    %v957 = vadd.f32 0.0, %v956
    %958 = vmatprep.mubr.f32.mxu0 0.0
    %959 = vmatmul.mubr.f32.gmra.mxu0 %v859
    %v960 = vpop.f32.mrf.mxu0
    %v961 = vadd.f32 0.0, %v960
    %v962 = vpop.f32.mrf.mxu0
    %v963 = vadd.f32 0.0, %v962
    %964 = vmatprep.mubr.f32.mxu0 0.0
    %965 = vmatmul.mubr.f32.gmra.mxu0 %v862
    %v966 = vpop.f32.mrf.mxu0
    %v967 = vadd.f32 0.0, %v966
    %v968 = vpop.f32.mrf.mxu0
    %v969 = vadd.f32 0.0, %v968
    %970 = vmatprep.mubr.f32.mxu0 0.0
    %971 = vmatmul.mubr.f32.gmra.mxu0 %v865
    %v972 = vpop.f32.mrf.mxu0
    %v973 = vadd.f32 0.0, %v972
    %v974 = vpop.f32.mrf.mxu0
    %v975 = vadd.f32 0.0, %v974
    %976 = vmatprep.mubr.f32.mxu0 0.0
    %977 = vmatmul.mubr.f32.gmra.mxu0 %v868
    %v978 = vpop.f32.mrf.mxu0
    %v979 = vadd.f32 0.0, %v978
    %v980 = vpop.f32.mrf.mxu0
    %v981 = vadd.f32 0.0, %v980
    %982 = vdwg.mxu0
    %v983 = vadd.f32 %v653, %v937
    %v984 = vadd.f32 %v655, %v939
    %v985 = vadd.f32 %v659, %v943
    %v986 = vadd.f32 %v661, %v945
    %v987 = vadd.f32 %v665, %v949
    %v988 = vadd.f32 %v667, %v951
    %v989 = vadd.f32 %v671, %v955
    %v990 = vadd.f32 %v673, %v957
    %v991 = vadd.f32 %v677, %v961
    %v992 = vadd.f32 %v679, %v963
    %v993 = vadd.f32 %v683, %v967
    %v994 = vadd.f32 %v685, %v969
    %v995 = vadd.f32 %v689, %v973
    %v996 = vadd.f32 %v691, %v975
    %v997 = vadd.f32 %v695, %v979
    %v998 = vadd.f32 %v697, %v981
    %v999 = vld [vmem:[%s9] sm:$0x3]
    %v1001 = vlaneseq
    %v1002 = vshrl.u32 %v1001, 7
    %v1003 = vsub.s32 0, %v1002
    %v1004 = vrot.slane %v999, %v1003
    %v1005 = vlaneseq
    %v1006 = vshrl.u32 %v1005, 7
    %v1007 = vsub.s32 1, %v1006
    %v1008 = vrot.slane %v999, %v1007
    %v1011 = vadd.f32 %v983, %v1004
    %v1012 = vadd.f32 %v984, %v1008
    %v1013 = vadd.f32 %v985, %v1004
    %v1014 = vadd.f32 %v986, %v1008
    %v1015 = vadd.f32 %v987, %v1004
    %v1016 = vadd.f32 %v988, %v1008
    %v1017 = vadd.f32 %v989, %v1004
    %v1018 = vadd.f32 %v990, %v1008
    %v1019 = vadd.f32 %v991, %v1004
    %v1020 = vadd.f32 %v992, %v1008
    %v1021 = vadd.f32 %v993, %v1004
    %v1022 = vadd.f32 %v994, %v1008
    %v1023 = vadd.f32 %v995, %v1004
    %v1024 = vadd.f32 %v996, %v1008
    %v1025 = vadd.f32 %v997, %v1004
    %v1026 = vadd.f32 %v998, %v1008
    %v1027 = vmax.f32 %v1011, 0.0
    %v1028 = vmax.f32 %v1012, 0.0
    %v1029 = vmax.f32 %v1013, 0.0
    %v1030 = vmax.f32 %v1014, 0.0
    %v1031 = vmax.f32 %v1015, 0.0
    %v1032 = vmax.f32 %v1016, 0.0
    %v1033 = vmax.f32 %v1017, 0.0
    %v1034 = vmax.f32 %v1018, 0.0
    %v1035 = vmax.f32 %v1019, 0.0
    %v1036 = vmax.f32 %v1020, 0.0
    %v1037 = vmax.f32 %v1021, 0.0
    %v1038 = vmax.f32 %v1022, 0.0
    %v1039 = vmax.f32 %v1023, 0.0
    %v1040 = vmax.f32 %v1024, 0.0
    %v1041 = vmax.f32 %v1025, 0.0
    %v1042 = vmax.f32 %v1026, 0.0
    %v1043 = vld [vmem:[%s11] sm:$0xff]
    %v1044 = vld [vmem:[%s11 + $0x8] sm:$0xff]
    %v1045 = vld [vmem:[%s11 + $0x10] sm:$0xff]
    %v1046 = vld [vmem:[%s11 + $0x18] sm:$0x3f]
    %vm1047 = vcmask 490496
    %v1049 = vsel %vm1047, %v1043, 0
    %v1052 = vsel %vm1047, %v1044, 0
    %v1055 = vsel %vm1047, %v1045, 0
    %v1058 = vsel %vm1047, %v1046, 0
    %vm1060 = vcmask 1043456
    %v1062 = vsel %vm1060, %v1041, 0
    %v1065 = vsel %vm1060, %v1042, 0
    %1067 = vmatprep.subr.mxu0 0.0
    %1068 = vmatpush1.msra.mxu0 0.0
    %1069 = vmatprep.subr.mxu0 0.0
    %1070 = vmatpush1.msra.mxu0 0.0
    %1071 = vmatprep.subr.mxu0 0.0
    %1072 = vmatpush1.msra.mxu0 0.0
    %1073 = vmatprep.subr.mxu0 0.0
    %1074 = vmatpush1.msra.mxu0 0.0
    %1075 = vmatprep.subr.mxu0 0.0
    %1076 = vmatpush1.msra.mxu0 0.0
    %1077 = vmatprep.subr.mxu0 0.0
    %1078 = vmatpush1.msra.mxu0 0.0
    %1079 = vmatprep.subr.mxu0 0.0
    %1080 = vmatpush1.msra.mxu0 0.0
    %1081 = vmatprep.subr.mxu0 0.0
    %1082 = vmatpush1.msra.mxu0 0.0
    %1083 = vmatprep.subr.mxu0 %v1065
    %1084 = vmatpush1.msra.mxu0 %v1062
    %1085 = vmatprep.subr.mxu0 %v1040
    %1086 = vmatpush1.msra.mxu0 %v1039
    %1087 = vmatprep.subr.mxu0 %v1038
    %1088 = vmatpush1.msra.mxu0 %v1037
    %1089 = vmatprep.subr.mxu0 %v1036
    %1090 = vmatpush1.msra.mxu0 %v1035
    %1091 = vmatprep.subr.mxu0 %v1034
    %1092 = vmatpush1.msra.mxu0 %v1033
    %1093 = vmatprep.subr.mxu0 %v1032
    %1094 = vmatpush1.msra.mxu0 %v1031
    %1095 = vmatprep.subr.mxu0 %v1030
    %1096 = vmatpush1.msra.mxu0 %v1029
    %1097 = vmatprep.subr.mxu0 %v1028
    %1098 = vmatpush1.msra.mxu0 %v1027
    %1099 = vmatprep.subr.mxu0 0.0
    %1100 = vmatpush2.msra.mxu0 0.0
    %1101 = vmatprep.subr.mxu0 0.0
    %1102 = vmatpush2.msra.mxu0 0.0
    %1103 = vmatprep.subr.mxu0 0.0
    %1104 = vmatpush2.msra.mxu0 0.0
    %1105 = vmatprep.subr.mxu0 0.0
    %1106 = vmatpush2.msra.mxu0 0.0
    %1107 = vmatprep.subr.mxu0 0.0
    %1108 = vmatpush2.msra.mxu0 0.0
    %1109 = vmatprep.subr.mxu0 0.0
    %1110 = vmatpush2.msra.mxu0 0.0
    %1111 = vmatprep.subr.mxu0 0.0
    %1112 = vmatpush2.msra.mxu0 0.0
    %1113 = vmatprep.subr.mxu0 0.0
    %1114 = vmatpush2.msra.mxu0 0.0
    %1115 = vmatprep.subr.mxu0 0.0
    %1116 = vmatpush2.msra.mxu0 0.0
    %1117 = vmatprep.subr.mxu0 0.0
    %1118 = vmatpush2.msra.mxu0 0.0
    %1119 = vmatprep.subr.mxu0 0.0
    %1120 = vmatpush2.msra.mxu0 0.0
    %1121 = vmatprep.subr.mxu0 0.0
    %1122 = vmatpush2.msra.mxu0 0.0
    %1123 = vmatprep.subr.mxu0 0.0
    %1124 = vmatpush2.msra.mxu0 0.0
    %1125 = vmatprep.subr.mxu0 0.0
    %1126 = vmatpush2.msra.mxu0 0.0
    %1127 = vmatprep.subr.mxu0 0.0
    %1128 = vmatpush2.msra.mxu0 0.0
    %1129 = vmatprep.subr.mxu0 0.0
    %1130 = vmatpush2.msra.mxu0 0.0
    %1131 = vmatprep.mubr.f32.mxu0 0.0
    %1132 = vmatmul.mubr.f32.gmra.mxu0 %v1049
    %v1133 = vpop.f32.mrf.mxu0
    %v1134 = vadd.f32 0.0, %v1133
    %v1135 = vpop.f32.mrf.mxu0
    %v1136 = vadd.f32 0.0, %v1135
    %1137 = vmatprep.mubr.f32.mxu0 0.0
    %1138 = vmatmul.mubr.f32.gmra.mxu0 %v1052
    %v1139 = vpop.f32.mrf.mxu0
    %v1140 = vadd.f32 0.0, %v1139
    %v1141 = vpop.f32.mrf.mxu0
    %v1142 = vadd.f32 0.0, %v1141
    %1143 = vmatprep.mubr.f32.mxu0 0.0
    %1144 = vmatmul.mubr.f32.gmra.mxu0 %v1055
    %v1145 = vpop.f32.mrf.mxu0
    %v1146 = vadd.f32 0.0, %v1145
    %v1147 = vpop.f32.mrf.mxu0
    %v1148 = vadd.f32 0.0, %v1147
    %1149 = vmatprep.mubr.f32.mxu0 0.0
    %1150 = vmatmul.mubr.f32.gmra.mxu0 %v1058
    %v1151 = vpop.f32.mrf.mxu0
    %v1152 = vadd.f32 0.0, %v1151
    %v1153 = vpop.f32.mrf.mxu0
    %v1154 = vadd.f32 0.0, %v1153
    %1155 = vdwg.mxu0
    %s1156 = scalar_lea.vmem %s11, 32
    %v1157 = vld [vmem:[%s1156] sm:$0xff]
    %v1158 = vld [vmem:[%s1156 + $0x8] sm:$0xff]
    %v1159 = vld [vmem:[%s1156 + $0x10] sm:$0xff]
    %v1160 = vld [vmem:[%s1156 + $0x18] sm:$0x3f]
    %v1162 = vsel %vm1047, %v1157, 0
    %v1165 = vsel %vm1047, %v1158, 0
    %v1168 = vsel %vm1047, %v1159, 0
    %v1171 = vsel %vm1047, %v1160, 0
    %1173 = vmatprep.subr.mxu0 0.0
    %1174 = vmatpush1.msra.mxu0 0.0
    %1175 = vmatprep.subr.mxu0 0.0
    %1176 = vmatpush1.msra.mxu0 0.0
    %1177 = vmatprep.subr.mxu0 0.0
    %1178 = vmatpush1.msra.mxu0 0.0
    %1179 = vmatprep.subr.mxu0 0.0
    %1180 = vmatpush1.msra.mxu0 0.0
    %1181 = vmatprep.subr.mxu0 0.0
    %1182 = vmatpush1.msra.mxu0 0.0
    %1183 = vmatprep.subr.mxu0 0.0
    %1184 = vmatpush1.msra.mxu0 0.0
    %1185 = vmatprep.subr.mxu0 0.0
    %1186 = vmatpush1.msra.mxu0 0.0
    %1187 = vmatprep.subr.mxu0 0.0
    %1188 = vmatpush1.msra.mxu0 0.0
    %1189 = vmatprep.subr.mxu0 %v1065
    %1190 = vmatpush1.msra.mxu0 %v1062
    %1191 = vmatprep.subr.mxu0 %v1040
    %1192 = vmatpush1.msra.mxu0 %v1039
    %1193 = vmatprep.subr.mxu0 %v1038
    %1194 = vmatpush1.msra.mxu0 %v1037
    %1195 = vmatprep.subr.mxu0 %v1036
    %1196 = vmatpush1.msra.mxu0 %v1035
    %1197 = vmatprep.subr.mxu0 %v1034
    %1198 = vmatpush1.msra.mxu0 %v1033
    %1199 = vmatprep.subr.mxu0 %v1032
    %1200 = vmatpush1.msra.mxu0 %v1031
    %1201 = vmatprep.subr.mxu0 %v1030
    %1202 = vmatpush1.msra.mxu0 %v1029
    %1203 = vmatprep.subr.mxu0 %v1028
    %1204 = vmatpush1.msra.mxu0 %v1027
    %1205 = vmatprep.subr.mxu0 0.0
    %1206 = vmatpush2.msra.mxu0 0.0
    %1207 = vmatprep.subr.mxu0 0.0
    %1208 = vmatpush2.msra.mxu0 0.0
    %1209 = vmatprep.subr.mxu0 0.0
    %1210 = vmatpush2.msra.mxu0 0.0
    %1211 = vmatprep.subr.mxu0 0.0
    %1212 = vmatpush2.msra.mxu0 0.0
    %1213 = vmatprep.subr.mxu0 0.0
    %1214 = vmatpush2.msra.mxu0 0.0
    %1215 = vmatprep.subr.mxu0 0.0
    %1216 = vmatpush2.msra.mxu0 0.0
    %1217 = vmatprep.subr.mxu0 0.0
    %1218 = vmatpush2.msra.mxu0 0.0
    %1219 = vmatprep.subr.mxu0 0.0
    %1220 = vmatpush2.msra.mxu0 0.0
    %1221 = vmatprep.subr.mxu0 0.0
    %1222 = vmatpush2.msra.mxu0 0.0
    %1223 = vmatprep.subr.mxu0 0.0
    %1224 = vmatpush2.msra.mxu0 0.0
    %1225 = vmatprep.subr.mxu0 0.0
    %1226 = vmatpush2.msra.mxu0 0.0
    %1227 = vmatprep.subr.mxu0 0.0
    %1228 = vmatpush2.msra.mxu0 0.0
    %1229 = vmatprep.subr.mxu0 0.0
    %1230 = vmatpush2.msra.mxu0 0.0
    %1231 = vmatprep.subr.mxu0 0.0
    %1232 = vmatpush2.msra.mxu0 0.0
    %1233 = vmatprep.subr.mxu0 0.0
    %1234 = vmatpush2.msra.mxu0 0.0
    %1235 = vmatprep.subr.mxu0 0.0
    %1236 = vmatpush2.msra.mxu0 0.0
    %1237 = vmatprep.mubr.f32.mxu0 0.0
    %1238 = vmatmul.mubr.f32.gmra.mxu0 %v1162
    %v1239 = vpop.f32.mrf.mxu0
    %v1240 = vadd.f32 0.0, %v1239
    %v1241 = vpop.f32.mrf.mxu0
    %v1242 = vadd.f32 0.0, %v1241
    %1243 = vmatprep.mubr.f32.mxu0 0.0
    %1244 = vmatmul.mubr.f32.gmra.mxu0 %v1165
    %v1245 = vpop.f32.mrf.mxu0
    %v1246 = vadd.f32 0.0, %v1245
    %v1247 = vpop.f32.mrf.mxu0
    %v1248 = vadd.f32 0.0, %v1247
    %1249 = vmatprep.mubr.f32.mxu0 0.0
    %1250 = vmatmul.mubr.f32.gmra.mxu0 %v1168
    %v1251 = vpop.f32.mrf.mxu0
    %v1252 = vadd.f32 0.0, %v1251
    %v1253 = vpop.f32.mrf.mxu0
    %v1254 = vadd.f32 0.0, %v1253
    %1255 = vmatprep.mubr.f32.mxu0 0.0
    %1256 = vmatmul.mubr.f32.gmra.mxu0 %v1171
    %v1257 = vpop.f32.mrf.mxu0
    %v1258 = vadd.f32 0.0, %v1257
    %v1259 = vpop.f32.mrf.mxu0
    %v1260 = vadd.f32 0.0, %v1259
    %1261 = vdwg.mxu0
    %v1262 = vld [vmem:[%s13] sm:$0xff]
    %v1263 = vld [vmem:[%s13 + $0x8] sm:$0xff]
    %v1264 = vld [vmem:[%s13 + $0x10] sm:$0xff]
    %v1265 = vld [vmem:[%s13 + $0x18] sm:$0xff]
    %v1266 = vld [vmem:[%s13 + $0x20] sm:$0xff]
    %v1267 = vld [vmem:[%s13 + $0x28] sm:$0xff]
    %v1268 = vld [vmem:[%s13 + $0x30] sm:$0xff]
    %v1269 = vld [vmem:[%s13 + $0x38] sm:$0xff]
    %v1270 = vld [vmem:[%s13 + $0x40] sm:$0xff]
    %v1271 = vld [vmem:[%s13 + $0x48] sm:$0xff]
    %v1272 = vld [vmem:[%s13 + $0x50] sm:$0xff]
    %v1273 = vld [vmem:[%s13 + $0x58] sm:$0xff]
    %v1274 = vld [vmem:[%s13 + $0x60] sm:$0xff]
    %v1275 = vld [vmem:[%s13 + $0x68] sm:$0xff]
    %v1276 = vld [vmem:[%s13 + $0x70] sm:$0xff]
    %v1277 = vld [vmem:[%s13 + $0x78] sm:$0xff]
    %v1278 = vld [vmem:[%s13 + $0x80] sm:$0xff]
    %v1279 = vld [vmem:[%s13 + $0x88] sm:$0xff]
    %v1280 = vld [vmem:[%s13 + $0x90] sm:$0xff]
    %v1281 = vld [vmem:[%s13 + $0x98] sm:$0xff]
    %v1282 = vld [vmem:[%s13 + $0xa0] sm:$0xff]
    %v1283 = vld [vmem:[%s13 + $0xa8] sm:$0xff]
    %v1284 = vld [vmem:[%s13 + $0xb0] sm:$0xf]
    %vm1285 = vcmask 424960
    %v1287 = vsel %vm1285, %v1136, 0
    %v1290 = vsel %vm1285, %v1142, 0
    %v1293 = vsel %vm1285, %v1148, 0
    %v1296 = vsel %vm1285, %v1154, 0
    %v1299 = vsel %vm1060, %v1284, 0
    %1301 = vmatprep.subr.mxu0 0.0
    %1302 = vmatpush1.msra.mxu0 %v1277
    %1303 = vmatprep.subr.mxu0 0.0
    %1304 = vmatpush1.msra.mxu0 %v1276
    %1305 = vmatprep.subr.mxu0 0.0
    %1306 = vmatpush1.msra.mxu0 %v1275
    %1307 = vmatprep.subr.mxu0 0.0
    %1308 = vmatpush1.msra.mxu0 %v1274
    %1309 = vmatprep.subr.mxu0 0.0
    %1310 = vmatpush1.msra.mxu0 %v1273
    %1311 = vmatprep.subr.mxu0 0.0
    %1312 = vmatpush1.msra.mxu0 %v1272
    %1313 = vmatprep.subr.mxu0 0.0
    %1314 = vmatpush1.msra.mxu0 %v1271
    %1315 = vmatprep.subr.mxu0 0.0
    %1316 = vmatpush1.msra.mxu0 %v1270
    %1317 = vmatprep.subr.mxu0 0.0
    %1318 = vmatpush1.msra.mxu0 %v1269
    %1319 = vmatprep.subr.mxu0 0.0
    %1320 = vmatpush1.msra.mxu0 %v1268
    %1321 = vmatprep.subr.mxu0 0.0
    %1322 = vmatpush1.msra.mxu0 %v1267
    %1323 = vmatprep.subr.mxu0 0.0
    %1324 = vmatpush1.msra.mxu0 %v1266
    %1325 = vmatprep.subr.mxu0 0.0
    %1326 = vmatpush1.msra.mxu0 %v1265
    %1327 = vmatprep.subr.mxu0 0.0
    %1328 = vmatpush1.msra.mxu0 %v1264
    %1329 = vmatprep.subr.mxu0 0.0
    %1330 = vmatpush1.msra.mxu0 %v1263
    %1331 = vmatprep.subr.mxu0 0.0
    %1332 = vmatpush1.msra.mxu0 %v1262
    %1333 = vmatprep.subr.mxu0 0.0
    %1334 = vmatpush2.msra.mxu0 0.0
    %1335 = vmatprep.subr.mxu0 0.0
    %1336 = vmatpush2.msra.mxu0 0.0
    %1337 = vmatprep.subr.mxu0 0.0
    %1338 = vmatpush2.msra.mxu0 0.0
    %1339 = vmatprep.subr.mxu0 0.0
    %1340 = vmatpush2.msra.mxu0 0.0
    %1341 = vmatprep.subr.mxu0 0.0
    %1342 = vmatpush2.msra.mxu0 0.0
    %1343 = vmatprep.subr.mxu0 0.0
    %1344 = vmatpush2.msra.mxu0 0.0
    %1345 = vmatprep.subr.mxu0 0.0
    %1346 = vmatpush2.msra.mxu0 0.0
    %1347 = vmatprep.subr.mxu0 0.0
    %1348 = vmatpush2.msra.mxu0 0.0
    %1349 = vmatprep.subr.mxu0 0.0
    %1350 = vmatpush2.msra.mxu0 0.0
    %1351 = vmatprep.subr.mxu0 0.0
    %1352 = vmatpush2.msra.mxu0 %v1299
    %1353 = vmatprep.subr.mxu0 0.0
    %1354 = vmatpush2.msra.mxu0 %v1283
    %1355 = vmatprep.subr.mxu0 0.0
    %1356 = vmatpush2.msra.mxu0 %v1282
    %1357 = vmatprep.subr.mxu0 0.0
    %1358 = vmatpush2.msra.mxu0 %v1281
    %1359 = vmatprep.subr.mxu0 0.0
    %1360 = vmatpush2.msra.mxu0 %v1280
    %1361 = vmatprep.subr.mxu0 0.0
    %1362 = vmatpush2.msra.mxu0 %v1279
    %1363 = vmatprep.subr.mxu0 0.0
    %1364 = vmatpush2.msra.mxu0 %v1278
    %1365 = vmatprep.mubr.f32.mxu0 %v1287
    %1366 = vmatmul.mubr.f32.gmra.mxu0 %v1134
    %v1367 = vpop.f32.mrf.mxu0
    %v1368 = vadd.f32 0.0, %v1367
    %v1369 = vpop.f32.mrf.mxu0
    %1370 = vmatprep.mubr.f32.mxu0 %v1290
    %1371 = vmatmul.mubr.f32.gmra.mxu0 %v1140
    %v1372 = vpop.f32.mrf.mxu0
    %v1373 = vadd.f32 0.0, %v1372
    %v1374 = vpop.f32.mrf.mxu0
    %1375 = vmatprep.mubr.f32.mxu0 %v1293
    %1376 = vmatmul.mubr.f32.gmra.mxu0 %v1146
    %v1377 = vpop.f32.mrf.mxu0
    %v1378 = vadd.f32 0.0, %v1377
    %v1379 = vpop.f32.mrf.mxu0
    %1380 = vmatprep.mubr.f32.mxu0 %v1296
    %1381 = vmatmul.mubr.f32.gmra.mxu0 %v1152
    %v1382 = vpop.f32.mrf.mxu0
    %v1383 = vadd.f32 0.0, %v1382
    %v1384 = vpop.f32.mrf.mxu0
    %1385 = vdwg.mxu0
    %s1386 = scalar_lea.vmem %s13, 184
    %v1387 = vld [vmem:[%s1386] sm:$0xff]
    %v1388 = vld [vmem:[%s1386 + $0x8] sm:$0xff]
    %v1389 = vld [vmem:[%s1386 + $0x10] sm:$0xff]
    %v1390 = vld [vmem:[%s1386 + $0x18] sm:$0xff]
    %v1391 = vld [vmem:[%s1386 + $0x20] sm:$0xff]
    %v1392 = vld [vmem:[%s1386 + $0x28] sm:$0xff]
    %v1393 = vld [vmem:[%s1386 + $0x30] sm:$0xff]
    %v1394 = vld [vmem:[%s1386 + $0x38] sm:$0xff]
    %v1395 = vld [vmem:[%s1386 + $0x40] sm:$0xff]
    %v1396 = vld [vmem:[%s1386 + $0x48] sm:$0xff]
    %v1397 = vld [vmem:[%s1386 + $0x50] sm:$0xff]
    %v1398 = vld [vmem:[%s1386 + $0x58] sm:$0xff]
    %v1399 = vld [vmem:[%s1386 + $0x60] sm:$0xff]
    %v1400 = vld [vmem:[%s1386 + $0x68] sm:$0xff]
    %v1401 = vld [vmem:[%s1386 + $0x70] sm:$0xff]
    %v1402 = vld [vmem:[%s1386 + $0x78] sm:$0xff]
    %v1403 = vld [vmem:[%s1386 + $0x80] sm:$0xff]
    %v1404 = vld [vmem:[%s1386 + $0x88] sm:$0xff]
    %v1405 = vld [vmem:[%s1386 + $0x90] sm:$0xff]
    %v1406 = vld [vmem:[%s1386 + $0x98] sm:$0xff]
    %v1407 = vld [vmem:[%s1386 + $0xa0] sm:$0xff]
    %v1408 = vld [vmem:[%s1386 + $0xa8] sm:$0xff]
    %v1409 = vld [vmem:[%s1386 + $0xb0] sm:$0xf]
    %v1411 = vsel %vm1060, %v1409, 0
    %1413 = vmatprep.subr.mxu0 0.0
    %1414 = vmatpush1.msra.mxu0 %v1402
    %1415 = vmatprep.subr.mxu0 0.0
    %1416 = vmatpush1.msra.mxu0 %v1401
    %1417 = vmatprep.subr.mxu0 0.0
    %1418 = vmatpush1.msra.mxu0 %v1400
    %1419 = vmatprep.subr.mxu0 0.0
    %1420 = vmatpush1.msra.mxu0 %v1399
    %1421 = vmatprep.subr.mxu0 0.0
    %1422 = vmatpush1.msra.mxu0 %v1398
    %1423 = vmatprep.subr.mxu0 0.0
    %1424 = vmatpush1.msra.mxu0 %v1397
    %1425 = vmatprep.subr.mxu0 0.0
    %1426 = vmatpush1.msra.mxu0 %v1396
    %1427 = vmatprep.subr.mxu0 0.0
    %1428 = vmatpush1.msra.mxu0 %v1395
    %1429 = vmatprep.subr.mxu0 0.0
    %1430 = vmatpush1.msra.mxu0 %v1394
    %1431 = vmatprep.subr.mxu0 0.0
    %1432 = vmatpush1.msra.mxu0 %v1393
    %1433 = vmatprep.subr.mxu0 0.0
    %1434 = vmatpush1.msra.mxu0 %v1392
    %1435 = vmatprep.subr.mxu0 0.0
    %1436 = vmatpush1.msra.mxu0 %v1391
    %1437 = vmatprep.subr.mxu0 0.0
    %1438 = vmatpush1.msra.mxu0 %v1390
    %1439 = vmatprep.subr.mxu0 0.0
    %1440 = vmatpush1.msra.mxu0 %v1389
    %1441 = vmatprep.subr.mxu0 0.0
    %1442 = vmatpush1.msra.mxu0 %v1388
    %1443 = vmatprep.subr.mxu0 0.0
    %1444 = vmatpush1.msra.mxu0 %v1387
    %1445 = vmatprep.subr.mxu0 0.0
    %1446 = vmatpush2.msra.mxu0 0.0
    %1447 = vmatprep.subr.mxu0 0.0
    %1448 = vmatpush2.msra.mxu0 0.0
    %1449 = vmatprep.subr.mxu0 0.0
    %1450 = vmatpush2.msra.mxu0 0.0
    %1451 = vmatprep.subr.mxu0 0.0
    %1452 = vmatpush2.msra.mxu0 0.0
    %1453 = vmatprep.subr.mxu0 0.0
    %1454 = vmatpush2.msra.mxu0 0.0
    %1455 = vmatprep.subr.mxu0 0.0
    %1456 = vmatpush2.msra.mxu0 0.0
    %1457 = vmatprep.subr.mxu0 0.0
    %1458 = vmatpush2.msra.mxu0 0.0
    %1459 = vmatprep.subr.mxu0 0.0
    %1460 = vmatpush2.msra.mxu0 0.0
    %1461 = vmatprep.subr.mxu0 0.0
    %1462 = vmatpush2.msra.mxu0 0.0
    %1463 = vmatprep.subr.mxu0 0.0
    %1464 = vmatpush2.msra.mxu0 %v1411
    %1465 = vmatprep.subr.mxu0 0.0
    %1466 = vmatpush2.msra.mxu0 %v1408
    %1467 = vmatprep.subr.mxu0 0.0
    %1468 = vmatpush2.msra.mxu0 %v1407
    %1469 = vmatprep.subr.mxu0 0.0
    %1470 = vmatpush2.msra.mxu0 %v1406
    %1471 = vmatprep.subr.mxu0 0.0
    %1472 = vmatpush2.msra.mxu0 %v1405
    %1473 = vmatprep.subr.mxu0 0.0
    %1474 = vmatpush2.msra.mxu0 %v1404
    %1475 = vmatprep.subr.mxu0 0.0
    %1476 = vmatpush2.msra.mxu0 %v1403
    %1477 = vmatprep.mubr.f32.mxu0 %v1287
    %1478 = vmatmul.mubr.f32.gmra.mxu0 %v1134
    %v1479 = vpop.f32.mrf.mxu0
    %v1480 = vadd.f32 0.0, %v1479
    %v1481 = vpop.f32.mrf.mxu0
    %1482 = vmatprep.mubr.f32.mxu0 %v1290
    %1483 = vmatmul.mubr.f32.gmra.mxu0 %v1140
    %v1484 = vpop.f32.mrf.mxu0
    %v1485 = vadd.f32 0.0, %v1484
    %v1486 = vpop.f32.mrf.mxu0
    %1487 = vmatprep.mubr.f32.mxu0 %v1293
    %1488 = vmatmul.mubr.f32.gmra.mxu0 %v1146
    %v1489 = vpop.f32.mrf.mxu0
    %v1490 = vadd.f32 0.0, %v1489
    %v1491 = vpop.f32.mrf.mxu0
    %1492 = vmatprep.mubr.f32.mxu0 %v1296
    %1493 = vmatmul.mubr.f32.gmra.mxu0 %v1152
    %v1494 = vpop.f32.mrf.mxu0
    %v1495 = vadd.f32 0.0, %v1494
    %v1496 = vpop.f32.mrf.mxu0
    %1497 = vdwg.mxu0
    %v1498 = vmax.f32 %v1368, %v1480
    %v1499 = vmax.f32 %v1373, %v1485
    %v1500 = vmax.f32 %v1378, %v1490
    %v1501 = vmax.f32 %v1383, %v1495
    %v1503 = vsel %vm1285, %v1242, 0
    %v1506 = vsel %vm1285, %v1248, 0
    %v1509 = vsel %vm1285, %v1254, 0
    %v1512 = vsel %vm1285, %v1260, 0
    %1514 = vmatprep.subr.mxu0 0.0
    %1515 = vmatpush1.msra.mxu0 %v1277
    %1516 = vmatprep.subr.mxu0 0.0
    %1517 = vmatpush1.msra.mxu0 %v1276
    %1518 = vmatprep.subr.mxu0 0.0
    %1519 = vmatpush1.msra.mxu0 %v1275
    %1520 = vmatprep.subr.mxu0 0.0
    %1521 = vmatpush1.msra.mxu0 %v1274
    %1522 = vmatprep.subr.mxu0 0.0
    %1523 = vmatpush1.msra.mxu0 %v1273
    %1524 = vmatprep.subr.mxu0 0.0
    %1525 = vmatpush1.msra.mxu0 %v1272
    %1526 = vmatprep.subr.mxu0 0.0
    %1527 = vmatpush1.msra.mxu0 %v1271
    %1528 = vmatprep.subr.mxu0 0.0
    %1529 = vmatpush1.msra.mxu0 %v1270
    %1530 = vmatprep.subr.mxu0 0.0
    %1531 = vmatpush1.msra.mxu0 %v1269
    %1532 = vmatprep.subr.mxu0 0.0
    %1533 = vmatpush1.msra.mxu0 %v1268
    %1534 = vmatprep.subr.mxu0 0.0
    %1535 = vmatpush1.msra.mxu0 %v1267
    %1536 = vmatprep.subr.mxu0 0.0
    %1537 = vmatpush1.msra.mxu0 %v1266
    %1538 = vmatprep.subr.mxu0 0.0
    %1539 = vmatpush1.msra.mxu0 %v1265
    %1540 = vmatprep.subr.mxu0 0.0
    %1541 = vmatpush1.msra.mxu0 %v1264
    %1542 = vmatprep.subr.mxu0 0.0
    %1543 = vmatpush1.msra.mxu0 %v1263
    %1544 = vmatprep.subr.mxu0 0.0
    %1545 = vmatpush1.msra.mxu0 %v1262
    %1546 = vmatprep.subr.mxu0 0.0
    %1547 = vmatpush2.msra.mxu0 0.0
    %1548 = vmatprep.subr.mxu0 0.0
    %1549 = vmatpush2.msra.mxu0 0.0
    %1550 = vmatprep.subr.mxu0 0.0
    %1551 = vmatpush2.msra.mxu0 0.0
    %1552 = vmatprep.subr.mxu0 0.0
    %1553 = vmatpush2.msra.mxu0 0.0
    %1554 = vmatprep.subr.mxu0 0.0
    %1555 = vmatpush2.msra.mxu0 0.0
    %1556 = vmatprep.subr.mxu0 0.0
    %1557 = vmatpush2.msra.mxu0 0.0
    %1558 = vmatprep.subr.mxu0 0.0
    %1559 = vmatpush2.msra.mxu0 0.0
    %1560 = vmatprep.subr.mxu0 0.0
    %1561 = vmatpush2.msra.mxu0 0.0
    %1562 = vmatprep.subr.mxu0 0.0
    %1563 = vmatpush2.msra.mxu0 0.0
    %1564 = vmatprep.subr.mxu0 0.0
    %1565 = vmatpush2.msra.mxu0 %v1299
    %1566 = vmatprep.subr.mxu0 0.0
    %1567 = vmatpush2.msra.mxu0 %v1283
    %1568 = vmatprep.subr.mxu0 0.0
    %1569 = vmatpush2.msra.mxu0 %v1282
    %1570 = vmatprep.subr.mxu0 0.0
    %1571 = vmatpush2.msra.mxu0 %v1281
    %1572 = vmatprep.subr.mxu0 0.0
    %1573 = vmatpush2.msra.mxu0 %v1280
    %1574 = vmatprep.subr.mxu0 0.0
    %1575 = vmatpush2.msra.mxu0 %v1279
    %1576 = vmatprep.subr.mxu0 0.0
    %1577 = vmatpush2.msra.mxu0 %v1278
    %1578 = vmatprep.mubr.f32.mxu0 %v1503
    %1579 = vmatmul.mubr.f32.gmra.mxu0 %v1240
    %v1580 = vpop.f32.mrf.mxu0
    %v1581 = vadd.f32 0.0, %v1580
    %v1582 = vpop.f32.mrf.mxu0
    %1583 = vmatprep.mubr.f32.mxu0 %v1506
    %1584 = vmatmul.mubr.f32.gmra.mxu0 %v1246
    %v1585 = vpop.f32.mrf.mxu0
    %v1586 = vadd.f32 0.0, %v1585
    %v1587 = vpop.f32.mrf.mxu0
    %1588 = vmatprep.mubr.f32.mxu0 %v1509
    %1589 = vmatmul.mubr.f32.gmra.mxu0 %v1252
    %v1590 = vpop.f32.mrf.mxu0
    %v1591 = vadd.f32 0.0, %v1590
    %v1592 = vpop.f32.mrf.mxu0
    %1593 = vmatprep.mubr.f32.mxu0 %v1512
    %1594 = vmatmul.mubr.f32.gmra.mxu0 %v1258
    %v1595 = vpop.f32.mrf.mxu0
    %v1596 = vadd.f32 0.0, %v1595
    %v1597 = vpop.f32.mrf.mxu0
    %1598 = vdwg.mxu0
    %1599 = vmatprep.subr.mxu0 0.0
    %1600 = vmatpush1.msra.mxu0 %v1402
    %1601 = vmatprep.subr.mxu0 0.0
    %1602 = vmatpush1.msra.mxu0 %v1401
    %1603 = vmatprep.subr.mxu0 0.0
    %1604 = vmatpush1.msra.mxu0 %v1400
    %1605 = vmatprep.subr.mxu0 0.0
    %1606 = vmatpush1.msra.mxu0 %v1399
    %1607 = vmatprep.subr.mxu0 0.0
    %1608 = vmatpush1.msra.mxu0 %v1398
    %1609 = vmatprep.subr.mxu0 0.0
    %1610 = vmatpush1.msra.mxu0 %v1397
    %1611 = vmatprep.subr.mxu0 0.0
    %1612 = vmatpush1.msra.mxu0 %v1396
    %1613 = vmatprep.subr.mxu0 0.0
    %1614 = vmatpush1.msra.mxu0 %v1395
    %1615 = vmatprep.subr.mxu0 0.0
    %1616 = vmatpush1.msra.mxu0 %v1394
    %1617 = vmatprep.subr.mxu0 0.0
    %1618 = vmatpush1.msra.mxu0 %v1393
    %1619 = vmatprep.subr.mxu0 0.0
    %1620 = vmatpush1.msra.mxu0 %v1392
    %1621 = vmatprep.subr.mxu0 0.0
    %1622 = vmatpush1.msra.mxu0 %v1391
    %1623 = vmatprep.subr.mxu0 0.0
    %1624 = vmatpush1.msra.mxu0 %v1390
    %1625 = vmatprep.subr.mxu0 0.0
    %1626 = vmatpush1.msra.mxu0 %v1389
    %1627 = vmatprep.subr.mxu0 0.0
    %1628 = vmatpush1.msra.mxu0 %v1388
    %1629 = vmatprep.subr.mxu0 0.0
    %1630 = vmatpush1.msra.mxu0 %v1387
    %1631 = vmatprep.subr.mxu0 0.0
    %1632 = vmatpush2.msra.mxu0 0.0
    %1633 = vmatprep.subr.mxu0 0.0
    %1634 = vmatpush2.msra.mxu0 0.0
    %1635 = vmatprep.subr.mxu0 0.0
    %1636 = vmatpush2.msra.mxu0 0.0
    %1637 = vmatprep.subr.mxu0 0.0
    %1638 = vmatpush2.msra.mxu0 0.0
    %1639 = vmatprep.subr.mxu0 0.0
    %1640 = vmatpush2.msra.mxu0 0.0
    %1641 = vmatprep.subr.mxu0 0.0
    %1642 = vmatpush2.msra.mxu0 0.0
    %1643 = vmatprep.subr.mxu0 0.0
    %1644 = vmatpush2.msra.mxu0 0.0
    %1645 = vmatprep.subr.mxu0 0.0
    %1646 = vmatpush2.msra.mxu0 0.0
    %1647 = vmatprep.subr.mxu0 0.0
    %1648 = vmatpush2.msra.mxu0 0.0
    %1649 = vmatprep.subr.mxu0 0.0
    %1650 = vmatpush2.msra.mxu0 %v1411
    %1651 = vmatprep.subr.mxu0 0.0
    %1652 = vmatpush2.msra.mxu0 %v1408
    %1653 = vmatprep.subr.mxu0 0.0
    %1654 = vmatpush2.msra.mxu0 %v1407
    %1655 = vmatprep.subr.mxu0 0.0
    %1656 = vmatpush2.msra.mxu0 %v1406
    %1657 = vmatprep.subr.mxu0 0.0
    %1658 = vmatpush2.msra.mxu0 %v1405
    %1659 = vmatprep.subr.mxu0 0.0
    %1660 = vmatpush2.msra.mxu0 %v1404
    %1661 = vmatprep.subr.mxu0 0.0
    %1662 = vmatpush2.msra.mxu0 %v1403
    %1663 = vmatprep.mubr.f32.mxu0 %v1503
    %1664 = vmatmul.mubr.f32.gmra.mxu0 %v1240
    %v1665 = vpop.f32.mrf.mxu0
    %v1666 = vadd.f32 0.0, %v1665
    %v1667 = vpop.f32.mrf.mxu0
    %1668 = vmatprep.mubr.f32.mxu0 %v1506
    %1669 = vmatmul.mubr.f32.gmra.mxu0 %v1246
    %v1670 = vpop.f32.mrf.mxu0
    %v1671 = vadd.f32 0.0, %v1670
    %v1672 = vpop.f32.mrf.mxu0
    %1673 = vmatprep.mubr.f32.mxu0 %v1509
    %1674 = vmatmul.mubr.f32.gmra.mxu0 %v1252
    %v1675 = vpop.f32.mrf.mxu0
    %v1676 = vadd.f32 0.0, %v1675
    %v1677 = vpop.f32.mrf.mxu0
    %1678 = vmatprep.mubr.f32.mxu0 %v1512
    %1679 = vmatmul.mubr.f32.gmra.mxu0 %v1258
    %v1680 = vpop.f32.mrf.mxu0
    %v1681 = vadd.f32 0.0, %v1680
    %v1682 = vpop.f32.mrf.mxu0
    %1683 = vdwg.mxu0
    %v1684 = vmax.f32 %v1581, %v1666
    %v1685 = vmax.f32 %v1586, %v1671
    %v1686 = vmax.f32 %v1591, %v1676
    %v1687 = vmax.f32 %v1596, %v1681
    %v1688 = vmax.f32 %v1498, %v1684
    %v1689 = vmax.f32 %v1499, %v1685
    %v1690 = vmax.f32 %v1500, %v1686
    %v1691 = vmax.f32 %v1501, %v1687
    %v1692 = vld [vmem:[%s15] sm:$0xff]
    %v1693 = vld [vmem:[%s15 + $0x8] sm:$0xff]
    %v1694 = vld [vmem:[%s15 + $0x10] sm:$0x3f]
    %vm1695 = vcmask 244736
    %v1697 = vsel %vm1695, %v1692, 0
    %v1700 = vsel %vm1695, %v1693, 0
    %v1703 = vsel %vm1695, %v1694, 0
    %vm1705 = vcmask 1045504
    %v1707 = vsel %vm1705, %v1691, 0
    %1709 = vmatprep.subr.mxu0 0.0
    %1710 = vmatpush1.msra.mxu0 0.0
    %1711 = vmatprep.subr.mxu0 0.0
    %1712 = vmatpush1.msra.mxu0 0.0
    %1713 = vmatprep.subr.mxu0 0.0
    %1714 = vmatpush1.msra.mxu0 0.0
    %1715 = vmatprep.subr.mxu0 0.0
    %1716 = vmatpush1.msra.mxu0 0.0
    %1717 = vmatprep.subr.mxu0 0.0
    %1718 = vmatpush1.msra.mxu0 0.0
    %1719 = vmatprep.subr.mxu0 0.0
    %1720 = vmatpush1.msra.mxu0 0.0
    %1721 = vmatprep.subr.mxu0 0.0
    %1722 = vmatpush1.msra.mxu0 0.0
    %1723 = vmatprep.subr.mxu0 0.0
    %1724 = vmatpush1.msra.mxu0 0.0
    %1725 = vmatprep.subr.mxu0 0.0
    %1726 = vmatpush1.msra.mxu0 0.0
    %1727 = vmatprep.subr.mxu0 0.0
    %1728 = vmatpush1.msra.mxu0 0.0
    %1729 = vmatprep.subr.mxu0 0.0
    %1730 = vmatpush1.msra.mxu0 0.0
    %1731 = vmatprep.subr.mxu0 0.0
    %1732 = vmatpush1.msra.mxu0 0.0
    %1733 = vmatprep.subr.mxu0 0.0
    %1734 = vmatpush1.msra.mxu0 %v1707
    %1735 = vmatprep.subr.mxu0 0.0
    %1736 = vmatpush1.msra.mxu0 %v1690
    %1737 = vmatprep.subr.mxu0 0.0
    %1738 = vmatpush1.msra.mxu0 %v1689
    %1739 = vmatprep.subr.mxu0 0.0
    %1740 = vmatpush1.msra.mxu0 %v1688
    %1741 = vmatprep.subr.mxu0 0.0
    %1742 = vmatpush2.msra.mxu0 0.0
    %1743 = vmatprep.subr.mxu0 0.0
    %1744 = vmatpush2.msra.mxu0 0.0
    %1745 = vmatprep.subr.mxu0 0.0
    %1746 = vmatpush2.msra.mxu0 0.0
    %1747 = vmatprep.subr.mxu0 0.0
    %1748 = vmatpush2.msra.mxu0 0.0
    %1749 = vmatprep.subr.mxu0 0.0
    %1750 = vmatpush2.msra.mxu0 0.0
    %1751 = vmatprep.subr.mxu0 0.0
    %1752 = vmatpush2.msra.mxu0 0.0
    %1753 = vmatprep.subr.mxu0 0.0
    %1754 = vmatpush2.msra.mxu0 0.0
    %1755 = vmatprep.subr.mxu0 0.0
    %1756 = vmatpush2.msra.mxu0 0.0
    %1757 = vmatprep.subr.mxu0 0.0
    %1758 = vmatpush2.msra.mxu0 0.0
    %1759 = vmatprep.subr.mxu0 0.0
    %1760 = vmatpush2.msra.mxu0 0.0
    %1761 = vmatprep.subr.mxu0 0.0
    %1762 = vmatpush2.msra.mxu0 0.0
    %1763 = vmatprep.subr.mxu0 0.0
    %1764 = vmatpush2.msra.mxu0 0.0
    %1765 = vmatprep.subr.mxu0 0.0
    %1766 = vmatpush2.msra.mxu0 0.0
    %1767 = vmatprep.subr.mxu0 0.0
    %1768 = vmatpush2.msra.mxu0 0.0
    %1769 = vmatprep.subr.mxu0 0.0
    %1770 = vmatpush2.msra.mxu0 0.0
    %1771 = vmatprep.subr.mxu0 0.0
    %1772 = vmatpush2.msra.mxu0 0.0
    %1773 = vmatprep.mubr.f32.mxu0 0.0
    %1774 = vmatmul.mubr.f32.gmra.mxu0 %v1697
    %v1775 = vpop.f32.mrf.mxu0
    %v1776 = vadd.f32 0.0, %v1775
    %v1777 = vpop.f32.mrf.mxu0
    %1778 = vmatprep.mubr.f32.mxu0 0.0
    %1779 = vmatmul.mubr.f32.gmra.mxu0 %v1700
    %v1780 = vpop.f32.mrf.mxu0
    %v1781 = vadd.f32 0.0, %v1780
    %v1782 = vpop.f32.mrf.mxu0
    %1783 = vmatprep.mubr.f32.mxu0 0.0
    %1784 = vmatmul.mubr.f32.gmra.mxu0 %v1703
    %v1785 = vpop.f32.mrf.mxu0
    %v1786 = vadd.f32 0.0, %v1785
    %v1787 = vpop.f32.mrf.mxu0
    %1788 = vdwg.mxu0
    %v1789 = vld [vmem:[%s17] sm:$0xff]
    %v1790 = vld [vmem:[%s17 + $0x8] sm:$0xff]
    %v1791 = vld [vmem:[%s17 + $0x10] sm:$0xff]
    %v1792 = vld [vmem:[%s17 + $0x18] sm:$0xff]
    %v1793 = vld [vmem:[%s17 + $0x20] sm:$0xff]
    %v1794 = vld [vmem:[%s17 + $0x28] sm:$0xff]
    %v1795 = vld [vmem:[%s17 + $0x30] sm:$0xff]
    %v1796 = vld [vmem:[%s17 + $0x38] sm:$0xff]
    %v1797 = vld [vmem:[%s17 + $0x40] sm:$0xff]
    %v1798 = vld [vmem:[%s17 + $0x48] sm:$0xff]
    %v1799 = vld [vmem:[%s17 + $0x50] sm:$0xff]
    %v1800 = vld [vmem:[%s17 + $0x58] sm:$0xff]
    %v1801 = vld [vmem:[%s17 + $0x60] sm:$0xff]
    %v1802 = vld [vmem:[%s17 + $0x68] sm:$0xff]
    %v1803 = vld [vmem:[%s17 + $0x70] sm:$0xff]
    %v1804 = vld [vmem:[%s17 + $0x78] sm:$0xff]
    %v1805 = vld [vmem:[%s17 + $0x80] sm:$0xff]
    %v1806 = vld [vmem:[%s17 + $0x88] sm:$0xff]
    %v1807 = vld [vmem:[%s17 + $0x90] sm:$0xff]
    %v1808 = vld [vmem:[%s17 + $0x98] sm:$0xff]
    %v1809 = vld [vmem:[%s17 + $0xa0] sm:$0xff]
    %v1810 = vld [vmem:[%s17 + $0xa8] sm:$0xff]
    %v1811 = vld [vmem:[%s17 + $0xb0] sm:$0x3]
    %v1812 = vld [vmem:[%s17 + $0xb8] sm:$0x3]
    %s1813 = scalar_lea.vmem %s15, 24
    %v1814 = vld [vmem:[%s1813] sm:$0xff]
    %v1815 = vld [vmem:[%s1813 + $0x8] sm:$0xff]
    %v1816 = vld [vmem:[%s1813 + $0x10] sm:$0x3f]
    %v1818 = vsel %vm1695, %v1814, 0
    %v1821 = vsel %vm1695, %v1815, 0
    %v1824 = vsel %vm1695, %v1816, 0
    %1826 = vmatprep.subr.mxu0 0.0
    %1827 = vmatpush1.msra.mxu0 0.0
    %1828 = vmatprep.subr.mxu0 0.0
    %1829 = vmatpush1.msra.mxu0 0.0
    %1830 = vmatprep.subr.mxu0 0.0
    %1831 = vmatpush1.msra.mxu0 0.0
    %1832 = vmatprep.subr.mxu0 0.0
    %1833 = vmatpush1.msra.mxu0 0.0
    %1834 = vmatprep.subr.mxu0 0.0
    %1835 = vmatpush1.msra.mxu0 0.0
    %1836 = vmatprep.subr.mxu0 0.0
    %1837 = vmatpush1.msra.mxu0 0.0
    %1838 = vmatprep.subr.mxu0 0.0
    %1839 = vmatpush1.msra.mxu0 0.0
    %1840 = vmatprep.subr.mxu0 0.0
    %1841 = vmatpush1.msra.mxu0 0.0
    %1842 = vmatprep.subr.mxu0 0.0
    %1843 = vmatpush1.msra.mxu0 0.0
    %1844 = vmatprep.subr.mxu0 0.0
    %1845 = vmatpush1.msra.mxu0 0.0
    %1846 = vmatprep.subr.mxu0 0.0
    %1847 = vmatpush1.msra.mxu0 0.0
    %1848 = vmatprep.subr.mxu0 0.0
    %1849 = vmatpush1.msra.mxu0 0.0
    %1850 = vmatprep.subr.mxu0 0.0
    %1851 = vmatpush1.msra.mxu0 %v1707
    %1852 = vmatprep.subr.mxu0 0.0
    %1853 = vmatpush1.msra.mxu0 %v1690
    %1854 = vmatprep.subr.mxu0 0.0
    %1855 = vmatpush1.msra.mxu0 %v1689
    %1856 = vmatprep.subr.mxu0 0.0
    %1857 = vmatpush1.msra.mxu0 %v1688
    %1858 = vmatprep.subr.mxu0 0.0
    %1859 = vmatpush2.msra.mxu0 0.0
    %1860 = vmatprep.subr.mxu0 0.0
    %1861 = vmatpush2.msra.mxu0 0.0
    %1862 = vmatprep.subr.mxu0 0.0
    %1863 = vmatpush2.msra.mxu0 0.0
    %1864 = vmatprep.subr.mxu0 0.0
    %1865 = vmatpush2.msra.mxu0 0.0
    %1866 = vmatprep.subr.mxu0 0.0
    %1867 = vmatpush2.msra.mxu0 0.0
    %1868 = vmatprep.subr.mxu0 0.0
    %1869 = vmatpush2.msra.mxu0 0.0
    %1870 = vmatprep.subr.mxu0 0.0
    %1871 = vmatpush2.msra.mxu0 0.0
    %1872 = vmatprep.subr.mxu0 0.0
    %1873 = vmatpush2.msra.mxu0 0.0
    %1874 = vmatprep.subr.mxu0 0.0
    %1875 = vmatpush2.msra.mxu0 0.0
    %1876 = vmatprep.subr.mxu0 0.0
    %1877 = vmatpush2.msra.mxu0 0.0
    %1878 = vmatprep.subr.mxu0 0.0
    %1879 = vmatpush2.msra.mxu0 0.0
    %1880 = vmatprep.subr.mxu0 0.0
    %1881 = vmatpush2.msra.mxu0 0.0
    %1882 = vmatprep.subr.mxu0 0.0
    %1883 = vmatpush2.msra.mxu0 0.0
    %1884 = vmatprep.subr.mxu0 0.0
    %1885 = vmatpush2.msra.mxu0 0.0
    %1886 = vmatprep.subr.mxu0 0.0
    %1887 = vmatpush2.msra.mxu0 0.0
    %1888 = vmatprep.subr.mxu0 0.0
    %1889 = vmatpush2.msra.mxu0 0.0
    %1890 = vmatprep.mubr.f32.mxu0 0.0
    %1891 = vmatmul.mubr.f32.gmra.mxu0 %v1818
    %v1892 = vpop.f32.mrf.mxu0
    %v1893 = vadd.f32 0.0, %v1892
    %v1894 = vpop.f32.mrf.mxu0
    %1895 = vmatprep.mubr.f32.mxu0 0.0
    %1896 = vmatmul.mubr.f32.gmra.mxu0 %v1821
    %v1897 = vpop.f32.mrf.mxu0
    %v1898 = vadd.f32 0.0, %v1897
    %v1899 = vpop.f32.mrf.mxu0
    %1900 = vmatprep.mubr.f32.mxu0 0.0
    %1901 = vmatmul.mubr.f32.gmra.mxu0 %v1824
    %v1902 = vpop.f32.mrf.mxu0
    %v1903 = vadd.f32 0.0, %v1902
    %v1904 = vpop.f32.mrf.mxu0
    %1905 = vdwg.mxu0
    %s1906 = scalar_lea.vmem %s17, 192
    %v1907 = vld [vmem:[%s1906] sm:$0xff]
    %v1908 = vld [vmem:[%s1906 + $0x8] sm:$0xff]
    %v1909 = vld [vmem:[%s1906 + $0x10] sm:$0xff]
    %v1910 = vld [vmem:[%s1906 + $0x18] sm:$0xff]
    %v1911 = vld [vmem:[%s1906 + $0x20] sm:$0xff]
    %v1912 = vld [vmem:[%s1906 + $0x28] sm:$0xff]
    %v1913 = vld [vmem:[%s1906 + $0x30] sm:$0xff]
    %v1914 = vld [vmem:[%s1906 + $0x38] sm:$0xff]
    %v1915 = vld [vmem:[%s1906 + $0x40] sm:$0xff]
    %v1916 = vld [vmem:[%s1906 + $0x48] sm:$0xff]
    %v1917 = vld [vmem:[%s1906 + $0x50] sm:$0xff]
    %v1918 = vld [vmem:[%s1906 + $0x58] sm:$0xff]
    %v1919 = vld [vmem:[%s1906 + $0x60] sm:$0xff]
    %v1920 = vld [vmem:[%s1906 + $0x68] sm:$0xff]
    %v1921 = vld [vmem:[%s1906 + $0x70] sm:$0xff]
    %v1922 = vld [vmem:[%s1906 + $0x78] sm:$0xff]
    %v1923 = vld [vmem:[%s1906 + $0x80] sm:$0xff]
    %v1924 = vld [vmem:[%s1906 + $0x88] sm:$0xff]
    %v1925 = vld [vmem:[%s1906 + $0x90] sm:$0xff]
    %v1926 = vld [vmem:[%s1906 + $0x98] sm:$0xff]
    %v1927 = vld [vmem:[%s1906 + $0xa0] sm:$0xff]
    %v1928 = vld [vmem:[%s1906 + $0xa8] sm:$0xff]
    %v1929 = vld [vmem:[%s1906 + $0xb0] sm:$0x3]
    %v1930 = vld [vmem:[%s1906 + $0xb8] sm:$0x3]
    %vm1931 = vcmask 736256
    %v1933 = vsel %vm1931, %v1893, 0
    %v1936 = vsel %vm1931, %v1898, 0
    %v1939 = vsel %vm1931, %v1903, 0
    %vm1941 = vcmask 1041408
    %v1943 = vsel %vm1941, %v1929, 0
    %v1946 = vsel %vm1941, %v1930, 0
    %1948 = vmatprep.subr.mxu0 0.0
    %1949 = vmatpush1.msra.mxu0 0.0
    %1950 = vmatprep.subr.mxu0 0.0
    %1951 = vmatpush1.msra.mxu0 0.0
    %1952 = vmatprep.subr.mxu0 0.0
    %1953 = vmatpush1.msra.mxu0 0.0
    %1954 = vmatprep.subr.mxu0 0.0
    %1955 = vmatpush1.msra.mxu0 0.0
    %1956 = vmatprep.subr.mxu0 %v1946
    %1957 = vmatpush1.msra.mxu0 %v1943
    %1958 = vmatprep.subr.mxu0 %v1928
    %1959 = vmatpush1.msra.mxu0 %v1927
    %1960 = vmatprep.subr.mxu0 %v1926
    %1961 = vmatpush1.msra.mxu0 %v1925
    %1962 = vmatprep.subr.mxu0 %v1924
    %1963 = vmatpush1.msra.mxu0 %v1923
    %1964 = vmatprep.subr.mxu0 %v1922
    %1965 = vmatpush1.msra.mxu0 %v1921
    %1966 = vmatprep.subr.mxu0 %v1920
    %1967 = vmatpush1.msra.mxu0 %v1919
    %1968 = vmatprep.subr.mxu0 %v1918
    %1969 = vmatpush1.msra.mxu0 %v1917
    %1970 = vmatprep.subr.mxu0 %v1916
    %1971 = vmatpush1.msra.mxu0 %v1915
    %1972 = vmatprep.subr.mxu0 %v1914
    %1973 = vmatpush1.msra.mxu0 %v1913
    %1974 = vmatprep.subr.mxu0 %v1912
    %1975 = vmatpush1.msra.mxu0 %v1911
    %1976 = vmatprep.subr.mxu0 %v1910
    %1977 = vmatpush1.msra.mxu0 %v1909
    %1978 = vmatprep.subr.mxu0 %v1908
    %1979 = vmatpush1.msra.mxu0 %v1907
    %1980 = vmatprep.subr.mxu0 0.0
    %1981 = vmatpush2.msra.mxu0 0.0
    %1982 = vmatprep.subr.mxu0 0.0
    %1983 = vmatpush2.msra.mxu0 0.0
    %1984 = vmatprep.subr.mxu0 0.0
    %1985 = vmatpush2.msra.mxu0 0.0
    %1986 = vmatprep.subr.mxu0 0.0
    %1987 = vmatpush2.msra.mxu0 0.0
    %1988 = vmatprep.subr.mxu0 0.0
    %1989 = vmatpush2.msra.mxu0 0.0
    %1990 = vmatprep.subr.mxu0 0.0
    %1991 = vmatpush2.msra.mxu0 0.0
    %1992 = vmatprep.subr.mxu0 0.0
    %1993 = vmatpush2.msra.mxu0 0.0
    %1994 = vmatprep.subr.mxu0 0.0
    %1995 = vmatpush2.msra.mxu0 0.0
    %1996 = vmatprep.subr.mxu0 0.0
    %1997 = vmatpush2.msra.mxu0 0.0
    %1998 = vmatprep.subr.mxu0 0.0
    %1999 = vmatpush2.msra.mxu0 0.0
    %2000 = vmatprep.subr.mxu0 0.0
    %2001 = vmatpush2.msra.mxu0 0.0
    %2002 = vmatprep.subr.mxu0 0.0
    %2003 = vmatpush2.msra.mxu0 0.0
    %2004 = vmatprep.subr.mxu0 0.0
    %2005 = vmatpush2.msra.mxu0 0.0
    %2006 = vmatprep.subr.mxu0 0.0
    %2007 = vmatpush2.msra.mxu0 0.0
    %2008 = vmatprep.subr.mxu0 0.0
    %2009 = vmatpush2.msra.mxu0 0.0
    %2010 = vmatprep.subr.mxu0 0.0
    %2011 = vmatpush2.msra.mxu0 0.0
    %2012 = vmatprep.mubr.f32.mxu0 0.0
    %2013 = vmatmul.mubr.f32.gmra.mxu0 %v1933
    %v2014 = vpop.f32.mrf.mxu0
    %v2015 = vadd.f32 0.0, %v2014
    %v2016 = vpop.f32.mrf.mxu0
    %v2017 = vadd.f32 0.0, %v2016
    %2018 = vmatprep.mubr.f32.mxu0 0.0
    %2019 = vmatmul.mubr.f32.gmra.mxu0 %v1936
    %v2020 = vpop.f32.mrf.mxu0
    %v2021 = vadd.f32 0.0, %v2020
    %v2022 = vpop.f32.mrf.mxu0
    %v2023 = vadd.f32 0.0, %v2022
    %2024 = vmatprep.mubr.f32.mxu0 0.0
    %2025 = vmatmul.mubr.f32.gmra.mxu0 %v1939
    %v2026 = vpop.f32.mrf.mxu0
    %v2027 = vadd.f32 0.0, %v2026
    %v2028 = vpop.f32.mrf.mxu0
    %v2029 = vadd.f32 0.0, %v2028
    %2030 = vdwg.mxu0
    %v2032 = vsel %vm1931, %v1776, 0
    %v2035 = vsel %vm1931, %v1781, 0
    %v2038 = vsel %vm1931, %v1786, 0
    %v2041 = vsel %vm1941, %v1811, 0
    %v2044 = vsel %vm1941, %v1812, 0
    %2046 = vmatprep.subr.mxu0 0.0
    %2047 = vmatpush1.msra.mxu0 0.0
    %2048 = vmatprep.subr.mxu0 0.0
    %2049 = vmatpush1.msra.mxu0 0.0
    %2050 = vmatprep.subr.mxu0 0.0
    %2051 = vmatpush1.msra.mxu0 0.0
    %2052 = vmatprep.subr.mxu0 0.0
    %2053 = vmatpush1.msra.mxu0 0.0
    %2054 = vmatprep.subr.mxu0 %v2044
    %2055 = vmatpush1.msra.mxu0 %v2041
    %2056 = vmatprep.subr.mxu0 %v1810
    %2057 = vmatpush1.msra.mxu0 %v1809
    %2058 = vmatprep.subr.mxu0 %v1808
    %2059 = vmatpush1.msra.mxu0 %v1807
    %2060 = vmatprep.subr.mxu0 %v1806
    %2061 = vmatpush1.msra.mxu0 %v1805
    %2062 = vmatprep.subr.mxu0 %v1804
    %2063 = vmatpush1.msra.mxu0 %v1803
    %2064 = vmatprep.subr.mxu0 %v1802
    %2065 = vmatpush1.msra.mxu0 %v1801
    %2066 = vmatprep.subr.mxu0 %v1800
    %2067 = vmatpush1.msra.mxu0 %v1799
    %2068 = vmatprep.subr.mxu0 %v1798
    %2069 = vmatpush1.msra.mxu0 %v1797
    %2070 = vmatprep.subr.mxu0 %v1796
    %2071 = vmatpush1.msra.mxu0 %v1795
    %2072 = vmatprep.subr.mxu0 %v1794
    %2073 = vmatpush1.msra.mxu0 %v1793
    %2074 = vmatprep.subr.mxu0 %v1792
    %2075 = vmatpush1.msra.mxu0 %v1791
    %2076 = vmatprep.subr.mxu0 %v1790
    %2077 = vmatpush1.msra.mxu0 %v1789
    %2078 = vmatprep.subr.mxu0 0.0
    %2079 = vmatpush2.msra.mxu0 0.0
    %2080 = vmatprep.subr.mxu0 0.0
    %2081 = vmatpush2.msra.mxu0 0.0
    %2082 = vmatprep.subr.mxu0 0.0
    %2083 = vmatpush2.msra.mxu0 0.0
    %2084 = vmatprep.subr.mxu0 0.0
    %2085 = vmatpush2.msra.mxu0 0.0
    %2086 = vmatprep.subr.mxu0 0.0
    %2087 = vmatpush2.msra.mxu0 0.0
    %2088 = vmatprep.subr.mxu0 0.0
    %2089 = vmatpush2.msra.mxu0 0.0
    %2090 = vmatprep.subr.mxu0 0.0
    %2091 = vmatpush2.msra.mxu0 0.0
    %2092 = vmatprep.subr.mxu0 0.0
    %2093 = vmatpush2.msra.mxu0 0.0
    %2094 = vmatprep.subr.mxu0 0.0
    %2095 = vmatpush2.msra.mxu0 0.0
    %2096 = vmatprep.subr.mxu0 0.0
    %2097 = vmatpush2.msra.mxu0 0.0
    %2098 = vmatprep.subr.mxu0 0.0
    %2099 = vmatpush2.msra.mxu0 0.0
    %2100 = vmatprep.subr.mxu0 0.0
    %2101 = vmatpush2.msra.mxu0 0.0
    %2102 = vmatprep.subr.mxu0 0.0
    %2103 = vmatpush2.msra.mxu0 0.0
    %2104 = vmatprep.subr.mxu0 0.0
    %2105 = vmatpush2.msra.mxu0 0.0
    %2106 = vmatprep.subr.mxu0 0.0
    %2107 = vmatpush2.msra.mxu0 0.0
    %2108 = vmatprep.subr.mxu0 0.0
    %2109 = vmatpush2.msra.mxu0 0.0
    %2110 = vmatprep.mubr.f32.mxu0 0.0
    %2111 = vmatmul.mubr.f32.gmra.mxu0 %v2032
    %v2112 = vpop.f32.mrf.mxu0
    %v2113 = vadd.f32 %v2015, %v2112
    %v2114 = vpop.f32.mrf.mxu0
    %v2115 = vadd.f32 %v2017, %v2114
    %2116 = vmatprep.mubr.f32.mxu0 0.0
    %2117 = vmatmul.mubr.f32.gmra.mxu0 %v2035
    %v2118 = vpop.f32.mrf.mxu0
    %v2119 = vadd.f32 %v2021, %v2118
    %v2120 = vpop.f32.mrf.mxu0
    %v2121 = vadd.f32 %v2023, %v2120
    %2122 = vmatprep.mubr.f32.mxu0 0.0
    %2123 = vmatmul.mubr.f32.gmra.mxu0 %v2038
    %v2124 = vpop.f32.mrf.mxu0
    %v2125 = vadd.f32 %v2027, %v2124
    %v2126 = vpop.f32.mrf.mxu0
    %v2127 = vadd.f32 %v2029, %v2126
    %2128 = vdwg.mxu0
    %s2129 = scalar_lea.vmem %s15, 48
    %v2130 = vld [vmem:[%s2129] sm:$0xff]
    %v2131 = vld [vmem:[%s2129 + $0x8] sm:$0xff]
    %v2132 = vld [vmem:[%s2129 + $0x10] sm:$0x3f]
    %v2134 = vsel %vm1695, %v2130, 0
    %v2137 = vsel %vm1695, %v2131, 0
    %v2140 = vsel %vm1695, %v2132, 0
    %2142 = vmatprep.subr.mxu0 0.0
    %2143 = vmatpush1.msra.mxu0 0.0
    %2144 = vmatprep.subr.mxu0 0.0
    %2145 = vmatpush1.msra.mxu0 0.0
    %2146 = vmatprep.subr.mxu0 0.0
    %2147 = vmatpush1.msra.mxu0 0.0
    %2148 = vmatprep.subr.mxu0 0.0
    %2149 = vmatpush1.msra.mxu0 0.0
    %2150 = vmatprep.subr.mxu0 0.0
    %2151 = vmatpush1.msra.mxu0 0.0
    %2152 = vmatprep.subr.mxu0 0.0
    %2153 = vmatpush1.msra.mxu0 0.0
    %2154 = vmatprep.subr.mxu0 0.0
    %2155 = vmatpush1.msra.mxu0 0.0
    %2156 = vmatprep.subr.mxu0 0.0
    %2157 = vmatpush1.msra.mxu0 0.0
    %2158 = vmatprep.subr.mxu0 0.0
    %2159 = vmatpush1.msra.mxu0 0.0
    %2160 = vmatprep.subr.mxu0 0.0
    %2161 = vmatpush1.msra.mxu0 0.0
    %2162 = vmatprep.subr.mxu0 0.0
    %2163 = vmatpush1.msra.mxu0 0.0
    %2164 = vmatprep.subr.mxu0 0.0
    %2165 = vmatpush1.msra.mxu0 0.0
    %2166 = vmatprep.subr.mxu0 0.0
    %2167 = vmatpush1.msra.mxu0 %v1707
    %2168 = vmatprep.subr.mxu0 0.0
    %2169 = vmatpush1.msra.mxu0 %v1690
    %2170 = vmatprep.subr.mxu0 0.0
    %2171 = vmatpush1.msra.mxu0 %v1689
    %2172 = vmatprep.subr.mxu0 0.0
    %2173 = vmatpush1.msra.mxu0 %v1688
    %2174 = vmatprep.subr.mxu0 0.0
    %2175 = vmatpush2.msra.mxu0 0.0
    %2176 = vmatprep.subr.mxu0 0.0
    %2177 = vmatpush2.msra.mxu0 0.0
    %2178 = vmatprep.subr.mxu0 0.0
    %2179 = vmatpush2.msra.mxu0 0.0
    %2180 = vmatprep.subr.mxu0 0.0
    %2181 = vmatpush2.msra.mxu0 0.0
    %2182 = vmatprep.subr.mxu0 0.0
    %2183 = vmatpush2.msra.mxu0 0.0
    %2184 = vmatprep.subr.mxu0 0.0
    %2185 = vmatpush2.msra.mxu0 0.0
    %2186 = vmatprep.subr.mxu0 0.0
    %2187 = vmatpush2.msra.mxu0 0.0
    %2188 = vmatprep.subr.mxu0 0.0
    %2189 = vmatpush2.msra.mxu0 0.0
    %2190 = vmatprep.subr.mxu0 0.0
    %2191 = vmatpush2.msra.mxu0 0.0
    %2192 = vmatprep.subr.mxu0 0.0
    %2193 = vmatpush2.msra.mxu0 0.0
    %2194 = vmatprep.subr.mxu0 0.0
    %2195 = vmatpush2.msra.mxu0 0.0
    %2196 = vmatprep.subr.mxu0 0.0
    %2197 = vmatpush2.msra.mxu0 0.0
    %2198 = vmatprep.subr.mxu0 0.0
    %2199 = vmatpush2.msra.mxu0 0.0
    %2200 = vmatprep.subr.mxu0 0.0
    %2201 = vmatpush2.msra.mxu0 0.0
    %2202 = vmatprep.subr.mxu0 0.0
    %2203 = vmatpush2.msra.mxu0 0.0
    %2204 = vmatprep.subr.mxu0 0.0
    %2205 = vmatpush2.msra.mxu0 0.0
    %2206 = vmatprep.mubr.f32.mxu0 0.0
    %2207 = vmatmul.mubr.f32.gmra.mxu0 %v2134
    %v2208 = vpop.f32.mrf.mxu0
    %v2209 = vadd.f32 0.0, %v2208
    %v2210 = vpop.f32.mrf.mxu0
    %2211 = vmatprep.mubr.f32.mxu0 0.0
    %2212 = vmatmul.mubr.f32.gmra.mxu0 %v2137
    %v2213 = vpop.f32.mrf.mxu0
    %v2214 = vadd.f32 0.0, %v2213
    %v2215 = vpop.f32.mrf.mxu0
    %2216 = vmatprep.mubr.f32.mxu0 0.0
    %2217 = vmatmul.mubr.f32.gmra.mxu0 %v2140
    %v2218 = vpop.f32.mrf.mxu0
    %v2219 = vadd.f32 0.0, %v2218
    %v2220 = vpop.f32.mrf.mxu0
    %2221 = vdwg.mxu0
    %s2222 = scalar_lea.vmem %s17, 384
    %v2223 = vld [vmem:[%s2222] sm:$0xff]
    %v2224 = vld [vmem:[%s2222 + $0x8] sm:$0xff]
    %v2225 = vld [vmem:[%s2222 + $0x10] sm:$0xff]
    %v2226 = vld [vmem:[%s2222 + $0x18] sm:$0xff]
    %v2227 = vld [vmem:[%s2222 + $0x20] sm:$0xff]
    %v2228 = vld [vmem:[%s2222 + $0x28] sm:$0xff]
    %v2229 = vld [vmem:[%s2222 + $0x30] sm:$0xff]
    %v2230 = vld [vmem:[%s2222 + $0x38] sm:$0xff]
    %v2231 = vld [vmem:[%s2222 + $0x40] sm:$0xff]
    %v2232 = vld [vmem:[%s2222 + $0x48] sm:$0xff]
    %v2233 = vld [vmem:[%s2222 + $0x50] sm:$0xff]
    %v2234 = vld [vmem:[%s2222 + $0x58] sm:$0xff]
    %v2235 = vld [vmem:[%s2222 + $0x60] sm:$0xff]
    %v2236 = vld [vmem:[%s2222 + $0x68] sm:$0xff]
    %v2237 = vld [vmem:[%s2222 + $0x70] sm:$0xff]
    %v2238 = vld [vmem:[%s2222 + $0x78] sm:$0xff]
    %v2239 = vld [vmem:[%s2222 + $0x80] sm:$0xff]
    %v2240 = vld [vmem:[%s2222 + $0x88] sm:$0xff]
    %v2241 = vld [vmem:[%s2222 + $0x90] sm:$0xff]
    %v2242 = vld [vmem:[%s2222 + $0x98] sm:$0xff]
    %v2243 = vld [vmem:[%s2222 + $0xa0] sm:$0xff]
    %v2244 = vld [vmem:[%s2222 + $0xa8] sm:$0xff]
    %v2245 = vld [vmem:[%s2222 + $0xb0] sm:$0x3]
    %v2246 = vld [vmem:[%s2222 + $0xb8] sm:$0x3]
    %v2248 = vsel %vm1931, %v2209, 0
    %v2251 = vsel %vm1931, %v2214, 0
    %v2254 = vsel %vm1931, %v2219, 0
    %v2257 = vsel %vm1941, %v2245, 0
    %v2260 = vsel %vm1941, %v2246, 0
    %2262 = vmatprep.subr.mxu0 0.0
    %2263 = vmatpush1.msra.mxu0 0.0
    %2264 = vmatprep.subr.mxu0 0.0
    %2265 = vmatpush1.msra.mxu0 0.0
    %2266 = vmatprep.subr.mxu0 0.0
    %2267 = vmatpush1.msra.mxu0 0.0
    %2268 = vmatprep.subr.mxu0 0.0
    %2269 = vmatpush1.msra.mxu0 0.0
    %2270 = vmatprep.subr.mxu0 %v2260
    %2271 = vmatpush1.msra.mxu0 %v2257
    %2272 = vmatprep.subr.mxu0 %v2244
    %2273 = vmatpush1.msra.mxu0 %v2243
    %2274 = vmatprep.subr.mxu0 %v2242
    %2275 = vmatpush1.msra.mxu0 %v2241
    %2276 = vmatprep.subr.mxu0 %v2240
    %2277 = vmatpush1.msra.mxu0 %v2239
    %2278 = vmatprep.subr.mxu0 %v2238
    %2279 = vmatpush1.msra.mxu0 %v2237
    %2280 = vmatprep.subr.mxu0 %v2236
    %2281 = vmatpush1.msra.mxu0 %v2235
    %2282 = vmatprep.subr.mxu0 %v2234
    %2283 = vmatpush1.msra.mxu0 %v2233
    %2284 = vmatprep.subr.mxu0 %v2232
    %2285 = vmatpush1.msra.mxu0 %v2231
    %2286 = vmatprep.subr.mxu0 %v2230
    %2287 = vmatpush1.msra.mxu0 %v2229
    %2288 = vmatprep.subr.mxu0 %v2228
    %2289 = vmatpush1.msra.mxu0 %v2227
    %2290 = vmatprep.subr.mxu0 %v2226
    %2291 = vmatpush1.msra.mxu0 %v2225
    %2292 = vmatprep.subr.mxu0 %v2224
    %2293 = vmatpush1.msra.mxu0 %v2223
    %2294 = vmatprep.subr.mxu0 0.0
    %2295 = vmatpush2.msra.mxu0 0.0
    %2296 = vmatprep.subr.mxu0 0.0
    %2297 = vmatpush2.msra.mxu0 0.0
    %2298 = vmatprep.subr.mxu0 0.0
    %2299 = vmatpush2.msra.mxu0 0.0
    %2300 = vmatprep.subr.mxu0 0.0
    %2301 = vmatpush2.msra.mxu0 0.0
    %2302 = vmatprep.subr.mxu0 0.0
    %2303 = vmatpush2.msra.mxu0 0.0
    %2304 = vmatprep.subr.mxu0 0.0
    %2305 = vmatpush2.msra.mxu0 0.0
    %2306 = vmatprep.subr.mxu0 0.0
    %2307 = vmatpush2.msra.mxu0 0.0
    %2308 = vmatprep.subr.mxu0 0.0
    %2309 = vmatpush2.msra.mxu0 0.0
    %2310 = vmatprep.subr.mxu0 0.0
    %2311 = vmatpush2.msra.mxu0 0.0
    %2312 = vmatprep.subr.mxu0 0.0
    %2313 = vmatpush2.msra.mxu0 0.0
    %2314 = vmatprep.subr.mxu0 0.0
    %2315 = vmatpush2.msra.mxu0 0.0
    %2316 = vmatprep.subr.mxu0 0.0
    %2317 = vmatpush2.msra.mxu0 0.0
    %2318 = vmatprep.subr.mxu0 0.0
    %2319 = vmatpush2.msra.mxu0 0.0
    %2320 = vmatprep.subr.mxu0 0.0
    %2321 = vmatpush2.msra.mxu0 0.0
    %2322 = vmatprep.subr.mxu0 0.0
    %2323 = vmatpush2.msra.mxu0 0.0
    %2324 = vmatprep.subr.mxu0 0.0
    %2325 = vmatpush2.msra.mxu0 0.0
    %2326 = vmatprep.mubr.f32.mxu0 0.0
    %2327 = vmatmul.mubr.f32.gmra.mxu0 %v2248
    %v2328 = vpop.f32.mrf.mxu0
    %v2329 = vadd.f32 0.0, %v2328
    %v2330 = vpop.f32.mrf.mxu0
    %v2331 = vadd.f32 0.0, %v2330
    %2332 = vmatprep.mubr.f32.mxu0 0.0
    %2333 = vmatmul.mubr.f32.gmra.mxu0 %v2251
    %v2334 = vpop.f32.mrf.mxu0
    %v2335 = vadd.f32 0.0, %v2334
    %v2336 = vpop.f32.mrf.mxu0
    %v2337 = vadd.f32 0.0, %v2336
    %2338 = vmatprep.mubr.f32.mxu0 0.0
    %2339 = vmatmul.mubr.f32.gmra.mxu0 %v2254
    %v2340 = vpop.f32.mrf.mxu0
    %v2341 = vadd.f32 0.0, %v2340
    %v2342 = vpop.f32.mrf.mxu0
    %v2343 = vadd.f32 0.0, %v2342
    %2344 = vdwg.mxu0
    %v2345 = vadd.f32 %v2113, %v2329
    %v2346 = vadd.f32 %v2115, %v2331
    %v2347 = vadd.f32 %v2119, %v2335
    %v2348 = vadd.f32 %v2121, %v2337
    %v2349 = vadd.f32 %v2125, %v2341
    %v2350 = vadd.f32 %v2127, %v2343
    %s2351 = scalar_lea.vmem %s15, 72
    %v2352 = vld [vmem:[%s2351] sm:$0xff]
    %v2353 = vld [vmem:[%s2351 + $0x8] sm:$0xff]
    %v2354 = vld [vmem:[%s2351 + $0x10] sm:$0x3f]
    %v2356 = vsel %vm1695, %v2352, 0
    %v2359 = vsel %vm1695, %v2353, 0
    %v2362 = vsel %vm1695, %v2354, 0
    %2364 = vmatprep.subr.mxu0 0.0
    %2365 = vmatpush1.msra.mxu0 0.0
    %2366 = vmatprep.subr.mxu0 0.0
    %2367 = vmatpush1.msra.mxu0 0.0
    %2368 = vmatprep.subr.mxu0 0.0
    %2369 = vmatpush1.msra.mxu0 0.0
    %2370 = vmatprep.subr.mxu0 0.0
    %2371 = vmatpush1.msra.mxu0 0.0
    %2372 = vmatprep.subr.mxu0 0.0
    %2373 = vmatpush1.msra.mxu0 0.0
    %2374 = vmatprep.subr.mxu0 0.0
    %2375 = vmatpush1.msra.mxu0 0.0
    %2376 = vmatprep.subr.mxu0 0.0
    %2377 = vmatpush1.msra.mxu0 0.0
    %2378 = vmatprep.subr.mxu0 0.0
    %2379 = vmatpush1.msra.mxu0 0.0
    %2380 = vmatprep.subr.mxu0 0.0
    %2381 = vmatpush1.msra.mxu0 0.0
    %2382 = vmatprep.subr.mxu0 0.0
    %2383 = vmatpush1.msra.mxu0 0.0
    %2384 = vmatprep.subr.mxu0 0.0
    %2385 = vmatpush1.msra.mxu0 0.0
    %2386 = vmatprep.subr.mxu0 0.0
    %2387 = vmatpush1.msra.mxu0 0.0
    %2388 = vmatprep.subr.mxu0 0.0
    %2389 = vmatpush1.msra.mxu0 %v1707
    %2390 = vmatprep.subr.mxu0 0.0
    %2391 = vmatpush1.msra.mxu0 %v1690
    %2392 = vmatprep.subr.mxu0 0.0
    %2393 = vmatpush1.msra.mxu0 %v1689
    %2394 = vmatprep.subr.mxu0 0.0
    %2395 = vmatpush1.msra.mxu0 %v1688
    %2396 = vmatprep.subr.mxu0 0.0
    %2397 = vmatpush2.msra.mxu0 0.0
    %2398 = vmatprep.subr.mxu0 0.0
    %2399 = vmatpush2.msra.mxu0 0.0
    %2400 = vmatprep.subr.mxu0 0.0
    %2401 = vmatpush2.msra.mxu0 0.0
    %2402 = vmatprep.subr.mxu0 0.0
    %2403 = vmatpush2.msra.mxu0 0.0
    %2404 = vmatprep.subr.mxu0 0.0
    %2405 = vmatpush2.msra.mxu0 0.0
    %2406 = vmatprep.subr.mxu0 0.0
    %2407 = vmatpush2.msra.mxu0 0.0
    %2408 = vmatprep.subr.mxu0 0.0
    %2409 = vmatpush2.msra.mxu0 0.0
    %2410 = vmatprep.subr.mxu0 0.0
    %2411 = vmatpush2.msra.mxu0 0.0
    %2412 = vmatprep.subr.mxu0 0.0
    %2413 = vmatpush2.msra.mxu0 0.0
    %2414 = vmatprep.subr.mxu0 0.0
    %2415 = vmatpush2.msra.mxu0 0.0
    %2416 = vmatprep.subr.mxu0 0.0
    %2417 = vmatpush2.msra.mxu0 0.0
    %2418 = vmatprep.subr.mxu0 0.0
    %2419 = vmatpush2.msra.mxu0 0.0
    %2420 = vmatprep.subr.mxu0 0.0
    %2421 = vmatpush2.msra.mxu0 0.0
    %2422 = vmatprep.subr.mxu0 0.0
    %2423 = vmatpush2.msra.mxu0 0.0
    %2424 = vmatprep.subr.mxu0 0.0
    %2425 = vmatpush2.msra.mxu0 0.0
    %2426 = vmatprep.subr.mxu0 0.0
    %2427 = vmatpush2.msra.mxu0 0.0
    %2428 = vmatprep.mubr.f32.mxu0 0.0
    %2429 = vmatmul.mubr.f32.gmra.mxu0 %v2356
    %v2430 = vpop.f32.mrf.mxu0
    %v2431 = vadd.f32 0.0, %v2430
    %v2432 = vpop.f32.mrf.mxu0
    %2433 = vmatprep.mubr.f32.mxu0 0.0
    %2434 = vmatmul.mubr.f32.gmra.mxu0 %v2359
    %v2435 = vpop.f32.mrf.mxu0
    %v2436 = vadd.f32 0.0, %v2435
    %v2437 = vpop.f32.mrf.mxu0
    %2438 = vmatprep.mubr.f32.mxu0 0.0
    %2439 = vmatmul.mubr.f32.gmra.mxu0 %v2362
    %v2440 = vpop.f32.mrf.mxu0
    %v2441 = vadd.f32 0.0, %v2440
    %v2442 = vpop.f32.mrf.mxu0
    %2443 = vdwg.mxu0
    %s2444 = scalar_lea.vmem %s17, 576
    %v2445 = vld [vmem:[%s2444] sm:$0xff]
    %v2446 = vld [vmem:[%s2444 + $0x8] sm:$0xff]
    %v2447 = vld [vmem:[%s2444 + $0x10] sm:$0xff]
    %v2448 = vld [vmem:[%s2444 + $0x18] sm:$0xff]
    %v2449 = vld [vmem:[%s2444 + $0x20] sm:$0xff]
    %v2450 = vld [vmem:[%s2444 + $0x28] sm:$0xff]
    %v2451 = vld [vmem:[%s2444 + $0x30] sm:$0xff]
    %v2452 = vld [vmem:[%s2444 + $0x38] sm:$0xff]
    %v2453 = vld [vmem:[%s2444 + $0x40] sm:$0xff]
    %v2454 = vld [vmem:[%s2444 + $0x48] sm:$0xff]
    %v2455 = vld [vmem:[%s2444 + $0x50] sm:$0xff]
    %v2456 = vld [vmem:[%s2444 + $0x58] sm:$0xff]
    %v2457 = vld [vmem:[%s2444 + $0x60] sm:$0xff]
    %v2458 = vld [vmem:[%s2444 + $0x68] sm:$0xff]
    %v2459 = vld [vmem:[%s2444 + $0x70] sm:$0xff]
    %v2460 = vld [vmem:[%s2444 + $0x78] sm:$0xff]
    %v2461 = vld [vmem:[%s2444 + $0x80] sm:$0xff]
    %v2462 = vld [vmem:[%s2444 + $0x88] sm:$0xff]
    %v2463 = vld [vmem:[%s2444 + $0x90] sm:$0xff]
    %v2464 = vld [vmem:[%s2444 + $0x98] sm:$0xff]
    %v2465 = vld [vmem:[%s2444 + $0xa0] sm:$0xff]
    %v2466 = vld [vmem:[%s2444 + $0xa8] sm:$0xff]
    %v2467 = vld [vmem:[%s2444 + $0xb0] sm:$0x3]
    %v2468 = vld [vmem:[%s2444 + $0xb8] sm:$0x3]
    %v2470 = vsel %vm1931, %v2431, 0
    %v2473 = vsel %vm1931, %v2436, 0
    %v2476 = vsel %vm1931, %v2441, 0
    %v2479 = vsel %vm1941, %v2467, 0
    %v2482 = vsel %vm1941, %v2468, 0
    %2484 = vmatprep.subr.mxu0 0.0
    %2485 = vmatpush1.msra.mxu0 0.0
    %2486 = vmatprep.subr.mxu0 0.0
    %2487 = vmatpush1.msra.mxu0 0.0
    %2488 = vmatprep.subr.mxu0 0.0
    %2489 = vmatpush1.msra.mxu0 0.0
    %2490 = vmatprep.subr.mxu0 0.0
    %2491 = vmatpush1.msra.mxu0 0.0
    %2492 = vmatprep.subr.mxu0 %v2482
    %2493 = vmatpush1.msra.mxu0 %v2479
    %2494 = vmatprep.subr.mxu0 %v2466
    %2495 = vmatpush1.msra.mxu0 %v2465
    %2496 = vmatprep.subr.mxu0 %v2464
    %2497 = vmatpush1.msra.mxu0 %v2463
    %2498 = vmatprep.subr.mxu0 %v2462
    %2499 = vmatpush1.msra.mxu0 %v2461
    %2500 = vmatprep.subr.mxu0 %v2460
    %2501 = vmatpush1.msra.mxu0 %v2459
    %2502 = vmatprep.subr.mxu0 %v2458
    %2503 = vmatpush1.msra.mxu0 %v2457
    %2504 = vmatprep.subr.mxu0 %v2456
    %2505 = vmatpush1.msra.mxu0 %v2455
    %2506 = vmatprep.subr.mxu0 %v2454
    %2507 = vmatpush1.msra.mxu0 %v2453
    %2508 = vmatprep.subr.mxu0 %v2452
    %2509 = vmatpush1.msra.mxu0 %v2451
    %2510 = vmatprep.subr.mxu0 %v2450
    %2511 = vmatpush1.msra.mxu0 %v2449
    %2512 = vmatprep.subr.mxu0 %v2448
    %2513 = vmatpush1.msra.mxu0 %v2447
    %2514 = vmatprep.subr.mxu0 %v2446
    %2515 = vmatpush1.msra.mxu0 %v2445
    %2516 = vmatprep.subr.mxu0 0.0
    %2517 = vmatpush2.msra.mxu0 0.0
    %2518 = vmatprep.subr.mxu0 0.0
    %2519 = vmatpush2.msra.mxu0 0.0
    %2520 = vmatprep.subr.mxu0 0.0
    %2521 = vmatpush2.msra.mxu0 0.0
    %2522 = vmatprep.subr.mxu0 0.0
    %2523 = vmatpush2.msra.mxu0 0.0
    %2524 = vmatprep.subr.mxu0 0.0
    %2525 = vmatpush2.msra.mxu0 0.0
    %2526 = vmatprep.subr.mxu0 0.0
    %2527 = vmatpush2.msra.mxu0 0.0
    %2528 = vmatprep.subr.mxu0 0.0
    %2529 = vmatpush2.msra.mxu0 0.0
    %2530 = vmatprep.subr.mxu0 0.0
    %2531 = vmatpush2.msra.mxu0 0.0
    %2532 = vmatprep.subr.mxu0 0.0
    %2533 = vmatpush2.msra.mxu0 0.0
    %2534 = vmatprep.subr.mxu0 0.0
    %2535 = vmatpush2.msra.mxu0 0.0
    %2536 = vmatprep.subr.mxu0 0.0
    %2537 = vmatpush2.msra.mxu0 0.0
    %2538 = vmatprep.subr.mxu0 0.0
    %2539 = vmatpush2.msra.mxu0 0.0
    %2540 = vmatprep.subr.mxu0 0.0
    %2541 = vmatpush2.msra.mxu0 0.0
    %2542 = vmatprep.subr.mxu0 0.0
    %2543 = vmatpush2.msra.mxu0 0.0
    %2544 = vmatprep.subr.mxu0 0.0
    %2545 = vmatpush2.msra.mxu0 0.0
    %2546 = vmatprep.subr.mxu0 0.0
    %2547 = vmatpush2.msra.mxu0 0.0
    %2548 = vmatprep.mubr.f32.mxu0 0.0
    %2549 = vmatmul.mubr.f32.gmra.mxu0 %v2470
    %v2550 = vpop.f32.mrf.mxu0
    %v2551 = vadd.f32 0.0, %v2550
    %v2552 = vpop.f32.mrf.mxu0
    %v2553 = vadd.f32 0.0, %v2552
    %2554 = vmatprep.mubr.f32.mxu0 0.0
    %2555 = vmatmul.mubr.f32.gmra.mxu0 %v2473
    %v2556 = vpop.f32.mrf.mxu0
    %v2557 = vadd.f32 0.0, %v2556
    %v2558 = vpop.f32.mrf.mxu0
    %v2559 = vadd.f32 0.0, %v2558
    %2560 = vmatprep.mubr.f32.mxu0 0.0
    %2561 = vmatmul.mubr.f32.gmra.mxu0 %v2476
    %v2562 = vpop.f32.mrf.mxu0
    %v2563 = vadd.f32 0.0, %v2562
    %v2564 = vpop.f32.mrf.mxu0
    %v2565 = vadd.f32 0.0, %v2564
    %2566 = vdwg.mxu0
    %v2567 = vadd.f32 %v2345, %v2551
    %v2568 = vadd.f32 %v2346, %v2553
    %v2569 = vadd.f32 %v2347, %v2557
    %v2570 = vadd.f32 %v2348, %v2559
    %v2571 = vadd.f32 %v2349, %v2563
    %v2572 = vadd.f32 %v2350, %v2565
    %s2573 = scalar_lea.vmem %s15, 96
    %v2574 = vld [vmem:[%s2573] sm:$0xff]
    %v2575 = vld [vmem:[%s2573 + $0x8] sm:$0xff]
    %v2576 = vld [vmem:[%s2573 + $0x10] sm:$0x3f]
    %v2578 = vsel %vm1695, %v2574, 0
    %v2581 = vsel %vm1695, %v2575, 0
    %v2584 = vsel %vm1695, %v2576, 0
    %2586 = vmatprep.subr.mxu0 0.0
    %2587 = vmatpush1.msra.mxu0 0.0
    %2588 = vmatprep.subr.mxu0 0.0
    %2589 = vmatpush1.msra.mxu0 0.0
    %2590 = vmatprep.subr.mxu0 0.0
    %2591 = vmatpush1.msra.mxu0 0.0
    %2592 = vmatprep.subr.mxu0 0.0
    %2593 = vmatpush1.msra.mxu0 0.0
    %2594 = vmatprep.subr.mxu0 0.0
    %2595 = vmatpush1.msra.mxu0 0.0
    %2596 = vmatprep.subr.mxu0 0.0
    %2597 = vmatpush1.msra.mxu0 0.0
    %2598 = vmatprep.subr.mxu0 0.0
    %2599 = vmatpush1.msra.mxu0 0.0
    %2600 = vmatprep.subr.mxu0 0.0
    %2601 = vmatpush1.msra.mxu0 0.0
    %2602 = vmatprep.subr.mxu0 0.0
    %2603 = vmatpush1.msra.mxu0 0.0
    %2604 = vmatprep.subr.mxu0 0.0
    %2605 = vmatpush1.msra.mxu0 0.0
    %2606 = vmatprep.subr.mxu0 0.0
    %2607 = vmatpush1.msra.mxu0 0.0
    %2608 = vmatprep.subr.mxu0 0.0
    %2609 = vmatpush1.msra.mxu0 0.0
    %2610 = vmatprep.subr.mxu0 0.0
    %2611 = vmatpush1.msra.mxu0 %v1707
    %2612 = vmatprep.subr.mxu0 0.0
    %2613 = vmatpush1.msra.mxu0 %v1690
    %2614 = vmatprep.subr.mxu0 0.0
    %2615 = vmatpush1.msra.mxu0 %v1689
    %2616 = vmatprep.subr.mxu0 0.0
    %2617 = vmatpush1.msra.mxu0 %v1688
    %2618 = vmatprep.subr.mxu0 0.0
    %2619 = vmatpush2.msra.mxu0 0.0
    %2620 = vmatprep.subr.mxu0 0.0
    %2621 = vmatpush2.msra.mxu0 0.0
    %2622 = vmatprep.subr.mxu0 0.0
    %2623 = vmatpush2.msra.mxu0 0.0
    %2624 = vmatprep.subr.mxu0 0.0
    %2625 = vmatpush2.msra.mxu0 0.0
    %2626 = vmatprep.subr.mxu0 0.0
    %2627 = vmatpush2.msra.mxu0 0.0
    %2628 = vmatprep.subr.mxu0 0.0
    %2629 = vmatpush2.msra.mxu0 0.0
    %2630 = vmatprep.subr.mxu0 0.0
    %2631 = vmatpush2.msra.mxu0 0.0
    %2632 = vmatprep.subr.mxu0 0.0
    %2633 = vmatpush2.msra.mxu0 0.0
    %2634 = vmatprep.subr.mxu0 0.0
    %2635 = vmatpush2.msra.mxu0 0.0
    %2636 = vmatprep.subr.mxu0 0.0
    %2637 = vmatpush2.msra.mxu0 0.0
    %2638 = vmatprep.subr.mxu0 0.0
    %2639 = vmatpush2.msra.mxu0 0.0
    %2640 = vmatprep.subr.mxu0 0.0
    %2641 = vmatpush2.msra.mxu0 0.0
    %2642 = vmatprep.subr.mxu0 0.0
    %2643 = vmatpush2.msra.mxu0 0.0
    %2644 = vmatprep.subr.mxu0 0.0
    %2645 = vmatpush2.msra.mxu0 0.0
    %2646 = vmatprep.subr.mxu0 0.0
    %2647 = vmatpush2.msra.mxu0 0.0
    %2648 = vmatprep.subr.mxu0 0.0
    %2649 = vmatpush2.msra.mxu0 0.0
    %2650 = vmatprep.mubr.f32.mxu0 0.0
    %2651 = vmatmul.mubr.f32.gmra.mxu0 %v2578
    %v2652 = vpop.f32.mrf.mxu0
    %v2653 = vadd.f32 0.0, %v2652
    %v2654 = vpop.f32.mrf.mxu0
    %2655 = vmatprep.mubr.f32.mxu0 0.0
    %2656 = vmatmul.mubr.f32.gmra.mxu0 %v2581
    %v2657 = vpop.f32.mrf.mxu0
    %v2658 = vadd.f32 0.0, %v2657
    %v2659 = vpop.f32.mrf.mxu0
    %2660 = vmatprep.mubr.f32.mxu0 0.0
    %2661 = vmatmul.mubr.f32.gmra.mxu0 %v2584
    %v2662 = vpop.f32.mrf.mxu0
    %v2663 = vadd.f32 0.0, %v2662
    %v2664 = vpop.f32.mrf.mxu0
    %2665 = vdwg.mxu0
    %s2666 = scalar_lea.vmem %s17, 768
    %v2667 = vld [vmem:[%s2666] sm:$0xff]
    %v2668 = vld [vmem:[%s2666 + $0x8] sm:$0xff]
    %v2669 = vld [vmem:[%s2666 + $0x10] sm:$0xff]
    %v2670 = vld [vmem:[%s2666 + $0x18] sm:$0xff]
    %v2671 = vld [vmem:[%s2666 + $0x20] sm:$0xff]
    %v2672 = vld [vmem:[%s2666 + $0x28] sm:$0xff]
    %v2673 = vld [vmem:[%s2666 + $0x30] sm:$0xff]
    %v2674 = vld [vmem:[%s2666 + $0x38] sm:$0xff]
    %v2675 = vld [vmem:[%s2666 + $0x40] sm:$0xff]
    %v2676 = vld [vmem:[%s2666 + $0x48] sm:$0xff]
    %v2677 = vld [vmem:[%s2666 + $0x50] sm:$0xff]
    %v2678 = vld [vmem:[%s2666 + $0x58] sm:$0xff]
    %v2679 = vld [vmem:[%s2666 + $0x60] sm:$0xff]
    %v2680 = vld [vmem:[%s2666 + $0x68] sm:$0xff]
    %v2681 = vld [vmem:[%s2666 + $0x70] sm:$0xff]
    %v2682 = vld [vmem:[%s2666 + $0x78] sm:$0xff]
    %v2683 = vld [vmem:[%s2666 + $0x80] sm:$0xff]
    %v2684 = vld [vmem:[%s2666 + $0x88] sm:$0xff]
    %v2685 = vld [vmem:[%s2666 + $0x90] sm:$0xff]
    %v2686 = vld [vmem:[%s2666 + $0x98] sm:$0xff]
    %v2687 = vld [vmem:[%s2666 + $0xa0] sm:$0xff]
    %v2688 = vld [vmem:[%s2666 + $0xa8] sm:$0xff]
    %v2689 = vld [vmem:[%s2666 + $0xb0] sm:$0x3]
    %v2690 = vld [vmem:[%s2666 + $0xb8] sm:$0x3]
    %v2692 = vsel %vm1931, %v2653, 0
    %v2695 = vsel %vm1931, %v2658, 0
    %v2698 = vsel %vm1931, %v2663, 0
    %v2701 = vsel %vm1941, %v2689, 0
    %v2704 = vsel %vm1941, %v2690, 0
    %2706 = vmatprep.subr.mxu0 0.0
    %2707 = vmatpush1.msra.mxu0 0.0
    %2708 = vmatprep.subr.mxu0 0.0
    %2709 = vmatpush1.msra.mxu0 0.0
    %2710 = vmatprep.subr.mxu0 0.0
    %2711 = vmatpush1.msra.mxu0 0.0
    %2712 = vmatprep.subr.mxu0 0.0
    %2713 = vmatpush1.msra.mxu0 0.0
    %2714 = vmatprep.subr.mxu0 %v2704
    %2715 = vmatpush1.msra.mxu0 %v2701
    %2716 = vmatprep.subr.mxu0 %v2688
    %2717 = vmatpush1.msra.mxu0 %v2687
    %2718 = vmatprep.subr.mxu0 %v2686
    %2719 = vmatpush1.msra.mxu0 %v2685
    %2720 = vmatprep.subr.mxu0 %v2684
    %2721 = vmatpush1.msra.mxu0 %v2683
    %2722 = vmatprep.subr.mxu0 %v2682
    %2723 = vmatpush1.msra.mxu0 %v2681
    %2724 = vmatprep.subr.mxu0 %v2680
    %2725 = vmatpush1.msra.mxu0 %v2679
    %2726 = vmatprep.subr.mxu0 %v2678
    %2727 = vmatpush1.msra.mxu0 %v2677
    %2728 = vmatprep.subr.mxu0 %v2676
    %2729 = vmatpush1.msra.mxu0 %v2675
    %2730 = vmatprep.subr.mxu0 %v2674
    %2731 = vmatpush1.msra.mxu0 %v2673
    %2732 = vmatprep.subr.mxu0 %v2672
    %2733 = vmatpush1.msra.mxu0 %v2671
    %2734 = vmatprep.subr.mxu0 %v2670
    %2735 = vmatpush1.msra.mxu0 %v2669
    %2736 = vmatprep.subr.mxu0 %v2668
    %2737 = vmatpush1.msra.mxu0 %v2667
    %2738 = vmatprep.subr.mxu0 0.0
    %2739 = vmatpush2.msra.mxu0 0.0
    %2740 = vmatprep.subr.mxu0 0.0
    %2741 = vmatpush2.msra.mxu0 0.0
    %2742 = vmatprep.subr.mxu0 0.0
    %2743 = vmatpush2.msra.mxu0 0.0
    %2744 = vmatprep.subr.mxu0 0.0
    %2745 = vmatpush2.msra.mxu0 0.0
    %2746 = vmatprep.subr.mxu0 0.0
    %2747 = vmatpush2.msra.mxu0 0.0
    %2748 = vmatprep.subr.mxu0 0.0
    %2749 = vmatpush2.msra.mxu0 0.0
    %2750 = vmatprep.subr.mxu0 0.0
    %2751 = vmatpush2.msra.mxu0 0.0
    %2752 = vmatprep.subr.mxu0 0.0
    %2753 = vmatpush2.msra.mxu0 0.0
    %2754 = vmatprep.subr.mxu0 0.0
    %2755 = vmatpush2.msra.mxu0 0.0
    %2756 = vmatprep.subr.mxu0 0.0
    %2757 = vmatpush2.msra.mxu0 0.0
    %2758 = vmatprep.subr.mxu0 0.0
    %2759 = vmatpush2.msra.mxu0 0.0
    %2760 = vmatprep.subr.mxu0 0.0
    %2761 = vmatpush2.msra.mxu0 0.0
    %2762 = vmatprep.subr.mxu0 0.0
    %2763 = vmatpush2.msra.mxu0 0.0
    %2764 = vmatprep.subr.mxu0 0.0
    %2765 = vmatpush2.msra.mxu0 0.0
    %2766 = vmatprep.subr.mxu0 0.0
    %2767 = vmatpush2.msra.mxu0 0.0
    %2768 = vmatprep.subr.mxu0 0.0
    %2769 = vmatpush2.msra.mxu0 0.0
    %2770 = vmatprep.mubr.f32.mxu0 0.0
    %2771 = vmatmul.mubr.f32.gmra.mxu0 %v2692
    %v2772 = vpop.f32.mrf.mxu0
    %v2773 = vadd.f32 0.0, %v2772
    %v2774 = vpop.f32.mrf.mxu0
    %v2775 = vadd.f32 0.0, %v2774
    %2776 = vmatprep.mubr.f32.mxu0 0.0
    %2777 = vmatmul.mubr.f32.gmra.mxu0 %v2695
    %v2778 = vpop.f32.mrf.mxu0
    %v2779 = vadd.f32 0.0, %v2778
    %v2780 = vpop.f32.mrf.mxu0
    %v2781 = vadd.f32 0.0, %v2780
    %2782 = vmatprep.mubr.f32.mxu0 0.0
    %2783 = vmatmul.mubr.f32.gmra.mxu0 %v2698
    %v2784 = vpop.f32.mrf.mxu0
    %v2785 = vadd.f32 0.0, %v2784
    %v2786 = vpop.f32.mrf.mxu0
    %v2787 = vadd.f32 0.0, %v2786
    %2788 = vdwg.mxu0
    %v2789 = vadd.f32 %v2567, %v2773
    %v2790 = vadd.f32 %v2568, %v2775
    %v2791 = vadd.f32 %v2569, %v2779
    %v2792 = vadd.f32 %v2570, %v2781
    %v2793 = vadd.f32 %v2571, %v2785
    %v2794 = vadd.f32 %v2572, %v2787
    %v2795 = vld [vmem:[%s19] sm:$0x3]
    %v2797 = vlaneseq
    %v2798 = vshrl.u32 %v2797, 7
    %v2799 = vsub.s32 0, %v2798
    %v2800 = vrot.slane %v2795, %v2799
    %v2801 = vlaneseq
    %v2802 = vshrl.u32 %v2801, 7
    %v2803 = vsub.s32 1, %v2802
    %v2804 = vrot.slane %v2795, %v2803
    %v2807 = vadd.f32 %v2789, %v2800
    %v2808 = vadd.f32 %v2790, %v2804
    %v2809 = vadd.f32 %v2791, %v2800
    %v2810 = vadd.f32 %v2792, %v2804
    %v2811 = vadd.f32 %v2793, %v2800
    %v2812 = vadd.f32 %v2794, %v2804
    %v2813 = vmax.f32 %v2807, 0.0
    %v2814 = vmax.f32 %v2808, 0.0
    %v2815 = vmax.f32 %v2809, 0.0
    %v2816 = vmax.f32 %v2810, 0.0
    %v2817 = vmax.f32 %v2811, 0.0
    %v2818 = vmax.f32 %v2812, 0.0
    %v2819 = vld [vmem:[%s21] sm:$0xff]
    %v2820 = vld [vmem:[%s21 + $0x8] sm:$0x3]
    %vm2821 = vcmask 179200
    %v2823 = vsel %vm2821, %v2819, 0
    %v2826 = vsel %vm2821, %v2820, 0
    %v2829 = vsel %vm1705, %v2817, 0
    %v2832 = vsel %vm1705, %v2818, 0
    %2834 = vmatprep.subr.mxu0 0.0
    %2835 = vmatpush1.msra.mxu0 0.0
    %2836 = vmatprep.subr.mxu0 0.0
    %2837 = vmatpush1.msra.mxu0 0.0
    %2838 = vmatprep.subr.mxu0 0.0
    %2839 = vmatpush1.msra.mxu0 0.0
    %2840 = vmatprep.subr.mxu0 0.0
    %2841 = vmatpush1.msra.mxu0 0.0
    %2842 = vmatprep.subr.mxu0 0.0
    %2843 = vmatpush1.msra.mxu0 0.0
    %2844 = vmatprep.subr.mxu0 0.0
    %2845 = vmatpush1.msra.mxu0 0.0
    %2846 = vmatprep.subr.mxu0 0.0
    %2847 = vmatpush1.msra.mxu0 0.0
    %2848 = vmatprep.subr.mxu0 0.0
    %2849 = vmatpush1.msra.mxu0 0.0
    %2850 = vmatprep.subr.mxu0 0.0
    %2851 = vmatpush1.msra.mxu0 0.0
    %2852 = vmatprep.subr.mxu0 0.0
    %2853 = vmatpush1.msra.mxu0 0.0
    %2854 = vmatprep.subr.mxu0 0.0
    %2855 = vmatpush1.msra.mxu0 0.0
    %2856 = vmatprep.subr.mxu0 0.0
    %2857 = vmatpush1.msra.mxu0 0.0
    %2858 = vmatprep.subr.mxu0 0.0
    %2859 = vmatpush1.msra.mxu0 0.0
    %2860 = vmatprep.subr.mxu0 %v2832
    %2861 = vmatpush1.msra.mxu0 %v2829
    %2862 = vmatprep.subr.mxu0 %v2816
    %2863 = vmatpush1.msra.mxu0 %v2815
    %2864 = vmatprep.subr.mxu0 %v2814
    %2865 = vmatpush1.msra.mxu0 %v2813
    %2866 = vmatprep.subr.mxu0 0.0
    %2867 = vmatpush2.msra.mxu0 0.0
    %2868 = vmatprep.subr.mxu0 0.0
    %2869 = vmatpush2.msra.mxu0 0.0
    %2870 = vmatprep.subr.mxu0 0.0
    %2871 = vmatpush2.msra.mxu0 0.0
    %2872 = vmatprep.subr.mxu0 0.0
    %2873 = vmatpush2.msra.mxu0 0.0
    %2874 = vmatprep.subr.mxu0 0.0
    %2875 = vmatpush2.msra.mxu0 0.0
    %2876 = vmatprep.subr.mxu0 0.0
    %2877 = vmatpush2.msra.mxu0 0.0
    %2878 = vmatprep.subr.mxu0 0.0
    %2879 = vmatpush2.msra.mxu0 0.0
    %2880 = vmatprep.subr.mxu0 0.0
    %2881 = vmatpush2.msra.mxu0 0.0
    %2882 = vmatprep.subr.mxu0 0.0
    %2883 = vmatpush2.msra.mxu0 0.0
    %2884 = vmatprep.subr.mxu0 0.0
    %2885 = vmatpush2.msra.mxu0 0.0
    %2886 = vmatprep.subr.mxu0 0.0
    %2887 = vmatpush2.msra.mxu0 0.0
    %2888 = vmatprep.subr.mxu0 0.0
    %2889 = vmatpush2.msra.mxu0 0.0
    %2890 = vmatprep.subr.mxu0 0.0
    %2891 = vmatpush2.msra.mxu0 0.0
    %2892 = vmatprep.subr.mxu0 0.0
    %2893 = vmatpush2.msra.mxu0 0.0
    %2894 = vmatprep.subr.mxu0 0.0
    %2895 = vmatpush2.msra.mxu0 0.0
    %2896 = vmatprep.subr.mxu0 0.0
    %2897 = vmatpush2.msra.mxu0 0.0
    %2898 = vmatprep.mubr.f32.mxu0 0.0
    %2899 = vmatmul.mubr.f32.gmra.mxu0 %v2823
    %v2900 = vpop.f32.mrf.mxu0
    %v2901 = vadd.f32 0.0, %v2900
    %v2902 = vpop.f32.mrf.mxu0
    %v2903 = vadd.f32 0.0, %v2902
    %2904 = vmatprep.mubr.f32.mxu0 0.0
    %2905 = vmatmul.mubr.f32.gmra.mxu0 %v2826
    %v2906 = vpop.f32.mrf.mxu0
    %v2907 = vadd.f32 0.0, %v2906
    %v2908 = vpop.f32.mrf.mxu0
    %v2909 = vadd.f32 0.0, %v2908
    %2910 = vdwg.mxu0
    %s2911 = scalar_lea.vmem %s21, 16
    %v2912 = vld [vmem:[%s2911] sm:$0xff]
    %v2913 = vld [vmem:[%s2911 + $0x8] sm:$0x3]
    %v2915 = vsel %vm2821, %v2912, 0
    %v2918 = vsel %vm2821, %v2913, 0
    %2920 = vmatprep.subr.mxu0 0.0
    %2921 = vmatpush1.msra.mxu0 0.0
    %2922 = vmatprep.subr.mxu0 0.0
    %2923 = vmatpush1.msra.mxu0 0.0
    %2924 = vmatprep.subr.mxu0 0.0
    %2925 = vmatpush1.msra.mxu0 0.0
    %2926 = vmatprep.subr.mxu0 0.0
    %2927 = vmatpush1.msra.mxu0 0.0
    %2928 = vmatprep.subr.mxu0 0.0
    %2929 = vmatpush1.msra.mxu0 0.0
    %2930 = vmatprep.subr.mxu0 0.0
    %2931 = vmatpush1.msra.mxu0 0.0
    %2932 = vmatprep.subr.mxu0 0.0
    %2933 = vmatpush1.msra.mxu0 0.0
    %2934 = vmatprep.subr.mxu0 0.0
    %2935 = vmatpush1.msra.mxu0 0.0
    %2936 = vmatprep.subr.mxu0 0.0
    %2937 = vmatpush1.msra.mxu0 0.0
    %2938 = vmatprep.subr.mxu0 0.0
    %2939 = vmatpush1.msra.mxu0 0.0
    %2940 = vmatprep.subr.mxu0 0.0
    %2941 = vmatpush1.msra.mxu0 0.0
    %2942 = vmatprep.subr.mxu0 0.0
    %2943 = vmatpush1.msra.mxu0 0.0
    %2944 = vmatprep.subr.mxu0 0.0
    %2945 = vmatpush1.msra.mxu0 0.0
    %2946 = vmatprep.subr.mxu0 %v2832
    %2947 = vmatpush1.msra.mxu0 %v2829
    %2948 = vmatprep.subr.mxu0 %v2816
    %2949 = vmatpush1.msra.mxu0 %v2815
    %2950 = vmatprep.subr.mxu0 %v2814
    %2951 = vmatpush1.msra.mxu0 %v2813
    %2952 = vmatprep.subr.mxu0 0.0
    %2953 = vmatpush2.msra.mxu0 0.0
    %2954 = vmatprep.subr.mxu0 0.0
    %2955 = vmatpush2.msra.mxu0 0.0
    %2956 = vmatprep.subr.mxu0 0.0
    %2957 = vmatpush2.msra.mxu0 0.0
    %2958 = vmatprep.subr.mxu0 0.0
    %2959 = vmatpush2.msra.mxu0 0.0
    %2960 = vmatprep.subr.mxu0 0.0
    %2961 = vmatpush2.msra.mxu0 0.0
    %2962 = vmatprep.subr.mxu0 0.0
    %2963 = vmatpush2.msra.mxu0 0.0
    %2964 = vmatprep.subr.mxu0 0.0
    %2965 = vmatpush2.msra.mxu0 0.0
    %2966 = vmatprep.subr.mxu0 0.0
    %2967 = vmatpush2.msra.mxu0 0.0
    %2968 = vmatprep.subr.mxu0 0.0
    %2969 = vmatpush2.msra.mxu0 0.0
    %2970 = vmatprep.subr.mxu0 0.0
    %2971 = vmatpush2.msra.mxu0 0.0
    %2972 = vmatprep.subr.mxu0 0.0
    %2973 = vmatpush2.msra.mxu0 0.0
    %2974 = vmatprep.subr.mxu0 0.0
    %2975 = vmatpush2.msra.mxu0 0.0
    %2976 = vmatprep.subr.mxu0 0.0
    %2977 = vmatpush2.msra.mxu0 0.0
    %2978 = vmatprep.subr.mxu0 0.0
    %2979 = vmatpush2.msra.mxu0 0.0
    %2980 = vmatprep.subr.mxu0 0.0
    %2981 = vmatpush2.msra.mxu0 0.0
    %2982 = vmatprep.subr.mxu0 0.0
    %2983 = vmatpush2.msra.mxu0 0.0
    %2984 = vmatprep.mubr.f32.mxu0 0.0
    %2985 = vmatmul.mubr.f32.gmra.mxu0 %v2915
    %v2986 = vpop.f32.mrf.mxu0
    %v2987 = vadd.f32 0.0, %v2986
    %v2988 = vpop.f32.mrf.mxu0
    %v2989 = vadd.f32 0.0, %v2988
    %2990 = vmatprep.mubr.f32.mxu0 0.0
    %2991 = vmatmul.mubr.f32.gmra.mxu0 %v2918
    %v2992 = vpop.f32.mrf.mxu0
    %v2993 = vadd.f32 0.0, %v2992
    %v2994 = vpop.f32.mrf.mxu0
    %v2995 = vadd.f32 0.0, %v2994
    %2996 = vdwg.mxu0
    %v2997 = vld [vmem:[%s23] sm:$0xff]
    %v2998 = vld [vmem:[%s23 + $0x8] sm:$0xff]
    %v2999 = vld [vmem:[%s23 + $0x10] sm:$0xff]
    %v3000 = vld [vmem:[%s23 + $0x18] sm:$0xff]
    %v3001 = vld [vmem:[%s23 + $0x20] sm:$0xff]
    %v3002 = vld [vmem:[%s23 + $0x28] sm:$0xff]
    %v3003 = vld [vmem:[%s23 + $0x30] sm:$0xff]
    %v3004 = vld [vmem:[%s23 + $0x38] sm:$0xff]
    %v3005 = vld [vmem:[%s23 + $0x40] sm:$0xff]
    %v3006 = vld [vmem:[%s23 + $0x48] sm:$0xff]
    %v3007 = vld [vmem:[%s23 + $0x50] sm:$0xff]
    %v3008 = vld [vmem:[%s23 + $0x58] sm:$0xff]
    %v3009 = vld [vmem:[%s23 + $0x60] sm:$0xff]
    %v3010 = vld [vmem:[%s23 + $0x68] sm:$0xff]
    %v3011 = vld [vmem:[%s23 + $0x70] sm:$0xff]
    %v3012 = vld [vmem:[%s23 + $0x78] sm:$0xff]
    %v3013 = vld [vmem:[%s23 + $0x80] sm:$0xff]
    %v3014 = vld [vmem:[%s23 + $0x88] sm:$0xff]
    %v3015 = vld [vmem:[%s23 + $0x90] sm:$0xff]
    %v3016 = vld [vmem:[%s23 + $0x98] sm:$0xff]
    %v3017 = vld [vmem:[%s23 + $0xa0] sm:$0xff]
    %v3018 = vld [vmem:[%s23 + $0xa8] sm:$0xff]
    %vm3019 = vcmask 392192
    %v3021 = vsel %vm3019, %v2903, 0
    %v3024 = vsel %vm3019, %v2909, 0
    %3026 = vmatprep.subr.mxu0 0.0
    %3027 = vmatpush1.msra.mxu0 %v3012
    %3028 = vmatprep.subr.mxu0 0.0
    %3029 = vmatpush1.msra.mxu0 %v3011
    %3030 = vmatprep.subr.mxu0 0.0
    %3031 = vmatpush1.msra.mxu0 %v3010
    %3032 = vmatprep.subr.mxu0 0.0
    %3033 = vmatpush1.msra.mxu0 %v3009
    %3034 = vmatprep.subr.mxu0 0.0
    %3035 = vmatpush1.msra.mxu0 %v3008
    %3036 = vmatprep.subr.mxu0 0.0
    %3037 = vmatpush1.msra.mxu0 %v3007
    %3038 = vmatprep.subr.mxu0 0.0
    %3039 = vmatpush1.msra.mxu0 %v3006
    %3040 = vmatprep.subr.mxu0 0.0
    %3041 = vmatpush1.msra.mxu0 %v3005
    %3042 = vmatprep.subr.mxu0 0.0
    %3043 = vmatpush1.msra.mxu0 %v3004
    %3044 = vmatprep.subr.mxu0 0.0
    %3045 = vmatpush1.msra.mxu0 %v3003
    %3046 = vmatprep.subr.mxu0 0.0
    %3047 = vmatpush1.msra.mxu0 %v3002
    %3048 = vmatprep.subr.mxu0 0.0
    %3049 = vmatpush1.msra.mxu0 %v3001
    %3050 = vmatprep.subr.mxu0 0.0
    %3051 = vmatpush1.msra.mxu0 %v3000
    %3052 = vmatprep.subr.mxu0 0.0
    %3053 = vmatpush1.msra.mxu0 %v2999
    %3054 = vmatprep.subr.mxu0 0.0
    %3055 = vmatpush1.msra.mxu0 %v2998
    %3056 = vmatprep.subr.mxu0 0.0
    %3057 = vmatpush1.msra.mxu0 %v2997
    %3058 = vmatprep.subr.mxu0 0.0
    %3059 = vmatpush2.msra.mxu0 0.0
    %3060 = vmatprep.subr.mxu0 0.0
    %3061 = vmatpush2.msra.mxu0 0.0
    %3062 = vmatprep.subr.mxu0 0.0
    %3063 = vmatpush2.msra.mxu0 0.0
    %3064 = vmatprep.subr.mxu0 0.0
    %3065 = vmatpush2.msra.mxu0 0.0
    %3066 = vmatprep.subr.mxu0 0.0
    %3067 = vmatpush2.msra.mxu0 0.0
    %3068 = vmatprep.subr.mxu0 0.0
    %3069 = vmatpush2.msra.mxu0 0.0
    %3070 = vmatprep.subr.mxu0 0.0
    %3071 = vmatpush2.msra.mxu0 0.0
    %3072 = vmatprep.subr.mxu0 0.0
    %3073 = vmatpush2.msra.mxu0 0.0
    %3074 = vmatprep.subr.mxu0 0.0
    %3075 = vmatpush2.msra.mxu0 0.0
    %3076 = vmatprep.subr.mxu0 0.0
    %3077 = vmatpush2.msra.mxu0 0.0
    %3078 = vmatprep.subr.mxu0 0.0
    %3079 = vmatpush2.msra.mxu0 %v3018
    %3080 = vmatprep.subr.mxu0 0.0
    %3081 = vmatpush2.msra.mxu0 %v3017
    %3082 = vmatprep.subr.mxu0 0.0
    %3083 = vmatpush2.msra.mxu0 %v3016
    %3084 = vmatprep.subr.mxu0 0.0
    %3085 = vmatpush2.msra.mxu0 %v3015
    %3086 = vmatprep.subr.mxu0 0.0
    %3087 = vmatpush2.msra.mxu0 %v3014
    %3088 = vmatprep.subr.mxu0 0.0
    %3089 = vmatpush2.msra.mxu0 %v3013
    %3090 = vmatprep.mubr.f32.mxu0 %v3021
    %3091 = vmatmul.mubr.f32.gmra.mxu0 %v2901
    %v3092 = vpop.f32.mrf.mxu0
    %v3093 = vadd.f32 0.0, %v3092
    %v3094 = vpop.f32.mrf.mxu0
    %3095 = vmatprep.mubr.f32.mxu0 %v3024
    %3096 = vmatmul.mubr.f32.gmra.mxu0 %v2907
    %v3097 = vpop.f32.mrf.mxu0
    %v3098 = vadd.f32 0.0, %v3097
    %v3099 = vpop.f32.mrf.mxu0
    %3100 = vdwg.mxu0
    %s3101 = scalar_lea.vmem %s23, 176
    %v3102 = vld [vmem:[%s3101] sm:$0xff]
    %v3103 = vld [vmem:[%s3101 + $0x8] sm:$0xff]
    %v3104 = vld [vmem:[%s3101 + $0x10] sm:$0xff]
    %v3105 = vld [vmem:[%s3101 + $0x18] sm:$0xff]
    %v3106 = vld [vmem:[%s3101 + $0x20] sm:$0xff]
    %v3107 = vld [vmem:[%s3101 + $0x28] sm:$0xff]
    %v3108 = vld [vmem:[%s3101 + $0x30] sm:$0xff]
    %v3109 = vld [vmem:[%s3101 + $0x38] sm:$0xff]
    %v3110 = vld [vmem:[%s3101 + $0x40] sm:$0xff]
    %v3111 = vld [vmem:[%s3101 + $0x48] sm:$0xff]
    %v3112 = vld [vmem:[%s3101 + $0x50] sm:$0xff]
    %v3113 = vld [vmem:[%s3101 + $0x58] sm:$0xff]
    %v3114 = vld [vmem:[%s3101 + $0x60] sm:$0xff]
    %v3115 = vld [vmem:[%s3101 + $0x68] sm:$0xff]
    %v3116 = vld [vmem:[%s3101 + $0x70] sm:$0xff]
    %v3117 = vld [vmem:[%s3101 + $0x78] sm:$0xff]
    %v3118 = vld [vmem:[%s3101 + $0x80] sm:$0xff]
    %v3119 = vld [vmem:[%s3101 + $0x88] sm:$0xff]
    %v3120 = vld [vmem:[%s3101 + $0x90] sm:$0xff]
    %v3121 = vld [vmem:[%s3101 + $0x98] sm:$0xff]
    %v3122 = vld [vmem:[%s3101 + $0xa0] sm:$0xff]
    %v3123 = vld [vmem:[%s3101 + $0xa8] sm:$0xff]
    %3124 = vmatprep.subr.mxu0 0.0
    %3125 = vmatpush1.msra.mxu0 %v3117
    %3126 = vmatprep.subr.mxu0 0.0
    %3127 = vmatpush1.msra.mxu0 %v3116
    %3128 = vmatprep.subr.mxu0 0.0
    %3129 = vmatpush1.msra.mxu0 %v3115
    %3130 = vmatprep.subr.mxu0 0.0
    %3131 = vmatpush1.msra.mxu0 %v3114
    %3132 = vmatprep.subr.mxu0 0.0
    %3133 = vmatpush1.msra.mxu0 %v3113
    %3134 = vmatprep.subr.mxu0 0.0
    %3135 = vmatpush1.msra.mxu0 %v3112
    %3136 = vmatprep.subr.mxu0 0.0
    %3137 = vmatpush1.msra.mxu0 %v3111
    %3138 = vmatprep.subr.mxu0 0.0
    %3139 = vmatpush1.msra.mxu0 %v3110
    %3140 = vmatprep.subr.mxu0 0.0
    %3141 = vmatpush1.msra.mxu0 %v3109
    %3142 = vmatprep.subr.mxu0 0.0
    %3143 = vmatpush1.msra.mxu0 %v3108
    %3144 = vmatprep.subr.mxu0 0.0
    %3145 = vmatpush1.msra.mxu0 %v3107
    %3146 = vmatprep.subr.mxu0 0.0
    %3147 = vmatpush1.msra.mxu0 %v3106
    %3148 = vmatprep.subr.mxu0 0.0
    %3149 = vmatpush1.msra.mxu0 %v3105
    %3150 = vmatprep.subr.mxu0 0.0
    %3151 = vmatpush1.msra.mxu0 %v3104
    %3152 = vmatprep.subr.mxu0 0.0
    %3153 = vmatpush1.msra.mxu0 %v3103
    %3154 = vmatprep.subr.mxu0 0.0
    %3155 = vmatpush1.msra.mxu0 %v3102
    %3156 = vmatprep.subr.mxu0 0.0
    %3157 = vmatpush2.msra.mxu0 0.0
    %3158 = vmatprep.subr.mxu0 0.0
    %3159 = vmatpush2.msra.mxu0 0.0
    %3160 = vmatprep.subr.mxu0 0.0
    %3161 = vmatpush2.msra.mxu0 0.0
    %3162 = vmatprep.subr.mxu0 0.0
    %3163 = vmatpush2.msra.mxu0 0.0
    %3164 = vmatprep.subr.mxu0 0.0
    %3165 = vmatpush2.msra.mxu0 0.0
    %3166 = vmatprep.subr.mxu0 0.0
    %3167 = vmatpush2.msra.mxu0 0.0
    %3168 = vmatprep.subr.mxu0 0.0
    %3169 = vmatpush2.msra.mxu0 0.0
    %3170 = vmatprep.subr.mxu0 0.0
    %3171 = vmatpush2.msra.mxu0 0.0
    %3172 = vmatprep.subr.mxu0 0.0
    %3173 = vmatpush2.msra.mxu0 0.0
    %3174 = vmatprep.subr.mxu0 0.0
    %3175 = vmatpush2.msra.mxu0 0.0
    %3176 = vmatprep.subr.mxu0 0.0
    %3177 = vmatpush2.msra.mxu0 %v3123
    %3178 = vmatprep.subr.mxu0 0.0
    %3179 = vmatpush2.msra.mxu0 %v3122
    %3180 = vmatprep.subr.mxu0 0.0
    %3181 = vmatpush2.msra.mxu0 %v3121
    %3182 = vmatprep.subr.mxu0 0.0
    %3183 = vmatpush2.msra.mxu0 %v3120
    %3184 = vmatprep.subr.mxu0 0.0
    %3185 = vmatpush2.msra.mxu0 %v3119
    %3186 = vmatprep.subr.mxu0 0.0
    %3187 = vmatpush2.msra.mxu0 %v3118
    %3188 = vmatprep.mubr.f32.mxu0 %v3021
    %3189 = vmatmul.mubr.f32.gmra.mxu0 %v2901
    %v3190 = vpop.f32.mrf.mxu0
    %v3191 = vadd.f32 0.0, %v3190
    %v3192 = vpop.f32.mrf.mxu0
    %3193 = vmatprep.mubr.f32.mxu0 %v3024
    %3194 = vmatmul.mubr.f32.gmra.mxu0 %v2907
    %v3195 = vpop.f32.mrf.mxu0
    %v3196 = vadd.f32 0.0, %v3195
    %v3197 = vpop.f32.mrf.mxu0
    %3198 = vdwg.mxu0
    %v3199 = vmax.f32 %v3093, %v3191
    %v3200 = vmax.f32 %v3098, %v3196
    %v3202 = vsel %vm3019, %v2989, 0
    %v3205 = vsel %vm3019, %v2995, 0
    %3207 = vmatprep.subr.mxu0 0.0
    %3208 = vmatpush1.msra.mxu0 %v3012
    %3209 = vmatprep.subr.mxu0 0.0
    %3210 = vmatpush1.msra.mxu0 %v3011
    %3211 = vmatprep.subr.mxu0 0.0
    %3212 = vmatpush1.msra.mxu0 %v3010
    %3213 = vmatprep.subr.mxu0 0.0
    %3214 = vmatpush1.msra.mxu0 %v3009
    %3215 = vmatprep.subr.mxu0 0.0
    %3216 = vmatpush1.msra.mxu0 %v3008
    %3217 = vmatprep.subr.mxu0 0.0
    %3218 = vmatpush1.msra.mxu0 %v3007
    %3219 = vmatprep.subr.mxu0 0.0
    %3220 = vmatpush1.msra.mxu0 %v3006
    %3221 = vmatprep.subr.mxu0 0.0
    %3222 = vmatpush1.msra.mxu0 %v3005
    %3223 = vmatprep.subr.mxu0 0.0
    %3224 = vmatpush1.msra.mxu0 %v3004
    %3225 = vmatprep.subr.mxu0 0.0
    %3226 = vmatpush1.msra.mxu0 %v3003
    %3227 = vmatprep.subr.mxu0 0.0
    %3228 = vmatpush1.msra.mxu0 %v3002
    %3229 = vmatprep.subr.mxu0 0.0
    %3230 = vmatpush1.msra.mxu0 %v3001
    %3231 = vmatprep.subr.mxu0 0.0
    %3232 = vmatpush1.msra.mxu0 %v3000
    %3233 = vmatprep.subr.mxu0 0.0
    %3234 = vmatpush1.msra.mxu0 %v2999
    %3235 = vmatprep.subr.mxu0 0.0
    %3236 = vmatpush1.msra.mxu0 %v2998
    %3237 = vmatprep.subr.mxu0 0.0
    %3238 = vmatpush1.msra.mxu0 %v2997
    %3239 = vmatprep.subr.mxu0 0.0
    %3240 = vmatpush2.msra.mxu0 0.0
    %3241 = vmatprep.subr.mxu0 0.0
    %3242 = vmatpush2.msra.mxu0 0.0
    %3243 = vmatprep.subr.mxu0 0.0
    %3244 = vmatpush2.msra.mxu0 0.0
    %3245 = vmatprep.subr.mxu0 0.0
    %3246 = vmatpush2.msra.mxu0 0.0
    %3247 = vmatprep.subr.mxu0 0.0
    %3248 = vmatpush2.msra.mxu0 0.0
    %3249 = vmatprep.subr.mxu0 0.0
    %3250 = vmatpush2.msra.mxu0 0.0
    %3251 = vmatprep.subr.mxu0 0.0
    %3252 = vmatpush2.msra.mxu0 0.0
    %3253 = vmatprep.subr.mxu0 0.0
    %3254 = vmatpush2.msra.mxu0 0.0
    %3255 = vmatprep.subr.mxu0 0.0
    %3256 = vmatpush2.msra.mxu0 0.0
    %3257 = vmatprep.subr.mxu0 0.0
    %3258 = vmatpush2.msra.mxu0 0.0
    %3259 = vmatprep.subr.mxu0 0.0
    %3260 = vmatpush2.msra.mxu0 %v3018
    %3261 = vmatprep.subr.mxu0 0.0
    %3262 = vmatpush2.msra.mxu0 %v3017
    %3263 = vmatprep.subr.mxu0 0.0
    %3264 = vmatpush2.msra.mxu0 %v3016
    %3265 = vmatprep.subr.mxu0 0.0
    %3266 = vmatpush2.msra.mxu0 %v3015
    %3267 = vmatprep.subr.mxu0 0.0
    %3268 = vmatpush2.msra.mxu0 %v3014
    %3269 = vmatprep.subr.mxu0 0.0
    %3270 = vmatpush2.msra.mxu0 %v3013
    %3271 = vmatprep.mubr.f32.mxu0 %v3202
    %3272 = vmatmul.mubr.f32.gmra.mxu0 %v2987
    %v3273 = vpop.f32.mrf.mxu0
    %v3274 = vadd.f32 0.0, %v3273
    %v3275 = vpop.f32.mrf.mxu0
    %3276 = vmatprep.mubr.f32.mxu0 %v3205
    %3277 = vmatmul.mubr.f32.gmra.mxu0 %v2993
    %v3278 = vpop.f32.mrf.mxu0
    %v3279 = vadd.f32 0.0, %v3278
    %v3280 = vpop.f32.mrf.mxu0
    %3281 = vdwg.mxu0
    %3282 = vmatprep.subr.mxu0 0.0
    %3283 = vmatpush1.msra.mxu0 %v3117
    %3284 = vmatprep.subr.mxu0 0.0
    %3285 = vmatpush1.msra.mxu0 %v3116
    %3286 = vmatprep.subr.mxu0 0.0
    %3287 = vmatpush1.msra.mxu0 %v3115
    %3288 = vmatprep.subr.mxu0 0.0
    %3289 = vmatpush1.msra.mxu0 %v3114
    %3290 = vmatprep.subr.mxu0 0.0
    %3291 = vmatpush1.msra.mxu0 %v3113
    %3292 = vmatprep.subr.mxu0 0.0
    %3293 = vmatpush1.msra.mxu0 %v3112
    %3294 = vmatprep.subr.mxu0 0.0
    %3295 = vmatpush1.msra.mxu0 %v3111
    %3296 = vmatprep.subr.mxu0 0.0
    %3297 = vmatpush1.msra.mxu0 %v3110
    %3298 = vmatprep.subr.mxu0 0.0
    %3299 = vmatpush1.msra.mxu0 %v3109
    %3300 = vmatprep.subr.mxu0 0.0
    %3301 = vmatpush1.msra.mxu0 %v3108
    %3302 = vmatprep.subr.mxu0 0.0
    %3303 = vmatpush1.msra.mxu0 %v3107
    %3304 = vmatprep.subr.mxu0 0.0
    %3305 = vmatpush1.msra.mxu0 %v3106
    %3306 = vmatprep.subr.mxu0 0.0
    %3307 = vmatpush1.msra.mxu0 %v3105
    %3308 = vmatprep.subr.mxu0 0.0
    %3309 = vmatpush1.msra.mxu0 %v3104
    %3310 = vmatprep.subr.mxu0 0.0
    %3311 = vmatpush1.msra.mxu0 %v3103
    %3312 = vmatprep.subr.mxu0 0.0
    %3313 = vmatpush1.msra.mxu0 %v3102
    %3314 = vmatprep.subr.mxu0 0.0
    %3315 = vmatpush2.msra.mxu0 0.0
    %3316 = vmatprep.subr.mxu0 0.0
    %3317 = vmatpush2.msra.mxu0 0.0
    %3318 = vmatprep.subr.mxu0 0.0
    %3319 = vmatpush2.msra.mxu0 0.0
    %3320 = vmatprep.subr.mxu0 0.0
    %3321 = vmatpush2.msra.mxu0 0.0
    %3322 = vmatprep.subr.mxu0 0.0
    %3323 = vmatpush2.msra.mxu0 0.0
    %3324 = vmatprep.subr.mxu0 0.0
    %3325 = vmatpush2.msra.mxu0 0.0
    %3326 = vmatprep.subr.mxu0 0.0
    %3327 = vmatpush2.msra.mxu0 0.0
    %3328 = vmatprep.subr.mxu0 0.0
    %3329 = vmatpush2.msra.mxu0 0.0
    %3330 = vmatprep.subr.mxu0 0.0
    %3331 = vmatpush2.msra.mxu0 0.0
    %3332 = vmatprep.subr.mxu0 0.0
    %3333 = vmatpush2.msra.mxu0 0.0
    %3334 = vmatprep.subr.mxu0 0.0
    %3335 = vmatpush2.msra.mxu0 %v3123
    %3336 = vmatprep.subr.mxu0 0.0
    %3337 = vmatpush2.msra.mxu0 %v3122
    %3338 = vmatprep.subr.mxu0 0.0
    %3339 = vmatpush2.msra.mxu0 %v3121
    %3340 = vmatprep.subr.mxu0 0.0
    %3341 = vmatpush2.msra.mxu0 %v3120
    %3342 = vmatprep.subr.mxu0 0.0
    %3343 = vmatpush2.msra.mxu0 %v3119
    %3344 = vmatprep.subr.mxu0 0.0
    %3345 = vmatpush2.msra.mxu0 %v3118
    %3346 = vmatprep.mubr.f32.mxu0 %v3202
    %3347 = vmatmul.mubr.f32.gmra.mxu0 %v2987
    %v3348 = vpop.f32.mrf.mxu0
    %v3349 = vadd.f32 0.0, %v3348
    %v3350 = vpop.f32.mrf.mxu0
    %3351 = vmatprep.mubr.f32.mxu0 %v3205
    %3352 = vmatmul.mubr.f32.gmra.mxu0 %v2993
    %v3353 = vpop.f32.mrf.mxu0
    %v3354 = vadd.f32 0.0, %v3353
    %v3355 = vpop.f32.mrf.mxu0
    %3356 = vdwg.mxu0
    %v3357 = vmax.f32 %v3274, %v3349
    %v3358 = vmax.f32 %v3279, %v3354
    %v3359 = vmax.f32 %v3199, %v3357
    %v3360 = vmax.f32 %v3200, %v3358
    %v3361 = vld [vmem:[%s25] sm:$0x3]
    %vm3362 = vcmask 80896
    %v3364 = vsel %vm3362, %v3361, 0
    %v3367 = vsel %vm1941, %v3360, 0
    %3369 = vmatprep.subr.mxu0 0.0
    %3370 = vmatpush1.msra.mxu0 0.0
    %3371 = vmatprep.subr.mxu0 0.0
    %3372 = vmatpush1.msra.mxu0 0.0
    %3373 = vmatprep.subr.mxu0 0.0
    %3374 = vmatpush1.msra.mxu0 0.0
    %3375 = vmatprep.subr.mxu0 0.0
    %3376 = vmatpush1.msra.mxu0 0.0
    %3377 = vmatprep.subr.mxu0 0.0
    %3378 = vmatpush1.msra.mxu0 0.0
    %3379 = vmatprep.subr.mxu0 0.0
    %3380 = vmatpush1.msra.mxu0 0.0
    %3381 = vmatprep.subr.mxu0 0.0
    %3382 = vmatpush1.msra.mxu0 0.0
    %3383 = vmatprep.subr.mxu0 0.0
    %3384 = vmatpush1.msra.mxu0 0.0
    %3385 = vmatprep.subr.mxu0 0.0
    %3386 = vmatpush1.msra.mxu0 0.0
    %3387 = vmatprep.subr.mxu0 0.0
    %3388 = vmatpush1.msra.mxu0 0.0
    %3389 = vmatprep.subr.mxu0 0.0
    %3390 = vmatpush1.msra.mxu0 0.0
    %3391 = vmatprep.subr.mxu0 0.0
    %3392 = vmatpush1.msra.mxu0 0.0
    %3393 = vmatprep.subr.mxu0 0.0
    %3394 = vmatpush1.msra.mxu0 0.0
    %3395 = vmatprep.subr.mxu0 0.0
    %3396 = vmatpush1.msra.mxu0 0.0
    %3397 = vmatprep.subr.mxu0 0.0
    %3398 = vmatpush1.msra.mxu0 %v3367
    %3399 = vmatprep.subr.mxu0 0.0
    %3400 = vmatpush1.msra.mxu0 %v3359
    %3401 = vmatprep.subr.mxu0 0.0
    %3402 = vmatpush2.msra.mxu0 0.0
    %3403 = vmatprep.subr.mxu0 0.0
    %3404 = vmatpush2.msra.mxu0 0.0
    %3405 = vmatprep.subr.mxu0 0.0
    %3406 = vmatpush2.msra.mxu0 0.0
    %3407 = vmatprep.subr.mxu0 0.0
    %3408 = vmatpush2.msra.mxu0 0.0
    %3409 = vmatprep.subr.mxu0 0.0
    %3410 = vmatpush2.msra.mxu0 0.0
    %3411 = vmatprep.subr.mxu0 0.0
    %3412 = vmatpush2.msra.mxu0 0.0
    %3413 = vmatprep.subr.mxu0 0.0
    %3414 = vmatpush2.msra.mxu0 0.0
    %3415 = vmatprep.subr.mxu0 0.0
    %3416 = vmatpush2.msra.mxu0 0.0
    %3417 = vmatprep.subr.mxu0 0.0
    %3418 = vmatpush2.msra.mxu0 0.0
    %3419 = vmatprep.subr.mxu0 0.0
    %3420 = vmatpush2.msra.mxu0 0.0
    %3421 = vmatprep.subr.mxu0 0.0
    %3422 = vmatpush2.msra.mxu0 0.0
    %3423 = vmatprep.subr.mxu0 0.0
    %3424 = vmatpush2.msra.mxu0 0.0
    %3425 = vmatprep.subr.mxu0 0.0
    %3426 = vmatpush2.msra.mxu0 0.0
    %3427 = vmatprep.subr.mxu0 0.0
    %3428 = vmatpush2.msra.mxu0 0.0
    %3429 = vmatprep.subr.mxu0 0.0
    %3430 = vmatpush2.msra.mxu0 0.0
    %3431 = vmatprep.subr.mxu0 0.0
    %3432 = vmatpush2.msra.mxu0 0.0
    %3433 = vmatprep.mubr.f32.mxu0 0.0
    %3434 = vmatmul.mubr.f32.gmra.mxu0 %v3364
    %v3435 = vpop.f32.mrf.mxu0
    %v3436 = vadd.f32 0.0, %v3435
    %v3437 = vpop.f32.mrf.mxu0
    %3438 = vdwg.mxu0
    %v3439 = vld [vmem:[%s27] sm:$0xff]
    %v3440 = vld [vmem:[%s27 + $0x8] sm:$0xff]
    %v3441 = vld [vmem:[%s27 + $0x10] sm:$0xff]
    %v3442 = vld [vmem:[%s27 + $0x18] sm:$0xff]
    %v3443 = vld [vmem:[%s27 + $0x20] sm:$0xff]
    %v3444 = vld [vmem:[%s27 + $0x28] sm:$0xff]
    %v3445 = vld [vmem:[%s27 + $0x30] sm:$0xff]
    %v3446 = vld [vmem:[%s27 + $0x38] sm:$0xff]
    %v3447 = vld [vmem:[%s27 + $0x40] sm:$0xff]
    %v3448 = vld [vmem:[%s27 + $0x48] sm:$0xff]
    %s3449 = scalar_lea.vmem %s25, 2
    %v3450 = vld [vmem:[%s3449] sm:$0x3]
    %v3452 = vsel %vm3362, %v3450, 0
    %3454 = vmatprep.subr.mxu0 0.0
    %3455 = vmatpush1.msra.mxu0 0.0
    %3456 = vmatprep.subr.mxu0 0.0
    %3457 = vmatpush1.msra.mxu0 0.0
    %3458 = vmatprep.subr.mxu0 0.0
    %3459 = vmatpush1.msra.mxu0 0.0
    %3460 = vmatprep.subr.mxu0 0.0
    %3461 = vmatpush1.msra.mxu0 0.0
    %3462 = vmatprep.subr.mxu0 0.0
    %3463 = vmatpush1.msra.mxu0 0.0
    %3464 = vmatprep.subr.mxu0 0.0
    %3465 = vmatpush1.msra.mxu0 0.0
    %3466 = vmatprep.subr.mxu0 0.0
    %3467 = vmatpush1.msra.mxu0 0.0
    %3468 = vmatprep.subr.mxu0 0.0
    %3469 = vmatpush1.msra.mxu0 0.0
    %3470 = vmatprep.subr.mxu0 0.0
    %3471 = vmatpush1.msra.mxu0 0.0
    %3472 = vmatprep.subr.mxu0 0.0
    %3473 = vmatpush1.msra.mxu0 0.0
    %3474 = vmatprep.subr.mxu0 0.0
    %3475 = vmatpush1.msra.mxu0 0.0
    %3476 = vmatprep.subr.mxu0 0.0
    %3477 = vmatpush1.msra.mxu0 0.0
    %3478 = vmatprep.subr.mxu0 0.0
    %3479 = vmatpush1.msra.mxu0 0.0
    %3480 = vmatprep.subr.mxu0 0.0
    %3481 = vmatpush1.msra.mxu0 0.0
    %3482 = vmatprep.subr.mxu0 0.0
    %3483 = vmatpush1.msra.mxu0 %v3367
    %3484 = vmatprep.subr.mxu0 0.0
    %3485 = vmatpush1.msra.mxu0 %v3359
    %3486 = vmatprep.subr.mxu0 0.0
    %3487 = vmatpush2.msra.mxu0 0.0
    %3488 = vmatprep.subr.mxu0 0.0
    %3489 = vmatpush2.msra.mxu0 0.0
    %3490 = vmatprep.subr.mxu0 0.0
    %3491 = vmatpush2.msra.mxu0 0.0
    %3492 = vmatprep.subr.mxu0 0.0
    %3493 = vmatpush2.msra.mxu0 0.0
    %3494 = vmatprep.subr.mxu0 0.0
    %3495 = vmatpush2.msra.mxu0 0.0
    %3496 = vmatprep.subr.mxu0 0.0
    %3497 = vmatpush2.msra.mxu0 0.0
    %3498 = vmatprep.subr.mxu0 0.0
    %3499 = vmatpush2.msra.mxu0 0.0
    %3500 = vmatprep.subr.mxu0 0.0
    %3501 = vmatpush2.msra.mxu0 0.0
    %3502 = vmatprep.subr.mxu0 0.0
    %3503 = vmatpush2.msra.mxu0 0.0
    %3504 = vmatprep.subr.mxu0 0.0
    %3505 = vmatpush2.msra.mxu0 0.0
    %3506 = vmatprep.subr.mxu0 0.0
    %3507 = vmatpush2.msra.mxu0 0.0
    %3508 = vmatprep.subr.mxu0 0.0
    %3509 = vmatpush2.msra.mxu0 0.0
    %3510 = vmatprep.subr.mxu0 0.0
    %3511 = vmatpush2.msra.mxu0 0.0
    %3512 = vmatprep.subr.mxu0 0.0
    %3513 = vmatpush2.msra.mxu0 0.0
    %3514 = vmatprep.subr.mxu0 0.0
    %3515 = vmatpush2.msra.mxu0 0.0
    %3516 = vmatprep.subr.mxu0 0.0
    %3517 = vmatpush2.msra.mxu0 0.0
    %3518 = vmatprep.mubr.f32.mxu0 0.0
    %3519 = vmatmul.mubr.f32.gmra.mxu0 %v3452
    %v3520 = vpop.f32.mrf.mxu0
    %v3521 = vadd.f32 0.0, %v3520
    %v3522 = vpop.f32.mrf.mxu0
    %3523 = vdwg.mxu0
    %s3524 = scalar_lea.vmem %s27, 80
    %v3525 = vld [vmem:[%s3524] sm:$0xff]
    %v3526 = vld [vmem:[%s3524 + $0x8] sm:$0xff]
    %v3527 = vld [vmem:[%s3524 + $0x10] sm:$0xff]
    %v3528 = vld [vmem:[%s3524 + $0x18] sm:$0xff]
    %v3529 = vld [vmem:[%s3524 + $0x20] sm:$0xff]
    %v3530 = vld [vmem:[%s3524 + $0x28] sm:$0xff]
    %v3531 = vld [vmem:[%s3524 + $0x30] sm:$0xff]
    %v3532 = vld [vmem:[%s3524 + $0x38] sm:$0xff]
    %v3533 = vld [vmem:[%s3524 + $0x40] sm:$0xff]
    %v3534 = vld [vmem:[%s3524 + $0x48] sm:$0xff]
    %vm3535 = vcmask 654336
    %v3537 = vsel %vm3535, %v3521, 0
    %3539 = vmatprep.subr.mxu0 0.0
    %3540 = vmatpush1.msra.mxu0 0.0
    %3541 = vmatprep.subr.mxu0 0.0
    %3542 = vmatpush1.msra.mxu0 0.0
    %3543 = vmatprep.subr.mxu0 0.0
    %3544 = vmatpush1.msra.mxu0 0.0
    %3545 = vmatprep.subr.mxu0 0.0
    %3546 = vmatpush1.msra.mxu0 0.0
    %3547 = vmatprep.subr.mxu0 0.0
    %3548 = vmatpush1.msra.mxu0 0.0
    %3549 = vmatprep.subr.mxu0 0.0
    %3550 = vmatpush1.msra.mxu0 0.0
    %3551 = vmatprep.subr.mxu0 0.0
    %3552 = vmatpush1.msra.mxu0 %v3534
    %3553 = vmatprep.subr.mxu0 0.0
    %3554 = vmatpush1.msra.mxu0 %v3533
    %3555 = vmatprep.subr.mxu0 0.0
    %3556 = vmatpush1.msra.mxu0 %v3532
    %3557 = vmatprep.subr.mxu0 0.0
    %3558 = vmatpush1.msra.mxu0 %v3531
    %3559 = vmatprep.subr.mxu0 0.0
    %3560 = vmatpush1.msra.mxu0 %v3530
    %3561 = vmatprep.subr.mxu0 0.0
    %3562 = vmatpush1.msra.mxu0 %v3529
    %3563 = vmatprep.subr.mxu0 0.0
    %3564 = vmatpush1.msra.mxu0 %v3528
    %3565 = vmatprep.subr.mxu0 0.0
    %3566 = vmatpush1.msra.mxu0 %v3527
    %3567 = vmatprep.subr.mxu0 0.0
    %3568 = vmatpush1.msra.mxu0 %v3526
    %3569 = vmatprep.subr.mxu0 0.0
    %3570 = vmatpush1.msra.mxu0 %v3525
    %3571 = vmatprep.subr.mxu0 0.0
    %3572 = vmatpush2.msra.mxu0 0.0
    %3573 = vmatprep.subr.mxu0 0.0
    %3574 = vmatpush2.msra.mxu0 0.0
    %3575 = vmatprep.subr.mxu0 0.0
    %3576 = vmatpush2.msra.mxu0 0.0
    %3577 = vmatprep.subr.mxu0 0.0
    %3578 = vmatpush2.msra.mxu0 0.0
    %3579 = vmatprep.subr.mxu0 0.0
    %3580 = vmatpush2.msra.mxu0 0.0
    %3581 = vmatprep.subr.mxu0 0.0
    %3582 = vmatpush2.msra.mxu0 0.0
    %3583 = vmatprep.subr.mxu0 0.0
    %3584 = vmatpush2.msra.mxu0 0.0
    %3585 = vmatprep.subr.mxu0 0.0
    %3586 = vmatpush2.msra.mxu0 0.0
    %3587 = vmatprep.subr.mxu0 0.0
    %3588 = vmatpush2.msra.mxu0 0.0
    %3589 = vmatprep.subr.mxu0 0.0
    %3590 = vmatpush2.msra.mxu0 0.0
    %3591 = vmatprep.subr.mxu0 0.0
    %3592 = vmatpush2.msra.mxu0 0.0
    %3593 = vmatprep.subr.mxu0 0.0
    %3594 = vmatpush2.msra.mxu0 0.0
    %3595 = vmatprep.subr.mxu0 0.0
    %3596 = vmatpush2.msra.mxu0 0.0
    %3597 = vmatprep.subr.mxu0 0.0
    %3598 = vmatpush2.msra.mxu0 0.0
    %3599 = vmatprep.subr.mxu0 0.0
    %3600 = vmatpush2.msra.mxu0 0.0
    %3601 = vmatprep.subr.mxu0 0.0
    %3602 = vmatpush2.msra.mxu0 0.0
    %3603 = vmatprep.mubr.f32.mxu0 0.0
    %3604 = vmatmul.mubr.f32.gmra.mxu0 %v3537
    %v3605 = vpop.f32.mrf.mxu0
    %v3606 = vadd.f32 0.0, %v3605
    %v3607 = vpop.f32.mrf.mxu0
    %3608 = vdwg.mxu0
    %v3610 = vsel %vm3535, %v3436, 0
    %3612 = vmatprep.subr.mxu0 0.0
    %3613 = vmatpush1.msra.mxu0 0.0
    %3614 = vmatprep.subr.mxu0 0.0
    %3615 = vmatpush1.msra.mxu0 0.0
    %3616 = vmatprep.subr.mxu0 0.0
    %3617 = vmatpush1.msra.mxu0 0.0
    %3618 = vmatprep.subr.mxu0 0.0
    %3619 = vmatpush1.msra.mxu0 0.0
    %3620 = vmatprep.subr.mxu0 0.0
    %3621 = vmatpush1.msra.mxu0 0.0
    %3622 = vmatprep.subr.mxu0 0.0
    %3623 = vmatpush1.msra.mxu0 0.0
    %3624 = vmatprep.subr.mxu0 0.0
    %3625 = vmatpush1.msra.mxu0 %v3448
    %3626 = vmatprep.subr.mxu0 0.0
    %3627 = vmatpush1.msra.mxu0 %v3447
    %3628 = vmatprep.subr.mxu0 0.0
    %3629 = vmatpush1.msra.mxu0 %v3446
    %3630 = vmatprep.subr.mxu0 0.0
    %3631 = vmatpush1.msra.mxu0 %v3445
    %3632 = vmatprep.subr.mxu0 0.0
    %3633 = vmatpush1.msra.mxu0 %v3444
    %3634 = vmatprep.subr.mxu0 0.0
    %3635 = vmatpush1.msra.mxu0 %v3443
    %3636 = vmatprep.subr.mxu0 0.0
    %3637 = vmatpush1.msra.mxu0 %v3442
    %3638 = vmatprep.subr.mxu0 0.0
    %3639 = vmatpush1.msra.mxu0 %v3441
    %3640 = vmatprep.subr.mxu0 0.0
    %3641 = vmatpush1.msra.mxu0 %v3440
    %3642 = vmatprep.subr.mxu0 0.0
    %3643 = vmatpush1.msra.mxu0 %v3439
    %3644 = vmatprep.subr.mxu0 0.0
    %3645 = vmatpush2.msra.mxu0 0.0
    %3646 = vmatprep.subr.mxu0 0.0
    %3647 = vmatpush2.msra.mxu0 0.0
    %3648 = vmatprep.subr.mxu0 0.0
    %3649 = vmatpush2.msra.mxu0 0.0
    %3650 = vmatprep.subr.mxu0 0.0
    %3651 = vmatpush2.msra.mxu0 0.0
    %3652 = vmatprep.subr.mxu0 0.0
    %3653 = vmatpush2.msra.mxu0 0.0
    %3654 = vmatprep.subr.mxu0 0.0
    %3655 = vmatpush2.msra.mxu0 0.0
    %3656 = vmatprep.subr.mxu0 0.0
    %3657 = vmatpush2.msra.mxu0 0.0
    %3658 = vmatprep.subr.mxu0 0.0
    %3659 = vmatpush2.msra.mxu0 0.0
    %3660 = vmatprep.subr.mxu0 0.0
    %3661 = vmatpush2.msra.mxu0 0.0
    %3662 = vmatprep.subr.mxu0 0.0
    %3663 = vmatpush2.msra.mxu0 0.0
    %3664 = vmatprep.subr.mxu0 0.0
    %3665 = vmatpush2.msra.mxu0 0.0
    %3666 = vmatprep.subr.mxu0 0.0
    %3667 = vmatpush2.msra.mxu0 0.0
    %3668 = vmatprep.subr.mxu0 0.0
    %3669 = vmatpush2.msra.mxu0 0.0
    %3670 = vmatprep.subr.mxu0 0.0
    %3671 = vmatpush2.msra.mxu0 0.0
    %3672 = vmatprep.subr.mxu0 0.0
    %3673 = vmatpush2.msra.mxu0 0.0
    %3674 = vmatprep.subr.mxu0 0.0
    %3675 = vmatpush2.msra.mxu0 0.0
    %3676 = vmatprep.mubr.f32.mxu0 0.0
    %3677 = vmatmul.mubr.f32.gmra.mxu0 %v3610
    %v3678 = vpop.f32.mrf.mxu0
    %v3679 = vadd.f32 %v3606, %v3678
    %v3680 = vpop.f32.mrf.mxu0
    %3681 = vdwg.mxu0
    %s3682 = scalar_lea.vmem %s25, 4
    %v3683 = vld [vmem:[%s3682] sm:$0x3]
    %v3685 = vsel %vm3362, %v3683, 0
    %3687 = vmatprep.subr.mxu0 0.0
    %3688 = vmatpush1.msra.mxu0 0.0
    %3689 = vmatprep.subr.mxu0 0.0
    %3690 = vmatpush1.msra.mxu0 0.0
    %3691 = vmatprep.subr.mxu0 0.0
    %3692 = vmatpush1.msra.mxu0 0.0
    %3693 = vmatprep.subr.mxu0 0.0
    %3694 = vmatpush1.msra.mxu0 0.0
    %3695 = vmatprep.subr.mxu0 0.0
    %3696 = vmatpush1.msra.mxu0 0.0
    %3697 = vmatprep.subr.mxu0 0.0
    %3698 = vmatpush1.msra.mxu0 0.0
    %3699 = vmatprep.subr.mxu0 0.0
    %3700 = vmatpush1.msra.mxu0 0.0
    %3701 = vmatprep.subr.mxu0 0.0
    %3702 = vmatpush1.msra.mxu0 0.0
    %3703 = vmatprep.subr.mxu0 0.0
    %3704 = vmatpush1.msra.mxu0 0.0
    %3705 = vmatprep.subr.mxu0 0.0
    %3706 = vmatpush1.msra.mxu0 0.0
    %3707 = vmatprep.subr.mxu0 0.0
    %3708 = vmatpush1.msra.mxu0 0.0
    %3709 = vmatprep.subr.mxu0 0.0
    %3710 = vmatpush1.msra.mxu0 0.0
    %3711 = vmatprep.subr.mxu0 0.0
    %3712 = vmatpush1.msra.mxu0 0.0
    %3713 = vmatprep.subr.mxu0 0.0
    %3714 = vmatpush1.msra.mxu0 0.0
    %3715 = vmatprep.subr.mxu0 0.0
    %3716 = vmatpush1.msra.mxu0 %v3367
    %3717 = vmatprep.subr.mxu0 0.0
    %3718 = vmatpush1.msra.mxu0 %v3359
    %3719 = vmatprep.subr.mxu0 0.0
    %3720 = vmatpush2.msra.mxu0 0.0
    %3721 = vmatprep.subr.mxu0 0.0
    %3722 = vmatpush2.msra.mxu0 0.0
    %3723 = vmatprep.subr.mxu0 0.0
    %3724 = vmatpush2.msra.mxu0 0.0
    %3725 = vmatprep.subr.mxu0 0.0
    %3726 = vmatpush2.msra.mxu0 0.0
    %3727 = vmatprep.subr.mxu0 0.0
    %3728 = vmatpush2.msra.mxu0 0.0
    %3729 = vmatprep.subr.mxu0 0.0
    %3730 = vmatpush2.msra.mxu0 0.0
    %3731 = vmatprep.subr.mxu0 0.0
    %3732 = vmatpush2.msra.mxu0 0.0
    %3733 = vmatprep.subr.mxu0 0.0
    %3734 = vmatpush2.msra.mxu0 0.0
    %3735 = vmatprep.subr.mxu0 0.0
    %3736 = vmatpush2.msra.mxu0 0.0
    %3737 = vmatprep.subr.mxu0 0.0
    %3738 = vmatpush2.msra.mxu0 0.0
    %3739 = vmatprep.subr.mxu0 0.0
    %3740 = vmatpush2.msra.mxu0 0.0
    %3741 = vmatprep.subr.mxu0 0.0
    %3742 = vmatpush2.msra.mxu0 0.0
    %3743 = vmatprep.subr.mxu0 0.0
    %3744 = vmatpush2.msra.mxu0 0.0
    %3745 = vmatprep.subr.mxu0 0.0
    %3746 = vmatpush2.msra.mxu0 0.0
    %3747 = vmatprep.subr.mxu0 0.0
    %3748 = vmatpush2.msra.mxu0 0.0
    %3749 = vmatprep.subr.mxu0 0.0
    %3750 = vmatpush2.msra.mxu0 0.0
    %3751 = vmatprep.mubr.f32.mxu0 0.0
    %3752 = vmatmul.mubr.f32.gmra.mxu0 %v3685
    %v3753 = vpop.f32.mrf.mxu0
    %v3754 = vadd.f32 0.0, %v3753
    %v3755 = vpop.f32.mrf.mxu0
    %3756 = vdwg.mxu0
    %s3757 = scalar_lea.vmem %s27, 160
    %v3758 = vld [vmem:[%s3757] sm:$0xff]
    %v3759 = vld [vmem:[%s3757 + $0x8] sm:$0xff]
    %v3760 = vld [vmem:[%s3757 + $0x10] sm:$0xff]
    %v3761 = vld [vmem:[%s3757 + $0x18] sm:$0xff]
    %v3762 = vld [vmem:[%s3757 + $0x20] sm:$0xff]
    %v3763 = vld [vmem:[%s3757 + $0x28] sm:$0xff]
    %v3764 = vld [vmem:[%s3757 + $0x30] sm:$0xff]
    %v3765 = vld [vmem:[%s3757 + $0x38] sm:$0xff]
    %v3766 = vld [vmem:[%s3757 + $0x40] sm:$0xff]
    %v3767 = vld [vmem:[%s3757 + $0x48] sm:$0xff]
    %v3769 = vsel %vm3535, %v3754, 0
    %3771 = vmatprep.subr.mxu0 0.0
    %3772 = vmatpush1.msra.mxu0 0.0
    %3773 = vmatprep.subr.mxu0 0.0
    %3774 = vmatpush1.msra.mxu0 0.0
    %3775 = vmatprep.subr.mxu0 0.0
    %3776 = vmatpush1.msra.mxu0 0.0
    %3777 = vmatprep.subr.mxu0 0.0
    %3778 = vmatpush1.msra.mxu0 0.0
    %3779 = vmatprep.subr.mxu0 0.0
    %3780 = vmatpush1.msra.mxu0 0.0
    %3781 = vmatprep.subr.mxu0 0.0
    %3782 = vmatpush1.msra.mxu0 0.0
    %3783 = vmatprep.subr.mxu0 0.0
    %3784 = vmatpush1.msra.mxu0 %v3767
    %3785 = vmatprep.subr.mxu0 0.0
    %3786 = vmatpush1.msra.mxu0 %v3766
    %3787 = vmatprep.subr.mxu0 0.0
    %3788 = vmatpush1.msra.mxu0 %v3765
    %3789 = vmatprep.subr.mxu0 0.0
    %3790 = vmatpush1.msra.mxu0 %v3764
    %3791 = vmatprep.subr.mxu0 0.0
    %3792 = vmatpush1.msra.mxu0 %v3763
    %3793 = vmatprep.subr.mxu0 0.0
    %3794 = vmatpush1.msra.mxu0 %v3762
    %3795 = vmatprep.subr.mxu0 0.0
    %3796 = vmatpush1.msra.mxu0 %v3761
    %3797 = vmatprep.subr.mxu0 0.0
    %3798 = vmatpush1.msra.mxu0 %v3760
    %3799 = vmatprep.subr.mxu0 0.0
    %3800 = vmatpush1.msra.mxu0 %v3759
    %3801 = vmatprep.subr.mxu0 0.0
    %3802 = vmatpush1.msra.mxu0 %v3758
    %3803 = vmatprep.subr.mxu0 0.0
    %3804 = vmatpush2.msra.mxu0 0.0
    %3805 = vmatprep.subr.mxu0 0.0
    %3806 = vmatpush2.msra.mxu0 0.0
    %3807 = vmatprep.subr.mxu0 0.0
    %3808 = vmatpush2.msra.mxu0 0.0
    %3809 = vmatprep.subr.mxu0 0.0
    %3810 = vmatpush2.msra.mxu0 0.0
    %3811 = vmatprep.subr.mxu0 0.0
    %3812 = vmatpush2.msra.mxu0 0.0
    %3813 = vmatprep.subr.mxu0 0.0
    %3814 = vmatpush2.msra.mxu0 0.0
    %3815 = vmatprep.subr.mxu0 0.0
    %3816 = vmatpush2.msra.mxu0 0.0
    %3817 = vmatprep.subr.mxu0 0.0
    %3818 = vmatpush2.msra.mxu0 0.0
    %3819 = vmatprep.subr.mxu0 0.0
    %3820 = vmatpush2.msra.mxu0 0.0
    %3821 = vmatprep.subr.mxu0 0.0
    %3822 = vmatpush2.msra.mxu0 0.0
    %3823 = vmatprep.subr.mxu0 0.0
    %3824 = vmatpush2.msra.mxu0 0.0
    %3825 = vmatprep.subr.mxu0 0.0
    %3826 = vmatpush2.msra.mxu0 0.0
    %3827 = vmatprep.subr.mxu0 0.0
    %3828 = vmatpush2.msra.mxu0 0.0
    %3829 = vmatprep.subr.mxu0 0.0
    %3830 = vmatpush2.msra.mxu0 0.0
    %3831 = vmatprep.subr.mxu0 0.0
    %3832 = vmatpush2.msra.mxu0 0.0
    %3833 = vmatprep.subr.mxu0 0.0
    %3834 = vmatpush2.msra.mxu0 0.0
    %3835 = vmatprep.mubr.f32.mxu0 0.0
    %3836 = vmatmul.mubr.f32.gmra.mxu0 %v3769
    %v3837 = vpop.f32.mrf.mxu0
    %v3838 = vadd.f32 0.0, %v3837
    %v3839 = vpop.f32.mrf.mxu0
    %3840 = vdwg.mxu0
    %v3841 = vadd.f32 %v3679, %v3838
    %s3842 = scalar_lea.vmem %s25, 6
    %v3843 = vld [vmem:[%s3842] sm:$0x3]
    %v3845 = vsel %vm3362, %v3843, 0
    %3847 = vmatprep.subr.mxu0 0.0
    %3848 = vmatpush1.msra.mxu0 0.0
    %3849 = vmatprep.subr.mxu0 0.0
    %3850 = vmatpush1.msra.mxu0 0.0
    %3851 = vmatprep.subr.mxu0 0.0
    %3852 = vmatpush1.msra.mxu0 0.0
    %3853 = vmatprep.subr.mxu0 0.0
    %3854 = vmatpush1.msra.mxu0 0.0
    %3855 = vmatprep.subr.mxu0 0.0
    %3856 = vmatpush1.msra.mxu0 0.0
    %3857 = vmatprep.subr.mxu0 0.0
    %3858 = vmatpush1.msra.mxu0 0.0
    %3859 = vmatprep.subr.mxu0 0.0
    %3860 = vmatpush1.msra.mxu0 0.0
    %3861 = vmatprep.subr.mxu0 0.0
    %3862 = vmatpush1.msra.mxu0 0.0
    %3863 = vmatprep.subr.mxu0 0.0
    %3864 = vmatpush1.msra.mxu0 0.0
    %3865 = vmatprep.subr.mxu0 0.0
    %3866 = vmatpush1.msra.mxu0 0.0
    %3867 = vmatprep.subr.mxu0 0.0
    %3868 = vmatpush1.msra.mxu0 0.0
    %3869 = vmatprep.subr.mxu0 0.0
    %3870 = vmatpush1.msra.mxu0 0.0
    %3871 = vmatprep.subr.mxu0 0.0
    %3872 = vmatpush1.msra.mxu0 0.0
    %3873 = vmatprep.subr.mxu0 0.0
    %3874 = vmatpush1.msra.mxu0 0.0
    %3875 = vmatprep.subr.mxu0 0.0
    %3876 = vmatpush1.msra.mxu0 %v3367
    %3877 = vmatprep.subr.mxu0 0.0
    %3878 = vmatpush1.msra.mxu0 %v3359
    %3879 = vmatprep.subr.mxu0 0.0
    %3880 = vmatpush2.msra.mxu0 0.0
    %3881 = vmatprep.subr.mxu0 0.0
    %3882 = vmatpush2.msra.mxu0 0.0
    %3883 = vmatprep.subr.mxu0 0.0
    %3884 = vmatpush2.msra.mxu0 0.0
    %3885 = vmatprep.subr.mxu0 0.0
    %3886 = vmatpush2.msra.mxu0 0.0
    %3887 = vmatprep.subr.mxu0 0.0
    %3888 = vmatpush2.msra.mxu0 0.0
    %3889 = vmatprep.subr.mxu0 0.0
    %3890 = vmatpush2.msra.mxu0 0.0
    %3891 = vmatprep.subr.mxu0 0.0
    %3892 = vmatpush2.msra.mxu0 0.0
    %3893 = vmatprep.subr.mxu0 0.0
    %3894 = vmatpush2.msra.mxu0 0.0
    %3895 = vmatprep.subr.mxu0 0.0
    %3896 = vmatpush2.msra.mxu0 0.0
    %3897 = vmatprep.subr.mxu0 0.0
    %3898 = vmatpush2.msra.mxu0 0.0
    %3899 = vmatprep.subr.mxu0 0.0
    %3900 = vmatpush2.msra.mxu0 0.0
    %3901 = vmatprep.subr.mxu0 0.0
    %3902 = vmatpush2.msra.mxu0 0.0
    %3903 = vmatprep.subr.mxu0 0.0
    %3904 = vmatpush2.msra.mxu0 0.0
    %3905 = vmatprep.subr.mxu0 0.0
    %3906 = vmatpush2.msra.mxu0 0.0
    %3907 = vmatprep.subr.mxu0 0.0
    %3908 = vmatpush2.msra.mxu0 0.0
    %3909 = vmatprep.subr.mxu0 0.0
    %3910 = vmatpush2.msra.mxu0 0.0
    %3911 = vmatprep.mubr.f32.mxu0 0.0
    %3912 = vmatmul.mubr.f32.gmra.mxu0 %v3845
    %v3913 = vpop.f32.mrf.mxu0
    %v3914 = vadd.f32 0.0, %v3913
    %v3915 = vpop.f32.mrf.mxu0
    %3916 = vdwg.mxu0
    %s3917 = scalar_lea.vmem %s27, 240
    %v3918 = vld [vmem:[%s3917] sm:$0xff]
    %v3919 = vld [vmem:[%s3917 + $0x8] sm:$0xff]
    %v3920 = vld [vmem:[%s3917 + $0x10] sm:$0xff]
    %v3921 = vld [vmem:[%s3917 + $0x18] sm:$0xff]
    %v3922 = vld [vmem:[%s3917 + $0x20] sm:$0xff]
    %v3923 = vld [vmem:[%s3917 + $0x28] sm:$0xff]
    %v3924 = vld [vmem:[%s3917 + $0x30] sm:$0xff]
    %v3925 = vld [vmem:[%s3917 + $0x38] sm:$0xff]
    %v3926 = vld [vmem:[%s3917 + $0x40] sm:$0xff]
    %v3927 = vld [vmem:[%s3917 + $0x48] sm:$0xff]
    %v3929 = vsel %vm3535, %v3914, 0
    %3931 = vmatprep.subr.mxu0 0.0
    %3932 = vmatpush1.msra.mxu0 0.0
    %3933 = vmatprep.subr.mxu0 0.0
    %3934 = vmatpush1.msra.mxu0 0.0
    %3935 = vmatprep.subr.mxu0 0.0
    %3936 = vmatpush1.msra.mxu0 0.0
    %3937 = vmatprep.subr.mxu0 0.0
    %3938 = vmatpush1.msra.mxu0 0.0
    %3939 = vmatprep.subr.mxu0 0.0
    %3940 = vmatpush1.msra.mxu0 0.0
    %3941 = vmatprep.subr.mxu0 0.0
    %3942 = vmatpush1.msra.mxu0 0.0
    %3943 = vmatprep.subr.mxu0 0.0
    %3944 = vmatpush1.msra.mxu0 %v3927
    %3945 = vmatprep.subr.mxu0 0.0
    %3946 = vmatpush1.msra.mxu0 %v3926
    %3947 = vmatprep.subr.mxu0 0.0
    %3948 = vmatpush1.msra.mxu0 %v3925
    %3949 = vmatprep.subr.mxu0 0.0
    %3950 = vmatpush1.msra.mxu0 %v3924
    %3951 = vmatprep.subr.mxu0 0.0
    %3952 = vmatpush1.msra.mxu0 %v3923
    %3953 = vmatprep.subr.mxu0 0.0
    %3954 = vmatpush1.msra.mxu0 %v3922
    %3955 = vmatprep.subr.mxu0 0.0
    %3956 = vmatpush1.msra.mxu0 %v3921
    %3957 = vmatprep.subr.mxu0 0.0
    %3958 = vmatpush1.msra.mxu0 %v3920
    %3959 = vmatprep.subr.mxu0 0.0
    %3960 = vmatpush1.msra.mxu0 %v3919
    %3961 = vmatprep.subr.mxu0 0.0
    %3962 = vmatpush1.msra.mxu0 %v3918
    %3963 = vmatprep.subr.mxu0 0.0
    %3964 = vmatpush2.msra.mxu0 0.0
    %3965 = vmatprep.subr.mxu0 0.0
    %3966 = vmatpush2.msra.mxu0 0.0
    %3967 = vmatprep.subr.mxu0 0.0
    %3968 = vmatpush2.msra.mxu0 0.0
    %3969 = vmatprep.subr.mxu0 0.0
    %3970 = vmatpush2.msra.mxu0 0.0
    %3971 = vmatprep.subr.mxu0 0.0
    %3972 = vmatpush2.msra.mxu0 0.0
    %3973 = vmatprep.subr.mxu0 0.0
    %3974 = vmatpush2.msra.mxu0 0.0
    %3975 = vmatprep.subr.mxu0 0.0
    %3976 = vmatpush2.msra.mxu0 0.0
    %3977 = vmatprep.subr.mxu0 0.0
    %3978 = vmatpush2.msra.mxu0 0.0
    %3979 = vmatprep.subr.mxu0 0.0
    %3980 = vmatpush2.msra.mxu0 0.0
    %3981 = vmatprep.subr.mxu0 0.0
    %3982 = vmatpush2.msra.mxu0 0.0
    %3983 = vmatprep.subr.mxu0 0.0
    %3984 = vmatpush2.msra.mxu0 0.0
    %3985 = vmatprep.subr.mxu0 0.0
    %3986 = vmatpush2.msra.mxu0 0.0
    %3987 = vmatprep.subr.mxu0 0.0
    %3988 = vmatpush2.msra.mxu0 0.0
    %3989 = vmatprep.subr.mxu0 0.0
    %3990 = vmatpush2.msra.mxu0 0.0
    %3991 = vmatprep.subr.mxu0 0.0
    %3992 = vmatpush2.msra.mxu0 0.0
    %3993 = vmatprep.subr.mxu0 0.0
    %3994 = vmatpush2.msra.mxu0 0.0
    %3995 = vmatprep.mubr.f32.mxu0 0.0
    %3996 = vmatmul.mubr.f32.gmra.mxu0 %v3929
    %v3997 = vpop.f32.mrf.mxu0
    %v3998 = vadd.f32 0.0, %v3997
    %v3999 = vpop.f32.mrf.mxu0
    %4000 = vdwg.mxu0
    %v4001 = vadd.f32 %v3841, %v3998
    %s4002 = scalar_lea.vmem %s25, 8
    %v4003 = vld [vmem:[%s4002] sm:$0x3]
    %v4005 = vsel %vm3362, %v4003, 0
    %4007 = vmatprep.subr.mxu0 0.0
    %4008 = vmatpush1.msra.mxu0 0.0
    %4009 = vmatprep.subr.mxu0 0.0
    %4010 = vmatpush1.msra.mxu0 0.0
    %4011 = vmatprep.subr.mxu0 0.0
    %4012 = vmatpush1.msra.mxu0 0.0
    %4013 = vmatprep.subr.mxu0 0.0
    %4014 = vmatpush1.msra.mxu0 0.0
    %4015 = vmatprep.subr.mxu0 0.0
    %4016 = vmatpush1.msra.mxu0 0.0
    %4017 = vmatprep.subr.mxu0 0.0
    %4018 = vmatpush1.msra.mxu0 0.0
    %4019 = vmatprep.subr.mxu0 0.0
    %4020 = vmatpush1.msra.mxu0 0.0
    %4021 = vmatprep.subr.mxu0 0.0
    %4022 = vmatpush1.msra.mxu0 0.0
    %4023 = vmatprep.subr.mxu0 0.0
    %4024 = vmatpush1.msra.mxu0 0.0
    %4025 = vmatprep.subr.mxu0 0.0
    %4026 = vmatpush1.msra.mxu0 0.0
    %4027 = vmatprep.subr.mxu0 0.0
    %4028 = vmatpush1.msra.mxu0 0.0
    %4029 = vmatprep.subr.mxu0 0.0
    %4030 = vmatpush1.msra.mxu0 0.0
    %4031 = vmatprep.subr.mxu0 0.0
    %4032 = vmatpush1.msra.mxu0 0.0
    %4033 = vmatprep.subr.mxu0 0.0
    %4034 = vmatpush1.msra.mxu0 0.0
    %4035 = vmatprep.subr.mxu0 0.0
    %4036 = vmatpush1.msra.mxu0 %v3367
    %4037 = vmatprep.subr.mxu0 0.0
    %4038 = vmatpush1.msra.mxu0 %v3359
    %4039 = vmatprep.subr.mxu0 0.0
    %4040 = vmatpush2.msra.mxu0 0.0
    %4041 = vmatprep.subr.mxu0 0.0
    %4042 = vmatpush2.msra.mxu0 0.0
    %4043 = vmatprep.subr.mxu0 0.0
    %4044 = vmatpush2.msra.mxu0 0.0
    %4045 = vmatprep.subr.mxu0 0.0
    %4046 = vmatpush2.msra.mxu0 0.0
    %4047 = vmatprep.subr.mxu0 0.0
    %4048 = vmatpush2.msra.mxu0 0.0
    %4049 = vmatprep.subr.mxu0 0.0
    %4050 = vmatpush2.msra.mxu0 0.0
    %4051 = vmatprep.subr.mxu0 0.0
    %4052 = vmatpush2.msra.mxu0 0.0
    %4053 = vmatprep.subr.mxu0 0.0
    %4054 = vmatpush2.msra.mxu0 0.0
    %4055 = vmatprep.subr.mxu0 0.0
    %4056 = vmatpush2.msra.mxu0 0.0
    %4057 = vmatprep.subr.mxu0 0.0
    %4058 = vmatpush2.msra.mxu0 0.0
    %4059 = vmatprep.subr.mxu0 0.0
    %4060 = vmatpush2.msra.mxu0 0.0
    %4061 = vmatprep.subr.mxu0 0.0
    %4062 = vmatpush2.msra.mxu0 0.0
    %4063 = vmatprep.subr.mxu0 0.0
    %4064 = vmatpush2.msra.mxu0 0.0
    %4065 = vmatprep.subr.mxu0 0.0
    %4066 = vmatpush2.msra.mxu0 0.0
    %4067 = vmatprep.subr.mxu0 0.0
    %4068 = vmatpush2.msra.mxu0 0.0
    %4069 = vmatprep.subr.mxu0 0.0
    %4070 = vmatpush2.msra.mxu0 0.0
    %4071 = vmatprep.mubr.f32.mxu0 0.0
    %4072 = vmatmul.mubr.f32.gmra.mxu0 %v4005
    %v4073 = vpop.f32.mrf.mxu0
    %v4074 = vadd.f32 0.0, %v4073
    %v4075 = vpop.f32.mrf.mxu0
    %4076 = vdwg.mxu0
    %s4077 = scalar_lea.vmem %s27, 320
    %v4078 = vld [vmem:[%s4077] sm:$0xff]
    %v4079 = vld [vmem:[%s4077 + $0x8] sm:$0xff]
    %v4080 = vld [vmem:[%s4077 + $0x10] sm:$0xff]
    %v4081 = vld [vmem:[%s4077 + $0x18] sm:$0xff]
    %v4082 = vld [vmem:[%s4077 + $0x20] sm:$0xff]
    %v4083 = vld [vmem:[%s4077 + $0x28] sm:$0xff]
    %v4084 = vld [vmem:[%s4077 + $0x30] sm:$0xff]
    %v4085 = vld [vmem:[%s4077 + $0x38] sm:$0xff]
    %v4086 = vld [vmem:[%s4077 + $0x40] sm:$0xff]
    %v4087 = vld [vmem:[%s4077 + $0x48] sm:$0xff]
    %v4089 = vsel %vm3535, %v4074, 0
    %4091 = vmatprep.subr.mxu0 0.0
    %4092 = vmatpush1.msra.mxu0 0.0
    %4093 = vmatprep.subr.mxu0 0.0
    %4094 = vmatpush1.msra.mxu0 0.0
    %4095 = vmatprep.subr.mxu0 0.0
    %4096 = vmatpush1.msra.mxu0 0.0
    %4097 = vmatprep.subr.mxu0 0.0
    %4098 = vmatpush1.msra.mxu0 0.0
    %4099 = vmatprep.subr.mxu0 0.0
    %4100 = vmatpush1.msra.mxu0 0.0
    %4101 = vmatprep.subr.mxu0 0.0
    %4102 = vmatpush1.msra.mxu0 0.0
    %4103 = vmatprep.subr.mxu0 0.0
    %4104 = vmatpush1.msra.mxu0 %v4087
    %4105 = vmatprep.subr.mxu0 0.0
    %4106 = vmatpush1.msra.mxu0 %v4086
    %4107 = vmatprep.subr.mxu0 0.0
    %4108 = vmatpush1.msra.mxu0 %v4085
    %4109 = vmatprep.subr.mxu0 0.0
    %4110 = vmatpush1.msra.mxu0 %v4084
    %4111 = vmatprep.subr.mxu0 0.0
    %4112 = vmatpush1.msra.mxu0 %v4083
    %4113 = vmatprep.subr.mxu0 0.0
    %4114 = vmatpush1.msra.mxu0 %v4082
    %4115 = vmatprep.subr.mxu0 0.0
    %4116 = vmatpush1.msra.mxu0 %v4081
    %4117 = vmatprep.subr.mxu0 0.0
    %4118 = vmatpush1.msra.mxu0 %v4080
    %4119 = vmatprep.subr.mxu0 0.0
    %4120 = vmatpush1.msra.mxu0 %v4079
    %4121 = vmatprep.subr.mxu0 0.0
    %4122 = vmatpush1.msra.mxu0 %v4078
    %4123 = vmatprep.subr.mxu0 0.0
    %4124 = vmatpush2.msra.mxu0 0.0
    %4125 = vmatprep.subr.mxu0 0.0
    %4126 = vmatpush2.msra.mxu0 0.0
    %4127 = vmatprep.subr.mxu0 0.0
    %4128 = vmatpush2.msra.mxu0 0.0
    %4129 = vmatprep.subr.mxu0 0.0
    %4130 = vmatpush2.msra.mxu0 0.0
    %4131 = vmatprep.subr.mxu0 0.0
    %4132 = vmatpush2.msra.mxu0 0.0
    %4133 = vmatprep.subr.mxu0 0.0
    %4134 = vmatpush2.msra.mxu0 0.0
    %4135 = vmatprep.subr.mxu0 0.0
    %4136 = vmatpush2.msra.mxu0 0.0
    %4137 = vmatprep.subr.mxu0 0.0
    %4138 = vmatpush2.msra.mxu0 0.0
    %4139 = vmatprep.subr.mxu0 0.0
    %4140 = vmatpush2.msra.mxu0 0.0
    %4141 = vmatprep.subr.mxu0 0.0
    %4142 = vmatpush2.msra.mxu0 0.0
    %4143 = vmatprep.subr.mxu0 0.0
    %4144 = vmatpush2.msra.mxu0 0.0
    %4145 = vmatprep.subr.mxu0 0.0
    %4146 = vmatpush2.msra.mxu0 0.0
    %4147 = vmatprep.subr.mxu0 0.0
    %4148 = vmatpush2.msra.mxu0 0.0
    %4149 = vmatprep.subr.mxu0 0.0
    %4150 = vmatpush2.msra.mxu0 0.0
    %4151 = vmatprep.subr.mxu0 0.0
    %4152 = vmatpush2.msra.mxu0 0.0
    %4153 = vmatprep.subr.mxu0 0.0
    %4154 = vmatpush2.msra.mxu0 0.0
    %4155 = vmatprep.mubr.f32.mxu0 0.0
    %4156 = vmatmul.mubr.f32.gmra.mxu0 %v4089
    %v4157 = vpop.f32.mrf.mxu0
    %v4158 = vadd.f32 0.0, %v4157
    %v4159 = vpop.f32.mrf.mxu0
    %4160 = vdwg.mxu0
    %v4161 = vadd.f32 %v4001, %v4158
    %v4162 = vld [vmem:[%s29] sm:$0x1]
    %v4164 = vlaneseq
    %v4165 = vshrl.u32 %v4164, 7
    %v4166 = vsub.s32 0, %v4165
    %v4167 = vrot.slane %v4162, %v4166
    %v4169 = vadd.f32 %v4161, %v4167
    %v4170 = vmax.f32 %v4169, 0.0
    %v4171 = vld [vmem:[%s3] sm:$0x3]
    %v4172 = vld [vmem:[%s31] sm:$0x7]
    %v4173 = vld [vmem:[%s33] sm:$0xff]
    %v4174 = vld [vmem:[%s33 + $0x8] sm:$0xff]
    %v4175 = vld [vmem:[%s33 + $0x10] sm:$0xff]
    %v4176 = vld [vmem:[%s33 + $0x18] sm:$0xff]
    %v4177 = vld [vmem:[%s33 + $0x20] sm:$0xff]
    %v4178 = vld [vmem:[%s33 + $0x28] sm:$0xff]
    %v4179 = vld [vmem:[%s33 + $0x30] sm:$0xff]
    %v4180 = vld [vmem:[%s33 + $0x38] sm:$0xff]
    %v4181 = vld [vmem:[%s33 + $0x40] sm:$0xff]
    %v4182 = vld [vmem:[%s33 + $0x48] sm:$0xff]
    %v4183 = vld [vmem:[%s33 + $0x50] sm:$0xff]
    %v4184 = vld [vmem:[%s33 + $0x58] sm:$0xff]
    %v4185 = vld [vmem:[%s33 + $0x60] sm:$0xff]
    %v4186 = vld [vmem:[%s33 + $0x68] sm:$0xff]
    %v4187 = vld [vmem:[%s33 + $0x70] sm:$0xff]
    %v4188 = vld [vmem:[%s33 + $0x78] sm:$0xff]
    %v4189 = vld [vmem:[%s33 + $0x80] sm:$0xff]
    %v4190 = vld [vmem:[%s33 + $0x88] sm:$0xff]
    %v4191 = vld [vmem:[%s33 + $0x90] sm:$0xff]
    %v4192 = vld [vmem:[%s33 + $0x98] sm:$0xff]
    %v4193 = vld [vmem:[%s33 + $0xa0] sm:$0xff]
    %v4194 = vld [vmem:[%s33 + $0xa8] sm:$0xff]
    %v4195 = vld [vmem:[%s33 + $0xb0] sm:$0xff]
    %v4196 = vld [vmem:[%s33 + $0xb8] sm:$0xff]
    %v4197 = vld [vmem:[%s33 + $0xc0] sm:$0xff]
    %v4198 = vld [vmem:[%s33 + $0xc8] sm:$0xff]
    %v4199 = vld [vmem:[%s33 + $0xd0] sm:$0xff]
    %v4200 = vld [vmem:[%s33 + $0xd8] sm:$0xff]
    %v4201 = vld [vmem:[%s33 + $0xe0] sm:$0xff]
    %v4202 = vld [vmem:[%s33 + $0xe8] sm:$0xff]
    %v4203 = vld [vmem:[%s33 + $0xf0] sm:$0xff]
    %v4204 = vld [vmem:[%s33 + $0xf8] sm:$0xff]
    %v4205 = vld [vmem:[%s33 + $0x100] sm:$0xff]
    %v4206 = vld [vmem:[%s33 + $0x108] sm:$0xff]
    %v4207 = vld [vmem:[%s33 + $0x110] sm:$0xff]
    %v4208 = vld [vmem:[%s33 + $0x118] sm:$0xff]
    %v4209 = vld [vmem:[%s33 + $0x120] sm:$0xff]
    %v4210 = vld [vmem:[%s33 + $0x128] sm:$0xff]
    %v4211 = vld [vmem:[%s33 + $0x130] sm:$0xff]
    %v4212 = vld [vmem:[%s33 + $0x138] sm:$0xff]
    %v4213 = vld [vmem:[%s33 + $0x140] sm:$0xff]
    %v4214 = vld [vmem:[%s33 + $0x148] sm:$0xff]
    %v4215 = vld [vmem:[%s33 + $0x150] sm:$0xff]
    %v4216 = vld [vmem:[%s33 + $0x158] sm:$0xff]
    %v4217 = vld [vmem:[%s33 + $0x160] sm:$0xff]
    %v4218 = vld [vmem:[%s33 + $0x168] sm:$0xff]
    %v4219 = vld [vmem:[%s33 + $0x170] sm:$0xff]
    %v4220 = vld [vmem:[%s33 + $0x178] sm:$0xff]
    %v4221 = vld [vmem:[%s35] sm:$0x7]
    %v4222 = vld [vmem:[%s37] sm:$0x7]
    %4224 = vset.pattern.permute.xlu0 0
    %4225 = vperm.xlu0 %4224, %v4171
    %v4226 = vpop.permute.xlu0 %4225
    %v4229 = vlaneseq
    %v4230 = vshrl.u32 %v4229, 7
    %v4231 = vsub.s32 0, %v4230
    %v4232 = vrot.slane %v4172, %v4231
    %v4233 = vlaneseq
    %v4234 = vshrl.u32 %v4233, 7
    %v4235 = vsub.s32 1, %v4234
    %v4236 = vrot.slane %v4172, %v4235
    %v4237 = vlaneseq
    %v4238 = vshrl.u32 %v4237, 7
    %v4239 = vsub.s32 2, %v4238
    %v4240 = vrot.slane %v4172, %v4239
    %v4244 = vmul.f32 %v4226, %v4232
    %v4245 = vmul.f32 %v4226, %v4236
    %v4246 = vmul.f32 %v4226, %v4240
    %v4248 = vlaneseq
    %v4249 = vshrl.u32 %v4248, 7
    %v4250 = vsub.s32 0, %v4249
    %v4251 = vrot.slane %v4221, %v4250
    %v4252 = vlaneseq
    %v4253 = vshrl.u32 %v4252, 7
    %v4254 = vsub.s32 1, %v4253
    %v4255 = vrot.slane %v4221, %v4254
    %v4256 = vlaneseq
    %v4257 = vshrl.u32 %v4256, 7
    %v4258 = vsub.s32 2, %v4257
    %v4259 = vrot.slane %v4221, %v4258
    %v4263 = vadd.f32 %v4244, %v4251
    %v4264 = vadd.f32 %v4245, %v4255
    %v4265 = vadd.f32 %v4246, %v4259
    %v4267 = vlaneseq
    %v4268 = vshrl.u32 %v4267, 7
    %v4269 = vsub.s32 0, %v4268
    %v4270 = vrot.slane %v4222, %v4269
    %v4271 = vlaneseq
    %v4272 = vshrl.u32 %v4271, 7
    %v4273 = vsub.s32 1, %v4272
    %v4274 = vrot.slane %v4222, %v4273
    %v4275 = vlaneseq
    %v4276 = vshrl.u32 %v4275, 7
    %v4277 = vsub.s32 2, %v4276
    %v4278 = vrot.slane %v4222, %v4277
    %4282 = vmatprep.subr.mxu0 %v4219
    %4283 = vmatpush1.msra.mxu0 %v4218
    %4284 = vmatprep.subr.mxu0 %v4216
    %4285 = vmatpush1.msra.mxu0 %v4215
    %4286 = vmatprep.subr.mxu0 %v4213
    %4287 = vmatpush1.msra.mxu0 %v4212
    %4288 = vmatprep.subr.mxu0 %v4210
    %4289 = vmatpush1.msra.mxu0 %v4209
    %4290 = vmatprep.subr.mxu0 %v4207
    %4291 = vmatpush1.msra.mxu0 %v4206
    %4292 = vmatprep.subr.mxu0 %v4204
    %4293 = vmatpush1.msra.mxu0 %v4203
    %4294 = vmatprep.subr.mxu0 %v4201
    %4295 = vmatpush1.msra.mxu0 %v4200
    %4296 = vmatprep.subr.mxu0 %v4198
    %4297 = vmatpush1.msra.mxu0 %v4197
    %4298 = vmatprep.subr.mxu0 %v4195
    %4299 = vmatpush1.msra.mxu0 %v4194
    %4300 = vmatprep.subr.mxu0 %v4192
    %4301 = vmatpush1.msra.mxu0 %v4191
    %4302 = vmatprep.subr.mxu0 %v4189
    %4303 = vmatpush1.msra.mxu0 %v4188
    %4304 = vmatprep.subr.mxu0 %v4186
    %4305 = vmatpush1.msra.mxu0 %v4185
    %4306 = vmatprep.subr.mxu0 %v4183
    %4307 = vmatpush1.msra.mxu0 %v4182
    %4308 = vmatprep.subr.mxu0 %v4180
    %4309 = vmatpush1.msra.mxu0 %v4179
    %4310 = vmatprep.subr.mxu0 %v4177
    %4311 = vmatpush1.msra.mxu0 %v4176
    %4312 = vmatprep.subr.mxu0 %v4174
    %4313 = vmatpush1.msra.mxu0 %v4173
    %4314 = vmatprep.subr.mxu0 0.0
    %4315 = vmatpush2.msra.mxu0 0.0
    %4316 = vmatprep.subr.mxu0 0.0
    %4317 = vmatpush2.msra.mxu0 0.0
    %4318 = vmatprep.subr.mxu0 0.0
    %4319 = vmatpush2.msra.mxu0 0.0
    %4320 = vmatprep.subr.mxu0 0.0
    %4321 = vmatpush2.msra.mxu0 0.0
    %4322 = vmatprep.subr.mxu0 0.0
    %4323 = vmatpush2.msra.mxu0 0.0
    %4324 = vmatprep.subr.mxu0 0.0
    %4325 = vmatpush2.msra.mxu0 0.0
    %4326 = vmatprep.subr.mxu0 0.0
    %4327 = vmatpush2.msra.mxu0 0.0
    %4328 = vmatprep.subr.mxu0 0.0
    %4329 = vmatpush2.msra.mxu0 0.0
    %4330 = vmatprep.subr.mxu0 0.0
    %4331 = vmatpush2.msra.mxu0 0.0
    %4332 = vmatprep.subr.mxu0 0.0
    %4333 = vmatpush2.msra.mxu0 0.0
    %4334 = vmatprep.subr.mxu0 0.0
    %4335 = vmatpush2.msra.mxu0 0.0
    %4336 = vmatprep.subr.mxu0 0.0
    %4337 = vmatpush2.msra.mxu0 0.0
    %4338 = vmatprep.subr.mxu0 0.0
    %4339 = vmatpush2.msra.mxu0 0.0
    %4340 = vmatprep.subr.mxu0 0.0
    %4341 = vmatpush2.msra.mxu0 0.0
    %4342 = vmatprep.subr.mxu0 0.0
    %4343 = vmatpush2.msra.mxu0 0.0
    %4344 = vmatprep.subr.mxu0 0.0
    %4345 = vmatpush2.msra.mxu0 0.0
    %4346 = vmatprep.mubr.f32.mxu0 0.0
    %4347 = vmatmul.mubr.f32.gmra.mxu0 0.0
    %v4348 = vpop.f32.mrf.mxu0
    %v4349 = vadd.f32 %v4270, %v4348
    %v4350 = vpop.f32.mrf.mxu0
    %v4351 = vadd.f32 %v4274, %v4350
    %4352 = vdwg.mxu0
    %4353 = vmatprep.subr.mxu0 0.0
    %4354 = vmatpush1.msra.mxu0 %v4220
    %4355 = vmatprep.subr.mxu0 0.0
    %4356 = vmatpush1.msra.mxu0 %v4217
    %4357 = vmatprep.subr.mxu0 0.0
    %4358 = vmatpush1.msra.mxu0 %v4214
    %4359 = vmatprep.subr.mxu0 0.0
    %4360 = vmatpush1.msra.mxu0 %v4211
    %4361 = vmatprep.subr.mxu0 0.0
    %4362 = vmatpush1.msra.mxu0 %v4208
    %4363 = vmatprep.subr.mxu0 0.0
    %4364 = vmatpush1.msra.mxu0 %v4205
    %4365 = vmatprep.subr.mxu0 0.0
    %4366 = vmatpush1.msra.mxu0 %v4202
    %4367 = vmatprep.subr.mxu0 0.0
    %4368 = vmatpush1.msra.mxu0 %v4199
    %4369 = vmatprep.subr.mxu0 0.0
    %4370 = vmatpush1.msra.mxu0 %v4196
    %4371 = vmatprep.subr.mxu0 0.0
    %4372 = vmatpush1.msra.mxu0 %v4193
    %4373 = vmatprep.subr.mxu0 0.0
    %4374 = vmatpush1.msra.mxu0 %v4190
    %4375 = vmatprep.subr.mxu0 0.0
    %4376 = vmatpush1.msra.mxu0 %v4187
    %4377 = vmatprep.subr.mxu0 0.0
    %4378 = vmatpush1.msra.mxu0 %v4184
    %4379 = vmatprep.subr.mxu0 0.0
    %4380 = vmatpush1.msra.mxu0 %v4181
    %4381 = vmatprep.subr.mxu0 0.0
    %4382 = vmatpush1.msra.mxu0 %v4178
    %4383 = vmatprep.subr.mxu0 0.0
    %4384 = vmatpush1.msra.mxu0 %v4175
    %4385 = vmatprep.subr.mxu0 0.0
    %4386 = vmatpush2.msra.mxu0 0.0
    %4387 = vmatprep.subr.mxu0 0.0
    %4388 = vmatpush2.msra.mxu0 0.0
    %4389 = vmatprep.subr.mxu0 0.0
    %4390 = vmatpush2.msra.mxu0 0.0
    %4391 = vmatprep.subr.mxu0 0.0
    %4392 = vmatpush2.msra.mxu0 0.0
    %4393 = vmatprep.subr.mxu0 0.0
    %4394 = vmatpush2.msra.mxu0 0.0
    %4395 = vmatprep.subr.mxu0 0.0
    %4396 = vmatpush2.msra.mxu0 0.0
    %4397 = vmatprep.subr.mxu0 0.0
    %4398 = vmatpush2.msra.mxu0 0.0
    %4399 = vmatprep.subr.mxu0 0.0
    %4400 = vmatpush2.msra.mxu0 0.0
    %4401 = vmatprep.subr.mxu0 0.0
    %4402 = vmatpush2.msra.mxu0 0.0
    %4403 = vmatprep.subr.mxu0 0.0
    %4404 = vmatpush2.msra.mxu0 0.0
    %4405 = vmatprep.subr.mxu0 0.0
    %4406 = vmatpush2.msra.mxu0 0.0
    %4407 = vmatprep.subr.mxu0 0.0
    %4408 = vmatpush2.msra.mxu0 0.0
    %4409 = vmatprep.subr.mxu0 0.0
    %4410 = vmatpush2.msra.mxu0 0.0
    %4411 = vmatprep.subr.mxu0 0.0
    %4412 = vmatpush2.msra.mxu0 0.0
    %4413 = vmatprep.subr.mxu0 0.0
    %4414 = vmatpush2.msra.mxu0 0.0
    %4415 = vmatprep.subr.mxu0 0.0
    %4416 = vmatpush2.msra.mxu0 0.0
    %4417 = vmatprep.mubr.f32.mxu0 0.0
    %4418 = vmatmul.mubr.f32.gmra.mxu0 0.0
    %v4419 = vpop.f32.mrf.mxu0
    %v4420 = vadd.f32 %v4278, %v4419
    %v4421 = vpop.f32.mrf.mxu0
    %4422 = vdwg.mxu0
    %v4423 = vadd.f32 %v4263, %v4349
    %v4424 = vxor.u32 %v4423, 2147483648
    %v4425 = vmul.f32 %v4424, 1.442695
    %v4426 = vpow.pop %v4425
    %v4427 = vadd.f32 %v4426, 1.0
    %v4428 = vrcp.pop %v4427
    %v4429 = vmul.f32 1.0, %v4428
    %v4430 = vadd.f32 %v4264, %v4351
    %v4431 = vxor.u32 %v4430, 2147483648
    %v4432 = vmul.f32 %v4431, 1.442695
    %v4433 = vpow.pop %v4432
    %v4434 = vadd.f32 %v4433, 1.0
    %v4435 = vrcp.pop %v4434
    %v4436 = vmul.f32 1.0, %v4435
    %v4437 = vmul.f32 %v4429, %v4420
    %v4438 = vadd.f32 %v4265, %v4437
    %v4439 = vtanh.pop %v4438
    %v4440 = vsub.f32 1.0, %v4436
    %v4441 = vmul.f32 %v4440, %v4439
    %v4442 = vmul.f32 %v4436, 0.0
    %v4443 = vadd.f32 %v4441, %v4442
    %4444 = vset.pattern.permute.xlu0 1
    %4445 = vperm.xlu0 %4444, %v4171
    %v4446 = vpop.permute.xlu0 %4445
    %v4448 = vmul.f32 %v4446, %v4232
    %v4449 = vmul.f32 %v4446, %v4236
    %v4450 = vmul.f32 %v4446, %v4240
    %v4451 = vadd.f32 %v4448, %v4251
    %v4452 = vadd.f32 %v4449, %v4255
    %v4453 = vadd.f32 %v4450, %v4259
    %4454 = vmatprep.subr.mxu0 %v4219
    %4455 = vmatpush1.msra.mxu0 %v4218
    %4456 = vmatprep.subr.mxu0 %v4216
    %4457 = vmatpush1.msra.mxu0 %v4215
    %4458 = vmatprep.subr.mxu0 %v4213
    %4459 = vmatpush1.msra.mxu0 %v4212
    %4460 = vmatprep.subr.mxu0 %v4210
    %4461 = vmatpush1.msra.mxu0 %v4209
    %4462 = vmatprep.subr.mxu0 %v4207
    %4463 = vmatpush1.msra.mxu0 %v4206
    %4464 = vmatprep.subr.mxu0 %v4204
    %4465 = vmatpush1.msra.mxu0 %v4203
    %4466 = vmatprep.subr.mxu0 %v4201
    %4467 = vmatpush1.msra.mxu0 %v4200
    %4468 = vmatprep.subr.mxu0 %v4198
    %4469 = vmatpush1.msra.mxu0 %v4197
    %4470 = vmatprep.subr.mxu0 %v4195
    %4471 = vmatpush1.msra.mxu0 %v4194
    %4472 = vmatprep.subr.mxu0 %v4192
    %4473 = vmatpush1.msra.mxu0 %v4191
    %4474 = vmatprep.subr.mxu0 %v4189
    %4475 = vmatpush1.msra.mxu0 %v4188
    %4476 = vmatprep.subr.mxu0 %v4186
    %4477 = vmatpush1.msra.mxu0 %v4185
    %4478 = vmatprep.subr.mxu0 %v4183
    %4479 = vmatpush1.msra.mxu0 %v4182
    %4480 = vmatprep.subr.mxu0 %v4180
    %4481 = vmatpush1.msra.mxu0 %v4179
    %4482 = vmatprep.subr.mxu0 %v4177
    %4483 = vmatpush1.msra.mxu0 %v4176
    %4484 = vmatprep.subr.mxu0 %v4174
    %4485 = vmatpush1.msra.mxu0 %v4173
    %4486 = vmatprep.subr.mxu0 0.0
    %4487 = vmatpush2.msra.mxu0 0.0
    %4488 = vmatprep.subr.mxu0 0.0
    %4489 = vmatpush2.msra.mxu0 0.0
    %4490 = vmatprep.subr.mxu0 0.0
    %4491 = vmatpush2.msra.mxu0 0.0
    %4492 = vmatprep.subr.mxu0 0.0
    %4493 = vmatpush2.msra.mxu0 0.0
    %4494 = vmatprep.subr.mxu0 0.0
    %4495 = vmatpush2.msra.mxu0 0.0
    %4496 = vmatprep.subr.mxu0 0.0
    %4497 = vmatpush2.msra.mxu0 0.0
    %4498 = vmatprep.subr.mxu0 0.0
    %4499 = vmatpush2.msra.mxu0 0.0
    %4500 = vmatprep.subr.mxu0 0.0
    %4501 = vmatpush2.msra.mxu0 0.0
    %4502 = vmatprep.subr.mxu0 0.0
    %4503 = vmatpush2.msra.mxu0 0.0
    %4504 = vmatprep.subr.mxu0 0.0
    %4505 = vmatpush2.msra.mxu0 0.0
    %4506 = vmatprep.subr.mxu0 0.0
    %4507 = vmatpush2.msra.mxu0 0.0
    %4508 = vmatprep.subr.mxu0 0.0
    %4509 = vmatpush2.msra.mxu0 0.0
    %4510 = vmatprep.subr.mxu0 0.0
    %4511 = vmatpush2.msra.mxu0 0.0
    %4512 = vmatprep.subr.mxu0 0.0
    %4513 = vmatpush2.msra.mxu0 0.0
    %4514 = vmatprep.subr.mxu0 0.0
    %4515 = vmatpush2.msra.mxu0 0.0
    %4516 = vmatprep.subr.mxu0 0.0
    %4517 = vmatpush2.msra.mxu0 0.0
    %4518 = vmatprep.mubr.f32.mxu0 0.0
    %4519 = vmatmul.mubr.f32.gmra.mxu0 %v4443
    %v4520 = vpop.f32.mrf.mxu0
    %v4521 = vadd.f32 %v4270, %v4520
    %v4522 = vpop.f32.mrf.mxu0
    %v4523 = vadd.f32 %v4274, %v4522
    %4524 = vdwg.mxu0
    %4525 = vmatprep.subr.mxu0 0.0
    %4526 = vmatpush1.msra.mxu0 %v4220
    %4527 = vmatprep.subr.mxu0 0.0
    %4528 = vmatpush1.msra.mxu0 %v4217
    %4529 = vmatprep.subr.mxu0 0.0
    %4530 = vmatpush1.msra.mxu0 %v4214
    %4531 = vmatprep.subr.mxu0 0.0
    %4532 = vmatpush1.msra.mxu0 %v4211
    %4533 = vmatprep.subr.mxu0 0.0
    %4534 = vmatpush1.msra.mxu0 %v4208
    %4535 = vmatprep.subr.mxu0 0.0
    %4536 = vmatpush1.msra.mxu0 %v4205
    %4537 = vmatprep.subr.mxu0 0.0
    %4538 = vmatpush1.msra.mxu0 %v4202
    %4539 = vmatprep.subr.mxu0 0.0
    %4540 = vmatpush1.msra.mxu0 %v4199
    %4541 = vmatprep.subr.mxu0 0.0
    %4542 = vmatpush1.msra.mxu0 %v4196
    %4543 = vmatprep.subr.mxu0 0.0
    %4544 = vmatpush1.msra.mxu0 %v4193
    %4545 = vmatprep.subr.mxu0 0.0
    %4546 = vmatpush1.msra.mxu0 %v4190
    %4547 = vmatprep.subr.mxu0 0.0
    %4548 = vmatpush1.msra.mxu0 %v4187
    %4549 = vmatprep.subr.mxu0 0.0
    %4550 = vmatpush1.msra.mxu0 %v4184
    %4551 = vmatprep.subr.mxu0 0.0
    %4552 = vmatpush1.msra.mxu0 %v4181
    %4553 = vmatprep.subr.mxu0 0.0
    %4554 = vmatpush1.msra.mxu0 %v4178
    %4555 = vmatprep.subr.mxu0 0.0
    %4556 = vmatpush1.msra.mxu0 %v4175
    %4557 = vmatprep.subr.mxu0 0.0
    %4558 = vmatpush2.msra.mxu0 0.0
    %4559 = vmatprep.subr.mxu0 0.0
    %4560 = vmatpush2.msra.mxu0 0.0
    %4561 = vmatprep.subr.mxu0 0.0
    %4562 = vmatpush2.msra.mxu0 0.0
    %4563 = vmatprep.subr.mxu0 0.0
    %4564 = vmatpush2.msra.mxu0 0.0
    %4565 = vmatprep.subr.mxu0 0.0
    %4566 = vmatpush2.msra.mxu0 0.0
    %4567 = vmatprep.subr.mxu0 0.0
    %4568 = vmatpush2.msra.mxu0 0.0
    %4569 = vmatprep.subr.mxu0 0.0
    %4570 = vmatpush2.msra.mxu0 0.0
    %4571 = vmatprep.subr.mxu0 0.0
    %4572 = vmatpush2.msra.mxu0 0.0
    %4573 = vmatprep.subr.mxu0 0.0
    %4574 = vmatpush2.msra.mxu0 0.0
    %4575 = vmatprep.subr.mxu0 0.0
    %4576 = vmatpush2.msra.mxu0 0.0
    %4577 = vmatprep.subr.mxu0 0.0
    %4578 = vmatpush2.msra.mxu0 0.0
    %4579 = vmatprep.subr.mxu0 0.0
    %4580 = vmatpush2.msra.mxu0 0.0
    %4581 = vmatprep.subr.mxu0 0.0
    %4582 = vmatpush2.msra.mxu0 0.0
    %4583 = vmatprep.subr.mxu0 0.0
    %4584 = vmatpush2.msra.mxu0 0.0
    %4585 = vmatprep.subr.mxu0 0.0
    %4586 = vmatpush2.msra.mxu0 0.0
    %4587 = vmatprep.subr.mxu0 0.0
    %4588 = vmatpush2.msra.mxu0 0.0
    %4589 = vmatprep.mubr.f32.mxu0 0.0
    %4590 = vmatmul.mubr.f32.gmra.mxu0 %v4443
    %v4591 = vpop.f32.mrf.mxu0
    %v4592 = vadd.f32 %v4278, %v4591
    %v4593 = vpop.f32.mrf.mxu0
    %4594 = vdwg.mxu0
    %v4595 = vadd.f32 %v4451, %v4521
    %v4596 = vxor.u32 %v4595, 2147483648
    %v4597 = vmul.f32 %v4596, 1.442695
    %v4598 = vpow.pop %v4597
    %v4599 = vadd.f32 %v4598, 1.0
    %v4600 = vrcp.pop %v4599
    %v4601 = vmul.f32 1.0, %v4600
    %v4602 = vadd.f32 %v4452, %v4523
    %v4603 = vxor.u32 %v4602, 2147483648
    %v4604 = vmul.f32 %v4603, 1.442695
    %v4605 = vpow.pop %v4604
    %v4606 = vadd.f32 %v4605, 1.0
    %v4607 = vrcp.pop %v4606
    %v4608 = vmul.f32 1.0, %v4607
    %v4609 = vmul.f32 %v4601, %v4592
    %v4610 = vadd.f32 %v4453, %v4609
    %v4611 = vtanh.pop %v4610
    %v4612 = vsub.f32 1.0, %v4608
    %v4613 = vmul.f32 %v4612, %v4611
    %v4614 = vmul.f32 %v4608, %v4443
    %v4615 = vadd.f32 %v4613, %v4614
    %4616 = vset.pattern.permute.xlu0 2
    %4617 = vperm.xlu0 %4616, %v4171
    %v4618 = vpop.permute.xlu0 %4617
    %v4620 = vmul.f32 %v4618, %v4232
    %v4621 = vmul.f32 %v4618, %v4236
    %v4622 = vmul.f32 %v4618, %v4240
    %v4623 = vadd.f32 %v4620, %v4251
    %v4624 = vadd.f32 %v4621, %v4255
    %v4625 = vadd.f32 %v4622, %v4259
    %4626 = vmatprep.subr.mxu0 %v4219
    %4627 = vmatpush1.msra.mxu0 %v4218
    %4628 = vmatprep.subr.mxu0 %v4216
    %4629 = vmatpush1.msra.mxu0 %v4215
    %4630 = vmatprep.subr.mxu0 %v4213
    %4631 = vmatpush1.msra.mxu0 %v4212
    %4632 = vmatprep.subr.mxu0 %v4210
    %4633 = vmatpush1.msra.mxu0 %v4209
    %4634 = vmatprep.subr.mxu0 %v4207
    %4635 = vmatpush1.msra.mxu0 %v4206
    %4636 = vmatprep.subr.mxu0 %v4204
    %4637 = vmatpush1.msra.mxu0 %v4203
    %4638 = vmatprep.subr.mxu0 %v4201
    %4639 = vmatpush1.msra.mxu0 %v4200
    %4640 = vmatprep.subr.mxu0 %v4198
    %4641 = vmatpush1.msra.mxu0 %v4197
    %4642 = vmatprep.subr.mxu0 %v4195
    %4643 = vmatpush1.msra.mxu0 %v4194
    %4644 = vmatprep.subr.mxu0 %v4192
    %4645 = vmatpush1.msra.mxu0 %v4191
    %4646 = vmatprep.subr.mxu0 %v4189
    %4647 = vmatpush1.msra.mxu0 %v4188
    %4648 = vmatprep.subr.mxu0 %v4186
    %4649 = vmatpush1.msra.mxu0 %v4185
    %4650 = vmatprep.subr.mxu0 %v4183
    %4651 = vmatpush1.msra.mxu0 %v4182
    %4652 = vmatprep.subr.mxu0 %v4180
    %4653 = vmatpush1.msra.mxu0 %v4179
    %4654 = vmatprep.subr.mxu0 %v4177
    %4655 = vmatpush1.msra.mxu0 %v4176
    %4656 = vmatprep.subr.mxu0 %v4174
    %4657 = vmatpush1.msra.mxu0 %v4173
    %4658 = vmatprep.subr.mxu0 0.0
    %4659 = vmatpush2.msra.mxu0 0.0
    %4660 = vmatprep.subr.mxu0 0.0
    %4661 = vmatpush2.msra.mxu0 0.0
    %4662 = vmatprep.subr.mxu0 0.0
    %4663 = vmatpush2.msra.mxu0 0.0
    %4664 = vmatprep.subr.mxu0 0.0
    %4665 = vmatpush2.msra.mxu0 0.0
    %4666 = vmatprep.subr.mxu0 0.0
    %4667 = vmatpush2.msra.mxu0 0.0
    %4668 = vmatprep.subr.mxu0 0.0
    %4669 = vmatpush2.msra.mxu0 0.0
    %4670 = vmatprep.subr.mxu0 0.0
    %4671 = vmatpush2.msra.mxu0 0.0
    %4672 = vmatprep.subr.mxu0 0.0
    %4673 = vmatpush2.msra.mxu0 0.0
    %4674 = vmatprep.subr.mxu0 0.0
    %4675 = vmatpush2.msra.mxu0 0.0
    %4676 = vmatprep.subr.mxu0 0.0
    %4677 = vmatpush2.msra.mxu0 0.0
    %4678 = vmatprep.subr.mxu0 0.0
    %4679 = vmatpush2.msra.mxu0 0.0
    %4680 = vmatprep.subr.mxu0 0.0
    %4681 = vmatpush2.msra.mxu0 0.0
    %4682 = vmatprep.subr.mxu0 0.0
    %4683 = vmatpush2.msra.mxu0 0.0
    %4684 = vmatprep.subr.mxu0 0.0
    %4685 = vmatpush2.msra.mxu0 0.0
    %4686 = vmatprep.subr.mxu0 0.0
    %4687 = vmatpush2.msra.mxu0 0.0
    %4688 = vmatprep.subr.mxu0 0.0
    %4689 = vmatpush2.msra.mxu0 0.0
    %4690 = vmatprep.mubr.f32.mxu0 0.0
    %4691 = vmatmul.mubr.f32.gmra.mxu0 %v4615
    %v4692 = vpop.f32.mrf.mxu0
    %v4693 = vadd.f32 %v4270, %v4692
    %v4694 = vpop.f32.mrf.mxu0
    %v4695 = vadd.f32 %v4274, %v4694
    %4696 = vdwg.mxu0
    %4697 = vmatprep.subr.mxu0 0.0
    %4698 = vmatpush1.msra.mxu0 %v4220
    %4699 = vmatprep.subr.mxu0 0.0
    %4700 = vmatpush1.msra.mxu0 %v4217
    %4701 = vmatprep.subr.mxu0 0.0
    %4702 = vmatpush1.msra.mxu0 %v4214
    %4703 = vmatprep.subr.mxu0 0.0
    %4704 = vmatpush1.msra.mxu0 %v4211
    %4705 = vmatprep.subr.mxu0 0.0
    %4706 = vmatpush1.msra.mxu0 %v4208
    %4707 = vmatprep.subr.mxu0 0.0
    %4708 = vmatpush1.msra.mxu0 %v4205
    %4709 = vmatprep.subr.mxu0 0.0
    %4710 = vmatpush1.msra.mxu0 %v4202
    %4711 = vmatprep.subr.mxu0 0.0
    %4712 = vmatpush1.msra.mxu0 %v4199
    %4713 = vmatprep.subr.mxu0 0.0
    %4714 = vmatpush1.msra.mxu0 %v4196
    %4715 = vmatprep.subr.mxu0 0.0
    %4716 = vmatpush1.msra.mxu0 %v4193
    %4717 = vmatprep.subr.mxu0 0.0
    %4718 = vmatpush1.msra.mxu0 %v4190
    %4719 = vmatprep.subr.mxu0 0.0
    %4720 = vmatpush1.msra.mxu0 %v4187
    %4721 = vmatprep.subr.mxu0 0.0
    %4722 = vmatpush1.msra.mxu0 %v4184
    %4723 = vmatprep.subr.mxu0 0.0
    %4724 = vmatpush1.msra.mxu0 %v4181
    %4725 = vmatprep.subr.mxu0 0.0
    %4726 = vmatpush1.msra.mxu0 %v4178
    %4727 = vmatprep.subr.mxu0 0.0
    %4728 = vmatpush1.msra.mxu0 %v4175
    %4729 = vmatprep.subr.mxu0 0.0
    %4730 = vmatpush2.msra.mxu0 0.0
    %4731 = vmatprep.subr.mxu0 0.0
    %4732 = vmatpush2.msra.mxu0 0.0
    %4733 = vmatprep.subr.mxu0 0.0
    %4734 = vmatpush2.msra.mxu0 0.0
    %4735 = vmatprep.subr.mxu0 0.0
    %4736 = vmatpush2.msra.mxu0 0.0
    %4737 = vmatprep.subr.mxu0 0.0
    %4738 = vmatpush2.msra.mxu0 0.0
    %4739 = vmatprep.subr.mxu0 0.0
    %4740 = vmatpush2.msra.mxu0 0.0
    %4741 = vmatprep.subr.mxu0 0.0
    %4742 = vmatpush2.msra.mxu0 0.0
    %4743 = vmatprep.subr.mxu0 0.0
    %4744 = vmatpush2.msra.mxu0 0.0
    %4745 = vmatprep.subr.mxu0 0.0
    %4746 = vmatpush2.msra.mxu0 0.0
    %4747 = vmatprep.subr.mxu0 0.0
    %4748 = vmatpush2.msra.mxu0 0.0
    %4749 = vmatprep.subr.mxu0 0.0
    %4750 = vmatpush2.msra.mxu0 0.0
    %4751 = vmatprep.subr.mxu0 0.0
    %4752 = vmatpush2.msra.mxu0 0.0
    %4753 = vmatprep.subr.mxu0 0.0
    %4754 = vmatpush2.msra.mxu0 0.0
    %4755 = vmatprep.subr.mxu0 0.0
    %4756 = vmatpush2.msra.mxu0 0.0
    %4757 = vmatprep.subr.mxu0 0.0
    %4758 = vmatpush2.msra.mxu0 0.0
    %4759 = vmatprep.subr.mxu0 0.0
    %4760 = vmatpush2.msra.mxu0 0.0
    %4761 = vmatprep.mubr.f32.mxu0 0.0
    %4762 = vmatmul.mubr.f32.gmra.mxu0 %v4615
    %v4763 = vpop.f32.mrf.mxu0
    %v4764 = vadd.f32 %v4278, %v4763
    %v4765 = vpop.f32.mrf.mxu0
    %4766 = vdwg.mxu0
    %v4767 = vadd.f32 %v4623, %v4693
    %v4768 = vxor.u32 %v4767, 2147483648
    %v4769 = vmul.f32 %v4768, 1.442695
    %v4770 = vpow.pop %v4769
    %v4771 = vadd.f32 %v4770, 1.0
    %v4772 = vrcp.pop %v4771
    %v4773 = vmul.f32 1.0, %v4772
    %v4774 = vadd.f32 %v4624, %v4695
    %v4775 = vxor.u32 %v4774, 2147483648
    %v4776 = vmul.f32 %v4775, 1.442695
    %v4777 = vpow.pop %v4776
    %v4778 = vadd.f32 %v4777, 1.0
    %v4779 = vrcp.pop %v4778
    %v4780 = vmul.f32 1.0, %v4779
    %v4781 = vmul.f32 %v4773, %v4764
    %v4782 = vadd.f32 %v4625, %v4781
    %v4783 = vtanh.pop %v4782
    %v4784 = vsub.f32 1.0, %v4780
    %v4785 = vmul.f32 %v4784, %v4783
    %v4786 = vmul.f32 %v4780, %v4615
    %v4787 = vadd.f32 %v4785, %v4786
    %4788 = vset.pattern.permute.xlu0 3
    %4789 = vperm.xlu0 %4788, %v4171
    %v4790 = vpop.permute.xlu0 %4789
    %v4792 = vmul.f32 %v4790, %v4232
    %v4793 = vmul.f32 %v4790, %v4236
    %v4794 = vmul.f32 %v4790, %v4240
    %v4795 = vadd.f32 %v4792, %v4251
    %v4796 = vadd.f32 %v4793, %v4255
    %v4797 = vadd.f32 %v4794, %v4259
    %4798 = vmatprep.subr.mxu0 %v4219
    %4799 = vmatpush1.msra.mxu0 %v4218
    %4800 = vmatprep.subr.mxu0 %v4216
    %4801 = vmatpush1.msra.mxu0 %v4215
    %4802 = vmatprep.subr.mxu0 %v4213
    %4803 = vmatpush1.msra.mxu0 %v4212
    %4804 = vmatprep.subr.mxu0 %v4210
    %4805 = vmatpush1.msra.mxu0 %v4209
    %4806 = vmatprep.subr.mxu0 %v4207
    %4807 = vmatpush1.msra.mxu0 %v4206
    %4808 = vmatprep.subr.mxu0 %v4204
    %4809 = vmatpush1.msra.mxu0 %v4203
    %4810 = vmatprep.subr.mxu0 %v4201
    %4811 = vmatpush1.msra.mxu0 %v4200
    %4812 = vmatprep.subr.mxu0 %v4198
    %4813 = vmatpush1.msra.mxu0 %v4197
    %4814 = vmatprep.subr.mxu0 %v4195
    %4815 = vmatpush1.msra.mxu0 %v4194
    %4816 = vmatprep.subr.mxu0 %v4192
    %4817 = vmatpush1.msra.mxu0 %v4191
    %4818 = vmatprep.subr.mxu0 %v4189
    %4819 = vmatpush1.msra.mxu0 %v4188
    %4820 = vmatprep.subr.mxu0 %v4186
    %4821 = vmatpush1.msra.mxu0 %v4185
    %4822 = vmatprep.subr.mxu0 %v4183
    %4823 = vmatpush1.msra.mxu0 %v4182
    %4824 = vmatprep.subr.mxu0 %v4180
    %4825 = vmatpush1.msra.mxu0 %v4179
    %4826 = vmatprep.subr.mxu0 %v4177
    %4827 = vmatpush1.msra.mxu0 %v4176
    %4828 = vmatprep.subr.mxu0 %v4174
    %4829 = vmatpush1.msra.mxu0 %v4173
    %4830 = vmatprep.subr.mxu0 0.0
    %4831 = vmatpush2.msra.mxu0 0.0
    %4832 = vmatprep.subr.mxu0 0.0
    %4833 = vmatpush2.msra.mxu0 0.0
    %4834 = vmatprep.subr.mxu0 0.0
    %4835 = vmatpush2.msra.mxu0 0.0
    %4836 = vmatprep.subr.mxu0 0.0
    %4837 = vmatpush2.msra.mxu0 0.0
    %4838 = vmatprep.subr.mxu0 0.0
    %4839 = vmatpush2.msra.mxu0 0.0
    %4840 = vmatprep.subr.mxu0 0.0
    %4841 = vmatpush2.msra.mxu0 0.0
    %4842 = vmatprep.subr.mxu0 0.0
    %4843 = vmatpush2.msra.mxu0 0.0
    %4844 = vmatprep.subr.mxu0 0.0
    %4845 = vmatpush2.msra.mxu0 0.0
    %4846 = vmatprep.subr.mxu0 0.0
    %4847 = vmatpush2.msra.mxu0 0.0
    %4848 = vmatprep.subr.mxu0 0.0
    %4849 = vmatpush2.msra.mxu0 0.0
    %4850 = vmatprep.subr.mxu0 0.0
    %4851 = vmatpush2.msra.mxu0 0.0
    %4852 = vmatprep.subr.mxu0 0.0
    %4853 = vmatpush2.msra.mxu0 0.0
    %4854 = vmatprep.subr.mxu0 0.0
    %4855 = vmatpush2.msra.mxu0 0.0
    %4856 = vmatprep.subr.mxu0 0.0
    %4857 = vmatpush2.msra.mxu0 0.0
    %4858 = vmatprep.subr.mxu0 0.0
    %4859 = vmatpush2.msra.mxu0 0.0
    %4860 = vmatprep.subr.mxu0 0.0
    %4861 = vmatpush2.msra.mxu0 0.0
    %4862 = vmatprep.mubr.f32.mxu0 0.0
    %4863 = vmatmul.mubr.f32.gmra.mxu0 %v4787
    %v4864 = vpop.f32.mrf.mxu0
    %v4865 = vadd.f32 %v4270, %v4864
    %v4866 = vpop.f32.mrf.mxu0
    %v4867 = vadd.f32 %v4274, %v4866
    %4868 = vdwg.mxu0
    %4869 = vmatprep.subr.mxu0 0.0
    %4870 = vmatpush1.msra.mxu0 %v4220
    %4871 = vmatprep.subr.mxu0 0.0
    %4872 = vmatpush1.msra.mxu0 %v4217
    %4873 = vmatprep.subr.mxu0 0.0
    %4874 = vmatpush1.msra.mxu0 %v4214
    %4875 = vmatprep.subr.mxu0 0.0
    %4876 = vmatpush1.msra.mxu0 %v4211
    %4877 = vmatprep.subr.mxu0 0.0
    %4878 = vmatpush1.msra.mxu0 %v4208
    %4879 = vmatprep.subr.mxu0 0.0
    %4880 = vmatpush1.msra.mxu0 %v4205
    %4881 = vmatprep.subr.mxu0 0.0
    %4882 = vmatpush1.msra.mxu0 %v4202
    %4883 = vmatprep.subr.mxu0 0.0
    %4884 = vmatpush1.msra.mxu0 %v4199
    %4885 = vmatprep.subr.mxu0 0.0
    %4886 = vmatpush1.msra.mxu0 %v4196
    %4887 = vmatprep.subr.mxu0 0.0
    %4888 = vmatpush1.msra.mxu0 %v4193
    %4889 = vmatprep.subr.mxu0 0.0
    %4890 = vmatpush1.msra.mxu0 %v4190
    %4891 = vmatprep.subr.mxu0 0.0
    %4892 = vmatpush1.msra.mxu0 %v4187
    %4893 = vmatprep.subr.mxu0 0.0
    %4894 = vmatpush1.msra.mxu0 %v4184
    %4895 = vmatprep.subr.mxu0 0.0
    %4896 = vmatpush1.msra.mxu0 %v4181
    %4897 = vmatprep.subr.mxu0 0.0
    %4898 = vmatpush1.msra.mxu0 %v4178
    %4899 = vmatprep.subr.mxu0 0.0
    %4900 = vmatpush1.msra.mxu0 %v4175
    %4901 = vmatprep.subr.mxu0 0.0
    %4902 = vmatpush2.msra.mxu0 0.0
    %4903 = vmatprep.subr.mxu0 0.0
    %4904 = vmatpush2.msra.mxu0 0.0
    %4905 = vmatprep.subr.mxu0 0.0
    %4906 = vmatpush2.msra.mxu0 0.0
    %4907 = vmatprep.subr.mxu0 0.0
    %4908 = vmatpush2.msra.mxu0 0.0
    %4909 = vmatprep.subr.mxu0 0.0
    %4910 = vmatpush2.msra.mxu0 0.0
    %4911 = vmatprep.subr.mxu0 0.0
    %4912 = vmatpush2.msra.mxu0 0.0
    %4913 = vmatprep.subr.mxu0 0.0
    %4914 = vmatpush2.msra.mxu0 0.0
    %4915 = vmatprep.subr.mxu0 0.0
    %4916 = vmatpush2.msra.mxu0 0.0
    %4917 = vmatprep.subr.mxu0 0.0
    %4918 = vmatpush2.msra.mxu0 0.0
    %4919 = vmatprep.subr.mxu0 0.0
    %4920 = vmatpush2.msra.mxu0 0.0
    %4921 = vmatprep.subr.mxu0 0.0
    %4922 = vmatpush2.msra.mxu0 0.0
    %4923 = vmatprep.subr.mxu0 0.0
    %4924 = vmatpush2.msra.mxu0 0.0
    %4925 = vmatprep.subr.mxu0 0.0
    %4926 = vmatpush2.msra.mxu0 0.0
    %4927 = vmatprep.subr.mxu0 0.0
    %4928 = vmatpush2.msra.mxu0 0.0
    %4929 = vmatprep.subr.mxu0 0.0
    %4930 = vmatpush2.msra.mxu0 0.0
    %4931 = vmatprep.subr.mxu0 0.0
    %4932 = vmatpush2.msra.mxu0 0.0
    %4933 = vmatprep.mubr.f32.mxu0 0.0
    %4934 = vmatmul.mubr.f32.gmra.mxu0 %v4787
    %v4935 = vpop.f32.mrf.mxu0
    %v4936 = vadd.f32 %v4278, %v4935
    %v4937 = vpop.f32.mrf.mxu0
    %4938 = vdwg.mxu0
    %v4939 = vadd.f32 %v4795, %v4865
    %v4940 = vxor.u32 %v4939, 2147483648
    %v4941 = vmul.f32 %v4940, 1.442695
    %v4942 = vpow.pop %v4941
    %v4943 = vadd.f32 %v4942, 1.0
    %v4944 = vrcp.pop %v4943
    %v4945 = vmul.f32 1.0, %v4944
    %v4946 = vadd.f32 %v4796, %v4867
    %v4947 = vxor.u32 %v4946, 2147483648
    %v4948 = vmul.f32 %v4947, 1.442695
    %v4949 = vpow.pop %v4948
    %v4950 = vadd.f32 %v4949, 1.0
    %v4951 = vrcp.pop %v4950
    %v4952 = vmul.f32 1.0, %v4951
    %v4953 = vmul.f32 %v4945, %v4936
    %v4954 = vadd.f32 %v4797, %v4953
    %v4955 = vtanh.pop %v4954
    %v4956 = vsub.f32 1.0, %v4952
    %v4957 = vmul.f32 %v4956, %v4955
    %v4958 = vmul.f32 %v4952, %v4787
    %v4959 = vadd.f32 %v4957, %v4958
    %4960 = vset.pattern.permute.xlu0 4
    %4961 = vperm.xlu0 %4960, %v4171
    %v4962 = vpop.permute.xlu0 %4961
    %v4964 = vmul.f32 %v4962, %v4232
    %v4965 = vmul.f32 %v4962, %v4236
    %v4966 = vmul.f32 %v4962, %v4240
    %v4967 = vadd.f32 %v4964, %v4251
    %v4968 = vadd.f32 %v4965, %v4255
    %v4969 = vadd.f32 %v4966, %v4259
    %4970 = vmatprep.subr.mxu0 %v4219
    %4971 = vmatpush1.msra.mxu0 %v4218
    %4972 = vmatprep.subr.mxu0 %v4216
    %4973 = vmatpush1.msra.mxu0 %v4215
    %4974 = vmatprep.subr.mxu0 %v4213
    %4975 = vmatpush1.msra.mxu0 %v4212
    %4976 = vmatprep.subr.mxu0 %v4210
    %4977 = vmatpush1.msra.mxu0 %v4209
    %4978 = vmatprep.subr.mxu0 %v4207
    %4979 = vmatpush1.msra.mxu0 %v4206
    %4980 = vmatprep.subr.mxu0 %v4204
    %4981 = vmatpush1.msra.mxu0 %v4203
    %4982 = vmatprep.subr.mxu0 %v4201
    %4983 = vmatpush1.msra.mxu0 %v4200
    %4984 = vmatprep.subr.mxu0 %v4198
    %4985 = vmatpush1.msra.mxu0 %v4197
    %4986 = vmatprep.subr.mxu0 %v4195
    %4987 = vmatpush1.msra.mxu0 %v4194
    %4988 = vmatprep.subr.mxu0 %v4192
    %4989 = vmatpush1.msra.mxu0 %v4191
    %4990 = vmatprep.subr.mxu0 %v4189
    %4991 = vmatpush1.msra.mxu0 %v4188
    %4992 = vmatprep.subr.mxu0 %v4186
    %4993 = vmatpush1.msra.mxu0 %v4185
    %4994 = vmatprep.subr.mxu0 %v4183
    %4995 = vmatpush1.msra.mxu0 %v4182
    %4996 = vmatprep.subr.mxu0 %v4180
    %4997 = vmatpush1.msra.mxu0 %v4179
    %4998 = vmatprep.subr.mxu0 %v4177
    %4999 = vmatpush1.msra.mxu0 %v4176
    %5000 = vmatprep.subr.mxu0 %v4174
    %5001 = vmatpush1.msra.mxu0 %v4173
    %5002 = vmatprep.subr.mxu0 0.0
    %5003 = vmatpush2.msra.mxu0 0.0
    %5004 = vmatprep.subr.mxu0 0.0
    %5005 = vmatpush2.msra.mxu0 0.0
    %5006 = vmatprep.subr.mxu0 0.0
    %5007 = vmatpush2.msra.mxu0 0.0
    %5008 = vmatprep.subr.mxu0 0.0
    %5009 = vmatpush2.msra.mxu0 0.0
    %5010 = vmatprep.subr.mxu0 0.0
    %5011 = vmatpush2.msra.mxu0 0.0
    %5012 = vmatprep.subr.mxu0 0.0
    %5013 = vmatpush2.msra.mxu0 0.0
    %5014 = vmatprep.subr.mxu0 0.0
    %5015 = vmatpush2.msra.mxu0 0.0
    %5016 = vmatprep.subr.mxu0 0.0
    %5017 = vmatpush2.msra.mxu0 0.0
    %5018 = vmatprep.subr.mxu0 0.0
    %5019 = vmatpush2.msra.mxu0 0.0
    %5020 = vmatprep.subr.mxu0 0.0
    %5021 = vmatpush2.msra.mxu0 0.0
    %5022 = vmatprep.subr.mxu0 0.0
    %5023 = vmatpush2.msra.mxu0 0.0
    %5024 = vmatprep.subr.mxu0 0.0
    %5025 = vmatpush2.msra.mxu0 0.0
    %5026 = vmatprep.subr.mxu0 0.0
    %5027 = vmatpush2.msra.mxu0 0.0
    %5028 = vmatprep.subr.mxu0 0.0
    %5029 = vmatpush2.msra.mxu0 0.0
    %5030 = vmatprep.subr.mxu0 0.0
    %5031 = vmatpush2.msra.mxu0 0.0
    %5032 = vmatprep.subr.mxu0 0.0
    %5033 = vmatpush2.msra.mxu0 0.0
    %5034 = vmatprep.mubr.f32.mxu0 0.0
    %5035 = vmatmul.mubr.f32.gmra.mxu0 %v4959
    %v5036 = vpop.f32.mrf.mxu0
    %v5037 = vadd.f32 %v4270, %v5036
    %v5038 = vpop.f32.mrf.mxu0
    %v5039 = vadd.f32 %v4274, %v5038
    %5040 = vdwg.mxu0
    %5041 = vmatprep.subr.mxu0 0.0
    %5042 = vmatpush1.msra.mxu0 %v4220
    %5043 = vmatprep.subr.mxu0 0.0
    %5044 = vmatpush1.msra.mxu0 %v4217
    %5045 = vmatprep.subr.mxu0 0.0
    %5046 = vmatpush1.msra.mxu0 %v4214
    %5047 = vmatprep.subr.mxu0 0.0
    %5048 = vmatpush1.msra.mxu0 %v4211
    %5049 = vmatprep.subr.mxu0 0.0
    %5050 = vmatpush1.msra.mxu0 %v4208
    %5051 = vmatprep.subr.mxu0 0.0
    %5052 = vmatpush1.msra.mxu0 %v4205
    %5053 = vmatprep.subr.mxu0 0.0
    %5054 = vmatpush1.msra.mxu0 %v4202
    %5055 = vmatprep.subr.mxu0 0.0
    %5056 = vmatpush1.msra.mxu0 %v4199
    %5057 = vmatprep.subr.mxu0 0.0
    %5058 = vmatpush1.msra.mxu0 %v4196
    %5059 = vmatprep.subr.mxu0 0.0
    %5060 = vmatpush1.msra.mxu0 %v4193
    %5061 = vmatprep.subr.mxu0 0.0
    %5062 = vmatpush1.msra.mxu0 %v4190
    %5063 = vmatprep.subr.mxu0 0.0
    %5064 = vmatpush1.msra.mxu0 %v4187
    %5065 = vmatprep.subr.mxu0 0.0
    %5066 = vmatpush1.msra.mxu0 %v4184
    %5067 = vmatprep.subr.mxu0 0.0
    %5068 = vmatpush1.msra.mxu0 %v4181
    %5069 = vmatprep.subr.mxu0 0.0
    %5070 = vmatpush1.msra.mxu0 %v4178
    %5071 = vmatprep.subr.mxu0 0.0
    %5072 = vmatpush1.msra.mxu0 %v4175
    %5073 = vmatprep.subr.mxu0 0.0
    %5074 = vmatpush2.msra.mxu0 0.0
    %5075 = vmatprep.subr.mxu0 0.0
    %5076 = vmatpush2.msra.mxu0 0.0
    %5077 = vmatprep.subr.mxu0 0.0
    %5078 = vmatpush2.msra.mxu0 0.0
    %5079 = vmatprep.subr.mxu0 0.0
    %5080 = vmatpush2.msra.mxu0 0.0
    %5081 = vmatprep.subr.mxu0 0.0
    %5082 = vmatpush2.msra.mxu0 0.0
    %5083 = vmatprep.subr.mxu0 0.0
    %5084 = vmatpush2.msra.mxu0 0.0
    %5085 = vmatprep.subr.mxu0 0.0
    %5086 = vmatpush2.msra.mxu0 0.0
    %5087 = vmatprep.subr.mxu0 0.0
    %5088 = vmatpush2.msra.mxu0 0.0
    %5089 = vmatprep.subr.mxu0 0.0
    %5090 = vmatpush2.msra.mxu0 0.0
    %5091 = vmatprep.subr.mxu0 0.0
    %5092 = vmatpush2.msra.mxu0 0.0
    %5093 = vmatprep.subr.mxu0 0.0
    %5094 = vmatpush2.msra.mxu0 0.0
    %5095 = vmatprep.subr.mxu0 0.0
    %5096 = vmatpush2.msra.mxu0 0.0
    %5097 = vmatprep.subr.mxu0 0.0
    %5098 = vmatpush2.msra.mxu0 0.0
    %5099 = vmatprep.subr.mxu0 0.0
    %5100 = vmatpush2.msra.mxu0 0.0
    %5101 = vmatprep.subr.mxu0 0.0
    %5102 = vmatpush2.msra.mxu0 0.0
    %5103 = vmatprep.subr.mxu0 0.0
    %5104 = vmatpush2.msra.mxu0 0.0
    %5105 = vmatprep.mubr.f32.mxu0 0.0
    %5106 = vmatmul.mubr.f32.gmra.mxu0 %v4959
    %v5107 = vpop.f32.mrf.mxu0
    %v5108 = vadd.f32 %v4278, %v5107
    %v5109 = vpop.f32.mrf.mxu0
    %5110 = vdwg.mxu0
    %v5111 = vadd.f32 %v4967, %v5037
    %v5112 = vxor.u32 %v5111, 2147483648
    %v5113 = vmul.f32 %v5112, 1.442695
    %v5114 = vpow.pop %v5113
    %v5115 = vadd.f32 %v5114, 1.0
    %v5116 = vrcp.pop %v5115
    %v5117 = vmul.f32 1.0, %v5116
    %v5118 = vadd.f32 %v4968, %v5039
    %v5119 = vxor.u32 %v5118, 2147483648
    %v5120 = vmul.f32 %v5119, 1.442695
    %v5121 = vpow.pop %v5120
    %v5122 = vadd.f32 %v5121, 1.0
    %v5123 = vrcp.pop %v5122
    %v5124 = vmul.f32 1.0, %v5123
    %v5125 = vmul.f32 %v5117, %v5108
    %v5126 = vadd.f32 %v4969, %v5125
    %v5127 = vtanh.pop %v5126
    %v5128 = vsub.f32 1.0, %v5124
    %v5129 = vmul.f32 %v5128, %v5127
    %v5130 = vmul.f32 %v5124, %v4959
    %v5131 = vadd.f32 %v5129, %v5130
    %5132 = vset.pattern.permute.xlu0 5
    %5133 = vperm.xlu0 %5132, %v4171
    %v5134 = vpop.permute.xlu0 %5133
    %v5136 = vmul.f32 %v5134, %v4232
    %v5137 = vmul.f32 %v5134, %v4236
    %v5138 = vmul.f32 %v5134, %v4240
    %v5139 = vadd.f32 %v5136, %v4251
    %v5140 = vadd.f32 %v5137, %v4255
    %v5141 = vadd.f32 %v5138, %v4259
    %5142 = vmatprep.subr.mxu0 %v4219
    %5143 = vmatpush1.msra.mxu0 %v4218
    %5144 = vmatprep.subr.mxu0 %v4216
    %5145 = vmatpush1.msra.mxu0 %v4215
    %5146 = vmatprep.subr.mxu0 %v4213
    %5147 = vmatpush1.msra.mxu0 %v4212
    %5148 = vmatprep.subr.mxu0 %v4210
    %5149 = vmatpush1.msra.mxu0 %v4209
    %5150 = vmatprep.subr.mxu0 %v4207
    %5151 = vmatpush1.msra.mxu0 %v4206
    %5152 = vmatprep.subr.mxu0 %v4204
    %5153 = vmatpush1.msra.mxu0 %v4203
    %5154 = vmatprep.subr.mxu0 %v4201
    %5155 = vmatpush1.msra.mxu0 %v4200
    %5156 = vmatprep.subr.mxu0 %v4198
    %5157 = vmatpush1.msra.mxu0 %v4197
    %5158 = vmatprep.subr.mxu0 %v4195
    %5159 = vmatpush1.msra.mxu0 %v4194
    %5160 = vmatprep.subr.mxu0 %v4192
    %5161 = vmatpush1.msra.mxu0 %v4191
    %5162 = vmatprep.subr.mxu0 %v4189
    %5163 = vmatpush1.msra.mxu0 %v4188
    %5164 = vmatprep.subr.mxu0 %v4186
    %5165 = vmatpush1.msra.mxu0 %v4185
    %5166 = vmatprep.subr.mxu0 %v4183
    %5167 = vmatpush1.msra.mxu0 %v4182
    %5168 = vmatprep.subr.mxu0 %v4180
    %5169 = vmatpush1.msra.mxu0 %v4179
    %5170 = vmatprep.subr.mxu0 %v4177
    %5171 = vmatpush1.msra.mxu0 %v4176
    %5172 = vmatprep.subr.mxu0 %v4174
    %5173 = vmatpush1.msra.mxu0 %v4173
    %5174 = vmatprep.subr.mxu0 0.0
    %5175 = vmatpush2.msra.mxu0 0.0
    %5176 = vmatprep.subr.mxu0 0.0
    %5177 = vmatpush2.msra.mxu0 0.0
    %5178 = vmatprep.subr.mxu0 0.0
    %5179 = vmatpush2.msra.mxu0 0.0
    %5180 = vmatprep.subr.mxu0 0.0
    %5181 = vmatpush2.msra.mxu0 0.0
    %5182 = vmatprep.subr.mxu0 0.0
    %5183 = vmatpush2.msra.mxu0 0.0
    %5184 = vmatprep.subr.mxu0 0.0
    %5185 = vmatpush2.msra.mxu0 0.0
    %5186 = vmatprep.subr.mxu0 0.0
    %5187 = vmatpush2.msra.mxu0 0.0
    %5188 = vmatprep.subr.mxu0 0.0
    %5189 = vmatpush2.msra.mxu0 0.0
    %5190 = vmatprep.subr.mxu0 0.0
    %5191 = vmatpush2.msra.mxu0 0.0
    %5192 = vmatprep.subr.mxu0 0.0
    %5193 = vmatpush2.msra.mxu0 0.0
    %5194 = vmatprep.subr.mxu0 0.0
    %5195 = vmatpush2.msra.mxu0 0.0
    %5196 = vmatprep.subr.mxu0 0.0
    %5197 = vmatpush2.msra.mxu0 0.0
    %5198 = vmatprep.subr.mxu0 0.0
    %5199 = vmatpush2.msra.mxu0 0.0
    %5200 = vmatprep.subr.mxu0 0.0
    %5201 = vmatpush2.msra.mxu0 0.0
    %5202 = vmatprep.subr.mxu0 0.0
    %5203 = vmatpush2.msra.mxu0 0.0
    %5204 = vmatprep.subr.mxu0 0.0
    %5205 = vmatpush2.msra.mxu0 0.0
    %5206 = vmatprep.mubr.f32.mxu0 0.0
    %5207 = vmatmul.mubr.f32.gmra.mxu0 %v5131
    %v5208 = vpop.f32.mrf.mxu0
    %v5209 = vadd.f32 %v4270, %v5208
    %v5210 = vpop.f32.mrf.mxu0
    %v5211 = vadd.f32 %v4274, %v5210
    %5212 = vdwg.mxu0
    %5213 = vmatprep.subr.mxu0 0.0
    %5214 = vmatpush1.msra.mxu0 %v4220
    %5215 = vmatprep.subr.mxu0 0.0
    %5216 = vmatpush1.msra.mxu0 %v4217
    %5217 = vmatprep.subr.mxu0 0.0
    %5218 = vmatpush1.msra.mxu0 %v4214
    %5219 = vmatprep.subr.mxu0 0.0
    %5220 = vmatpush1.msra.mxu0 %v4211
    %5221 = vmatprep.subr.mxu0 0.0
    %5222 = vmatpush1.msra.mxu0 %v4208
    %5223 = vmatprep.subr.mxu0 0.0
    %5224 = vmatpush1.msra.mxu0 %v4205
    %5225 = vmatprep.subr.mxu0 0.0
    %5226 = vmatpush1.msra.mxu0 %v4202
    %5227 = vmatprep.subr.mxu0 0.0
    %5228 = vmatpush1.msra.mxu0 %v4199
    %5229 = vmatprep.subr.mxu0 0.0
    %5230 = vmatpush1.msra.mxu0 %v4196
    %5231 = vmatprep.subr.mxu0 0.0
    %5232 = vmatpush1.msra.mxu0 %v4193
    %5233 = vmatprep.subr.mxu0 0.0
    %5234 = vmatpush1.msra.mxu0 %v4190
    %5235 = vmatprep.subr.mxu0 0.0
    %5236 = vmatpush1.msra.mxu0 %v4187
    %5237 = vmatprep.subr.mxu0 0.0
    %5238 = vmatpush1.msra.mxu0 %v4184
    %5239 = vmatprep.subr.mxu0 0.0
    %5240 = vmatpush1.msra.mxu0 %v4181
    %5241 = vmatprep.subr.mxu0 0.0
    %5242 = vmatpush1.msra.mxu0 %v4178
    %5243 = vmatprep.subr.mxu0 0.0
    %5244 = vmatpush1.msra.mxu0 %v4175
    %5245 = vmatprep.subr.mxu0 0.0
    %5246 = vmatpush2.msra.mxu0 0.0
    %5247 = vmatprep.subr.mxu0 0.0
    %5248 = vmatpush2.msra.mxu0 0.0
    %5249 = vmatprep.subr.mxu0 0.0
    %5250 = vmatpush2.msra.mxu0 0.0
    %5251 = vmatprep.subr.mxu0 0.0
    %5252 = vmatpush2.msra.mxu0 0.0
    %5253 = vmatprep.subr.mxu0 0.0
    %5254 = vmatpush2.msra.mxu0 0.0
    %5255 = vmatprep.subr.mxu0 0.0
    %5256 = vmatpush2.msra.mxu0 0.0
    %5257 = vmatprep.subr.mxu0 0.0
    %5258 = vmatpush2.msra.mxu0 0.0
    %5259 = vmatprep.subr.mxu0 0.0
    %5260 = vmatpush2.msra.mxu0 0.0
    %5261 = vmatprep.subr.mxu0 0.0
    %5262 = vmatpush2.msra.mxu0 0.0
    %5263 = vmatprep.subr.mxu0 0.0
    %5264 = vmatpush2.msra.mxu0 0.0
    %5265 = vmatprep.subr.mxu0 0.0
    %5266 = vmatpush2.msra.mxu0 0.0
    %5267 = vmatprep.subr.mxu0 0.0
    %5268 = vmatpush2.msra.mxu0 0.0
    %5269 = vmatprep.subr.mxu0 0.0
    %5270 = vmatpush2.msra.mxu0 0.0
    %5271 = vmatprep.subr.mxu0 0.0
    %5272 = vmatpush2.msra.mxu0 0.0
    %5273 = vmatprep.subr.mxu0 0.0
    %5274 = vmatpush2.msra.mxu0 0.0
    %5275 = vmatprep.subr.mxu0 0.0
    %5276 = vmatpush2.msra.mxu0 0.0
    %5277 = vmatprep.mubr.f32.mxu0 0.0
    %5278 = vmatmul.mubr.f32.gmra.mxu0 %v5131
    %v5279 = vpop.f32.mrf.mxu0
    %v5280 = vadd.f32 %v4278, %v5279
    %v5281 = vpop.f32.mrf.mxu0
    %5282 = vdwg.mxu0
    %v5283 = vadd.f32 %v5139, %v5209
    %v5284 = vxor.u32 %v5283, 2147483648
    %v5285 = vmul.f32 %v5284, 1.442695
    %v5286 = vpow.pop %v5285
    %v5287 = vadd.f32 %v5286, 1.0
    %v5288 = vrcp.pop %v5287
    %v5289 = vmul.f32 1.0, %v5288
    %v5290 = vadd.f32 %v5140, %v5211
    %v5291 = vxor.u32 %v5290, 2147483648
    %v5292 = vmul.f32 %v5291, 1.442695
    %v5293 = vpow.pop %v5292
    %v5294 = vadd.f32 %v5293, 1.0
    %v5295 = vrcp.pop %v5294
    %v5296 = vmul.f32 1.0, %v5295
    %v5297 = vmul.f32 %v5289, %v5280
    %v5298 = vadd.f32 %v5141, %v5297
    %v5299 = vtanh.pop %v5298
    %v5300 = vsub.f32 1.0, %v5296
    %v5301 = vmul.f32 %v5300, %v5299
    %v5302 = vmul.f32 %v5296, %v5131
    %v5303 = vadd.f32 %v5301, %v5302
    %5304 = vset.pattern.permute.xlu0 6
    %5305 = vperm.xlu0 %5304, %v4171
    %v5306 = vpop.permute.xlu0 %5305
    %v5308 = vmul.f32 %v5306, %v4232
    %v5309 = vmul.f32 %v5306, %v4236
    %v5310 = vmul.f32 %v5306, %v4240
    %v5311 = vadd.f32 %v5308, %v4251
    %v5312 = vadd.f32 %v5309, %v4255
    %v5313 = vadd.f32 %v5310, %v4259
    %5314 = vmatprep.subr.mxu0 %v4219
    %5315 = vmatpush1.msra.mxu0 %v4218
    %5316 = vmatprep.subr.mxu0 %v4216
    %5317 = vmatpush1.msra.mxu0 %v4215
    %5318 = vmatprep.subr.mxu0 %v4213
    %5319 = vmatpush1.msra.mxu0 %v4212
    %5320 = vmatprep.subr.mxu0 %v4210
    %5321 = vmatpush1.msra.mxu0 %v4209
    %5322 = vmatprep.subr.mxu0 %v4207
    %5323 = vmatpush1.msra.mxu0 %v4206
    %5324 = vmatprep.subr.mxu0 %v4204
    %5325 = vmatpush1.msra.mxu0 %v4203
    %5326 = vmatprep.subr.mxu0 %v4201
    %5327 = vmatpush1.msra.mxu0 %v4200
    %5328 = vmatprep.subr.mxu0 %v4198
    %5329 = vmatpush1.msra.mxu0 %v4197
    %5330 = vmatprep.subr.mxu0 %v4195
    %5331 = vmatpush1.msra.mxu0 %v4194
    %5332 = vmatprep.subr.mxu0 %v4192
    %5333 = vmatpush1.msra.mxu0 %v4191
    %5334 = vmatprep.subr.mxu0 %v4189
    %5335 = vmatpush1.msra.mxu0 %v4188
    %5336 = vmatprep.subr.mxu0 %v4186
    %5337 = vmatpush1.msra.mxu0 %v4185
    %5338 = vmatprep.subr.mxu0 %v4183
    %5339 = vmatpush1.msra.mxu0 %v4182
    %5340 = vmatprep.subr.mxu0 %v4180
    %5341 = vmatpush1.msra.mxu0 %v4179
    %5342 = vmatprep.subr.mxu0 %v4177
    %5343 = vmatpush1.msra.mxu0 %v4176
    %5344 = vmatprep.subr.mxu0 %v4174
    %5345 = vmatpush1.msra.mxu0 %v4173
    %5346 = vmatprep.subr.mxu0 0.0
    %5347 = vmatpush2.msra.mxu0 0.0
    %5348 = vmatprep.subr.mxu0 0.0
    %5349 = vmatpush2.msra.mxu0 0.0
    %5350 = vmatprep.subr.mxu0 0.0
    %5351 = vmatpush2.msra.mxu0 0.0
    %5352 = vmatprep.subr.mxu0 0.0
    %5353 = vmatpush2.msra.mxu0 0.0
    %5354 = vmatprep.subr.mxu0 0.0
    %5355 = vmatpush2.msra.mxu0 0.0
    %5356 = vmatprep.subr.mxu0 0.0
    %5357 = vmatpush2.msra.mxu0 0.0
    %5358 = vmatprep.subr.mxu0 0.0
    %5359 = vmatpush2.msra.mxu0 0.0
    %5360 = vmatprep.subr.mxu0 0.0
    %5361 = vmatpush2.msra.mxu0 0.0
    %5362 = vmatprep.subr.mxu0 0.0
    %5363 = vmatpush2.msra.mxu0 0.0
    %5364 = vmatprep.subr.mxu0 0.0
    %5365 = vmatpush2.msra.mxu0 0.0
    %5366 = vmatprep.subr.mxu0 0.0
    %5367 = vmatpush2.msra.mxu0 0.0
    %5368 = vmatprep.subr.mxu0 0.0
    %5369 = vmatpush2.msra.mxu0 0.0
    %5370 = vmatprep.subr.mxu0 0.0
    %5371 = vmatpush2.msra.mxu0 0.0
    %5372 = vmatprep.subr.mxu0 0.0
    %5373 = vmatpush2.msra.mxu0 0.0
    %5374 = vmatprep.subr.mxu0 0.0
    %5375 = vmatpush2.msra.mxu0 0.0
    %5376 = vmatprep.subr.mxu0 0.0
    %5377 = vmatpush2.msra.mxu0 0.0
    %5378 = vmatprep.mubr.f32.mxu0 0.0
    %5379 = vmatmul.mubr.f32.gmra.mxu0 %v5303
    %v5380 = vpop.f32.mrf.mxu0
    %v5381 = vadd.f32 %v4270, %v5380
    %v5382 = vpop.f32.mrf.mxu0
    %v5383 = vadd.f32 %v4274, %v5382
    %5384 = vdwg.mxu0
    %5385 = vmatprep.subr.mxu0 0.0
    %5386 = vmatpush1.msra.mxu0 %v4220
    %5387 = vmatprep.subr.mxu0 0.0
    %5388 = vmatpush1.msra.mxu0 %v4217
    %5389 = vmatprep.subr.mxu0 0.0
    %5390 = vmatpush1.msra.mxu0 %v4214
    %5391 = vmatprep.subr.mxu0 0.0
    %5392 = vmatpush1.msra.mxu0 %v4211
    %5393 = vmatprep.subr.mxu0 0.0
    %5394 = vmatpush1.msra.mxu0 %v4208
    %5395 = vmatprep.subr.mxu0 0.0
    %5396 = vmatpush1.msra.mxu0 %v4205
    %5397 = vmatprep.subr.mxu0 0.0
    %5398 = vmatpush1.msra.mxu0 %v4202
    %5399 = vmatprep.subr.mxu0 0.0
    %5400 = vmatpush1.msra.mxu0 %v4199
    %5401 = vmatprep.subr.mxu0 0.0
    %5402 = vmatpush1.msra.mxu0 %v4196
    %5403 = vmatprep.subr.mxu0 0.0
    %5404 = vmatpush1.msra.mxu0 %v4193
    %5405 = vmatprep.subr.mxu0 0.0
    %5406 = vmatpush1.msra.mxu0 %v4190
    %5407 = vmatprep.subr.mxu0 0.0
    %5408 = vmatpush1.msra.mxu0 %v4187
    %5409 = vmatprep.subr.mxu0 0.0
    %5410 = vmatpush1.msra.mxu0 %v4184
    %5411 = vmatprep.subr.mxu0 0.0
    %5412 = vmatpush1.msra.mxu0 %v4181
    %5413 = vmatprep.subr.mxu0 0.0
    %5414 = vmatpush1.msra.mxu0 %v4178
    %5415 = vmatprep.subr.mxu0 0.0
    %5416 = vmatpush1.msra.mxu0 %v4175
    %5417 = vmatprep.subr.mxu0 0.0
    %5418 = vmatpush2.msra.mxu0 0.0
    %5419 = vmatprep.subr.mxu0 0.0
    %5420 = vmatpush2.msra.mxu0 0.0
    %5421 = vmatprep.subr.mxu0 0.0
    %5422 = vmatpush2.msra.mxu0 0.0
    %5423 = vmatprep.subr.mxu0 0.0
    %5424 = vmatpush2.msra.mxu0 0.0
    %5425 = vmatprep.subr.mxu0 0.0
    %5426 = vmatpush2.msra.mxu0 0.0
    %5427 = vmatprep.subr.mxu0 0.0
    %5428 = vmatpush2.msra.mxu0 0.0
    %5429 = vmatprep.subr.mxu0 0.0
    %5430 = vmatpush2.msra.mxu0 0.0
    %5431 = vmatprep.subr.mxu0 0.0
    %5432 = vmatpush2.msra.mxu0 0.0
    %5433 = vmatprep.subr.mxu0 0.0
    %5434 = vmatpush2.msra.mxu0 0.0
    %5435 = vmatprep.subr.mxu0 0.0
    %5436 = vmatpush2.msra.mxu0 0.0
    %5437 = vmatprep.subr.mxu0 0.0
    %5438 = vmatpush2.msra.mxu0 0.0
    %5439 = vmatprep.subr.mxu0 0.0
    %5440 = vmatpush2.msra.mxu0 0.0
    %5441 = vmatprep.subr.mxu0 0.0
    %5442 = vmatpush2.msra.mxu0 0.0
    %5443 = vmatprep.subr.mxu0 0.0
    %5444 = vmatpush2.msra.mxu0 0.0
    %5445 = vmatprep.subr.mxu0 0.0
    %5446 = vmatpush2.msra.mxu0 0.0
    %5447 = vmatprep.subr.mxu0 0.0
    %5448 = vmatpush2.msra.mxu0 0.0
    %5449 = vmatprep.mubr.f32.mxu0 0.0
    %5450 = vmatmul.mubr.f32.gmra.mxu0 %v5303
    %v5451 = vpop.f32.mrf.mxu0
    %v5452 = vadd.f32 %v4278, %v5451
    %v5453 = vpop.f32.mrf.mxu0
    %5454 = vdwg.mxu0
    %v5455 = vadd.f32 %v5311, %v5381
    %v5456 = vxor.u32 %v5455, 2147483648
    %v5457 = vmul.f32 %v5456, 1.442695
    %v5458 = vpow.pop %v5457
    %v5459 = vadd.f32 %v5458, 1.0
    %v5460 = vrcp.pop %v5459
    %v5461 = vmul.f32 1.0, %v5460
    %v5462 = vadd.f32 %v5312, %v5383
    %v5463 = vxor.u32 %v5462, 2147483648
    %v5464 = vmul.f32 %v5463, 1.442695
    %v5465 = vpow.pop %v5464
    %v5466 = vadd.f32 %v5465, 1.0
    %v5467 = vrcp.pop %v5466
    %v5468 = vmul.f32 1.0, %v5467
    %v5469 = vmul.f32 %v5461, %v5452
    %v5470 = vadd.f32 %v5313, %v5469
    %v5471 = vtanh.pop %v5470
    %v5472 = vsub.f32 1.0, %v5468
    %v5473 = vmul.f32 %v5472, %v5471
    %v5474 = vmul.f32 %v5468, %v5303
    %v5475 = vadd.f32 %v5473, %v5474
    %5476 = vset.pattern.permute.xlu0 7
    %5477 = vperm.xlu0 %5476, %v4171
    %v5478 = vpop.permute.xlu0 %5477
    %v5480 = vmul.f32 %v5478, %v4232
    %v5481 = vmul.f32 %v5478, %v4236
    %v5482 = vmul.f32 %v5478, %v4240
    %v5483 = vadd.f32 %v5480, %v4251
    %v5484 = vadd.f32 %v5481, %v4255
    %v5485 = vadd.f32 %v5482, %v4259
    %5486 = vmatprep.subr.mxu0 %v4219
    %5487 = vmatpush1.msra.mxu0 %v4218
    %5488 = vmatprep.subr.mxu0 %v4216
    %5489 = vmatpush1.msra.mxu0 %v4215
    %5490 = vmatprep.subr.mxu0 %v4213
    %5491 = vmatpush1.msra.mxu0 %v4212
    %5492 = vmatprep.subr.mxu0 %v4210
    %5493 = vmatpush1.msra.mxu0 %v4209
    %5494 = vmatprep.subr.mxu0 %v4207
    %5495 = vmatpush1.msra.mxu0 %v4206
    %5496 = vmatprep.subr.mxu0 %v4204
    %5497 = vmatpush1.msra.mxu0 %v4203
    %5498 = vmatprep.subr.mxu0 %v4201
    %5499 = vmatpush1.msra.mxu0 %v4200
    %5500 = vmatprep.subr.mxu0 %v4198
    %5501 = vmatpush1.msra.mxu0 %v4197
    %5502 = vmatprep.subr.mxu0 %v4195
    %5503 = vmatpush1.msra.mxu0 %v4194
    %5504 = vmatprep.subr.mxu0 %v4192
    %5505 = vmatpush1.msra.mxu0 %v4191
    %5506 = vmatprep.subr.mxu0 %v4189
    %5507 = vmatpush1.msra.mxu0 %v4188
    %5508 = vmatprep.subr.mxu0 %v4186
    %5509 = vmatpush1.msra.mxu0 %v4185
    %5510 = vmatprep.subr.mxu0 %v4183
    %5511 = vmatpush1.msra.mxu0 %v4182
    %5512 = vmatprep.subr.mxu0 %v4180
    %5513 = vmatpush1.msra.mxu0 %v4179
    %5514 = vmatprep.subr.mxu0 %v4177
    %5515 = vmatpush1.msra.mxu0 %v4176
    %5516 = vmatprep.subr.mxu0 %v4174
    %5517 = vmatpush1.msra.mxu0 %v4173
    %5518 = vmatprep.subr.mxu0 0.0
    %5519 = vmatpush2.msra.mxu0 0.0
    %5520 = vmatprep.subr.mxu0 0.0
    %5521 = vmatpush2.msra.mxu0 0.0
    %5522 = vmatprep.subr.mxu0 0.0
    %5523 = vmatpush2.msra.mxu0 0.0
    %5524 = vmatprep.subr.mxu0 0.0
    %5525 = vmatpush2.msra.mxu0 0.0
    %5526 = vmatprep.subr.mxu0 0.0
    %5527 = vmatpush2.msra.mxu0 0.0
    %5528 = vmatprep.subr.mxu0 0.0
    %5529 = vmatpush2.msra.mxu0 0.0
    %5530 = vmatprep.subr.mxu0 0.0
    %5531 = vmatpush2.msra.mxu0 0.0
    %5532 = vmatprep.subr.mxu0 0.0
    %5533 = vmatpush2.msra.mxu0 0.0
    %5534 = vmatprep.subr.mxu0 0.0
    %5535 = vmatpush2.msra.mxu0 0.0
    %5536 = vmatprep.subr.mxu0 0.0
    %5537 = vmatpush2.msra.mxu0 0.0
    %5538 = vmatprep.subr.mxu0 0.0
    %5539 = vmatpush2.msra.mxu0 0.0
    %5540 = vmatprep.subr.mxu0 0.0
    %5541 = vmatpush2.msra.mxu0 0.0
    %5542 = vmatprep.subr.mxu0 0.0
    %5543 = vmatpush2.msra.mxu0 0.0
    %5544 = vmatprep.subr.mxu0 0.0
    %5545 = vmatpush2.msra.mxu0 0.0
    %5546 = vmatprep.subr.mxu0 0.0
    %5547 = vmatpush2.msra.mxu0 0.0
    %5548 = vmatprep.subr.mxu0 0.0
    %5549 = vmatpush2.msra.mxu0 0.0
    %5550 = vmatprep.mubr.f32.mxu0 0.0
    %5551 = vmatmul.mubr.f32.gmra.mxu0 %v5475
    %v5552 = vpop.f32.mrf.mxu0
    %v5553 = vadd.f32 %v4270, %v5552
    %v5554 = vpop.f32.mrf.mxu0
    %v5555 = vadd.f32 %v4274, %v5554
    %5556 = vdwg.mxu0
    %5557 = vmatprep.subr.mxu0 0.0
    %5558 = vmatpush1.msra.mxu0 %v4220
    %5559 = vmatprep.subr.mxu0 0.0
    %5560 = vmatpush1.msra.mxu0 %v4217
    %5561 = vmatprep.subr.mxu0 0.0
    %5562 = vmatpush1.msra.mxu0 %v4214
    %5563 = vmatprep.subr.mxu0 0.0
    %5564 = vmatpush1.msra.mxu0 %v4211
    %5565 = vmatprep.subr.mxu0 0.0
    %5566 = vmatpush1.msra.mxu0 %v4208
    %5567 = vmatprep.subr.mxu0 0.0
    %5568 = vmatpush1.msra.mxu0 %v4205
    %5569 = vmatprep.subr.mxu0 0.0
    %5570 = vmatpush1.msra.mxu0 %v4202
    %5571 = vmatprep.subr.mxu0 0.0
    %5572 = vmatpush1.msra.mxu0 %v4199
    %5573 = vmatprep.subr.mxu0 0.0
    %5574 = vmatpush1.msra.mxu0 %v4196
    %5575 = vmatprep.subr.mxu0 0.0
    %5576 = vmatpush1.msra.mxu0 %v4193
    %5577 = vmatprep.subr.mxu0 0.0
    %5578 = vmatpush1.msra.mxu0 %v4190
    %5579 = vmatprep.subr.mxu0 0.0
    %5580 = vmatpush1.msra.mxu0 %v4187
    %5581 = vmatprep.subr.mxu0 0.0
    %5582 = vmatpush1.msra.mxu0 %v4184
    %5583 = vmatprep.subr.mxu0 0.0
    %5584 = vmatpush1.msra.mxu0 %v4181
    %5585 = vmatprep.subr.mxu0 0.0
    %5586 = vmatpush1.msra.mxu0 %v4178
    %5587 = vmatprep.subr.mxu0 0.0
    %5588 = vmatpush1.msra.mxu0 %v4175
    %5589 = vmatprep.subr.mxu0 0.0
    %5590 = vmatpush2.msra.mxu0 0.0
    %5591 = vmatprep.subr.mxu0 0.0
    %5592 = vmatpush2.msra.mxu0 0.0
    %5593 = vmatprep.subr.mxu0 0.0
    %5594 = vmatpush2.msra.mxu0 0.0
    %5595 = vmatprep.subr.mxu0 0.0
    %5596 = vmatpush2.msra.mxu0 0.0
    %5597 = vmatprep.subr.mxu0 0.0
    %5598 = vmatpush2.msra.mxu0 0.0
    %5599 = vmatprep.subr.mxu0 0.0
    %5600 = vmatpush2.msra.mxu0 0.0
    %5601 = vmatprep.subr.mxu0 0.0
    %5602 = vmatpush2.msra.mxu0 0.0
    %5603 = vmatprep.subr.mxu0 0.0
    %5604 = vmatpush2.msra.mxu0 0.0
    %5605 = vmatprep.subr.mxu0 0.0
    %5606 = vmatpush2.msra.mxu0 0.0
    %5607 = vmatprep.subr.mxu0 0.0
    %5608 = vmatpush2.msra.mxu0 0.0
    %5609 = vmatprep.subr.mxu0 0.0
    %5610 = vmatpush2.msra.mxu0 0.0
    %5611 = vmatprep.subr.mxu0 0.0
    %5612 = vmatpush2.msra.mxu0 0.0
    %5613 = vmatprep.subr.mxu0 0.0
    %5614 = vmatpush2.msra.mxu0 0.0
    %5615 = vmatprep.subr.mxu0 0.0
    %5616 = vmatpush2.msra.mxu0 0.0
    %5617 = vmatprep.subr.mxu0 0.0
    %5618 = vmatpush2.msra.mxu0 0.0
    %5619 = vmatprep.subr.mxu0 0.0
    %5620 = vmatpush2.msra.mxu0 0.0
    %5621 = vmatprep.mubr.f32.mxu0 0.0
    %5622 = vmatmul.mubr.f32.gmra.mxu0 %v5475
    %v5623 = vpop.f32.mrf.mxu0
    %v5624 = vadd.f32 %v4278, %v5623
    %v5625 = vpop.f32.mrf.mxu0
    %5626 = vdwg.mxu0
    %v5627 = vadd.f32 %v5483, %v5553
    %v5628 = vxor.u32 %v5627, 2147483648
    %v5629 = vmul.f32 %v5628, 1.442695
    %v5630 = vpow.pop %v5629
    %v5631 = vadd.f32 %v5630, 1.0
    %v5632 = vrcp.pop %v5631
    %v5633 = vmul.f32 1.0, %v5632
    %v5634 = vadd.f32 %v5484, %v5555
    %v5635 = vxor.u32 %v5634, 2147483648
    %v5636 = vmul.f32 %v5635, 1.442695
    %v5637 = vpow.pop %v5636
    %v5638 = vadd.f32 %v5637, 1.0
    %v5639 = vrcp.pop %v5638
    %v5640 = vmul.f32 1.0, %v5639
    %v5641 = vmul.f32 %v5633, %v5624
    %v5642 = vadd.f32 %v5485, %v5641
    %v5643 = vtanh.pop %v5642
    %v5644 = vsub.f32 1.0, %v5640
    %v5645 = vmul.f32 %v5644, %v5643
    %v5646 = vmul.f32 %v5640, %v5475
    %v5647 = vadd.f32 %v5645, %v5646
    %5648 = vset.pattern.permute.xlu0 8
    %5649 = vperm.xlu0 %5648, %v4171
    %v5650 = vpop.permute.xlu0 %5649
    %v5652 = vmul.f32 %v5650, %v4232
    %v5653 = vmul.f32 %v5650, %v4236
    %v5654 = vmul.f32 %v5650, %v4240
    %v5655 = vadd.f32 %v5652, %v4251
    %v5656 = vadd.f32 %v5653, %v4255
    %v5657 = vadd.f32 %v5654, %v4259
    %5658 = vmatprep.subr.mxu0 %v4219
    %5659 = vmatpush1.msra.mxu0 %v4218
    %5660 = vmatprep.subr.mxu0 %v4216
    %5661 = vmatpush1.msra.mxu0 %v4215
    %5662 = vmatprep.subr.mxu0 %v4213
    %5663 = vmatpush1.msra.mxu0 %v4212
    %5664 = vmatprep.subr.mxu0 %v4210
    %5665 = vmatpush1.msra.mxu0 %v4209
    %5666 = vmatprep.subr.mxu0 %v4207
    %5667 = vmatpush1.msra.mxu0 %v4206
    %5668 = vmatprep.subr.mxu0 %v4204
    %5669 = vmatpush1.msra.mxu0 %v4203
    %5670 = vmatprep.subr.mxu0 %v4201
    %5671 = vmatpush1.msra.mxu0 %v4200
    %5672 = vmatprep.subr.mxu0 %v4198
    %5673 = vmatpush1.msra.mxu0 %v4197
    %5674 = vmatprep.subr.mxu0 %v4195
    %5675 = vmatpush1.msra.mxu0 %v4194
    %5676 = vmatprep.subr.mxu0 %v4192
    %5677 = vmatpush1.msra.mxu0 %v4191
    %5678 = vmatprep.subr.mxu0 %v4189
    %5679 = vmatpush1.msra.mxu0 %v4188
    %5680 = vmatprep.subr.mxu0 %v4186
    %5681 = vmatpush1.msra.mxu0 %v4185
    %5682 = vmatprep.subr.mxu0 %v4183
    %5683 = vmatpush1.msra.mxu0 %v4182
    %5684 = vmatprep.subr.mxu0 %v4180
    %5685 = vmatpush1.msra.mxu0 %v4179
    %5686 = vmatprep.subr.mxu0 %v4177
    %5687 = vmatpush1.msra.mxu0 %v4176
    %5688 = vmatprep.subr.mxu0 %v4174
    %5689 = vmatpush1.msra.mxu0 %v4173
    %5690 = vmatprep.subr.mxu0 0.0
    %5691 = vmatpush2.msra.mxu0 0.0
    %5692 = vmatprep.subr.mxu0 0.0
    %5693 = vmatpush2.msra.mxu0 0.0
    %5694 = vmatprep.subr.mxu0 0.0
    %5695 = vmatpush2.msra.mxu0 0.0
    %5696 = vmatprep.subr.mxu0 0.0
    %5697 = vmatpush2.msra.mxu0 0.0
    %5698 = vmatprep.subr.mxu0 0.0
    %5699 = vmatpush2.msra.mxu0 0.0
    %5700 = vmatprep.subr.mxu0 0.0
    %5701 = vmatpush2.msra.mxu0 0.0
    %5702 = vmatprep.subr.mxu0 0.0
    %5703 = vmatpush2.msra.mxu0 0.0
    %5704 = vmatprep.subr.mxu0 0.0
    %5705 = vmatpush2.msra.mxu0 0.0
    %5706 = vmatprep.subr.mxu0 0.0
    %5707 = vmatpush2.msra.mxu0 0.0
    %5708 = vmatprep.subr.mxu0 0.0
    %5709 = vmatpush2.msra.mxu0 0.0
    %5710 = vmatprep.subr.mxu0 0.0
    %5711 = vmatpush2.msra.mxu0 0.0
    %5712 = vmatprep.subr.mxu0 0.0
    %5713 = vmatpush2.msra.mxu0 0.0
    %5714 = vmatprep.subr.mxu0 0.0
    %5715 = vmatpush2.msra.mxu0 0.0
    %5716 = vmatprep.subr.mxu0 0.0
    %5717 = vmatpush2.msra.mxu0 0.0
    %5718 = vmatprep.subr.mxu0 0.0
    %5719 = vmatpush2.msra.mxu0 0.0
    %5720 = vmatprep.subr.mxu0 0.0
    %5721 = vmatpush2.msra.mxu0 0.0
    %5722 = vmatprep.mubr.f32.mxu0 0.0
    %5723 = vmatmul.mubr.f32.gmra.mxu0 %v5647
    %v5724 = vpop.f32.mrf.mxu0
    %v5725 = vadd.f32 %v4270, %v5724
    %v5726 = vpop.f32.mrf.mxu0
    %v5727 = vadd.f32 %v4274, %v5726
    %5728 = vdwg.mxu0
    %5729 = vmatprep.subr.mxu0 0.0
    %5730 = vmatpush1.msra.mxu0 %v4220
    %5731 = vmatprep.subr.mxu0 0.0
    %5732 = vmatpush1.msra.mxu0 %v4217
    %5733 = vmatprep.subr.mxu0 0.0
    %5734 = vmatpush1.msra.mxu0 %v4214
    %5735 = vmatprep.subr.mxu0 0.0
    %5736 = vmatpush1.msra.mxu0 %v4211
    %5737 = vmatprep.subr.mxu0 0.0
    %5738 = vmatpush1.msra.mxu0 %v4208
    %5739 = vmatprep.subr.mxu0 0.0
    %5740 = vmatpush1.msra.mxu0 %v4205
    %5741 = vmatprep.subr.mxu0 0.0
    %5742 = vmatpush1.msra.mxu0 %v4202
    %5743 = vmatprep.subr.mxu0 0.0
    %5744 = vmatpush1.msra.mxu0 %v4199
    %5745 = vmatprep.subr.mxu0 0.0
    %5746 = vmatpush1.msra.mxu0 %v4196
    %5747 = vmatprep.subr.mxu0 0.0
    %5748 = vmatpush1.msra.mxu0 %v4193
    %5749 = vmatprep.subr.mxu0 0.0
    %5750 = vmatpush1.msra.mxu0 %v4190
    %5751 = vmatprep.subr.mxu0 0.0
    %5752 = vmatpush1.msra.mxu0 %v4187
    %5753 = vmatprep.subr.mxu0 0.0
    %5754 = vmatpush1.msra.mxu0 %v4184
    %5755 = vmatprep.subr.mxu0 0.0
    %5756 = vmatpush1.msra.mxu0 %v4181
    %5757 = vmatprep.subr.mxu0 0.0
    %5758 = vmatpush1.msra.mxu0 %v4178
    %5759 = vmatprep.subr.mxu0 0.0
    %5760 = vmatpush1.msra.mxu0 %v4175
    %5761 = vmatprep.subr.mxu0 0.0
    %5762 = vmatpush2.msra.mxu0 0.0
    %5763 = vmatprep.subr.mxu0 0.0
    %5764 = vmatpush2.msra.mxu0 0.0
    %5765 = vmatprep.subr.mxu0 0.0
    %5766 = vmatpush2.msra.mxu0 0.0
    %5767 = vmatprep.subr.mxu0 0.0
    %5768 = vmatpush2.msra.mxu0 0.0
    %5769 = vmatprep.subr.mxu0 0.0
    %5770 = vmatpush2.msra.mxu0 0.0
    %5771 = vmatprep.subr.mxu0 0.0
    %5772 = vmatpush2.msra.mxu0 0.0
    %5773 = vmatprep.subr.mxu0 0.0
    %5774 = vmatpush2.msra.mxu0 0.0
    %5775 = vmatprep.subr.mxu0 0.0
    %5776 = vmatpush2.msra.mxu0 0.0
    %5777 = vmatprep.subr.mxu0 0.0
    %5778 = vmatpush2.msra.mxu0 0.0
    %5779 = vmatprep.subr.mxu0 0.0
    %5780 = vmatpush2.msra.mxu0 0.0
    %5781 = vmatprep.subr.mxu0 0.0
    %5782 = vmatpush2.msra.mxu0 0.0
    %5783 = vmatprep.subr.mxu0 0.0
    %5784 = vmatpush2.msra.mxu0 0.0
    %5785 = vmatprep.subr.mxu0 0.0
    %5786 = vmatpush2.msra.mxu0 0.0
    %5787 = vmatprep.subr.mxu0 0.0
    %5788 = vmatpush2.msra.mxu0 0.0
    %5789 = vmatprep.subr.mxu0 0.0
    %5790 = vmatpush2.msra.mxu0 0.0
    %5791 = vmatprep.subr.mxu0 0.0
    %5792 = vmatpush2.msra.mxu0 0.0
    %5793 = vmatprep.mubr.f32.mxu0 0.0
    %5794 = vmatmul.mubr.f32.gmra.mxu0 %v5647
    %v5795 = vpop.f32.mrf.mxu0
    %v5796 = vadd.f32 %v4278, %v5795
    %v5797 = vpop.f32.mrf.mxu0
    %5798 = vdwg.mxu0
    %v5799 = vadd.f32 %v5655, %v5725
    %v5800 = vxor.u32 %v5799, 2147483648
    %v5801 = vmul.f32 %v5800, 1.442695
    %v5802 = vpow.pop %v5801
    %v5803 = vadd.f32 %v5802, 1.0
    %v5804 = vrcp.pop %v5803
    %v5805 = vmul.f32 1.0, %v5804
    %v5806 = vadd.f32 %v5656, %v5727
    %v5807 = vxor.u32 %v5806, 2147483648
    %v5808 = vmul.f32 %v5807, 1.442695
    %v5809 = vpow.pop %v5808
    %v5810 = vadd.f32 %v5809, 1.0
    %v5811 = vrcp.pop %v5810
    %v5812 = vmul.f32 1.0, %v5811
    %v5813 = vmul.f32 %v5805, %v5796
    %v5814 = vadd.f32 %v5657, %v5813
    %v5815 = vtanh.pop %v5814
    %v5816 = vsub.f32 1.0, %v5812
    %v5817 = vmul.f32 %v5816, %v5815
    %v5818 = vmul.f32 %v5812, %v5647
    %v5819 = vadd.f32 %v5817, %v5818
    %5820 = vset.pattern.permute.xlu0 9
    %5821 = vperm.xlu0 %5820, %v4171
    %v5822 = vpop.permute.xlu0 %5821
    %v5824 = vmul.f32 %v5822, %v4232
    %v5825 = vmul.f32 %v5822, %v4236
    %v5826 = vmul.f32 %v5822, %v4240
    %v5827 = vadd.f32 %v5824, %v4251
    %v5828 = vadd.f32 %v5825, %v4255
    %v5829 = vadd.f32 %v5826, %v4259
    %5830 = vmatprep.subr.mxu0 %v4219
    %5831 = vmatpush1.msra.mxu0 %v4218
    %5832 = vmatprep.subr.mxu0 %v4216
    %5833 = vmatpush1.msra.mxu0 %v4215
    %5834 = vmatprep.subr.mxu0 %v4213
    %5835 = vmatpush1.msra.mxu0 %v4212
    %5836 = vmatprep.subr.mxu0 %v4210
    %5837 = vmatpush1.msra.mxu0 %v4209
    %5838 = vmatprep.subr.mxu0 %v4207
    %5839 = vmatpush1.msra.mxu0 %v4206
    %5840 = vmatprep.subr.mxu0 %v4204
    %5841 = vmatpush1.msra.mxu0 %v4203
    %5842 = vmatprep.subr.mxu0 %v4201
    %5843 = vmatpush1.msra.mxu0 %v4200
    %5844 = vmatprep.subr.mxu0 %v4198
    %5845 = vmatpush1.msra.mxu0 %v4197
    %5846 = vmatprep.subr.mxu0 %v4195
    %5847 = vmatpush1.msra.mxu0 %v4194
    %5848 = vmatprep.subr.mxu0 %v4192
    %5849 = vmatpush1.msra.mxu0 %v4191
    %5850 = vmatprep.subr.mxu0 %v4189
    %5851 = vmatpush1.msra.mxu0 %v4188
    %5852 = vmatprep.subr.mxu0 %v4186
    %5853 = vmatpush1.msra.mxu0 %v4185
    %5854 = vmatprep.subr.mxu0 %v4183
    %5855 = vmatpush1.msra.mxu0 %v4182
    %5856 = vmatprep.subr.mxu0 %v4180
    %5857 = vmatpush1.msra.mxu0 %v4179
    %5858 = vmatprep.subr.mxu0 %v4177
    %5859 = vmatpush1.msra.mxu0 %v4176
    %5860 = vmatprep.subr.mxu0 %v4174
    %5861 = vmatpush1.msra.mxu0 %v4173
    %5862 = vmatprep.subr.mxu0 0.0
    %5863 = vmatpush2.msra.mxu0 0.0
    %5864 = vmatprep.subr.mxu0 0.0
    %5865 = vmatpush2.msra.mxu0 0.0
    %5866 = vmatprep.subr.mxu0 0.0
    %5867 = vmatpush2.msra.mxu0 0.0
    %5868 = vmatprep.subr.mxu0 0.0
    %5869 = vmatpush2.msra.mxu0 0.0
    %5870 = vmatprep.subr.mxu0 0.0
    %5871 = vmatpush2.msra.mxu0 0.0
    %5872 = vmatprep.subr.mxu0 0.0
    %5873 = vmatpush2.msra.mxu0 0.0
    %5874 = vmatprep.subr.mxu0 0.0
    %5875 = vmatpush2.msra.mxu0 0.0
    %5876 = vmatprep.subr.mxu0 0.0
    %5877 = vmatpush2.msra.mxu0 0.0
    %5878 = vmatprep.subr.mxu0 0.0
    %5879 = vmatpush2.msra.mxu0 0.0
    %5880 = vmatprep.subr.mxu0 0.0
    %5881 = vmatpush2.msra.mxu0 0.0
    %5882 = vmatprep.subr.mxu0 0.0
    %5883 = vmatpush2.msra.mxu0 0.0
    %5884 = vmatprep.subr.mxu0 0.0
    %5885 = vmatpush2.msra.mxu0 0.0
    %5886 = vmatprep.subr.mxu0 0.0
    %5887 = vmatpush2.msra.mxu0 0.0
    %5888 = vmatprep.subr.mxu0 0.0
    %5889 = vmatpush2.msra.mxu0 0.0
    %5890 = vmatprep.subr.mxu0 0.0
    %5891 = vmatpush2.msra.mxu0 0.0
    %5892 = vmatprep.subr.mxu0 0.0
    %5893 = vmatpush2.msra.mxu0 0.0
    %5894 = vmatprep.mubr.f32.mxu0 0.0
    %5895 = vmatmul.mubr.f32.gmra.mxu0 %v5819
    %v5896 = vpop.f32.mrf.mxu0
    %v5897 = vadd.f32 %v4270, %v5896
    %v5898 = vpop.f32.mrf.mxu0
    %v5899 = vadd.f32 %v4274, %v5898
    %5900 = vdwg.mxu0
    %5901 = vmatprep.subr.mxu0 0.0
    %5902 = vmatpush1.msra.mxu0 %v4220
    %5903 = vmatprep.subr.mxu0 0.0
    %5904 = vmatpush1.msra.mxu0 %v4217
    %5905 = vmatprep.subr.mxu0 0.0
    %5906 = vmatpush1.msra.mxu0 %v4214
    %5907 = vmatprep.subr.mxu0 0.0
    %5908 = vmatpush1.msra.mxu0 %v4211
    %5909 = vmatprep.subr.mxu0 0.0
    %5910 = vmatpush1.msra.mxu0 %v4208
    %5911 = vmatprep.subr.mxu0 0.0
    %5912 = vmatpush1.msra.mxu0 %v4205
    %5913 = vmatprep.subr.mxu0 0.0
    %5914 = vmatpush1.msra.mxu0 %v4202
    %5915 = vmatprep.subr.mxu0 0.0
    %5916 = vmatpush1.msra.mxu0 %v4199
    %5917 = vmatprep.subr.mxu0 0.0
    %5918 = vmatpush1.msra.mxu0 %v4196
    %5919 = vmatprep.subr.mxu0 0.0
    %5920 = vmatpush1.msra.mxu0 %v4193
    %5921 = vmatprep.subr.mxu0 0.0
    %5922 = vmatpush1.msra.mxu0 %v4190
    %5923 = vmatprep.subr.mxu0 0.0
    %5924 = vmatpush1.msra.mxu0 %v4187
    %5925 = vmatprep.subr.mxu0 0.0
    %5926 = vmatpush1.msra.mxu0 %v4184
    %5927 = vmatprep.subr.mxu0 0.0
    %5928 = vmatpush1.msra.mxu0 %v4181
    %5929 = vmatprep.subr.mxu0 0.0
    %5930 = vmatpush1.msra.mxu0 %v4178
    %5931 = vmatprep.subr.mxu0 0.0
    %5932 = vmatpush1.msra.mxu0 %v4175
    %5933 = vmatprep.subr.mxu0 0.0
    %5934 = vmatpush2.msra.mxu0 0.0
    %5935 = vmatprep.subr.mxu0 0.0
    %5936 = vmatpush2.msra.mxu0 0.0
    %5937 = vmatprep.subr.mxu0 0.0
    %5938 = vmatpush2.msra.mxu0 0.0
    %5939 = vmatprep.subr.mxu0 0.0
    %5940 = vmatpush2.msra.mxu0 0.0
    %5941 = vmatprep.subr.mxu0 0.0
    %5942 = vmatpush2.msra.mxu0 0.0
    %5943 = vmatprep.subr.mxu0 0.0
    %5944 = vmatpush2.msra.mxu0 0.0
    %5945 = vmatprep.subr.mxu0 0.0
    %5946 = vmatpush2.msra.mxu0 0.0
    %5947 = vmatprep.subr.mxu0 0.0
    %5948 = vmatpush2.msra.mxu0 0.0
    %5949 = vmatprep.subr.mxu0 0.0
    %5950 = vmatpush2.msra.mxu0 0.0
    %5951 = vmatprep.subr.mxu0 0.0
    %5952 = vmatpush2.msra.mxu0 0.0
    %5953 = vmatprep.subr.mxu0 0.0
    %5954 = vmatpush2.msra.mxu0 0.0
    %5955 = vmatprep.subr.mxu0 0.0
    %5956 = vmatpush2.msra.mxu0 0.0
    %5957 = vmatprep.subr.mxu0 0.0
    %5958 = vmatpush2.msra.mxu0 0.0
    %5959 = vmatprep.subr.mxu0 0.0
    %5960 = vmatpush2.msra.mxu0 0.0
    %5961 = vmatprep.subr.mxu0 0.0
    %5962 = vmatpush2.msra.mxu0 0.0
    %5963 = vmatprep.subr.mxu0 0.0
    %5964 = vmatpush2.msra.mxu0 0.0
    %5965 = vmatprep.mubr.f32.mxu0 0.0
    %5966 = vmatmul.mubr.f32.gmra.mxu0 %v5819
    %v5967 = vpop.f32.mrf.mxu0
    %v5968 = vadd.f32 %v4278, %v5967
    %v5969 = vpop.f32.mrf.mxu0
    %5970 = vdwg.mxu0
    %v5971 = vadd.f32 %v5827, %v5897
    %v5972 = vxor.u32 %v5971, 2147483648
    %v5973 = vmul.f32 %v5972, 1.442695
    %v5974 = vpow.pop %v5973
    %v5975 = vadd.f32 %v5974, 1.0
    %v5976 = vrcp.pop %v5975
    %v5977 = vmul.f32 1.0, %v5976
    %v5978 = vadd.f32 %v5828, %v5899
    %v5979 = vxor.u32 %v5978, 2147483648
    %v5980 = vmul.f32 %v5979, 1.442695
    %v5981 = vpow.pop %v5980
    %v5982 = vadd.f32 %v5981, 1.0
    %v5983 = vrcp.pop %v5982
    %v5984 = vmul.f32 1.0, %v5983
    %v5985 = vmul.f32 %v5977, %v5968
    %v5986 = vadd.f32 %v5829, %v5985
    %v5987 = vtanh.pop %v5986
    %v5988 = vsub.f32 1.0, %v5984
    %v5989 = vmul.f32 %v5988, %v5987
    %v5990 = vmul.f32 %v5984, %v5819
    %v5991 = vadd.f32 %v5989, %v5990
    %5992 = vset.pattern.permute.xlu0 10
    %5993 = vperm.xlu0 %5992, %v4171
    %v5994 = vpop.permute.xlu0 %5993
    %v5996 = vmul.f32 %v5994, %v4232
    %v5997 = vmul.f32 %v5994, %v4236
    %v5998 = vmul.f32 %v5994, %v4240
    %v5999 = vadd.f32 %v5996, %v4251
    %v6000 = vadd.f32 %v5997, %v4255
    %v6001 = vadd.f32 %v5998, %v4259
    %6002 = vmatprep.subr.mxu0 %v4219
    %6003 = vmatpush1.msra.mxu0 %v4218
    %6004 = vmatprep.subr.mxu0 %v4216
    %6005 = vmatpush1.msra.mxu0 %v4215
    %6006 = vmatprep.subr.mxu0 %v4213
    %6007 = vmatpush1.msra.mxu0 %v4212
    %6008 = vmatprep.subr.mxu0 %v4210
    %6009 = vmatpush1.msra.mxu0 %v4209
    %6010 = vmatprep.subr.mxu0 %v4207
    %6011 = vmatpush1.msra.mxu0 %v4206
    %6012 = vmatprep.subr.mxu0 %v4204
    %6013 = vmatpush1.msra.mxu0 %v4203
    %6014 = vmatprep.subr.mxu0 %v4201
    %6015 = vmatpush1.msra.mxu0 %v4200
    %6016 = vmatprep.subr.mxu0 %v4198
    %6017 = vmatpush1.msra.mxu0 %v4197
    %6018 = vmatprep.subr.mxu0 %v4195
    %6019 = vmatpush1.msra.mxu0 %v4194
    %6020 = vmatprep.subr.mxu0 %v4192
    %6021 = vmatpush1.msra.mxu0 %v4191
    %6022 = vmatprep.subr.mxu0 %v4189
    %6023 = vmatpush1.msra.mxu0 %v4188
    %6024 = vmatprep.subr.mxu0 %v4186
    %6025 = vmatpush1.msra.mxu0 %v4185
    %6026 = vmatprep.subr.mxu0 %v4183
    %6027 = vmatpush1.msra.mxu0 %v4182
    %6028 = vmatprep.subr.mxu0 %v4180
    %6029 = vmatpush1.msra.mxu0 %v4179
    %6030 = vmatprep.subr.mxu0 %v4177
    %6031 = vmatpush1.msra.mxu0 %v4176
    %6032 = vmatprep.subr.mxu0 %v4174
    %6033 = vmatpush1.msra.mxu0 %v4173
    %6034 = vmatprep.subr.mxu0 0.0
    %6035 = vmatpush2.msra.mxu0 0.0
    %6036 = vmatprep.subr.mxu0 0.0
    %6037 = vmatpush2.msra.mxu0 0.0
    %6038 = vmatprep.subr.mxu0 0.0
    %6039 = vmatpush2.msra.mxu0 0.0
    %6040 = vmatprep.subr.mxu0 0.0
    %6041 = vmatpush2.msra.mxu0 0.0
    %6042 = vmatprep.subr.mxu0 0.0
    %6043 = vmatpush2.msra.mxu0 0.0
    %6044 = vmatprep.subr.mxu0 0.0
    %6045 = vmatpush2.msra.mxu0 0.0
    %6046 = vmatprep.subr.mxu0 0.0
    %6047 = vmatpush2.msra.mxu0 0.0
    %6048 = vmatprep.subr.mxu0 0.0
    %6049 = vmatpush2.msra.mxu0 0.0
    %6050 = vmatprep.subr.mxu0 0.0
    %6051 = vmatpush2.msra.mxu0 0.0
    %6052 = vmatprep.subr.mxu0 0.0
    %6053 = vmatpush2.msra.mxu0 0.0
    %6054 = vmatprep.subr.mxu0 0.0
    %6055 = vmatpush2.msra.mxu0 0.0
    %6056 = vmatprep.subr.mxu0 0.0
    %6057 = vmatpush2.msra.mxu0 0.0
    %6058 = vmatprep.subr.mxu0 0.0
    %6059 = vmatpush2.msra.mxu0 0.0
    %6060 = vmatprep.subr.mxu0 0.0
    %6061 = vmatpush2.msra.mxu0 0.0
    %6062 = vmatprep.subr.mxu0 0.0
    %6063 = vmatpush2.msra.mxu0 0.0
    %6064 = vmatprep.subr.mxu0 0.0
    %6065 = vmatpush2.msra.mxu0 0.0
    %6066 = vmatprep.mubr.f32.mxu0 0.0
    %6067 = vmatmul.mubr.f32.gmra.mxu0 %v5991
    %v6068 = vpop.f32.mrf.mxu0
    %v6069 = vadd.f32 %v4270, %v6068
    %v6070 = vpop.f32.mrf.mxu0
    %v6071 = vadd.f32 %v4274, %v6070
    %6072 = vdwg.mxu0
    %6073 = vmatprep.subr.mxu0 0.0
    %6074 = vmatpush1.msra.mxu0 %v4220
    %6075 = vmatprep.subr.mxu0 0.0
    %6076 = vmatpush1.msra.mxu0 %v4217
    %6077 = vmatprep.subr.mxu0 0.0
    %6078 = vmatpush1.msra.mxu0 %v4214
    %6079 = vmatprep.subr.mxu0 0.0
    %6080 = vmatpush1.msra.mxu0 %v4211
    %6081 = vmatprep.subr.mxu0 0.0
    %6082 = vmatpush1.msra.mxu0 %v4208
    %6083 = vmatprep.subr.mxu0 0.0
    %6084 = vmatpush1.msra.mxu0 %v4205
    %6085 = vmatprep.subr.mxu0 0.0
    %6086 = vmatpush1.msra.mxu0 %v4202
    %6087 = vmatprep.subr.mxu0 0.0
    %6088 = vmatpush1.msra.mxu0 %v4199
    %6089 = vmatprep.subr.mxu0 0.0
    %6090 = vmatpush1.msra.mxu0 %v4196
    %6091 = vmatprep.subr.mxu0 0.0
    %6092 = vmatpush1.msra.mxu0 %v4193
    %6093 = vmatprep.subr.mxu0 0.0
    %6094 = vmatpush1.msra.mxu0 %v4190
    %6095 = vmatprep.subr.mxu0 0.0
    %6096 = vmatpush1.msra.mxu0 %v4187
    %6097 = vmatprep.subr.mxu0 0.0
    %6098 = vmatpush1.msra.mxu0 %v4184
    %6099 = vmatprep.subr.mxu0 0.0
    %6100 = vmatpush1.msra.mxu0 %v4181
    %6101 = vmatprep.subr.mxu0 0.0
    %6102 = vmatpush1.msra.mxu0 %v4178
    %6103 = vmatprep.subr.mxu0 0.0
    %6104 = vmatpush1.msra.mxu0 %v4175
    %6105 = vmatprep.subr.mxu0 0.0
    %6106 = vmatpush2.msra.mxu0 0.0
    %6107 = vmatprep.subr.mxu0 0.0
    %6108 = vmatpush2.msra.mxu0 0.0
    %6109 = vmatprep.subr.mxu0 0.0
    %6110 = vmatpush2.msra.mxu0 0.0
    %6111 = vmatprep.subr.mxu0 0.0
    %6112 = vmatpush2.msra.mxu0 0.0
    %6113 = vmatprep.subr.mxu0 0.0
    %6114 = vmatpush2.msra.mxu0 0.0
    %6115 = vmatprep.subr.mxu0 0.0
    %6116 = vmatpush2.msra.mxu0 0.0
    %6117 = vmatprep.subr.mxu0 0.0
    %6118 = vmatpush2.msra.mxu0 0.0
    %6119 = vmatprep.subr.mxu0 0.0
    %6120 = vmatpush2.msra.mxu0 0.0
    %6121 = vmatprep.subr.mxu0 0.0
    %6122 = vmatpush2.msra.mxu0 0.0
    %6123 = vmatprep.subr.mxu0 0.0
    %6124 = vmatpush2.msra.mxu0 0.0
    %6125 = vmatprep.subr.mxu0 0.0
    %6126 = vmatpush2.msra.mxu0 0.0
    %6127 = vmatprep.subr.mxu0 0.0
    %6128 = vmatpush2.msra.mxu0 0.0
    %6129 = vmatprep.subr.mxu0 0.0
    %6130 = vmatpush2.msra.mxu0 0.0
    %6131 = vmatprep.subr.mxu0 0.0
    %6132 = vmatpush2.msra.mxu0 0.0
    %6133 = vmatprep.subr.mxu0 0.0
    %6134 = vmatpush2.msra.mxu0 0.0
    %6135 = vmatprep.subr.mxu0 0.0
    %6136 = vmatpush2.msra.mxu0 0.0
    %6137 = vmatprep.mubr.f32.mxu0 0.0
    %6138 = vmatmul.mubr.f32.gmra.mxu0 %v5991
    %v6139 = vpop.f32.mrf.mxu0
    %v6140 = vadd.f32 %v4278, %v6139
    %v6141 = vpop.f32.mrf.mxu0
    %6142 = vdwg.mxu0
    %v6143 = vadd.f32 %v5999, %v6069
    %v6144 = vxor.u32 %v6143, 2147483648
    %v6145 = vmul.f32 %v6144, 1.442695
    %v6146 = vpow.pop %v6145
    %v6147 = vadd.f32 %v6146, 1.0
    %v6148 = vrcp.pop %v6147
    %v6149 = vmul.f32 1.0, %v6148
    %v6150 = vadd.f32 %v6000, %v6071
    %v6151 = vxor.u32 %v6150, 2147483648
    %v6152 = vmul.f32 %v6151, 1.442695
    %v6153 = vpow.pop %v6152
    %v6154 = vadd.f32 %v6153, 1.0
    %v6155 = vrcp.pop %v6154
    %v6156 = vmul.f32 1.0, %v6155
    %v6157 = vmul.f32 %v6149, %v6140
    %v6158 = vadd.f32 %v6001, %v6157
    %v6159 = vtanh.pop %v6158
    %v6160 = vsub.f32 1.0, %v6156
    %v6161 = vmul.f32 %v6160, %v6159
    %v6162 = vmul.f32 %v6156, %v5991
    %v6163 = vadd.f32 %v6161, %v6162
    %6164 = vset.pattern.permute.xlu0 11
    %6165 = vperm.xlu0 %6164, %v4171
    %v6166 = vpop.permute.xlu0 %6165
    %v6168 = vmul.f32 %v6166, %v4232
    %v6169 = vmul.f32 %v6166, %v4236
    %v6170 = vmul.f32 %v6166, %v4240
    %v6171 = vadd.f32 %v6168, %v4251
    %v6172 = vadd.f32 %v6169, %v4255
    %v6173 = vadd.f32 %v6170, %v4259
    %6174 = vmatprep.subr.mxu0 %v4219
    %6175 = vmatpush1.msra.mxu0 %v4218
    %6176 = vmatprep.subr.mxu0 %v4216
    %6177 = vmatpush1.msra.mxu0 %v4215
    %6178 = vmatprep.subr.mxu0 %v4213
    %6179 = vmatpush1.msra.mxu0 %v4212
    %6180 = vmatprep.subr.mxu0 %v4210
    %6181 = vmatpush1.msra.mxu0 %v4209
    %6182 = vmatprep.subr.mxu0 %v4207
    %6183 = vmatpush1.msra.mxu0 %v4206
    %6184 = vmatprep.subr.mxu0 %v4204
    %6185 = vmatpush1.msra.mxu0 %v4203
    %6186 = vmatprep.subr.mxu0 %v4201
    %6187 = vmatpush1.msra.mxu0 %v4200
    %6188 = vmatprep.subr.mxu0 %v4198
    %6189 = vmatpush1.msra.mxu0 %v4197
    %6190 = vmatprep.subr.mxu0 %v4195
    %6191 = vmatpush1.msra.mxu0 %v4194
    %6192 = vmatprep.subr.mxu0 %v4192
    %6193 = vmatpush1.msra.mxu0 %v4191
    %6194 = vmatprep.subr.mxu0 %v4189
    %6195 = vmatpush1.msra.mxu0 %v4188
    %6196 = vmatprep.subr.mxu0 %v4186
    %6197 = vmatpush1.msra.mxu0 %v4185
    %6198 = vmatprep.subr.mxu0 %v4183
    %6199 = vmatpush1.msra.mxu0 %v4182
    %6200 = vmatprep.subr.mxu0 %v4180
    %6201 = vmatpush1.msra.mxu0 %v4179
    %6202 = vmatprep.subr.mxu0 %v4177
    %6203 = vmatpush1.msra.mxu0 %v4176
    %6204 = vmatprep.subr.mxu0 %v4174
    %6205 = vmatpush1.msra.mxu0 %v4173
    %6206 = vmatprep.subr.mxu0 0.0
    %6207 = vmatpush2.msra.mxu0 0.0
    %6208 = vmatprep.subr.mxu0 0.0
    %6209 = vmatpush2.msra.mxu0 0.0
    %6210 = vmatprep.subr.mxu0 0.0
    %6211 = vmatpush2.msra.mxu0 0.0
    %6212 = vmatprep.subr.mxu0 0.0
    %6213 = vmatpush2.msra.mxu0 0.0
    %6214 = vmatprep.subr.mxu0 0.0
    %6215 = vmatpush2.msra.mxu0 0.0
    %6216 = vmatprep.subr.mxu0 0.0
    %6217 = vmatpush2.msra.mxu0 0.0
    %6218 = vmatprep.subr.mxu0 0.0
    %6219 = vmatpush2.msra.mxu0 0.0
    %6220 = vmatprep.subr.mxu0 0.0
    %6221 = vmatpush2.msra.mxu0 0.0
    %6222 = vmatprep.subr.mxu0 0.0
    %6223 = vmatpush2.msra.mxu0 0.0
    %6224 = vmatprep.subr.mxu0 0.0
    %6225 = vmatpush2.msra.mxu0 0.0
    %6226 = vmatprep.subr.mxu0 0.0
    %6227 = vmatpush2.msra.mxu0 0.0
    %6228 = vmatprep.subr.mxu0 0.0
    %6229 = vmatpush2.msra.mxu0 0.0
    %6230 = vmatprep.subr.mxu0 0.0
    %6231 = vmatpush2.msra.mxu0 0.0
    %6232 = vmatprep.subr.mxu0 0.0
    %6233 = vmatpush2.msra.mxu0 0.0
    %6234 = vmatprep.subr.mxu0 0.0
    %6235 = vmatpush2.msra.mxu0 0.0
    %6236 = vmatprep.subr.mxu0 0.0
    %6237 = vmatpush2.msra.mxu0 0.0
    %6238 = vmatprep.mubr.f32.mxu0 0.0
    %6239 = vmatmul.mubr.f32.gmra.mxu0 %v6163
    %v6240 = vpop.f32.mrf.mxu0
    %v6241 = vadd.f32 %v4270, %v6240
    %v6242 = vpop.f32.mrf.mxu0
    %v6243 = vadd.f32 %v4274, %v6242
    %6244 = vdwg.mxu0
    %6245 = vmatprep.subr.mxu0 0.0
    %6246 = vmatpush1.msra.mxu0 %v4220
    %6247 = vmatprep.subr.mxu0 0.0
    %6248 = vmatpush1.msra.mxu0 %v4217
    %6249 = vmatprep.subr.mxu0 0.0
    %6250 = vmatpush1.msra.mxu0 %v4214
    %6251 = vmatprep.subr.mxu0 0.0
    %6252 = vmatpush1.msra.mxu0 %v4211
    %6253 = vmatprep.subr.mxu0 0.0
    %6254 = vmatpush1.msra.mxu0 %v4208
    %6255 = vmatprep.subr.mxu0 0.0
    %6256 = vmatpush1.msra.mxu0 %v4205
    %6257 = vmatprep.subr.mxu0 0.0
    %6258 = vmatpush1.msra.mxu0 %v4202
    %6259 = vmatprep.subr.mxu0 0.0
    %6260 = vmatpush1.msra.mxu0 %v4199
    %6261 = vmatprep.subr.mxu0 0.0
    %6262 = vmatpush1.msra.mxu0 %v4196
    %6263 = vmatprep.subr.mxu0 0.0
    %6264 = vmatpush1.msra.mxu0 %v4193
    %6265 = vmatprep.subr.mxu0 0.0
    %6266 = vmatpush1.msra.mxu0 %v4190
    %6267 = vmatprep.subr.mxu0 0.0
    %6268 = vmatpush1.msra.mxu0 %v4187
    %6269 = vmatprep.subr.mxu0 0.0
    %6270 = vmatpush1.msra.mxu0 %v4184
    %6271 = vmatprep.subr.mxu0 0.0
    %6272 = vmatpush1.msra.mxu0 %v4181
    %6273 = vmatprep.subr.mxu0 0.0
    %6274 = vmatpush1.msra.mxu0 %v4178
    %6275 = vmatprep.subr.mxu0 0.0
    %6276 = vmatpush1.msra.mxu0 %v4175
    %6277 = vmatprep.subr.mxu0 0.0
    %6278 = vmatpush2.msra.mxu0 0.0
    %6279 = vmatprep.subr.mxu0 0.0
    %6280 = vmatpush2.msra.mxu0 0.0
    %6281 = vmatprep.subr.mxu0 0.0
    %6282 = vmatpush2.msra.mxu0 0.0
    %6283 = vmatprep.subr.mxu0 0.0
    %6284 = vmatpush2.msra.mxu0 0.0
    %6285 = vmatprep.subr.mxu0 0.0
    %6286 = vmatpush2.msra.mxu0 0.0
    %6287 = vmatprep.subr.mxu0 0.0
    %6288 = vmatpush2.msra.mxu0 0.0
    %6289 = vmatprep.subr.mxu0 0.0
    %6290 = vmatpush2.msra.mxu0 0.0
    %6291 = vmatprep.subr.mxu0 0.0
    %6292 = vmatpush2.msra.mxu0 0.0
    %6293 = vmatprep.subr.mxu0 0.0
    %6294 = vmatpush2.msra.mxu0 0.0
    %6295 = vmatprep.subr.mxu0 0.0
    %6296 = vmatpush2.msra.mxu0 0.0
    %6297 = vmatprep.subr.mxu0 0.0
    %6298 = vmatpush2.msra.mxu0 0.0
    %6299 = vmatprep.subr.mxu0 0.0
    %6300 = vmatpush2.msra.mxu0 0.0
    %6301 = vmatprep.subr.mxu0 0.0
    %6302 = vmatpush2.msra.mxu0 0.0
    %6303 = vmatprep.subr.mxu0 0.0
    %6304 = vmatpush2.msra.mxu0 0.0
    %6305 = vmatprep.subr.mxu0 0.0
    %6306 = vmatpush2.msra.mxu0 0.0
    %6307 = vmatprep.subr.mxu0 0.0
    %6308 = vmatpush2.msra.mxu0 0.0
    %6309 = vmatprep.mubr.f32.mxu0 0.0
    %6310 = vmatmul.mubr.f32.gmra.mxu0 %v6163
    %v6311 = vpop.f32.mrf.mxu0
    %v6312 = vadd.f32 %v4278, %v6311
    %v6313 = vpop.f32.mrf.mxu0
    %6314 = vdwg.mxu0
    %v6315 = vadd.f32 %v6171, %v6241
    %v6316 = vxor.u32 %v6315, 2147483648
    %v6317 = vmul.f32 %v6316, 1.442695
    %v6318 = vpow.pop %v6317
    %v6319 = vadd.f32 %v6318, 1.0
    %v6320 = vrcp.pop %v6319
    %v6321 = vmul.f32 1.0, %v6320
    %v6322 = vadd.f32 %v6172, %v6243
    %v6323 = vxor.u32 %v6322, 2147483648
    %v6324 = vmul.f32 %v6323, 1.442695
    %v6325 = vpow.pop %v6324
    %v6326 = vadd.f32 %v6325, 1.0
    %v6327 = vrcp.pop %v6326
    %v6328 = vmul.f32 1.0, %v6327
    %v6329 = vmul.f32 %v6321, %v6312
    %v6330 = vadd.f32 %v6173, %v6329
    %v6331 = vtanh.pop %v6330
    %v6332 = vsub.f32 1.0, %v6328
    %v6333 = vmul.f32 %v6332, %v6331
    %v6334 = vmul.f32 %v6328, %v6163
    %v6335 = vadd.f32 %v6333, %v6334
    %6336 = vset.pattern.permute.xlu0 12
    %6337 = vperm.xlu0 %6336, %v4171
    %v6338 = vpop.permute.xlu0 %6337
    %v6340 = vmul.f32 %v6338, %v4232
    %v6341 = vmul.f32 %v6338, %v4236
    %v6342 = vmul.f32 %v6338, %v4240
    %v6343 = vadd.f32 %v6340, %v4251
    %v6344 = vadd.f32 %v6341, %v4255
    %v6345 = vadd.f32 %v6342, %v4259
    %6346 = vmatprep.subr.mxu0 %v4219
    %6347 = vmatpush1.msra.mxu0 %v4218
    %6348 = vmatprep.subr.mxu0 %v4216
    %6349 = vmatpush1.msra.mxu0 %v4215
    %6350 = vmatprep.subr.mxu0 %v4213
    %6351 = vmatpush1.msra.mxu0 %v4212
    %6352 = vmatprep.subr.mxu0 %v4210
    %6353 = vmatpush1.msra.mxu0 %v4209
    %6354 = vmatprep.subr.mxu0 %v4207
    %6355 = vmatpush1.msra.mxu0 %v4206
    %6356 = vmatprep.subr.mxu0 %v4204
    %6357 = vmatpush1.msra.mxu0 %v4203
    %6358 = vmatprep.subr.mxu0 %v4201
    %6359 = vmatpush1.msra.mxu0 %v4200
    %6360 = vmatprep.subr.mxu0 %v4198
    %6361 = vmatpush1.msra.mxu0 %v4197
    %6362 = vmatprep.subr.mxu0 %v4195
    %6363 = vmatpush1.msra.mxu0 %v4194
    %6364 = vmatprep.subr.mxu0 %v4192
    %6365 = vmatpush1.msra.mxu0 %v4191
    %6366 = vmatprep.subr.mxu0 %v4189
    %6367 = vmatpush1.msra.mxu0 %v4188
    %6368 = vmatprep.subr.mxu0 %v4186
    %6369 = vmatpush1.msra.mxu0 %v4185
    %6370 = vmatprep.subr.mxu0 %v4183
    %6371 = vmatpush1.msra.mxu0 %v4182
    %6372 = vmatprep.subr.mxu0 %v4180
    %6373 = vmatpush1.msra.mxu0 %v4179
    %6374 = vmatprep.subr.mxu0 %v4177
    %6375 = vmatpush1.msra.mxu0 %v4176
    %6376 = vmatprep.subr.mxu0 %v4174
    %6377 = vmatpush1.msra.mxu0 %v4173
    %6378 = vmatprep.subr.mxu0 0.0
    %6379 = vmatpush2.msra.mxu0 0.0
    %6380 = vmatprep.subr.mxu0 0.0
    %6381 = vmatpush2.msra.mxu0 0.0
    %6382 = vmatprep.subr.mxu0 0.0
    %6383 = vmatpush2.msra.mxu0 0.0
    %6384 = vmatprep.subr.mxu0 0.0
    %6385 = vmatpush2.msra.mxu0 0.0
    %6386 = vmatprep.subr.mxu0 0.0
    %6387 = vmatpush2.msra.mxu0 0.0
    %6388 = vmatprep.subr.mxu0 0.0
    %6389 = vmatpush2.msra.mxu0 0.0
    %6390 = vmatprep.subr.mxu0 0.0
    %6391 = vmatpush2.msra.mxu0 0.0
    %6392 = vmatprep.subr.mxu0 0.0
    %6393 = vmatpush2.msra.mxu0 0.0
    %6394 = vmatprep.subr.mxu0 0.0
    %6395 = vmatpush2.msra.mxu0 0.0
    %6396 = vmatprep.subr.mxu0 0.0
    %6397 = vmatpush2.msra.mxu0 0.0
    %6398 = vmatprep.subr.mxu0 0.0
    %6399 = vmatpush2.msra.mxu0 0.0
    %6400 = vmatprep.subr.mxu0 0.0
    %6401 = vmatpush2.msra.mxu0 0.0
    %6402 = vmatprep.subr.mxu0 0.0
    %6403 = vmatpush2.msra.mxu0 0.0
    %6404 = vmatprep.subr.mxu0 0.0
    %6405 = vmatpush2.msra.mxu0 0.0
    %6406 = vmatprep.subr.mxu0 0.0
    %6407 = vmatpush2.msra.mxu0 0.0
    %6408 = vmatprep.subr.mxu0 0.0
    %6409 = vmatpush2.msra.mxu0 0.0
    %6410 = vmatprep.mubr.f32.mxu0 0.0
    %6411 = vmatmul.mubr.f32.gmra.mxu0 %v6335
    %v6412 = vpop.f32.mrf.mxu0
    %v6413 = vadd.f32 %v4270, %v6412
    %v6414 = vpop.f32.mrf.mxu0
    %v6415 = vadd.f32 %v4274, %v6414
    %6416 = vdwg.mxu0
    %6417 = vmatprep.subr.mxu0 0.0
    %6418 = vmatpush1.msra.mxu0 %v4220
    %6419 = vmatprep.subr.mxu0 0.0
    %6420 = vmatpush1.msra.mxu0 %v4217
    %6421 = vmatprep.subr.mxu0 0.0
    %6422 = vmatpush1.msra.mxu0 %v4214
    %6423 = vmatprep.subr.mxu0 0.0
    %6424 = vmatpush1.msra.mxu0 %v4211
    %6425 = vmatprep.subr.mxu0 0.0
    %6426 = vmatpush1.msra.mxu0 %v4208
    %6427 = vmatprep.subr.mxu0 0.0
    %6428 = vmatpush1.msra.mxu0 %v4205
    %6429 = vmatprep.subr.mxu0 0.0
    %6430 = vmatpush1.msra.mxu0 %v4202
    %6431 = vmatprep.subr.mxu0 0.0
    %6432 = vmatpush1.msra.mxu0 %v4199
    %6433 = vmatprep.subr.mxu0 0.0
    %6434 = vmatpush1.msra.mxu0 %v4196
    %6435 = vmatprep.subr.mxu0 0.0
    %6436 = vmatpush1.msra.mxu0 %v4193
    %6437 = vmatprep.subr.mxu0 0.0
    %6438 = vmatpush1.msra.mxu0 %v4190
    %6439 = vmatprep.subr.mxu0 0.0
    %6440 = vmatpush1.msra.mxu0 %v4187
    %6441 = vmatprep.subr.mxu0 0.0
    %6442 = vmatpush1.msra.mxu0 %v4184
    %6443 = vmatprep.subr.mxu0 0.0
    %6444 = vmatpush1.msra.mxu0 %v4181
    %6445 = vmatprep.subr.mxu0 0.0
    %6446 = vmatpush1.msra.mxu0 %v4178
    %6447 = vmatprep.subr.mxu0 0.0
    %6448 = vmatpush1.msra.mxu0 %v4175
    %6449 = vmatprep.subr.mxu0 0.0
    %6450 = vmatpush2.msra.mxu0 0.0
    %6451 = vmatprep.subr.mxu0 0.0
    %6452 = vmatpush2.msra.mxu0 0.0
    %6453 = vmatprep.subr.mxu0 0.0
    %6454 = vmatpush2.msra.mxu0 0.0
    %6455 = vmatprep.subr.mxu0 0.0
    %6456 = vmatpush2.msra.mxu0 0.0
    %6457 = vmatprep.subr.mxu0 0.0
    %6458 = vmatpush2.msra.mxu0 0.0
    %6459 = vmatprep.subr.mxu0 0.0
    %6460 = vmatpush2.msra.mxu0 0.0
    %6461 = vmatprep.subr.mxu0 0.0
    %6462 = vmatpush2.msra.mxu0 0.0
    %6463 = vmatprep.subr.mxu0 0.0
    %6464 = vmatpush2.msra.mxu0 0.0
    %6465 = vmatprep.subr.mxu0 0.0
    %6466 = vmatpush2.msra.mxu0 0.0
    %6467 = vmatprep.subr.mxu0 0.0
    %6468 = vmatpush2.msra.mxu0 0.0
    %6469 = vmatprep.subr.mxu0 0.0
    %6470 = vmatpush2.msra.mxu0 0.0
    %6471 = vmatprep.subr.mxu0 0.0
    %6472 = vmatpush2.msra.mxu0 0.0
    %6473 = vmatprep.subr.mxu0 0.0
    %6474 = vmatpush2.msra.mxu0 0.0
    %6475 = vmatprep.subr.mxu0 0.0
    %6476 = vmatpush2.msra.mxu0 0.0
    %6477 = vmatprep.subr.mxu0 0.0
    %6478 = vmatpush2.msra.mxu0 0.0
    %6479 = vmatprep.subr.mxu0 0.0
    %6480 = vmatpush2.msra.mxu0 0.0
    %6481 = vmatprep.mubr.f32.mxu0 0.0
    %6482 = vmatmul.mubr.f32.gmra.mxu0 %v6335
    %v6483 = vpop.f32.mrf.mxu0
    %v6484 = vadd.f32 %v4278, %v6483
    %v6485 = vpop.f32.mrf.mxu0
    %6486 = vdwg.mxu0
    %v6487 = vadd.f32 %v6343, %v6413
    %v6488 = vxor.u32 %v6487, 2147483648
    %v6489 = vmul.f32 %v6488, 1.442695
    %v6490 = vpow.pop %v6489
    %v6491 = vadd.f32 %v6490, 1.0
    %v6492 = vrcp.pop %v6491
    %v6493 = vmul.f32 1.0, %v6492
    %v6494 = vadd.f32 %v6344, %v6415
    %v6495 = vxor.u32 %v6494, 2147483648
    %v6496 = vmul.f32 %v6495, 1.442695
    %v6497 = vpow.pop %v6496
    %v6498 = vadd.f32 %v6497, 1.0
    %v6499 = vrcp.pop %v6498
    %v6500 = vmul.f32 1.0, %v6499
    %v6501 = vmul.f32 %v6493, %v6484
    %v6502 = vadd.f32 %v6345, %v6501
    %v6503 = vtanh.pop %v6502
    %v6504 = vsub.f32 1.0, %v6500
    %v6505 = vmul.f32 %v6504, %v6503
    %v6506 = vmul.f32 %v6500, %v6335
    %v6507 = vadd.f32 %v6505, %v6506
    %6508 = vset.pattern.permute.xlu0 13
    %6509 = vperm.xlu0 %6508, %v4171
    %v6510 = vpop.permute.xlu0 %6509
    %v6512 = vmul.f32 %v6510, %v4232
    %v6513 = vmul.f32 %v6510, %v4236
    %v6514 = vmul.f32 %v6510, %v4240
    %v6515 = vadd.f32 %v6512, %v4251
    %v6516 = vadd.f32 %v6513, %v4255
    %v6517 = vadd.f32 %v6514, %v4259
    %6518 = vmatprep.subr.mxu0 %v4219
    %6519 = vmatpush1.msra.mxu0 %v4218
    %6520 = vmatprep.subr.mxu0 %v4216
    %6521 = vmatpush1.msra.mxu0 %v4215
    %6522 = vmatprep.subr.mxu0 %v4213
    %6523 = vmatpush1.msra.mxu0 %v4212
    %6524 = vmatprep.subr.mxu0 %v4210
    %6525 = vmatpush1.msra.mxu0 %v4209
    %6526 = vmatprep.subr.mxu0 %v4207
    %6527 = vmatpush1.msra.mxu0 %v4206
    %6528 = vmatprep.subr.mxu0 %v4204
    %6529 = vmatpush1.msra.mxu0 %v4203
    %6530 = vmatprep.subr.mxu0 %v4201
    %6531 = vmatpush1.msra.mxu0 %v4200
    %6532 = vmatprep.subr.mxu0 %v4198
    %6533 = vmatpush1.msra.mxu0 %v4197
    %6534 = vmatprep.subr.mxu0 %v4195
    %6535 = vmatpush1.msra.mxu0 %v4194
    %6536 = vmatprep.subr.mxu0 %v4192
    %6537 = vmatpush1.msra.mxu0 %v4191
    %6538 = vmatprep.subr.mxu0 %v4189
    %6539 = vmatpush1.msra.mxu0 %v4188
    %6540 = vmatprep.subr.mxu0 %v4186
    %6541 = vmatpush1.msra.mxu0 %v4185
    %6542 = vmatprep.subr.mxu0 %v4183
    %6543 = vmatpush1.msra.mxu0 %v4182
    %6544 = vmatprep.subr.mxu0 %v4180
    %6545 = vmatpush1.msra.mxu0 %v4179
    %6546 = vmatprep.subr.mxu0 %v4177
    %6547 = vmatpush1.msra.mxu0 %v4176
    %6548 = vmatprep.subr.mxu0 %v4174
    %6549 = vmatpush1.msra.mxu0 %v4173
    %6550 = vmatprep.subr.mxu0 0.0
    %6551 = vmatpush2.msra.mxu0 0.0
    %6552 = vmatprep.subr.mxu0 0.0
    %6553 = vmatpush2.msra.mxu0 0.0
    %6554 = vmatprep.subr.mxu0 0.0
    %6555 = vmatpush2.msra.mxu0 0.0
    %6556 = vmatprep.subr.mxu0 0.0
    %6557 = vmatpush2.msra.mxu0 0.0
    %6558 = vmatprep.subr.mxu0 0.0
    %6559 = vmatpush2.msra.mxu0 0.0
    %6560 = vmatprep.subr.mxu0 0.0
    %6561 = vmatpush2.msra.mxu0 0.0
    %6562 = vmatprep.subr.mxu0 0.0
    %6563 = vmatpush2.msra.mxu0 0.0
    %6564 = vmatprep.subr.mxu0 0.0
    %6565 = vmatpush2.msra.mxu0 0.0
    %6566 = vmatprep.subr.mxu0 0.0
    %6567 = vmatpush2.msra.mxu0 0.0
    %6568 = vmatprep.subr.mxu0 0.0
    %6569 = vmatpush2.msra.mxu0 0.0
    %6570 = vmatprep.subr.mxu0 0.0
    %6571 = vmatpush2.msra.mxu0 0.0
    %6572 = vmatprep.subr.mxu0 0.0
    %6573 = vmatpush2.msra.mxu0 0.0
    %6574 = vmatprep.subr.mxu0 0.0
    %6575 = vmatpush2.msra.mxu0 0.0
    %6576 = vmatprep.subr.mxu0 0.0
    %6577 = vmatpush2.msra.mxu0 0.0
    %6578 = vmatprep.subr.mxu0 0.0
    %6579 = vmatpush2.msra.mxu0 0.0
    %6580 = vmatprep.subr.mxu0 0.0
    %6581 = vmatpush2.msra.mxu0 0.0
    %6582 = vmatprep.mubr.f32.mxu0 0.0
    %6583 = vmatmul.mubr.f32.gmra.mxu0 %v6507
    %v6584 = vpop.f32.mrf.mxu0
    %v6585 = vadd.f32 %v4270, %v6584
    %v6586 = vpop.f32.mrf.mxu0
    %v6587 = vadd.f32 %v4274, %v6586
    %6588 = vdwg.mxu0
    %6589 = vmatprep.subr.mxu0 0.0
    %6590 = vmatpush1.msra.mxu0 %v4220
    %6591 = vmatprep.subr.mxu0 0.0
    %6592 = vmatpush1.msra.mxu0 %v4217
    %6593 = vmatprep.subr.mxu0 0.0
    %6594 = vmatpush1.msra.mxu0 %v4214
    %6595 = vmatprep.subr.mxu0 0.0
    %6596 = vmatpush1.msra.mxu0 %v4211
    %6597 = vmatprep.subr.mxu0 0.0
    %6598 = vmatpush1.msra.mxu0 %v4208
    %6599 = vmatprep.subr.mxu0 0.0
    %6600 = vmatpush1.msra.mxu0 %v4205
    %6601 = vmatprep.subr.mxu0 0.0
    %6602 = vmatpush1.msra.mxu0 %v4202
    %6603 = vmatprep.subr.mxu0 0.0
    %6604 = vmatpush1.msra.mxu0 %v4199
    %6605 = vmatprep.subr.mxu0 0.0
    %6606 = vmatpush1.msra.mxu0 %v4196
    %6607 = vmatprep.subr.mxu0 0.0
    %6608 = vmatpush1.msra.mxu0 %v4193
    %6609 = vmatprep.subr.mxu0 0.0
    %6610 = vmatpush1.msra.mxu0 %v4190
    %6611 = vmatprep.subr.mxu0 0.0
    %6612 = vmatpush1.msra.mxu0 %v4187
    %6613 = vmatprep.subr.mxu0 0.0
    %6614 = vmatpush1.msra.mxu0 %v4184
    %6615 = vmatprep.subr.mxu0 0.0
    %6616 = vmatpush1.msra.mxu0 %v4181
    %6617 = vmatprep.subr.mxu0 0.0
    %6618 = vmatpush1.msra.mxu0 %v4178
    %6619 = vmatprep.subr.mxu0 0.0
    %6620 = vmatpush1.msra.mxu0 %v4175
    %6621 = vmatprep.subr.mxu0 0.0
    %6622 = vmatpush2.msra.mxu0 0.0
    %6623 = vmatprep.subr.mxu0 0.0
    %6624 = vmatpush2.msra.mxu0 0.0
    %6625 = vmatprep.subr.mxu0 0.0
    %6626 = vmatpush2.msra.mxu0 0.0
    %6627 = vmatprep.subr.mxu0 0.0
    %6628 = vmatpush2.msra.mxu0 0.0
    %6629 = vmatprep.subr.mxu0 0.0
    %6630 = vmatpush2.msra.mxu0 0.0
    %6631 = vmatprep.subr.mxu0 0.0
    %6632 = vmatpush2.msra.mxu0 0.0
    %6633 = vmatprep.subr.mxu0 0.0
    %6634 = vmatpush2.msra.mxu0 0.0
    %6635 = vmatprep.subr.mxu0 0.0
    %6636 = vmatpush2.msra.mxu0 0.0
    %6637 = vmatprep.subr.mxu0 0.0
    %6638 = vmatpush2.msra.mxu0 0.0
    %6639 = vmatprep.subr.mxu0 0.0
    %6640 = vmatpush2.msra.mxu0 0.0
    %6641 = vmatprep.subr.mxu0 0.0
    %6642 = vmatpush2.msra.mxu0 0.0
    %6643 = vmatprep.subr.mxu0 0.0
    %6644 = vmatpush2.msra.mxu0 0.0
    %6645 = vmatprep.subr.mxu0 0.0
    %6646 = vmatpush2.msra.mxu0 0.0
    %6647 = vmatprep.subr.mxu0 0.0
    %6648 = vmatpush2.msra.mxu0 0.0
    %6649 = vmatprep.subr.mxu0 0.0
    %6650 = vmatpush2.msra.mxu0 0.0
    %6651 = vmatprep.subr.mxu0 0.0
    %6652 = vmatpush2.msra.mxu0 0.0
    %6653 = vmatprep.mubr.f32.mxu0 0.0
    %6654 = vmatmul.mubr.f32.gmra.mxu0 %v6507
    %v6655 = vpop.f32.mrf.mxu0
    %v6656 = vadd.f32 %v4278, %v6655
    %v6657 = vpop.f32.mrf.mxu0
    %6658 = vdwg.mxu0
    %v6659 = vadd.f32 %v6515, %v6585
    %v6660 = vxor.u32 %v6659, 2147483648
    %v6661 = vmul.f32 %v6660, 1.442695
    %v6662 = vpow.pop %v6661
    %v6663 = vadd.f32 %v6662, 1.0
    %v6664 = vrcp.pop %v6663
    %v6665 = vmul.f32 1.0, %v6664
    %v6666 = vadd.f32 %v6516, %v6587
    %v6667 = vxor.u32 %v6666, 2147483648
    %v6668 = vmul.f32 %v6667, 1.442695
    %v6669 = vpow.pop %v6668
    %v6670 = vadd.f32 %v6669, 1.0
    %v6671 = vrcp.pop %v6670
    %v6672 = vmul.f32 1.0, %v6671
    %v6673 = vmul.f32 %v6665, %v6656
    %v6674 = vadd.f32 %v6517, %v6673
    %v6675 = vtanh.pop %v6674
    %v6676 = vsub.f32 1.0, %v6672
    %v6677 = vmul.f32 %v6676, %v6675
    %v6678 = vmul.f32 %v6672, %v6507
    %v6679 = vadd.f32 %v6677, %v6678
    %6680 = vset.pattern.permute.xlu0 14
    %6681 = vperm.xlu0 %6680, %v4171
    %v6682 = vpop.permute.xlu0 %6681
    %v6684 = vmul.f32 %v6682, %v4232
    %v6685 = vmul.f32 %v6682, %v4236
    %v6686 = vmul.f32 %v6682, %v4240
    %v6687 = vadd.f32 %v6684, %v4251
    %v6688 = vadd.f32 %v6685, %v4255
    %v6689 = vadd.f32 %v6686, %v4259
    %6690 = vmatprep.subr.mxu0 %v4219
    %6691 = vmatpush1.msra.mxu0 %v4218
    %6692 = vmatprep.subr.mxu0 %v4216
    %6693 = vmatpush1.msra.mxu0 %v4215
    %6694 = vmatprep.subr.mxu0 %v4213
    %6695 = vmatpush1.msra.mxu0 %v4212
    %6696 = vmatprep.subr.mxu0 %v4210
    %6697 = vmatpush1.msra.mxu0 %v4209
    %6698 = vmatprep.subr.mxu0 %v4207
    %6699 = vmatpush1.msra.mxu0 %v4206
    %6700 = vmatprep.subr.mxu0 %v4204
    %6701 = vmatpush1.msra.mxu0 %v4203
    %6702 = vmatprep.subr.mxu0 %v4201
    %6703 = vmatpush1.msra.mxu0 %v4200
    %6704 = vmatprep.subr.mxu0 %v4198
    %6705 = vmatpush1.msra.mxu0 %v4197
    %6706 = vmatprep.subr.mxu0 %v4195
    %6707 = vmatpush1.msra.mxu0 %v4194
    %6708 = vmatprep.subr.mxu0 %v4192
    %6709 = vmatpush1.msra.mxu0 %v4191
    %6710 = vmatprep.subr.mxu0 %v4189
    %6711 = vmatpush1.msra.mxu0 %v4188
    %6712 = vmatprep.subr.mxu0 %v4186
    %6713 = vmatpush1.msra.mxu0 %v4185
    %6714 = vmatprep.subr.mxu0 %v4183
    %6715 = vmatpush1.msra.mxu0 %v4182
    %6716 = vmatprep.subr.mxu0 %v4180
    %6717 = vmatpush1.msra.mxu0 %v4179
    %6718 = vmatprep.subr.mxu0 %v4177
    %6719 = vmatpush1.msra.mxu0 %v4176
    %6720 = vmatprep.subr.mxu0 %v4174
    %6721 = vmatpush1.msra.mxu0 %v4173
    %6722 = vmatprep.subr.mxu0 0.0
    %6723 = vmatpush2.msra.mxu0 0.0
    %6724 = vmatprep.subr.mxu0 0.0
    %6725 = vmatpush2.msra.mxu0 0.0
    %6726 = vmatprep.subr.mxu0 0.0
    %6727 = vmatpush2.msra.mxu0 0.0
    %6728 = vmatprep.subr.mxu0 0.0
    %6729 = vmatpush2.msra.mxu0 0.0
    %6730 = vmatprep.subr.mxu0 0.0
    %6731 = vmatpush2.msra.mxu0 0.0
    %6732 = vmatprep.subr.mxu0 0.0
    %6733 = vmatpush2.msra.mxu0 0.0
    %6734 = vmatprep.subr.mxu0 0.0
    %6735 = vmatpush2.msra.mxu0 0.0
    %6736 = vmatprep.subr.mxu0 0.0
    %6737 = vmatpush2.msra.mxu0 0.0
    %6738 = vmatprep.subr.mxu0 0.0
    %6739 = vmatpush2.msra.mxu0 0.0
    %6740 = vmatprep.subr.mxu0 0.0
    %6741 = vmatpush2.msra.mxu0 0.0
    %6742 = vmatprep.subr.mxu0 0.0
    %6743 = vmatpush2.msra.mxu0 0.0
    %6744 = vmatprep.subr.mxu0 0.0
    %6745 = vmatpush2.msra.mxu0 0.0
    %6746 = vmatprep.subr.mxu0 0.0
    %6747 = vmatpush2.msra.mxu0 0.0
    %6748 = vmatprep.subr.mxu0 0.0
    %6749 = vmatpush2.msra.mxu0 0.0
    %6750 = vmatprep.subr.mxu0 0.0
    %6751 = vmatpush2.msra.mxu0 0.0
    %6752 = vmatprep.subr.mxu0 0.0
    %6753 = vmatpush2.msra.mxu0 0.0
    %6754 = vmatprep.mubr.f32.mxu0 0.0
    %6755 = vmatmul.mubr.f32.gmra.mxu0 %v6679
    %v6756 = vpop.f32.mrf.mxu0
    %v6757 = vadd.f32 %v4270, %v6756
    %v6758 = vpop.f32.mrf.mxu0
    %v6759 = vadd.f32 %v4274, %v6758
    %6760 = vdwg.mxu0
    %6761 = vmatprep.subr.mxu0 0.0
    %6762 = vmatpush1.msra.mxu0 %v4220
    %6763 = vmatprep.subr.mxu0 0.0
    %6764 = vmatpush1.msra.mxu0 %v4217
    %6765 = vmatprep.subr.mxu0 0.0
    %6766 = vmatpush1.msra.mxu0 %v4214
    %6767 = vmatprep.subr.mxu0 0.0
    %6768 = vmatpush1.msra.mxu0 %v4211
    %6769 = vmatprep.subr.mxu0 0.0
    %6770 = vmatpush1.msra.mxu0 %v4208
    %6771 = vmatprep.subr.mxu0 0.0
    %6772 = vmatpush1.msra.mxu0 %v4205
    %6773 = vmatprep.subr.mxu0 0.0
    %6774 = vmatpush1.msra.mxu0 %v4202
    %6775 = vmatprep.subr.mxu0 0.0
    %6776 = vmatpush1.msra.mxu0 %v4199
    %6777 = vmatprep.subr.mxu0 0.0
    %6778 = vmatpush1.msra.mxu0 %v4196
    %6779 = vmatprep.subr.mxu0 0.0
    %6780 = vmatpush1.msra.mxu0 %v4193
    %6781 = vmatprep.subr.mxu0 0.0
    %6782 = vmatpush1.msra.mxu0 %v4190
    %6783 = vmatprep.subr.mxu0 0.0
    %6784 = vmatpush1.msra.mxu0 %v4187
    %6785 = vmatprep.subr.mxu0 0.0
    %6786 = vmatpush1.msra.mxu0 %v4184
    %6787 = vmatprep.subr.mxu0 0.0
    %6788 = vmatpush1.msra.mxu0 %v4181
    %6789 = vmatprep.subr.mxu0 0.0
    %6790 = vmatpush1.msra.mxu0 %v4178
    %6791 = vmatprep.subr.mxu0 0.0
    %6792 = vmatpush1.msra.mxu0 %v4175
    %6793 = vmatprep.subr.mxu0 0.0
    %6794 = vmatpush2.msra.mxu0 0.0
    %6795 = vmatprep.subr.mxu0 0.0
    %6796 = vmatpush2.msra.mxu0 0.0
    %6797 = vmatprep.subr.mxu0 0.0
    %6798 = vmatpush2.msra.mxu0 0.0
    %6799 = vmatprep.subr.mxu0 0.0
    %6800 = vmatpush2.msra.mxu0 0.0
    %6801 = vmatprep.subr.mxu0 0.0
    %6802 = vmatpush2.msra.mxu0 0.0
    %6803 = vmatprep.subr.mxu0 0.0
    %6804 = vmatpush2.msra.mxu0 0.0
    %6805 = vmatprep.subr.mxu0 0.0
    %6806 = vmatpush2.msra.mxu0 0.0
    %6807 = vmatprep.subr.mxu0 0.0
    %6808 = vmatpush2.msra.mxu0 0.0
    %6809 = vmatprep.subr.mxu0 0.0
    %6810 = vmatpush2.msra.mxu0 0.0
    %6811 = vmatprep.subr.mxu0 0.0
    %6812 = vmatpush2.msra.mxu0 0.0
    %6813 = vmatprep.subr.mxu0 0.0
    %6814 = vmatpush2.msra.mxu0 0.0
    %6815 = vmatprep.subr.mxu0 0.0
    %6816 = vmatpush2.msra.mxu0 0.0
    %6817 = vmatprep.subr.mxu0 0.0
    %6818 = vmatpush2.msra.mxu0 0.0
    %6819 = vmatprep.subr.mxu0 0.0
    %6820 = vmatpush2.msra.mxu0 0.0
    %6821 = vmatprep.subr.mxu0 0.0
    %6822 = vmatpush2.msra.mxu0 0.0
    %6823 = vmatprep.subr.mxu0 0.0
    %6824 = vmatpush2.msra.mxu0 0.0
    %6825 = vmatprep.mubr.f32.mxu0 0.0
    %6826 = vmatmul.mubr.f32.gmra.mxu0 %v6679
    %v6827 = vpop.f32.mrf.mxu0
    %v6828 = vadd.f32 %v4278, %v6827
    %v6829 = vpop.f32.mrf.mxu0
    %6830 = vdwg.mxu0
    %v6831 = vadd.f32 %v6687, %v6757
    %v6832 = vxor.u32 %v6831, 2147483648
    %v6833 = vmul.f32 %v6832, 1.442695
    %v6834 = vpow.pop %v6833
    %v6835 = vadd.f32 %v6834, 1.0
    %v6836 = vrcp.pop %v6835
    %v6837 = vmul.f32 1.0, %v6836
    %v6838 = vadd.f32 %v6688, %v6759
    %v6839 = vxor.u32 %v6838, 2147483648
    %v6840 = vmul.f32 %v6839, 1.442695
    %v6841 = vpow.pop %v6840
    %v6842 = vadd.f32 %v6841, 1.0
    %v6843 = vrcp.pop %v6842
    %v6844 = vmul.f32 1.0, %v6843
    %v6845 = vmul.f32 %v6837, %v6828
    %v6846 = vadd.f32 %v6689, %v6845
    %v6847 = vtanh.pop %v6846
    %v6848 = vsub.f32 1.0, %v6844
    %v6849 = vmul.f32 %v6848, %v6847
    %v6850 = vmul.f32 %v6844, %v6679
    %v6851 = vadd.f32 %v6849, %v6850
    %6852 = vset.pattern.permute.xlu0 15
    %6853 = vperm.xlu0 %6852, %v4171
    %v6854 = vpop.permute.xlu0 %6853
    %v6856 = vmul.f32 %v6854, %v4232
    %v6857 = vmul.f32 %v6854, %v4236
    %v6858 = vmul.f32 %v6854, %v4240
    %v6859 = vadd.f32 %v6856, %v4251
    %v6860 = vadd.f32 %v6857, %v4255
    %v6861 = vadd.f32 %v6858, %v4259
    %6862 = vmatprep.subr.mxu0 %v4219
    %6863 = vmatpush1.msra.mxu0 %v4218
    %6864 = vmatprep.subr.mxu0 %v4216
    %6865 = vmatpush1.msra.mxu0 %v4215
    %6866 = vmatprep.subr.mxu0 %v4213
    %6867 = vmatpush1.msra.mxu0 %v4212
    %6868 = vmatprep.subr.mxu0 %v4210
    %6869 = vmatpush1.msra.mxu0 %v4209
    %6870 = vmatprep.subr.mxu0 %v4207
    %6871 = vmatpush1.msra.mxu0 %v4206
    %6872 = vmatprep.subr.mxu0 %v4204
    %6873 = vmatpush1.msra.mxu0 %v4203
    %6874 = vmatprep.subr.mxu0 %v4201
    %6875 = vmatpush1.msra.mxu0 %v4200
    %6876 = vmatprep.subr.mxu0 %v4198
    %6877 = vmatpush1.msra.mxu0 %v4197
    %6878 = vmatprep.subr.mxu0 %v4195
    %6879 = vmatpush1.msra.mxu0 %v4194
    %6880 = vmatprep.subr.mxu0 %v4192
    %6881 = vmatpush1.msra.mxu0 %v4191
    %6882 = vmatprep.subr.mxu0 %v4189
    %6883 = vmatpush1.msra.mxu0 %v4188
    %6884 = vmatprep.subr.mxu0 %v4186
    %6885 = vmatpush1.msra.mxu0 %v4185
    %6886 = vmatprep.subr.mxu0 %v4183
    %6887 = vmatpush1.msra.mxu0 %v4182
    %6888 = vmatprep.subr.mxu0 %v4180
    %6889 = vmatpush1.msra.mxu0 %v4179
    %6890 = vmatprep.subr.mxu0 %v4177
    %6891 = vmatpush1.msra.mxu0 %v4176
    %6892 = vmatprep.subr.mxu0 %v4174
    %6893 = vmatpush1.msra.mxu0 %v4173
    %6894 = vmatprep.subr.mxu0 0.0
    %6895 = vmatpush2.msra.mxu0 0.0
    %6896 = vmatprep.subr.mxu0 0.0
    %6897 = vmatpush2.msra.mxu0 0.0
    %6898 = vmatprep.subr.mxu0 0.0
    %6899 = vmatpush2.msra.mxu0 0.0
    %6900 = vmatprep.subr.mxu0 0.0
    %6901 = vmatpush2.msra.mxu0 0.0
    %6902 = vmatprep.subr.mxu0 0.0
    %6903 = vmatpush2.msra.mxu0 0.0
    %6904 = vmatprep.subr.mxu0 0.0
    %6905 = vmatpush2.msra.mxu0 0.0
    %6906 = vmatprep.subr.mxu0 0.0
    %6907 = vmatpush2.msra.mxu0 0.0
    %6908 = vmatprep.subr.mxu0 0.0
    %6909 = vmatpush2.msra.mxu0 0.0
    %6910 = vmatprep.subr.mxu0 0.0
    %6911 = vmatpush2.msra.mxu0 0.0
    %6912 = vmatprep.subr.mxu0 0.0
    %6913 = vmatpush2.msra.mxu0 0.0
    %6914 = vmatprep.subr.mxu0 0.0
    %6915 = vmatpush2.msra.mxu0 0.0
    %6916 = vmatprep.subr.mxu0 0.0
    %6917 = vmatpush2.msra.mxu0 0.0
    %6918 = vmatprep.subr.mxu0 0.0
    %6919 = vmatpush2.msra.mxu0 0.0
    %6920 = vmatprep.subr.mxu0 0.0
    %6921 = vmatpush2.msra.mxu0 0.0
    %6922 = vmatprep.subr.mxu0 0.0
    %6923 = vmatpush2.msra.mxu0 0.0
    %6924 = vmatprep.subr.mxu0 0.0
    %6925 = vmatpush2.msra.mxu0 0.0
    %6926 = vmatprep.mubr.f32.mxu0 0.0
    %6927 = vmatmul.mubr.f32.gmra.mxu0 %v6851
    %v6928 = vpop.f32.mrf.mxu0
    %v6929 = vadd.f32 %v4270, %v6928
    %v6930 = vpop.f32.mrf.mxu0
    %v6931 = vadd.f32 %v4274, %v6930
    %6932 = vdwg.mxu0
    %6933 = vmatprep.subr.mxu0 0.0
    %6934 = vmatpush1.msra.mxu0 %v4220
    %6935 = vmatprep.subr.mxu0 0.0
    %6936 = vmatpush1.msra.mxu0 %v4217
    %6937 = vmatprep.subr.mxu0 0.0
    %6938 = vmatpush1.msra.mxu0 %v4214
    %6939 = vmatprep.subr.mxu0 0.0
    %6940 = vmatpush1.msra.mxu0 %v4211
    %6941 = vmatprep.subr.mxu0 0.0
    %6942 = vmatpush1.msra.mxu0 %v4208
    %6943 = vmatprep.subr.mxu0 0.0
    %6944 = vmatpush1.msra.mxu0 %v4205
    %6945 = vmatprep.subr.mxu0 0.0
    %6946 = vmatpush1.msra.mxu0 %v4202
    %6947 = vmatprep.subr.mxu0 0.0
    %6948 = vmatpush1.msra.mxu0 %v4199
    %6949 = vmatprep.subr.mxu0 0.0
    %6950 = vmatpush1.msra.mxu0 %v4196
    %6951 = vmatprep.subr.mxu0 0.0
    %6952 = vmatpush1.msra.mxu0 %v4193
    %6953 = vmatprep.subr.mxu0 0.0
    %6954 = vmatpush1.msra.mxu0 %v4190
    %6955 = vmatprep.subr.mxu0 0.0
    %6956 = vmatpush1.msra.mxu0 %v4187
    %6957 = vmatprep.subr.mxu0 0.0
    %6958 = vmatpush1.msra.mxu0 %v4184
    %6959 = vmatprep.subr.mxu0 0.0
    %6960 = vmatpush1.msra.mxu0 %v4181
    %6961 = vmatprep.subr.mxu0 0.0
    %6962 = vmatpush1.msra.mxu0 %v4178
    %6963 = vmatprep.subr.mxu0 0.0
    %6964 = vmatpush1.msra.mxu0 %v4175
    %6965 = vmatprep.subr.mxu0 0.0
    %6966 = vmatpush2.msra.mxu0 0.0
    %6967 = vmatprep.subr.mxu0 0.0
    %6968 = vmatpush2.msra.mxu0 0.0
    %6969 = vmatprep.subr.mxu0 0.0
    %6970 = vmatpush2.msra.mxu0 0.0
    %6971 = vmatprep.subr.mxu0 0.0
    %6972 = vmatpush2.msra.mxu0 0.0
    %6973 = vmatprep.subr.mxu0 0.0
    %6974 = vmatpush2.msra.mxu0 0.0
    %6975 = vmatprep.subr.mxu0 0.0
    %6976 = vmatpush2.msra.mxu0 0.0
    %6977 = vmatprep.subr.mxu0 0.0
    %6978 = vmatpush2.msra.mxu0 0.0
    %6979 = vmatprep.subr.mxu0 0.0
    %6980 = vmatpush2.msra.mxu0 0.0
    %6981 = vmatprep.subr.mxu0 0.0
    %6982 = vmatpush2.msra.mxu0 0.0
    %6983 = vmatprep.subr.mxu0 0.0
    %6984 = vmatpush2.msra.mxu0 0.0
    %6985 = vmatprep.subr.mxu0 0.0
    %6986 = vmatpush2.msra.mxu0 0.0
    %6987 = vmatprep.subr.mxu0 0.0
    %6988 = vmatpush2.msra.mxu0 0.0
    %6989 = vmatprep.subr.mxu0 0.0
    %6990 = vmatpush2.msra.mxu0 0.0
    %6991 = vmatprep.subr.mxu0 0.0
    %6992 = vmatpush2.msra.mxu0 0.0
    %6993 = vmatprep.subr.mxu0 0.0
    %6994 = vmatpush2.msra.mxu0 0.0
    %6995 = vmatprep.subr.mxu0 0.0
    %6996 = vmatpush2.msra.mxu0 0.0
    %6997 = vmatprep.mubr.f32.mxu0 0.0
    %6998 = vmatmul.mubr.f32.gmra.mxu0 %v6851
    %v6999 = vpop.f32.mrf.mxu0
    %v7000 = vadd.f32 %v4278, %v6999
    %v7001 = vpop.f32.mrf.mxu0
    %7002 = vdwg.mxu0
    %v7003 = vadd.f32 %v6859, %v6929
    %v7004 = vxor.u32 %v7003, 2147483648
    %v7005 = vmul.f32 %v7004, 1.442695
    %v7006 = vpow.pop %v7005
    %v7007 = vadd.f32 %v7006, 1.0
    %v7008 = vrcp.pop %v7007
    %v7009 = vmul.f32 1.0, %v7008
    %v7010 = vadd.f32 %v6860, %v6931
    %v7011 = vxor.u32 %v7010, 2147483648
    %v7012 = vmul.f32 %v7011, 1.442695
    %v7013 = vpow.pop %v7012
    %v7014 = vadd.f32 %v7013, 1.0
    %v7015 = vrcp.pop %v7014
    %v7016 = vmul.f32 1.0, %v7015
    %v7017 = vmul.f32 %v7009, %v7000
    %v7018 = vadd.f32 %v6861, %v7017
    %v7019 = vtanh.pop %v7018
    %v7020 = vsub.f32 1.0, %v7016
    %v7021 = vmul.f32 %v7020, %v7019
    %v7022 = vmul.f32 %v7016, %v6851
    %v7023 = vadd.f32 %v7021, %v7022
    %7024 = vset.pattern.permute.xlu0 16
    %7025 = vperm.xlu0 %7024, %v4171
    %v7026 = vpop.permute.xlu0 %7025
    %v7028 = vmul.f32 %v7026, %v4232
    %v7029 = vmul.f32 %v7026, %v4236
    %v7030 = vmul.f32 %v7026, %v4240
    %v7031 = vadd.f32 %v7028, %v4251
    %v7032 = vadd.f32 %v7029, %v4255
    %v7033 = vadd.f32 %v7030, %v4259
    %7034 = vmatprep.subr.mxu0 %v4219
    %7035 = vmatpush1.msra.mxu0 %v4218
    %7036 = vmatprep.subr.mxu0 %v4216
    %7037 = vmatpush1.msra.mxu0 %v4215
    %7038 = vmatprep.subr.mxu0 %v4213
    %7039 = vmatpush1.msra.mxu0 %v4212
    %7040 = vmatprep.subr.mxu0 %v4210
    %7041 = vmatpush1.msra.mxu0 %v4209
    %7042 = vmatprep.subr.mxu0 %v4207
    %7043 = vmatpush1.msra.mxu0 %v4206
    %7044 = vmatprep.subr.mxu0 %v4204
    %7045 = vmatpush1.msra.mxu0 %v4203
    %7046 = vmatprep.subr.mxu0 %v4201
    %7047 = vmatpush1.msra.mxu0 %v4200
    %7048 = vmatprep.subr.mxu0 %v4198
    %7049 = vmatpush1.msra.mxu0 %v4197
    %7050 = vmatprep.subr.mxu0 %v4195
    %7051 = vmatpush1.msra.mxu0 %v4194
    %7052 = vmatprep.subr.mxu0 %v4192
    %7053 = vmatpush1.msra.mxu0 %v4191
    %7054 = vmatprep.subr.mxu0 %v4189
    %7055 = vmatpush1.msra.mxu0 %v4188
    %7056 = vmatprep.subr.mxu0 %v4186
    %7057 = vmatpush1.msra.mxu0 %v4185
    %7058 = vmatprep.subr.mxu0 %v4183
    %7059 = vmatpush1.msra.mxu0 %v4182
    %7060 = vmatprep.subr.mxu0 %v4180
    %7061 = vmatpush1.msra.mxu0 %v4179
    %7062 = vmatprep.subr.mxu0 %v4177
    %7063 = vmatpush1.msra.mxu0 %v4176
    %7064 = vmatprep.subr.mxu0 %v4174
    %7065 = vmatpush1.msra.mxu0 %v4173
    %7066 = vmatprep.subr.mxu0 0.0
    %7067 = vmatpush2.msra.mxu0 0.0
    %7068 = vmatprep.subr.mxu0 0.0
    %7069 = vmatpush2.msra.mxu0 0.0
    %7070 = vmatprep.subr.mxu0 0.0
    %7071 = vmatpush2.msra.mxu0 0.0
    %7072 = vmatprep.subr.mxu0 0.0
    %7073 = vmatpush2.msra.mxu0 0.0
    %7074 = vmatprep.subr.mxu0 0.0
    %7075 = vmatpush2.msra.mxu0 0.0
    %7076 = vmatprep.subr.mxu0 0.0
    %7077 = vmatpush2.msra.mxu0 0.0
    %7078 = vmatprep.subr.mxu0 0.0
    %7079 = vmatpush2.msra.mxu0 0.0
    %7080 = vmatprep.subr.mxu0 0.0
    %7081 = vmatpush2.msra.mxu0 0.0
    %7082 = vmatprep.subr.mxu0 0.0
    %7083 = vmatpush2.msra.mxu0 0.0
    %7084 = vmatprep.subr.mxu0 0.0
    %7085 = vmatpush2.msra.mxu0 0.0
    %7086 = vmatprep.subr.mxu0 0.0
    %7087 = vmatpush2.msra.mxu0 0.0
    %7088 = vmatprep.subr.mxu0 0.0
    %7089 = vmatpush2.msra.mxu0 0.0
    %7090 = vmatprep.subr.mxu0 0.0
    %7091 = vmatpush2.msra.mxu0 0.0
    %7092 = vmatprep.subr.mxu0 0.0
    %7093 = vmatpush2.msra.mxu0 0.0
    %7094 = vmatprep.subr.mxu0 0.0
    %7095 = vmatpush2.msra.mxu0 0.0
    %7096 = vmatprep.subr.mxu0 0.0
    %7097 = vmatpush2.msra.mxu0 0.0
    %7098 = vmatprep.mubr.f32.mxu0 0.0
    %7099 = vmatmul.mubr.f32.gmra.mxu0 %v7023
    %v7100 = vpop.f32.mrf.mxu0
    %v7101 = vadd.f32 %v4270, %v7100
    %v7102 = vpop.f32.mrf.mxu0
    %v7103 = vadd.f32 %v4274, %v7102
    %7104 = vdwg.mxu0
    %7105 = vmatprep.subr.mxu0 0.0
    %7106 = vmatpush1.msra.mxu0 %v4220
    %7107 = vmatprep.subr.mxu0 0.0
    %7108 = vmatpush1.msra.mxu0 %v4217
    %7109 = vmatprep.subr.mxu0 0.0
    %7110 = vmatpush1.msra.mxu0 %v4214
    %7111 = vmatprep.subr.mxu0 0.0
    %7112 = vmatpush1.msra.mxu0 %v4211
    %7113 = vmatprep.subr.mxu0 0.0
    %7114 = vmatpush1.msra.mxu0 %v4208
    %7115 = vmatprep.subr.mxu0 0.0
    %7116 = vmatpush1.msra.mxu0 %v4205
    %7117 = vmatprep.subr.mxu0 0.0
    %7118 = vmatpush1.msra.mxu0 %v4202
    %7119 = vmatprep.subr.mxu0 0.0
    %7120 = vmatpush1.msra.mxu0 %v4199
    %7121 = vmatprep.subr.mxu0 0.0
    %7122 = vmatpush1.msra.mxu0 %v4196
    %7123 = vmatprep.subr.mxu0 0.0
    %7124 = vmatpush1.msra.mxu0 %v4193
    %7125 = vmatprep.subr.mxu0 0.0
    %7126 = vmatpush1.msra.mxu0 %v4190
    %7127 = vmatprep.subr.mxu0 0.0
    %7128 = vmatpush1.msra.mxu0 %v4187
    %7129 = vmatprep.subr.mxu0 0.0
    %7130 = vmatpush1.msra.mxu0 %v4184
    %7131 = vmatprep.subr.mxu0 0.0
    %7132 = vmatpush1.msra.mxu0 %v4181
    %7133 = vmatprep.subr.mxu0 0.0
    %7134 = vmatpush1.msra.mxu0 %v4178
    %7135 = vmatprep.subr.mxu0 0.0
    %7136 = vmatpush1.msra.mxu0 %v4175
    %7137 = vmatprep.subr.mxu0 0.0
    %7138 = vmatpush2.msra.mxu0 0.0
    %7139 = vmatprep.subr.mxu0 0.0
    %7140 = vmatpush2.msra.mxu0 0.0
    %7141 = vmatprep.subr.mxu0 0.0
    %7142 = vmatpush2.msra.mxu0 0.0
    %7143 = vmatprep.subr.mxu0 0.0
    %7144 = vmatpush2.msra.mxu0 0.0
    %7145 = vmatprep.subr.mxu0 0.0
    %7146 = vmatpush2.msra.mxu0 0.0
    %7147 = vmatprep.subr.mxu0 0.0
    %7148 = vmatpush2.msra.mxu0 0.0
    %7149 = vmatprep.subr.mxu0 0.0
    %7150 = vmatpush2.msra.mxu0 0.0
    %7151 = vmatprep.subr.mxu0 0.0
    %7152 = vmatpush2.msra.mxu0 0.0
    %7153 = vmatprep.subr.mxu0 0.0
    %7154 = vmatpush2.msra.mxu0 0.0
    %7155 = vmatprep.subr.mxu0 0.0
    %7156 = vmatpush2.msra.mxu0 0.0
    %7157 = vmatprep.subr.mxu0 0.0
    %7158 = vmatpush2.msra.mxu0 0.0
    %7159 = vmatprep.subr.mxu0 0.0
    %7160 = vmatpush2.msra.mxu0 0.0
    %7161 = vmatprep.subr.mxu0 0.0
    %7162 = vmatpush2.msra.mxu0 0.0
    %7163 = vmatprep.subr.mxu0 0.0
    %7164 = vmatpush2.msra.mxu0 0.0
    %7165 = vmatprep.subr.mxu0 0.0
    %7166 = vmatpush2.msra.mxu0 0.0
    %7167 = vmatprep.subr.mxu0 0.0
    %7168 = vmatpush2.msra.mxu0 0.0
    %7169 = vmatprep.mubr.f32.mxu0 0.0
    %7170 = vmatmul.mubr.f32.gmra.mxu0 %v7023
    %v7171 = vpop.f32.mrf.mxu0
    %v7172 = vadd.f32 %v4278, %v7171
    %v7173 = vpop.f32.mrf.mxu0
    %7174 = vdwg.mxu0
    %v7175 = vadd.f32 %v7031, %v7101
    %v7176 = vxor.u32 %v7175, 2147483648
    %v7177 = vmul.f32 %v7176, 1.442695
    %v7178 = vpow.pop %v7177
    %v7179 = vadd.f32 %v7178, 1.0
    %v7180 = vrcp.pop %v7179
    %v7181 = vmul.f32 1.0, %v7180
    %v7182 = vadd.f32 %v7032, %v7103
    %v7183 = vxor.u32 %v7182, 2147483648
    %v7184 = vmul.f32 %v7183, 1.442695
    %v7185 = vpow.pop %v7184
    %v7186 = vadd.f32 %v7185, 1.0
    %v7187 = vrcp.pop %v7186
    %v7188 = vmul.f32 1.0, %v7187
    %v7189 = vmul.f32 %v7181, %v7172
    %v7190 = vadd.f32 %v7033, %v7189
    %v7191 = vtanh.pop %v7190
    %v7192 = vsub.f32 1.0, %v7188
    %v7193 = vmul.f32 %v7192, %v7191
    %v7194 = vmul.f32 %v7188, %v7023
    %v7195 = vadd.f32 %v7193, %v7194
    %7196 = vset.pattern.permute.xlu0 17
    %7197 = vperm.xlu0 %7196, %v4171
    %v7198 = vpop.permute.xlu0 %7197
    %v7200 = vmul.f32 %v7198, %v4232
    %v7201 = vmul.f32 %v7198, %v4236
    %v7202 = vmul.f32 %v7198, %v4240
    %v7203 = vadd.f32 %v7200, %v4251
    %v7204 = vadd.f32 %v7201, %v4255
    %v7205 = vadd.f32 %v7202, %v4259
    %7206 = vmatprep.subr.mxu0 %v4219
    %7207 = vmatpush1.msra.mxu0 %v4218
    %7208 = vmatprep.subr.mxu0 %v4216
    %7209 = vmatpush1.msra.mxu0 %v4215
    %7210 = vmatprep.subr.mxu0 %v4213
    %7211 = vmatpush1.msra.mxu0 %v4212
    %7212 = vmatprep.subr.mxu0 %v4210
    %7213 = vmatpush1.msra.mxu0 %v4209
    %7214 = vmatprep.subr.mxu0 %v4207
    %7215 = vmatpush1.msra.mxu0 %v4206
    %7216 = vmatprep.subr.mxu0 %v4204
    %7217 = vmatpush1.msra.mxu0 %v4203
    %7218 = vmatprep.subr.mxu0 %v4201
    %7219 = vmatpush1.msra.mxu0 %v4200
    %7220 = vmatprep.subr.mxu0 %v4198
    %7221 = vmatpush1.msra.mxu0 %v4197
    %7222 = vmatprep.subr.mxu0 %v4195
    %7223 = vmatpush1.msra.mxu0 %v4194
    %7224 = vmatprep.subr.mxu0 %v4192
    %7225 = vmatpush1.msra.mxu0 %v4191
    %7226 = vmatprep.subr.mxu0 %v4189
    %7227 = vmatpush1.msra.mxu0 %v4188
    %7228 = vmatprep.subr.mxu0 %v4186
    %7229 = vmatpush1.msra.mxu0 %v4185
    %7230 = vmatprep.subr.mxu0 %v4183
    %7231 = vmatpush1.msra.mxu0 %v4182
    %7232 = vmatprep.subr.mxu0 %v4180
    %7233 = vmatpush1.msra.mxu0 %v4179
    %7234 = vmatprep.subr.mxu0 %v4177
    %7235 = vmatpush1.msra.mxu0 %v4176
    %7236 = vmatprep.subr.mxu0 %v4174
    %7237 = vmatpush1.msra.mxu0 %v4173
    %7238 = vmatprep.subr.mxu0 0.0
    %7239 = vmatpush2.msra.mxu0 0.0
    %7240 = vmatprep.subr.mxu0 0.0
    %7241 = vmatpush2.msra.mxu0 0.0
    %7242 = vmatprep.subr.mxu0 0.0
    %7243 = vmatpush2.msra.mxu0 0.0
    %7244 = vmatprep.subr.mxu0 0.0
    %7245 = vmatpush2.msra.mxu0 0.0
    %7246 = vmatprep.subr.mxu0 0.0
    %7247 = vmatpush2.msra.mxu0 0.0
    %7248 = vmatprep.subr.mxu0 0.0
    %7249 = vmatpush2.msra.mxu0 0.0
    %7250 = vmatprep.subr.mxu0 0.0
    %7251 = vmatpush2.msra.mxu0 0.0
    %7252 = vmatprep.subr.mxu0 0.0
    %7253 = vmatpush2.msra.mxu0 0.0
    %7254 = vmatprep.subr.mxu0 0.0
    %7255 = vmatpush2.msra.mxu0 0.0
    %7256 = vmatprep.subr.mxu0 0.0
    %7257 = vmatpush2.msra.mxu0 0.0
    %7258 = vmatprep.subr.mxu0 0.0
    %7259 = vmatpush2.msra.mxu0 0.0
    %7260 = vmatprep.subr.mxu0 0.0
    %7261 = vmatpush2.msra.mxu0 0.0
    %7262 = vmatprep.subr.mxu0 0.0
    %7263 = vmatpush2.msra.mxu0 0.0
    %7264 = vmatprep.subr.mxu0 0.0
    %7265 = vmatpush2.msra.mxu0 0.0
    %7266 = vmatprep.subr.mxu0 0.0
    %7267 = vmatpush2.msra.mxu0 0.0
    %7268 = vmatprep.subr.mxu0 0.0
    %7269 = vmatpush2.msra.mxu0 0.0
    %7270 = vmatprep.mubr.f32.mxu0 0.0
    %7271 = vmatmul.mubr.f32.gmra.mxu0 %v7195
    %v7272 = vpop.f32.mrf.mxu0
    %v7273 = vadd.f32 %v4270, %v7272
    %v7274 = vpop.f32.mrf.mxu0
    %v7275 = vadd.f32 %v4274, %v7274
    %7276 = vdwg.mxu0
    %7277 = vmatprep.subr.mxu0 0.0
    %7278 = vmatpush1.msra.mxu0 %v4220
    %7279 = vmatprep.subr.mxu0 0.0
    %7280 = vmatpush1.msra.mxu0 %v4217
    %7281 = vmatprep.subr.mxu0 0.0
    %7282 = vmatpush1.msra.mxu0 %v4214
    %7283 = vmatprep.subr.mxu0 0.0
    %7284 = vmatpush1.msra.mxu0 %v4211
    %7285 = vmatprep.subr.mxu0 0.0
    %7286 = vmatpush1.msra.mxu0 %v4208
    %7287 = vmatprep.subr.mxu0 0.0
    %7288 = vmatpush1.msra.mxu0 %v4205
    %7289 = vmatprep.subr.mxu0 0.0
    %7290 = vmatpush1.msra.mxu0 %v4202
    %7291 = vmatprep.subr.mxu0 0.0
    %7292 = vmatpush1.msra.mxu0 %v4199
    %7293 = vmatprep.subr.mxu0 0.0
    %7294 = vmatpush1.msra.mxu0 %v4196
    %7295 = vmatprep.subr.mxu0 0.0
    %7296 = vmatpush1.msra.mxu0 %v4193
    %7297 = vmatprep.subr.mxu0 0.0
    %7298 = vmatpush1.msra.mxu0 %v4190
    %7299 = vmatprep.subr.mxu0 0.0
    %7300 = vmatpush1.msra.mxu0 %v4187
    %7301 = vmatprep.subr.mxu0 0.0
    %7302 = vmatpush1.msra.mxu0 %v4184
    %7303 = vmatprep.subr.mxu0 0.0
    %7304 = vmatpush1.msra.mxu0 %v4181
    %7305 = vmatprep.subr.mxu0 0.0
    %7306 = vmatpush1.msra.mxu0 %v4178
    %7307 = vmatprep.subr.mxu0 0.0
    %7308 = vmatpush1.msra.mxu0 %v4175
    %7309 = vmatprep.subr.mxu0 0.0
    %7310 = vmatpush2.msra.mxu0 0.0
    %7311 = vmatprep.subr.mxu0 0.0
    %7312 = vmatpush2.msra.mxu0 0.0
    %7313 = vmatprep.subr.mxu0 0.0
    %7314 = vmatpush2.msra.mxu0 0.0
    %7315 = vmatprep.subr.mxu0 0.0
    %7316 = vmatpush2.msra.mxu0 0.0
    %7317 = vmatprep.subr.mxu0 0.0
    %7318 = vmatpush2.msra.mxu0 0.0
    %7319 = vmatprep.subr.mxu0 0.0
    %7320 = vmatpush2.msra.mxu0 0.0
    %7321 = vmatprep.subr.mxu0 0.0
    %7322 = vmatpush2.msra.mxu0 0.0
    %7323 = vmatprep.subr.mxu0 0.0
    %7324 = vmatpush2.msra.mxu0 0.0
    %7325 = vmatprep.subr.mxu0 0.0
    %7326 = vmatpush2.msra.mxu0 0.0
    %7327 = vmatprep.subr.mxu0 0.0
    %7328 = vmatpush2.msra.mxu0 0.0
    %7329 = vmatprep.subr.mxu0 0.0
    %7330 = vmatpush2.msra.mxu0 0.0
    %7331 = vmatprep.subr.mxu0 0.0
    %7332 = vmatpush2.msra.mxu0 0.0
    %7333 = vmatprep.subr.mxu0 0.0
    %7334 = vmatpush2.msra.mxu0 0.0
    %7335 = vmatprep.subr.mxu0 0.0
    %7336 = vmatpush2.msra.mxu0 0.0
    %7337 = vmatprep.subr.mxu0 0.0
    %7338 = vmatpush2.msra.mxu0 0.0
    %7339 = vmatprep.subr.mxu0 0.0
    %7340 = vmatpush2.msra.mxu0 0.0
    %7341 = vmatprep.mubr.f32.mxu0 0.0
    %7342 = vmatmul.mubr.f32.gmra.mxu0 %v7195
    %v7343 = vpop.f32.mrf.mxu0
    %v7344 = vadd.f32 %v4278, %v7343
    %v7345 = vpop.f32.mrf.mxu0
    %7346 = vdwg.mxu0
    %v7347 = vadd.f32 %v7203, %v7273
    %v7348 = vxor.u32 %v7347, 2147483648
    %v7349 = vmul.f32 %v7348, 1.442695
    %v7350 = vpow.pop %v7349
    %v7351 = vadd.f32 %v7350, 1.0
    %v7352 = vrcp.pop %v7351
    %v7353 = vmul.f32 1.0, %v7352
    %v7354 = vadd.f32 %v7204, %v7275
    %v7355 = vxor.u32 %v7354, 2147483648
    %v7356 = vmul.f32 %v7355, 1.442695
    %v7357 = vpow.pop %v7356
    %v7358 = vadd.f32 %v7357, 1.0
    %v7359 = vrcp.pop %v7358
    %v7360 = vmul.f32 1.0, %v7359
    %v7361 = vmul.f32 %v7353, %v7344
    %v7362 = vadd.f32 %v7205, %v7361
    %v7363 = vtanh.pop %v7362
    %v7364 = vsub.f32 1.0, %v7360
    %v7365 = vmul.f32 %v7364, %v7363
    %v7366 = vmul.f32 %v7360, %v7195
    %v7367 = vadd.f32 %v7365, %v7366
    %7368 = vset.pattern.permute.xlu0 18
    %7369 = vperm.xlu0 %7368, %v4171
    %v7370 = vpop.permute.xlu0 %7369
    %v7372 = vmul.f32 %v7370, %v4232
    %v7373 = vmul.f32 %v7370, %v4236
    %v7374 = vmul.f32 %v7370, %v4240
    %v7375 = vadd.f32 %v7372, %v4251
    %v7376 = vadd.f32 %v7373, %v4255
    %v7377 = vadd.f32 %v7374, %v4259
    %7378 = vmatprep.subr.mxu0 %v4219
    %7379 = vmatpush1.msra.mxu0 %v4218
    %7380 = vmatprep.subr.mxu0 %v4216
    %7381 = vmatpush1.msra.mxu0 %v4215
    %7382 = vmatprep.subr.mxu0 %v4213
    %7383 = vmatpush1.msra.mxu0 %v4212
    %7384 = vmatprep.subr.mxu0 %v4210
    %7385 = vmatpush1.msra.mxu0 %v4209
    %7386 = vmatprep.subr.mxu0 %v4207
    %7387 = vmatpush1.msra.mxu0 %v4206
    %7388 = vmatprep.subr.mxu0 %v4204
    %7389 = vmatpush1.msra.mxu0 %v4203
    %7390 = vmatprep.subr.mxu0 %v4201
    %7391 = vmatpush1.msra.mxu0 %v4200
    %7392 = vmatprep.subr.mxu0 %v4198
    %7393 = vmatpush1.msra.mxu0 %v4197
    %7394 = vmatprep.subr.mxu0 %v4195
    %7395 = vmatpush1.msra.mxu0 %v4194
    %7396 = vmatprep.subr.mxu0 %v4192
    %7397 = vmatpush1.msra.mxu0 %v4191
    %7398 = vmatprep.subr.mxu0 %v4189
    %7399 = vmatpush1.msra.mxu0 %v4188
    %7400 = vmatprep.subr.mxu0 %v4186
    %7401 = vmatpush1.msra.mxu0 %v4185
    %7402 = vmatprep.subr.mxu0 %v4183
    %7403 = vmatpush1.msra.mxu0 %v4182
    %7404 = vmatprep.subr.mxu0 %v4180
    %7405 = vmatpush1.msra.mxu0 %v4179
    %7406 = vmatprep.subr.mxu0 %v4177
    %7407 = vmatpush1.msra.mxu0 %v4176
    %7408 = vmatprep.subr.mxu0 %v4174
    %7409 = vmatpush1.msra.mxu0 %v4173
    %7410 = vmatprep.subr.mxu0 0.0
    %7411 = vmatpush2.msra.mxu0 0.0
    %7412 = vmatprep.subr.mxu0 0.0
    %7413 = vmatpush2.msra.mxu0 0.0
    %7414 = vmatprep.subr.mxu0 0.0
    %7415 = vmatpush2.msra.mxu0 0.0
    %7416 = vmatprep.subr.mxu0 0.0
    %7417 = vmatpush2.msra.mxu0 0.0
    %7418 = vmatprep.subr.mxu0 0.0
    %7419 = vmatpush2.msra.mxu0 0.0
    %7420 = vmatprep.subr.mxu0 0.0
    %7421 = vmatpush2.msra.mxu0 0.0
    %7422 = vmatprep.subr.mxu0 0.0
    %7423 = vmatpush2.msra.mxu0 0.0
    %7424 = vmatprep.subr.mxu0 0.0
    %7425 = vmatpush2.msra.mxu0 0.0
    %7426 = vmatprep.subr.mxu0 0.0
    %7427 = vmatpush2.msra.mxu0 0.0
    %7428 = vmatprep.subr.mxu0 0.0
    %7429 = vmatpush2.msra.mxu0 0.0
    %7430 = vmatprep.subr.mxu0 0.0
    %7431 = vmatpush2.msra.mxu0 0.0
    %7432 = vmatprep.subr.mxu0 0.0
    %7433 = vmatpush2.msra.mxu0 0.0
    %7434 = vmatprep.subr.mxu0 0.0
    %7435 = vmatpush2.msra.mxu0 0.0
    %7436 = vmatprep.subr.mxu0 0.0
    %7437 = vmatpush2.msra.mxu0 0.0
    %7438 = vmatprep.subr.mxu0 0.0
    %7439 = vmatpush2.msra.mxu0 0.0
    %7440 = vmatprep.subr.mxu0 0.0
    %7441 = vmatpush2.msra.mxu0 0.0
    %7442 = vmatprep.mubr.f32.mxu0 0.0
    %7443 = vmatmul.mubr.f32.gmra.mxu0 %v7367
    %v7444 = vpop.f32.mrf.mxu0
    %v7445 = vadd.f32 %v4270, %v7444
    %v7446 = vpop.f32.mrf.mxu0
    %v7447 = vadd.f32 %v4274, %v7446
    %7448 = vdwg.mxu0
    %7449 = vmatprep.subr.mxu0 0.0
    %7450 = vmatpush1.msra.mxu0 %v4220
    %7451 = vmatprep.subr.mxu0 0.0
    %7452 = vmatpush1.msra.mxu0 %v4217
    %7453 = vmatprep.subr.mxu0 0.0
    %7454 = vmatpush1.msra.mxu0 %v4214
    %7455 = vmatprep.subr.mxu0 0.0
    %7456 = vmatpush1.msra.mxu0 %v4211
    %7457 = vmatprep.subr.mxu0 0.0
    %7458 = vmatpush1.msra.mxu0 %v4208
    %7459 = vmatprep.subr.mxu0 0.0
    %7460 = vmatpush1.msra.mxu0 %v4205
    %7461 = vmatprep.subr.mxu0 0.0
    %7462 = vmatpush1.msra.mxu0 %v4202
    %7463 = vmatprep.subr.mxu0 0.0
    %7464 = vmatpush1.msra.mxu0 %v4199
    %7465 = vmatprep.subr.mxu0 0.0
    %7466 = vmatpush1.msra.mxu0 %v4196
    %7467 = vmatprep.subr.mxu0 0.0
    %7468 = vmatpush1.msra.mxu0 %v4193
    %7469 = vmatprep.subr.mxu0 0.0
    %7470 = vmatpush1.msra.mxu0 %v4190
    %7471 = vmatprep.subr.mxu0 0.0
    %7472 = vmatpush1.msra.mxu0 %v4187
    %7473 = vmatprep.subr.mxu0 0.0
    %7474 = vmatpush1.msra.mxu0 %v4184
    %7475 = vmatprep.subr.mxu0 0.0
    %7476 = vmatpush1.msra.mxu0 %v4181
    %7477 = vmatprep.subr.mxu0 0.0
    %7478 = vmatpush1.msra.mxu0 %v4178
    %7479 = vmatprep.subr.mxu0 0.0
    %7480 = vmatpush1.msra.mxu0 %v4175
    %7481 = vmatprep.subr.mxu0 0.0
    %7482 = vmatpush2.msra.mxu0 0.0
    %7483 = vmatprep.subr.mxu0 0.0
    %7484 = vmatpush2.msra.mxu0 0.0
    %7485 = vmatprep.subr.mxu0 0.0
    %7486 = vmatpush2.msra.mxu0 0.0
    %7487 = vmatprep.subr.mxu0 0.0
    %7488 = vmatpush2.msra.mxu0 0.0
    %7489 = vmatprep.subr.mxu0 0.0
    %7490 = vmatpush2.msra.mxu0 0.0
    %7491 = vmatprep.subr.mxu0 0.0
    %7492 = vmatpush2.msra.mxu0 0.0
    %7493 = vmatprep.subr.mxu0 0.0
    %7494 = vmatpush2.msra.mxu0 0.0
    %7495 = vmatprep.subr.mxu0 0.0
    %7496 = vmatpush2.msra.mxu0 0.0
    %7497 = vmatprep.subr.mxu0 0.0
    %7498 = vmatpush2.msra.mxu0 0.0
    %7499 = vmatprep.subr.mxu0 0.0
    %7500 = vmatpush2.msra.mxu0 0.0
    %7501 = vmatprep.subr.mxu0 0.0
    %7502 = vmatpush2.msra.mxu0 0.0
    %7503 = vmatprep.subr.mxu0 0.0
    %7504 = vmatpush2.msra.mxu0 0.0
    %7505 = vmatprep.subr.mxu0 0.0
    %7506 = vmatpush2.msra.mxu0 0.0
    %7507 = vmatprep.subr.mxu0 0.0
    %7508 = vmatpush2.msra.mxu0 0.0
    %7509 = vmatprep.subr.mxu0 0.0
    %7510 = vmatpush2.msra.mxu0 0.0
    %7511 = vmatprep.subr.mxu0 0.0
    %7512 = vmatpush2.msra.mxu0 0.0
    %7513 = vmatprep.mubr.f32.mxu0 0.0
    %7514 = vmatmul.mubr.f32.gmra.mxu0 %v7367
    %v7515 = vpop.f32.mrf.mxu0
    %v7516 = vadd.f32 %v4278, %v7515
    %v7517 = vpop.f32.mrf.mxu0
    %7518 = vdwg.mxu0
    %v7519 = vadd.f32 %v7375, %v7445
    %v7520 = vxor.u32 %v7519, 2147483648
    %v7521 = vmul.f32 %v7520, 1.442695
    %v7522 = vpow.pop %v7521
    %v7523 = vadd.f32 %v7522, 1.0
    %v7524 = vrcp.pop %v7523
    %v7525 = vmul.f32 1.0, %v7524
    %v7526 = vadd.f32 %v7376, %v7447
    %v7527 = vxor.u32 %v7526, 2147483648
    %v7528 = vmul.f32 %v7527, 1.442695
    %v7529 = vpow.pop %v7528
    %v7530 = vadd.f32 %v7529, 1.0
    %v7531 = vrcp.pop %v7530
    %v7532 = vmul.f32 1.0, %v7531
    %v7533 = vmul.f32 %v7525, %v7516
    %v7534 = vadd.f32 %v7377, %v7533
    %v7535 = vtanh.pop %v7534
    %v7536 = vsub.f32 1.0, %v7532
    %v7537 = vmul.f32 %v7536, %v7535
    %v7538 = vmul.f32 %v7532, %v7367
    %v7539 = vadd.f32 %v7537, %v7538
    %7540 = vset.pattern.permute.xlu0 19
    %7541 = vperm.xlu0 %7540, %v4171
    %v7542 = vpop.permute.xlu0 %7541
    %v7544 = vmul.f32 %v7542, %v4232
    %v7545 = vmul.f32 %v7542, %v4236
    %v7546 = vmul.f32 %v7542, %v4240
    %v7547 = vadd.f32 %v7544, %v4251
    %v7548 = vadd.f32 %v7545, %v4255
    %v7549 = vadd.f32 %v7546, %v4259
    %7550 = vmatprep.subr.mxu0 %v4219
    %7551 = vmatpush1.msra.mxu0 %v4218
    %7552 = vmatprep.subr.mxu0 %v4216
    %7553 = vmatpush1.msra.mxu0 %v4215
    %7554 = vmatprep.subr.mxu0 %v4213
    %7555 = vmatpush1.msra.mxu0 %v4212
    %7556 = vmatprep.subr.mxu0 %v4210
    %7557 = vmatpush1.msra.mxu0 %v4209
    %7558 = vmatprep.subr.mxu0 %v4207
    %7559 = vmatpush1.msra.mxu0 %v4206
    %7560 = vmatprep.subr.mxu0 %v4204
    %7561 = vmatpush1.msra.mxu0 %v4203
    %7562 = vmatprep.subr.mxu0 %v4201
    %7563 = vmatpush1.msra.mxu0 %v4200
    %7564 = vmatprep.subr.mxu0 %v4198
    %7565 = vmatpush1.msra.mxu0 %v4197
    %7566 = vmatprep.subr.mxu0 %v4195
    %7567 = vmatpush1.msra.mxu0 %v4194
    %7568 = vmatprep.subr.mxu0 %v4192
    %7569 = vmatpush1.msra.mxu0 %v4191
    %7570 = vmatprep.subr.mxu0 %v4189
    %7571 = vmatpush1.msra.mxu0 %v4188
    %7572 = vmatprep.subr.mxu0 %v4186
    %7573 = vmatpush1.msra.mxu0 %v4185
    %7574 = vmatprep.subr.mxu0 %v4183
    %7575 = vmatpush1.msra.mxu0 %v4182
    %7576 = vmatprep.subr.mxu0 %v4180
    %7577 = vmatpush1.msra.mxu0 %v4179
    %7578 = vmatprep.subr.mxu0 %v4177
    %7579 = vmatpush1.msra.mxu0 %v4176
    %7580 = vmatprep.subr.mxu0 %v4174
    %7581 = vmatpush1.msra.mxu0 %v4173
    %7582 = vmatprep.subr.mxu0 0.0
    %7583 = vmatpush2.msra.mxu0 0.0
    %7584 = vmatprep.subr.mxu0 0.0
    %7585 = vmatpush2.msra.mxu0 0.0
    %7586 = vmatprep.subr.mxu0 0.0
    %7587 = vmatpush2.msra.mxu0 0.0
    %7588 = vmatprep.subr.mxu0 0.0
    %7589 = vmatpush2.msra.mxu0 0.0
    %7590 = vmatprep.subr.mxu0 0.0
    %7591 = vmatpush2.msra.mxu0 0.0
    %7592 = vmatprep.subr.mxu0 0.0
    %7593 = vmatpush2.msra.mxu0 0.0
    %7594 = vmatprep.subr.mxu0 0.0
    %7595 = vmatpush2.msra.mxu0 0.0
    %7596 = vmatprep.subr.mxu0 0.0
    %7597 = vmatpush2.msra.mxu0 0.0
    %7598 = vmatprep.subr.mxu0 0.0
    %7599 = vmatpush2.msra.mxu0 0.0
    %7600 = vmatprep.subr.mxu0 0.0
    %7601 = vmatpush2.msra.mxu0 0.0
    %7602 = vmatprep.subr.mxu0 0.0
    %7603 = vmatpush2.msra.mxu0 0.0
    %7604 = vmatprep.subr.mxu0 0.0
    %7605 = vmatpush2.msra.mxu0 0.0
    %7606 = vmatprep.subr.mxu0 0.0
    %7607 = vmatpush2.msra.mxu0 0.0
    %7608 = vmatprep.subr.mxu0 0.0
    %7609 = vmatpush2.msra.mxu0 0.0
    %7610 = vmatprep.subr.mxu0 0.0
    %7611 = vmatpush2.msra.mxu0 0.0
    %7612 = vmatprep.subr.mxu0 0.0
    %7613 = vmatpush2.msra.mxu0 0.0
    %7614 = vmatprep.mubr.f32.mxu0 0.0
    %7615 = vmatmul.mubr.f32.gmra.mxu0 %v7539
    %v7616 = vpop.f32.mrf.mxu0
    %v7617 = vadd.f32 %v4270, %v7616
    %v7618 = vpop.f32.mrf.mxu0
    %v7619 = vadd.f32 %v4274, %v7618
    %7620 = vdwg.mxu0
    %7621 = vmatprep.subr.mxu0 0.0
    %7622 = vmatpush1.msra.mxu0 %v4220
    %7623 = vmatprep.subr.mxu0 0.0
    %7624 = vmatpush1.msra.mxu0 %v4217
    %7625 = vmatprep.subr.mxu0 0.0
    %7626 = vmatpush1.msra.mxu0 %v4214
    %7627 = vmatprep.subr.mxu0 0.0
    %7628 = vmatpush1.msra.mxu0 %v4211
    %7629 = vmatprep.subr.mxu0 0.0
    %7630 = vmatpush1.msra.mxu0 %v4208
    %7631 = vmatprep.subr.mxu0 0.0
    %7632 = vmatpush1.msra.mxu0 %v4205
    %7633 = vmatprep.subr.mxu0 0.0
    %7634 = vmatpush1.msra.mxu0 %v4202
    %7635 = vmatprep.subr.mxu0 0.0
    %7636 = vmatpush1.msra.mxu0 %v4199
    %7637 = vmatprep.subr.mxu0 0.0
    %7638 = vmatpush1.msra.mxu0 %v4196
    %7639 = vmatprep.subr.mxu0 0.0
    %7640 = vmatpush1.msra.mxu0 %v4193
    %7641 = vmatprep.subr.mxu0 0.0
    %7642 = vmatpush1.msra.mxu0 %v4190
    %7643 = vmatprep.subr.mxu0 0.0
    %7644 = vmatpush1.msra.mxu0 %v4187
    %7645 = vmatprep.subr.mxu0 0.0
    %7646 = vmatpush1.msra.mxu0 %v4184
    %7647 = vmatprep.subr.mxu0 0.0
    %7648 = vmatpush1.msra.mxu0 %v4181
    %7649 = vmatprep.subr.mxu0 0.0
    %7650 = vmatpush1.msra.mxu0 %v4178
    %7651 = vmatprep.subr.mxu0 0.0
    %7652 = vmatpush1.msra.mxu0 %v4175
    %7653 = vmatprep.subr.mxu0 0.0
    %7654 = vmatpush2.msra.mxu0 0.0
    %7655 = vmatprep.subr.mxu0 0.0
    %7656 = vmatpush2.msra.mxu0 0.0
    %7657 = vmatprep.subr.mxu0 0.0
    %7658 = vmatpush2.msra.mxu0 0.0
    %7659 = vmatprep.subr.mxu0 0.0
    %7660 = vmatpush2.msra.mxu0 0.0
    %7661 = vmatprep.subr.mxu0 0.0
    %7662 = vmatpush2.msra.mxu0 0.0
    %7663 = vmatprep.subr.mxu0 0.0
    %7664 = vmatpush2.msra.mxu0 0.0
    %7665 = vmatprep.subr.mxu0 0.0
    %7666 = vmatpush2.msra.mxu0 0.0
    %7667 = vmatprep.subr.mxu0 0.0
    %7668 = vmatpush2.msra.mxu0 0.0
    %7669 = vmatprep.subr.mxu0 0.0
    %7670 = vmatpush2.msra.mxu0 0.0
    %7671 = vmatprep.subr.mxu0 0.0
    %7672 = vmatpush2.msra.mxu0 0.0
    %7673 = vmatprep.subr.mxu0 0.0
    %7674 = vmatpush2.msra.mxu0 0.0
    %7675 = vmatprep.subr.mxu0 0.0
    %7676 = vmatpush2.msra.mxu0 0.0
    %7677 = vmatprep.subr.mxu0 0.0
    %7678 = vmatpush2.msra.mxu0 0.0
    %7679 = vmatprep.subr.mxu0 0.0
    %7680 = vmatpush2.msra.mxu0 0.0
    %7681 = vmatprep.subr.mxu0 0.0
    %7682 = vmatpush2.msra.mxu0 0.0
    %7683 = vmatprep.subr.mxu0 0.0
    %7684 = vmatpush2.msra.mxu0 0.0
    %7685 = vmatprep.mubr.f32.mxu0 0.0
    %7686 = vmatmul.mubr.f32.gmra.mxu0 %v7539
    %v7687 = vpop.f32.mrf.mxu0
    %v7688 = vadd.f32 %v4278, %v7687
    %v7689 = vpop.f32.mrf.mxu0
    %7690 = vdwg.mxu0
    %v7691 = vadd.f32 %v7547, %v7617
    %v7692 = vxor.u32 %v7691, 2147483648
    %v7693 = vmul.f32 %v7692, 1.442695
    %v7694 = vpow.pop %v7693
    %v7695 = vadd.f32 %v7694, 1.0
    %v7696 = vrcp.pop %v7695
    %v7697 = vmul.f32 1.0, %v7696
    %v7698 = vadd.f32 %v7548, %v7619
    %v7699 = vxor.u32 %v7698, 2147483648
    %v7700 = vmul.f32 %v7699, 1.442695
    %v7701 = vpow.pop %v7700
    %v7702 = vadd.f32 %v7701, 1.0
    %v7703 = vrcp.pop %v7702
    %v7704 = vmul.f32 1.0, %v7703
    %v7705 = vmul.f32 %v7697, %v7688
    %v7706 = vadd.f32 %v7549, %v7705
    %v7707 = vtanh.pop %v7706
    %v7708 = vsub.f32 1.0, %v7704
    %v7709 = vmul.f32 %v7708, %v7707
    %v7710 = vmul.f32 %v7704, %v7539
    %v7711 = vadd.f32 %v7709, %v7710
    %v7712 = vld [vmem:[%s39] sm:$0xff]
    %v7713 = vld [vmem:[%s39 + $0x8] sm:$0xff]
    %v7714 = vld [vmem:[%s39 + $0x10] sm:$0xff]
    %v7715 = vld [vmem:[%s39 + $0x18] sm:$0xff]
    %v7716 = vld [vmem:[%s39 + $0x20] sm:$0xff]
    %v7717 = vld [vmem:[%s39 + $0x28] sm:$0xff]
    %v7718 = vld [vmem:[%s39 + $0x30] sm:$0xff]
    %v7719 = vld [vmem:[%s39 + $0x38] sm:$0xff]
    %v7720 = vld [vmem:[%s39 + $0x40] sm:$0xff]
    %v7721 = vld [vmem:[%s39 + $0x48] sm:$0xff]
    %v7722 = vld [vmem:[%s39 + $0x50] sm:$0xff]
    %v7723 = vld [vmem:[%s39 + $0x58] sm:$0xff]
    %v7724 = vld [vmem:[%s39 + $0x60] sm:$0xff]
    %v7725 = vld [vmem:[%s39 + $0x68] sm:$0xff]
    %v7726 = vld [vmem:[%s39 + $0x70] sm:$0xff]
    %v7727 = vld [vmem:[%s39 + $0x78] sm:$0xff]
    %v7728 = vld [vmem:[%s41] sm:$0x1]
    %v7730 = vlaneseq
    %v7731 = vshrl.u32 %v7730, 7
    %v7732 = vsub.s32 0, %v7731
    %v7733 = vrot.slane %v7728, %v7732
    %7735 = vmatprep.subr.mxu0 0.0
    %7736 = vmatpush1.msra.mxu0 %v7727
    %7737 = vmatprep.subr.mxu0 0.0
    %7738 = vmatpush1.msra.mxu0 %v7726
    %7739 = vmatprep.subr.mxu0 0.0
    %7740 = vmatpush1.msra.mxu0 %v7725
    %7741 = vmatprep.subr.mxu0 0.0
    %7742 = vmatpush1.msra.mxu0 %v7724
    %7743 = vmatprep.subr.mxu0 0.0
    %7744 = vmatpush1.msra.mxu0 %v7723
    %7745 = vmatprep.subr.mxu0 0.0
    %7746 = vmatpush1.msra.mxu0 %v7722
    %7747 = vmatprep.subr.mxu0 0.0
    %7748 = vmatpush1.msra.mxu0 %v7721
    %7749 = vmatprep.subr.mxu0 0.0
    %7750 = vmatpush1.msra.mxu0 %v7720
    %7751 = vmatprep.subr.mxu0 0.0
    %7752 = vmatpush1.msra.mxu0 %v7719
    %7753 = vmatprep.subr.mxu0 0.0
    %7754 = vmatpush1.msra.mxu0 %v7718
    %7755 = vmatprep.subr.mxu0 0.0
    %7756 = vmatpush1.msra.mxu0 %v7717
    %7757 = vmatprep.subr.mxu0 0.0
    %7758 = vmatpush1.msra.mxu0 %v7716
    %7759 = vmatprep.subr.mxu0 0.0
    %7760 = vmatpush1.msra.mxu0 %v7715
    %7761 = vmatprep.subr.mxu0 0.0
    %7762 = vmatpush1.msra.mxu0 %v7714
    %7763 = vmatprep.subr.mxu0 0.0
    %7764 = vmatpush1.msra.mxu0 %v7713
    %7765 = vmatprep.subr.mxu0 0.0
    %7766 = vmatpush1.msra.mxu0 %v7712
    %7767 = vmatprep.subr.mxu0 0.0
    %7768 = vmatpush2.msra.mxu0 0.0
    %7769 = vmatprep.subr.mxu0 0.0
    %7770 = vmatpush2.msra.mxu0 0.0
    %7771 = vmatprep.subr.mxu0 0.0
    %7772 = vmatpush2.msra.mxu0 0.0
    %7773 = vmatprep.subr.mxu0 0.0
    %7774 = vmatpush2.msra.mxu0 0.0
    %7775 = vmatprep.subr.mxu0 0.0
    %7776 = vmatpush2.msra.mxu0 0.0
    %7777 = vmatprep.subr.mxu0 0.0
    %7778 = vmatpush2.msra.mxu0 0.0
    %7779 = vmatprep.subr.mxu0 0.0
    %7780 = vmatpush2.msra.mxu0 0.0
    %7781 = vmatprep.subr.mxu0 0.0
    %7782 = vmatpush2.msra.mxu0 0.0
    %7783 = vmatprep.subr.mxu0 0.0
    %7784 = vmatpush2.msra.mxu0 0.0
    %7785 = vmatprep.subr.mxu0 0.0
    %7786 = vmatpush2.msra.mxu0 0.0
    %7787 = vmatprep.subr.mxu0 0.0
    %7788 = vmatpush2.msra.mxu0 0.0
    %7789 = vmatprep.subr.mxu0 0.0
    %7790 = vmatpush2.msra.mxu0 0.0
    %7791 = vmatprep.subr.mxu0 0.0
    %7792 = vmatpush2.msra.mxu0 0.0
    %7793 = vmatprep.subr.mxu0 0.0
    %7794 = vmatpush2.msra.mxu0 0.0
    %7795 = vmatprep.subr.mxu0 0.0
    %7796 = vmatpush2.msra.mxu0 0.0
    %7797 = vmatprep.subr.mxu0 0.0
    %7798 = vmatpush2.msra.mxu0 0.0
    %7799 = vmatprep.mubr.f32.mxu0 0.0
    %7800 = vmatmul.mubr.f32.gmra.mxu0 %v7711
    %v7801 = vpop.f32.mrf.mxu0
    %v7802 = vadd.f32 %v7733, %v7801
    %v7803 = vpop.f32.mrf.mxu0
    %7804 = vdwg.mxu0
    %v7805 = vld [vmem:[%s43] sm:$0xff]
    %v7806 = vld [vmem:[%s43 + $0x8] sm:$0xff]
    %v7807 = vld [vmem:[%s43 + $0x10] sm:$0xff]
    %v7808 = vld [vmem:[%s43 + $0x18] sm:$0xff]
    %v7809 = vld [vmem:[%s43 + $0x20] sm:$0xff]
    %v7810 = vld [vmem:[%s43 + $0x28] sm:$0xff]
    %v7811 = vld [vmem:[%s43 + $0x30] sm:$0xff]
    %v7812 = vld [vmem:[%s43 + $0x38] sm:$0xff]
    %v7813 = vld [vmem:[%s43 + $0x40] sm:$0xff]
    %v7814 = vld [vmem:[%s43 + $0x48] sm:$0xff]
    %v7815 = vld [vmem:[%s43 + $0x50] sm:$0xff]
    %v7816 = vld [vmem:[%s43 + $0x58] sm:$0xff]
    %v7817 = vld [vmem:[%s43 + $0x60] sm:$0xff]
    %v7818 = vld [vmem:[%s43 + $0x68] sm:$0xff]
    %v7819 = vld [vmem:[%s43 + $0x70] sm:$0xff]
    %v7820 = vld [vmem:[%s43 + $0x78] sm:$0xff]
    %v7821 = vld [vmem:[%s43 + $0x80] sm:$0xff]
    %v7822 = vld [vmem:[%s43 + $0x88] sm:$0xff]
    %v7823 = vld [vmem:[%s43 + $0x90] sm:$0xff]
    %v7824 = vld [vmem:[%s43 + $0x98] sm:$0xff]
    %v7825 = vld [vmem:[%s43 + $0xa0] sm:$0xff]
    %v7826 = vld [vmem:[%s43 + $0xa8] sm:$0xff]
    %v7827 = vld [vmem:[%s43 + $0xb0] sm:$0xff]
    %v7828 = vld [vmem:[%s43 + $0xb8] sm:$0xff]
    %v7829 = vld [vmem:[%s43 + $0xc0] sm:$0xff]
    %v7830 = vld [vmem:[%s43 + $0xc8] sm:$0xff]
    %v7831 = vld [vmem:[%s43 + $0xd0] sm:$0xff]
    %v7832 = vld [vmem:[%s43 + $0xd8] sm:$0xff]
    %v7833 = vld [vmem:[%s43 + $0xe0] sm:$0xff]
    %v7834 = vld [vmem:[%s43 + $0xe8] sm:$0xff]
    %v7835 = vld [vmem:[%s43 + $0xf0] sm:$0xff]
    %v7836 = vld [vmem:[%s43 + $0xf8] sm:$0xff]
    %v7837 = vld [vmem:[%s45] sm:$0xff]
    %v7838 = vld [vmem:[%s45 + $0x8] sm:$0xff]
    %v7839 = vld [vmem:[%s45 + $0x10] sm:$0xff]
    %v7840 = vld [vmem:[%s45 + $0x18] sm:$0xff]
    %v7841 = vld [vmem:[%s45 + $0x20] sm:$0xff]
    %v7842 = vld [vmem:[%s45 + $0x28] sm:$0xff]
    %v7843 = vld [vmem:[%s45 + $0x30] sm:$0xff]
    %v7844 = vld [vmem:[%s45 + $0x38] sm:$0xff]
    %v7845 = vld [vmem:[%s45 + $0x40] sm:$0xff]
    %v7846 = vld [vmem:[%s45 + $0x48] sm:$0xff]
    %v7847 = vld [vmem:[%s45 + $0x50] sm:$0xff]
    %v7848 = vld [vmem:[%s45 + $0x58] sm:$0xff]
    %v7849 = vld [vmem:[%s45 + $0x60] sm:$0xff]
    %v7850 = vld [vmem:[%s45 + $0x68] sm:$0xff]
    %v7851 = vld [vmem:[%s45 + $0x70] sm:$0xff]
    %v7852 = vld [vmem:[%s45 + $0x78] sm:$0xff]
    %v7853 = vld [vmem:[%s45 + $0x80] sm:$0xff]
    %v7854 = vld [vmem:[%s45 + $0x88] sm:$0xff]
    %v7855 = vld [vmem:[%s45 + $0x90] sm:$0xff]
    %v7856 = vld [vmem:[%s45 + $0x98] sm:$0xff]
    %v7857 = vld [vmem:[%s45 + $0xa0] sm:$0xff]
    %v7858 = vld [vmem:[%s45 + $0xa8] sm:$0xff]
    %v7859 = vld [vmem:[%s45 + $0xb0] sm:$0xff]
    %v7860 = vld [vmem:[%s45 + $0xb8] sm:$0xff]
    %v7861 = vld [vmem:[%s45 + $0xc0] sm:$0xff]
    %v7862 = vld [vmem:[%s45 + $0xc8] sm:$0xff]
    %v7863 = vld [vmem:[%s45 + $0xd0] sm:$0xff]
    %v7864 = vld [vmem:[%s45 + $0xd8] sm:$0xff]
    %v7865 = vld [vmem:[%s45 + $0xe0] sm:$0xff]
    %v7866 = vld [vmem:[%s45 + $0xe8] sm:$0xff]
    %v7867 = vld [vmem:[%s45 + $0xf0] sm:$0xff]
    %v7868 = vld [vmem:[%s45 + $0xf8] sm:$0xff]
    %7869 = vmatprep.subr.mxu0 %v7868
    %7870 = vmatpush1.msra.mxu0 %v7867
    %7871 = vmatprep.subr.mxu0 %v7866
    %7872 = vmatpush1.msra.mxu0 %v7865
    %7873 = vmatprep.subr.mxu0 %v7864
    %7874 = vmatpush1.msra.mxu0 %v7863
    %7875 = vmatprep.subr.mxu0 %v7862
    %7876 = vmatpush1.msra.mxu0 %v7861
    %7877 = vmatprep.subr.mxu0 %v7860
    %7878 = vmatpush1.msra.mxu0 %v7859
    %7879 = vmatprep.subr.mxu0 %v7858
    %7880 = vmatpush1.msra.mxu0 %v7857
    %7881 = vmatprep.subr.mxu0 %v7856
    %7882 = vmatpush1.msra.mxu0 %v7855
    %7883 = vmatprep.subr.mxu0 %v7854
    %7884 = vmatpush1.msra.mxu0 %v7853
    %7885 = vmatprep.subr.mxu0 %v7852
    %7886 = vmatpush1.msra.mxu0 %v7851
    %7887 = vmatprep.subr.mxu0 %v7850
    %7888 = vmatpush1.msra.mxu0 %v7849
    %7889 = vmatprep.subr.mxu0 %v7848
    %7890 = vmatpush1.msra.mxu0 %v7847
    %7891 = vmatprep.subr.mxu0 %v7846
    %7892 = vmatpush1.msra.mxu0 %v7845
    %7893 = vmatprep.subr.mxu0 %v7844
    %7894 = vmatpush1.msra.mxu0 %v7843
    %7895 = vmatprep.subr.mxu0 %v7842
    %7896 = vmatpush1.msra.mxu0 %v7841
    %7897 = vmatprep.subr.mxu0 %v7840
    %7898 = vmatpush1.msra.mxu0 %v7839
    %7899 = vmatprep.subr.mxu0 %v7838
    %7900 = vmatpush1.msra.mxu0 %v7837
    %7901 = vmatprep.subr.mxu0 0.0
    %7902 = vmatpush2.msra.mxu0 0.0
    %7903 = vmatprep.subr.mxu0 0.0
    %7904 = vmatpush2.msra.mxu0 0.0
    %7905 = vmatprep.subr.mxu0 0.0
    %7906 = vmatpush2.msra.mxu0 0.0
    %7907 = vmatprep.subr.mxu0 0.0
    %7908 = vmatpush2.msra.mxu0 0.0
    %7909 = vmatprep.subr.mxu0 0.0
    %7910 = vmatpush2.msra.mxu0 0.0
    %7911 = vmatprep.subr.mxu0 0.0
    %7912 = vmatpush2.msra.mxu0 0.0
    %7913 = vmatprep.subr.mxu0 0.0
    %7914 = vmatpush2.msra.mxu0 0.0
    %7915 = vmatprep.subr.mxu0 0.0
    %7916 = vmatpush2.msra.mxu0 0.0
    %7917 = vmatprep.subr.mxu0 0.0
    %7918 = vmatpush2.msra.mxu0 0.0
    %7919 = vmatprep.subr.mxu0 0.0
    %7920 = vmatpush2.msra.mxu0 0.0
    %7921 = vmatprep.subr.mxu0 0.0
    %7922 = vmatpush2.msra.mxu0 0.0
    %7923 = vmatprep.subr.mxu0 0.0
    %7924 = vmatpush2.msra.mxu0 0.0
    %7925 = vmatprep.subr.mxu0 0.0
    %7926 = vmatpush2.msra.mxu0 0.0
    %7927 = vmatprep.subr.mxu0 0.0
    %7928 = vmatpush2.msra.mxu0 0.0
    %7929 = vmatprep.subr.mxu0 0.0
    %7930 = vmatpush2.msra.mxu0 0.0
    %7931 = vmatprep.subr.mxu0 0.0
    %7932 = vmatpush2.msra.mxu0 0.0
    %7933 = vmatprep.mubr.f32.mxu0 0.0
    %7934 = vmatmul.mubr.f32.gmra.mxu0 %v7711
    %v7935 = vpop.f32.mrf.mxu0
    %v7936 = vadd.f32 0.0, %v7935
    %v7937 = vpop.f32.mrf.mxu0
    %v7938 = vadd.f32 0.0, %v7937
    %7939 = vdwg.mxu0
    %7940 = vmatprep.subr.mxu0 %v7836
    %7941 = vmatpush1.msra.mxu0 %v7835
    %7942 = vmatprep.subr.mxu0 %v7834
    %7943 = vmatpush1.msra.mxu0 %v7833
    %7944 = vmatprep.subr.mxu0 %v7832
    %7945 = vmatpush1.msra.mxu0 %v7831
    %7946 = vmatprep.subr.mxu0 %v7830
    %7947 = vmatpush1.msra.mxu0 %v7829
    %7948 = vmatprep.subr.mxu0 %v7828
    %7949 = vmatpush1.msra.mxu0 %v7827
    %7950 = vmatprep.subr.mxu0 %v7826
    %7951 = vmatpush1.msra.mxu0 %v7825
    %7952 = vmatprep.subr.mxu0 %v7824
    %7953 = vmatpush1.msra.mxu0 %v7823
    %7954 = vmatprep.subr.mxu0 %v7822
    %7955 = vmatpush1.msra.mxu0 %v7821
    %7956 = vmatprep.subr.mxu0 %v7820
    %7957 = vmatpush1.msra.mxu0 %v7819
    %7958 = vmatprep.subr.mxu0 %v7818
    %7959 = vmatpush1.msra.mxu0 %v7817
    %7960 = vmatprep.subr.mxu0 %v7816
    %7961 = vmatpush1.msra.mxu0 %v7815
    %7962 = vmatprep.subr.mxu0 %v7814
    %7963 = vmatpush1.msra.mxu0 %v7813
    %7964 = vmatprep.subr.mxu0 %v7812
    %7965 = vmatpush1.msra.mxu0 %v7811
    %7966 = vmatprep.subr.mxu0 %v7810
    %7967 = vmatpush1.msra.mxu0 %v7809
    %7968 = vmatprep.subr.mxu0 %v7808
    %7969 = vmatpush1.msra.mxu0 %v7807
    %7970 = vmatprep.subr.mxu0 %v7806
    %7971 = vmatpush1.msra.mxu0 %v7805
    %7972 = vmatprep.subr.mxu0 0.0
    %7973 = vmatpush2.msra.mxu0 0.0
    %7974 = vmatprep.subr.mxu0 0.0
    %7975 = vmatpush2.msra.mxu0 0.0
    %7976 = vmatprep.subr.mxu0 0.0
    %7977 = vmatpush2.msra.mxu0 0.0
    %7978 = vmatprep.subr.mxu0 0.0
    %7979 = vmatpush2.msra.mxu0 0.0
    %7980 = vmatprep.subr.mxu0 0.0
    %7981 = vmatpush2.msra.mxu0 0.0
    %7982 = vmatprep.subr.mxu0 0.0
    %7983 = vmatpush2.msra.mxu0 0.0
    %7984 = vmatprep.subr.mxu0 0.0
    %7985 = vmatpush2.msra.mxu0 0.0
    %7986 = vmatprep.subr.mxu0 0.0
    %7987 = vmatpush2.msra.mxu0 0.0
    %7988 = vmatprep.subr.mxu0 0.0
    %7989 = vmatpush2.msra.mxu0 0.0
    %7990 = vmatprep.subr.mxu0 0.0
    %7991 = vmatpush2.msra.mxu0 0.0
    %7992 = vmatprep.subr.mxu0 0.0
    %7993 = vmatpush2.msra.mxu0 0.0
    %7994 = vmatprep.subr.mxu0 0.0
    %7995 = vmatpush2.msra.mxu0 0.0
    %7996 = vmatprep.subr.mxu0 0.0
    %7997 = vmatpush2.msra.mxu0 0.0
    %7998 = vmatprep.subr.mxu0 0.0
    %7999 = vmatpush2.msra.mxu0 0.0
    %8000 = vmatprep.subr.mxu0 0.0
    %8001 = vmatpush2.msra.mxu0 0.0
    %8002 = vmatprep.subr.mxu0 0.0
    %8003 = vmatpush2.msra.mxu0 0.0
    %8004 = vmatprep.mubr.f32.mxu0 0.0
    %8005 = vmatmul.mubr.f32.gmra.mxu0 %v4170
    %v8006 = vpop.f32.mrf.mxu0
    %v8007 = vadd.f32 %v7936, %v8006
    %v8008 = vpop.f32.mrf.mxu0
    %v8009 = vadd.f32 %v7938, %v8008
    %8010 = vdwg.mxu0
    %v8011 = vld [vmem:[%s47] sm:$0x3]
    %v8013 = vlaneseq
    %v8014 = vshrl.u32 %v8013, 7
    %v8015 = vsub.s32 0, %v8014
    %v8016 = vrot.slane %v8011, %v8015
    %v8017 = vlaneseq
    %v8018 = vshrl.u32 %v8017, 7
    %v8019 = vsub.s32 1, %v8018
    %v8020 = vrot.slane %v8011, %v8019
    %v8023 = vadd.f32 %v8007, %v8016
    %v8024 = vadd.f32 %v8009, %v8020
    %v8025 = vmax.f32 %v8023, 0.0
    %v8026 = vmax.f32 %v8024, 0.0
    %v8027 = vld [vmem:[%s49] sm:$0xff]
    %v8028 = vld [vmem:[%s49 + $0x8] sm:$0xff]
    %v8029 = vld [vmem:[%s49 + $0x10] sm:$0xff]
    %v8030 = vld [vmem:[%s49 + $0x18] sm:$0xff]
    %v8031 = vld [vmem:[%s49 + $0x20] sm:$0xff]
    %v8032 = vld [vmem:[%s49 + $0x28] sm:$0xff]
    %v8033 = vld [vmem:[%s49 + $0x30] sm:$0xff]
    %v8034 = vld [vmem:[%s49 + $0x38] sm:$0xff]
    %v8035 = vld [vmem:[%s49 + $0x40] sm:$0xff]
    %v8036 = vld [vmem:[%s49 + $0x48] sm:$0xff]
    %v8037 = vld [vmem:[%s49 + $0x50] sm:$0xff]
    %v8038 = vld [vmem:[%s49 + $0x58] sm:$0xff]
    %v8039 = vld [vmem:[%s49 + $0x60] sm:$0xff]
    %v8040 = vld [vmem:[%s49 + $0x68] sm:$0xff]
    %v8041 = vld [vmem:[%s49 + $0x70] sm:$0xff]
    %v8042 = vld [vmem:[%s49 + $0x78] sm:$0xff]
    %v8043 = vld [vmem:[%s49 + $0x80] sm:$0xff]
    %v8044 = vld [vmem:[%s49 + $0x88] sm:$0xff]
    %v8045 = vld [vmem:[%s49 + $0x90] sm:$0xff]
    %v8046 = vld [vmem:[%s49 + $0x98] sm:$0xff]
    %v8047 = vld [vmem:[%s49 + $0xa0] sm:$0xff]
    %v8048 = vld [vmem:[%s49 + $0xa8] sm:$0xff]
    %v8049 = vld [vmem:[%s49 + $0xb0] sm:$0xff]
    %v8050 = vld [vmem:[%s49 + $0xb8] sm:$0xff]
    %v8051 = vld [vmem:[%s49 + $0xc0] sm:$0xff]
    %v8052 = vld [vmem:[%s49 + $0xc8] sm:$0xff]
    %v8053 = vld [vmem:[%s49 + $0xd0] sm:$0xff]
    %v8054 = vld [vmem:[%s49 + $0xd8] sm:$0xff]
    %v8055 = vld [vmem:[%s49 + $0xe0] sm:$0xff]
    %v8056 = vld [vmem:[%s49 + $0xe8] sm:$0xff]
    %v8057 = vld [vmem:[%s49 + $0xf0] sm:$0xff]
    %v8058 = vld [vmem:[%s49 + $0xf8] sm:$0xff]
    %v8059 = vld [vmem:[%s51] sm:$0x1]
    %v8061 = vlaneseq
    %v8062 = vshrl.u32 %v8061, 7
    %v8063 = vsub.s32 0, %v8062
    %v8064 = vrot.slane %v8059, %v8063
    %8066 = vmatprep.subr.mxu0 0.0
    %8067 = vmatpush1.msra.mxu0 %v8042
    %8068 = vmatprep.subr.mxu0 0.0
    %8069 = vmatpush1.msra.mxu0 %v8041
    %8070 = vmatprep.subr.mxu0 0.0
    %8071 = vmatpush1.msra.mxu0 %v8040
    %8072 = vmatprep.subr.mxu0 0.0
    %8073 = vmatpush1.msra.mxu0 %v8039
    %8074 = vmatprep.subr.mxu0 0.0
    %8075 = vmatpush1.msra.mxu0 %v8038
    %8076 = vmatprep.subr.mxu0 0.0
    %8077 = vmatpush1.msra.mxu0 %v8037
    %8078 = vmatprep.subr.mxu0 0.0
    %8079 = vmatpush1.msra.mxu0 %v8036
    %8080 = vmatprep.subr.mxu0 0.0
    %8081 = vmatpush1.msra.mxu0 %v8035
    %8082 = vmatprep.subr.mxu0 0.0
    %8083 = vmatpush1.msra.mxu0 %v8034
    %8084 = vmatprep.subr.mxu0 0.0
    %8085 = vmatpush1.msra.mxu0 %v8033
    %8086 = vmatprep.subr.mxu0 0.0
    %8087 = vmatpush1.msra.mxu0 %v8032
    %8088 = vmatprep.subr.mxu0 0.0
    %8089 = vmatpush1.msra.mxu0 %v8031
    %8090 = vmatprep.subr.mxu0 0.0
    %8091 = vmatpush1.msra.mxu0 %v8030
    %8092 = vmatprep.subr.mxu0 0.0
    %8093 = vmatpush1.msra.mxu0 %v8029
    %8094 = vmatprep.subr.mxu0 0.0
    %8095 = vmatpush1.msra.mxu0 %v8028
    %8096 = vmatprep.subr.mxu0 0.0
    %8097 = vmatpush1.msra.mxu0 %v8027
    %8098 = vmatprep.subr.mxu0 0.0
    %8099 = vmatpush2.msra.mxu0 %v8058
    %8100 = vmatprep.subr.mxu0 0.0
    %8101 = vmatpush2.msra.mxu0 %v8057
    %8102 = vmatprep.subr.mxu0 0.0
    %8103 = vmatpush2.msra.mxu0 %v8056
    %8104 = vmatprep.subr.mxu0 0.0
    %8105 = vmatpush2.msra.mxu0 %v8055
    %8106 = vmatprep.subr.mxu0 0.0
    %8107 = vmatpush2.msra.mxu0 %v8054
    %8108 = vmatprep.subr.mxu0 0.0
    %8109 = vmatpush2.msra.mxu0 %v8053
    %8110 = vmatprep.subr.mxu0 0.0
    %8111 = vmatpush2.msra.mxu0 %v8052
    %8112 = vmatprep.subr.mxu0 0.0
    %8113 = vmatpush2.msra.mxu0 %v8051
    %8114 = vmatprep.subr.mxu0 0.0
    %8115 = vmatpush2.msra.mxu0 %v8050
    %8116 = vmatprep.subr.mxu0 0.0
    %8117 = vmatpush2.msra.mxu0 %v8049
    %8118 = vmatprep.subr.mxu0 0.0
    %8119 = vmatpush2.msra.mxu0 %v8048
    %8120 = vmatprep.subr.mxu0 0.0
    %8121 = vmatpush2.msra.mxu0 %v8047
    %8122 = vmatprep.subr.mxu0 0.0
    %8123 = vmatpush2.msra.mxu0 %v8046
    %8124 = vmatprep.subr.mxu0 0.0
    %8125 = vmatpush2.msra.mxu0 %v8045
    %8126 = vmatprep.subr.mxu0 0.0
    %8127 = vmatpush2.msra.mxu0 %v8044
    %8128 = vmatprep.subr.mxu0 0.0
    %8129 = vmatpush2.msra.mxu0 %v8043
    %8130 = vmatprep.mubr.f32.mxu0 %v8026
    %8131 = vmatmul.mubr.f32.gmra.mxu0 %v8025
    %v8132 = vpop.f32.mrf.mxu0
    %v8133 = vadd.f32 %v8064, %v8132
    %v8134 = vpop.f32.mrf.mxu0
    %8135 = vdwg.mxu0
    %v8136 = vmax.f32 %v8133, 0.0
    %v8137 = vld [vmem:[%s53] sm:$0xff]
    %v8138 = vld [vmem:[%s53 + $0x8] sm:$0xff]
    %v8139 = vld [vmem:[%s53 + $0x10] sm:$0xff]
    %v8140 = vld [vmem:[%s53 + $0x18] sm:$0xff]
    %v8141 = vld [vmem:[%s53 + $0x20] sm:$0xff]
    %v8142 = vld [vmem:[%s53 + $0x28] sm:$0xff]
    %v8143 = vld [vmem:[%s53 + $0x30] sm:$0xff]
    %v8144 = vld [vmem:[%s53 + $0x38] sm:$0xff]
    %v8145 = vld [vmem:[%s53 + $0x40] sm:$0xff]
    %v8146 = vld [vmem:[%s53 + $0x48] sm:$0xff]
    %v8147 = vld [vmem:[%s53 + $0x50] sm:$0xf]
    %v8148 = vld [vmem:[%s55] sm:$0x1]
    %v8150 = vlaneseq
    %v8151 = vshrl.u32 %v8150, 7
    %v8152 = vsub.s32 0, %v8151
    %v8153 = vrot.slane %v8148, %v8152
    %vm8155 = vcmask 687104
    %v8157 = vsel %vm8155, %v8136, 0
    %v8160 = vsel %vm1060, %v8147, 0
    %8162 = vmatprep.subr.mxu0 0.0
    %8163 = vmatpush1.msra.mxu0 0.0
    %8164 = vmatprep.subr.mxu0 0.0
    %8165 = vmatpush1.msra.mxu0 0.0
    %8166 = vmatprep.subr.mxu0 0.0
    %8167 = vmatpush1.msra.mxu0 0.0
    %8168 = vmatprep.subr.mxu0 0.0
    %8169 = vmatpush1.msra.mxu0 0.0
    %8170 = vmatprep.subr.mxu0 0.0
    %8171 = vmatpush1.msra.mxu0 0.0
    %8172 = vmatprep.subr.mxu0 0.0
    %8173 = vmatpush1.msra.mxu0 %v8160
    %8174 = vmatprep.subr.mxu0 0.0
    %8175 = vmatpush1.msra.mxu0 %v8146
    %8176 = vmatprep.subr.mxu0 0.0
    %8177 = vmatpush1.msra.mxu0 %v8145
    %8178 = vmatprep.subr.mxu0 0.0
    %8179 = vmatpush1.msra.mxu0 %v8144
    %8180 = vmatprep.subr.mxu0 0.0
    %8181 = vmatpush1.msra.mxu0 %v8143
    %8182 = vmatprep.subr.mxu0 0.0
    %8183 = vmatpush1.msra.mxu0 %v8142
    %8184 = vmatprep.subr.mxu0 0.0
    %8185 = vmatpush1.msra.mxu0 %v8141
    %8186 = vmatprep.subr.mxu0 0.0
    %8187 = vmatpush1.msra.mxu0 %v8140
    %8188 = vmatprep.subr.mxu0 0.0
    %8189 = vmatpush1.msra.mxu0 %v8139
    %8190 = vmatprep.subr.mxu0 0.0
    %8191 = vmatpush1.msra.mxu0 %v8138
    %8192 = vmatprep.subr.mxu0 0.0
    %8193 = vmatpush1.msra.mxu0 %v8137
    %8194 = vmatprep.subr.mxu0 0.0
    %8195 = vmatpush2.msra.mxu0 0.0
    %8196 = vmatprep.subr.mxu0 0.0
    %8197 = vmatpush2.msra.mxu0 0.0
    %8198 = vmatprep.subr.mxu0 0.0
    %8199 = vmatpush2.msra.mxu0 0.0
    %8200 = vmatprep.subr.mxu0 0.0
    %8201 = vmatpush2.msra.mxu0 0.0
    %8202 = vmatprep.subr.mxu0 0.0
    %8203 = vmatpush2.msra.mxu0 0.0
    %8204 = vmatprep.subr.mxu0 0.0
    %8205 = vmatpush2.msra.mxu0 0.0
    %8206 = vmatprep.subr.mxu0 0.0
    %8207 = vmatpush2.msra.mxu0 0.0
    %8208 = vmatprep.subr.mxu0 0.0
    %8209 = vmatpush2.msra.mxu0 0.0
    %8210 = vmatprep.subr.mxu0 0.0
    %8211 = vmatpush2.msra.mxu0 0.0
    %8212 = vmatprep.subr.mxu0 0.0
    %8213 = vmatpush2.msra.mxu0 0.0
    %8214 = vmatprep.subr.mxu0 0.0
    %8215 = vmatpush2.msra.mxu0 0.0
    %8216 = vmatprep.subr.mxu0 0.0
    %8217 = vmatpush2.msra.mxu0 0.0
    %8218 = vmatprep.subr.mxu0 0.0
    %8219 = vmatpush2.msra.mxu0 0.0
    %8220 = vmatprep.subr.mxu0 0.0
    %8221 = vmatpush2.msra.mxu0 0.0
    %8222 = vmatprep.subr.mxu0 0.0
    %8223 = vmatpush2.msra.mxu0 0.0
    %8224 = vmatprep.subr.mxu0 0.0
    %8225 = vmatpush2.msra.mxu0 0.0
    %8226 = vmatprep.mubr.f32.mxu0 0.0
    %8227 = vmatmul.mubr.f32.gmra.mxu0 %v8157
    %v8228 = vpop.f32.mrf.mxu0
    %v8229 = vadd.f32 %v8153, %v8228
    %v8230 = vpop.f32.mrf.mxu0
    %8231 = vdwg.mxu0
    %vm8232 = vcmask 74752
    %8233 = vst.msk [vmem:[#allocation2] sm:$0x3] %vm8232, %v8229
    %8234 = vst.msk [vmem:[#allocation4] sm:$0x3] %vm8232, %v7802
    // Predicated region
    $region114: #{watermarked_net_forward.1} parent=1 // pred_check
      _
    $region115: #{watermarked_net_forward.1} parent=1 // pred_check_branch
      %8236 = sbr.rel (0) target = $region117
    $region116: #{watermarked_net_forward.1} parent=1 // pred_region
      %s8238 = ssub.s32 32, 32
      %8239 = vsyncadd [#allocation3], %s8238
      %s8241 = sshll.u32 [#allocation2], 4
      %s8242 = int_to_ptr.vmem [resolvable:$true] %s8241
      %8244 = dma.vmem_to_hbm [thread:$0]  %s8242, 32, %s57, [#allocation3]
    $region117: #{watermarked_net_forward.1} parent=1 // pred_fallthru
      _
    // Predicated region
    $region118: #{watermarked_net_forward.1} parent=1 // pred_check
      _
    $region119: #{watermarked_net_forward.1} parent=1 // pred_check_branch
      %8246 = sbr.rel (0) target = $region121
    $region120: #{watermarked_net_forward.1} parent=1 // pred_region
      %s8248 = ssub.s32 32, 32
      %8249 = vsyncadd [#allocation5], %s8248
      %s8251 = sshll.u32 [#allocation4], 4
      %s8252 = int_to_ptr.vmem [resolvable:$true] %s8251
      %8254 = dma.vmem_to_hbm [thread:$0]  %s8252, 32, %s59, [#allocation5]
    $region121: #{watermarked_net_forward.1} parent=1 // pred_fallthru
      _
    // Predicated region
    $region122: #{watermarked_net_forward.1} parent=1 // pred_check
      _
    $region123: #{watermarked_net_forward.1} parent=1 // pred_check_branch
      %8256 = sbr.rel (0) target = $region125
    $region124: #{watermarked_net_forward.1} parent=1 // pred_region
      %8257 = dma.done [#allocation3], 32
    $region125: #{watermarked_net_forward.1} parent=1 // pred_fallthru
      _
    // Predicated region
    $region126: #{watermarked_net_forward.1} parent=1 // pred_check
      _
    $region127: #{watermarked_net_forward.1} parent=1 // pred_check_branch
      %8259 = sbr.rel (0) target = $region129
    $region128: #{watermarked_net_forward.1} parent=1 // pred_region
      %8260 = dma.done [#allocation5], 32
    $region129: #{watermarked_net_forward.1} parent=1 // pred_fallthru
      _
    %8261 = vsyncpa [#allocation3], 1
    %8262 = vsyncpa [#allocation5], 1

</llo_original>
